<compile_context>
chip_gen: v7x
topology: tpu7x:2x2x1
jax: 0.10.0
libtpu: 0.0.40
codegen_flags: <defaults>
</compile_context>

<pallas_src>
import math

import jax
import jax.numpy as jnp
from jax.experimental import pallas as pl
from jax.experimental.pallas import tpu as pltpu

D_MODEL = 512
N_HEADS = 8
D_K = 64          # = d_v
D_FF = 2048
LN_EPS = 1e-5     # PyTorch nn.LayerNorm default; fresh LN each forward -> gamma=1, beta=0


def _layer_norm_f32(x):
    # LayerNorm over last axis, biased variance, gamma=1, beta=0 (default-init LN).
    mean = jnp.mean(x, axis=-1, keepdims=True)
    var = jnp.mean((x - mean) ** 2, axis=-1, keepdims=True)
    return (x - mean) * jax.lax.rsqrt(var + LN_EPS)


# ---------------------------------------------------------------------------
# Fused EncoderLayer kernel: MHA + LN, FFN + LN  (one grid step per batch item)
# ---------------------------------------------------------------------------
def encoder_layer_kernel(x_ref, bias_ref,
                         wqkv_ref, bqkv_ref, wo_ref, bo_ref,
                         w1_ref, b1_ref, w2_ref, b2_ref,
                         out_ref):
    x = x_ref[0]                      # [L, D_MODEL] f32
    mask_bias = bias_ref[0]           # [L, L] bf16 additive bias (0 or ~-1e9)
    L = x.shape[0]

    x_bf = x.astype(jnp.bfloat16)

    # ---- fused, lane-dense Q/K/V projection: one [L,512] @ [512,1536] matmul --
    # (1/sqrt(d_k) is already folded into the Q columns of wqkv / bqkv.)
    qkv = jnp.dot(x_bf, wqkv_ref[...],
                  preferred_element_type=jnp.float32) + bqkv_ref[...]   # [L, 1536] f32
    qkv_bf = qkv.astype(jnp.bfloat16)

    def split_heads(col_off):         # [L, 512] slice of qkv -> [H, L, D_K]
        return jnp.stack(
            [qkv_bf[:, col_off + h * D_K: col_off + (h + 1) * D_K]
             for h in range(N_HEADS)], axis=0)

    q = split_heads(0)                # [H, L, D_K] bf16 (already scaled)
    k = split_heads(D_MODEL)          # [H, L, D_K] bf16
    v = split_heads(2 * D_MODEL)      # [H, L, D_K] bf16

    # ---- scaled dot-product attention, all heads in one batched matmul -------
    scores = jnp.einsum("hld,hmd->hlm", q, k,
                        preferred_element_type=jnp.float32)             # [H, L, L] f32
    scores = scores + mask_bias[None, :, :]      # masked_fill(mask, -1e9) equivalent
    scores = scores - jnp.max(scores, axis=-1, keepdims=True)
    p = jnp.exp(scores)                          # f32 (correct on v5e; bf16 exp is a v6e/v7x micro-opt)
    attn = p * pl.reciprocal(jnp.sum(p, axis=-1, keepdims=True), approx=True)

    ctx = jnp.einsum("hlm,hmd->hld", attn.astype(jnp.bfloat16), v,
                     preferred_element_type=jnp.float32)                # [H, L, D_K] f32

    # ---- output projection: concat_h(ctx_h) @ Wo  (one lane-dense K=512 matmul)
    ctx_bf = ctx.astype(jnp.bfloat16)
    ctx_cat = jnp.concatenate([ctx_bf[h] for h in range(N_HEADS)], axis=-1)  # [L, 512] bf16
    attn_out = jnp.dot(ctx_cat, wo_ref[...],
                       preferred_element_type=jnp.float32) + bo_ref[...]     # [L, D_MODEL] f32

    h1 = _layer_norm_f32(attn_out + x)            # residual + LayerNorm (f32)

    # ---- position-wise feed-forward + residual + LayerNorm --------------------
    ff = jnp.dot(h1.astype(jnp.bfloat16), w1_ref[...],
                 preferred_element_type=jnp.float32) + b1_ref[...]
    ff = jnp.maximum(ff, 0.0)                                          # ReLU
    y = jnp.dot(ff.astype(jnp.bfloat16), w2_ref[...],
                preferred_element_type=jnp.float32) + b2_ref[...]

    out_ref[0] = _layer_norm_f32(y + h1)


# ---------------------------------------------------------------------------
# Wrapper
# ---------------------------------------------------------------------------
def _const_spec(shape):
    return pl.BlockSpec(shape, lambda b: (0,) * len(shape))


def _vmem_limit_bytes():
    # Per-generation VMEM limit: ~3/4 of physical, capped at 100 MiB.
    # v5e/v6e (128 MiB) -> 96 MiB; v7x (64 MiB) -> 48 MiB.
    try:
        cap = int(pltpu.get_tpu_info().vmem_capacity_bytes)
    except Exception:
        cap = 64 * 1024 * 1024
    return int(min(cap * 3 // 4, 100 * 1024 * 1024))


def encoder_layer(enc_inputs, enc_self_attn_mask, params):
    """enc_inputs: [B, L, d_model] f32; enc_self_attn_mask: [B, L, L] (1.0/True = masked)."""
    B, L, D = enc_inputs.shape
    assert D == D_MODEL

    # Additive mask bias precomputed once in the wrapper; stored in bf16 to halve
    # mask HBM traffic / VMEM (exp(~-1e9) == 0 either way).
    mask_bias = (enc_self_attn_mask.astype(jnp.float32)
                 * jnp.float32(-1e9)).astype(jnp.bfloat16)

    in_specs = [
        pl.BlockSpec((1, L, D_MODEL), lambda b: (b, 0, 0)),     # x
        pl.BlockSpec((1, L, L), lambda b: (b, 0, 0)),           # additive mask bias (bf16)
        _const_spec((D_MODEL, 3 * D_MODEL)),                    # fused W_QKV (bf16, Q pre-scaled)
        _const_spec((1, 3 * D_MODEL)),                          # fused b_QKV (f32, Q pre-scaled)
        _const_spec((D_MODEL, D_MODEL)),                        # W_O (bf16)
        _const_spec((1, D_MODEL)),                              # b_O
        _const_spec((D_MODEL, D_FF)),                           # W1 (bf16)
        _const_spec((1, D_FF)),                                 # b1
        _const_spec((D_FF, D_MODEL)),                           # W2 (bf16)
        _const_spec((1, D_MODEL)),                              # b2
    ]
    out_specs = pl.BlockSpec((1, L, D_MODEL), lambda b: (b, 0, 0))

    return pl.pallas_call(
        encoder_layer_kernel,
        out_shape=jax.ShapeDtypeStruct((B, L, D_MODEL), jnp.float32),
        grid=(B,),
        in_specs=in_specs,
        out_specs=out_specs,
        compiler_params=pltpu.CompilerParams(
            dimension_semantics=("parallel",),        # independent per batch item
            vmem_limit_bytes=_vmem_limit_bytes()),
    )(enc_inputs, mask_bias,
      params["wqkv"], params["bqkv"], params["wo"], params["bo"],
      params["w1"], params["b1"], params["w2"], params["b2"])


# ---------------------------------------------------------------------------
# Deterministic parameter init (mimics PyTorch Linear uniform(-1/sqrt(in), 1/sqrt(in)))
# ---------------------------------------------------------------------------
def init_params(key):
    def linear(key, fan_in, fan_out):
        kw, kb = jax.random.split(key)
        bound = 1.0 / math.sqrt(fan_in)
        w = jax.random.uniform(kw, (fan_in, fan_out), jnp.float32, -bound, bound)
        b = jax.random.uniform(kb, (fan_out,), jnp.float32, -bound, bound)
        return w, b

    keys = jax.random.split(key, 6)
    wq, bq = linear(keys[0], D_MODEL, D_MODEL)
    wk, bk = linear(keys[1], D_MODEL, D_MODEL)
    wv, bv = linear(keys[2], D_MODEL, D_MODEL)
    wo, bo = linear(keys[3], D_MODEL, D_MODEL)
    w1, b1 = linear(keys[4], D_MODEL, D_FF)
    w2, b2 = linear(keys[5], D_FF, D_MODEL)

    # Fold 1/sqrt(d_k) into Wq / bq (exact: 0.125 is a power of two).
    scale = 1.0 / math.sqrt(D_K)
    wq = wq * scale
    bq = bq * scale

    # Fused QKV weight [D_MODEL, 3*D_MODEL], columns: [Q(512) | K(512) | V(512)],
    # within each, column h*64+d is head h dim d (matches PyTorch view+transpose).
    wqkv = jnp.concatenate([wq, wk, wv], axis=1).astype(jnp.bfloat16)
    bqkv = jnp.concatenate([bq, bk, bv], axis=0).reshape(1, 3 * D_MODEL)   # keep f32

    return dict(
        wqkv=wqkv, bqkv=bqkv,
        wo=wo.astype(jnp.bfloat16), bo=bo.reshape(1, D_MODEL),
        w1=w1.astype(jnp.bfloat16), b1=b1.reshape(1, D_FF),
        w2=w2.astype(jnp.bfloat16), b2=b2.reshape(1, D_MODEL),
    )


if __name__ == "__main__":
    B, L = 2, 8
    key = jax.random.PRNGKey(0)
    k_x, k_p = jax.random.split(key)

    enc_inputs = jax.random.normal(k_x, (B, L, D_MODEL), jnp.float32)

    # Padding-style self-attention mask: last 2 key positions are masked (1.0 = masked).
    mask = jnp.zeros((B, L, L), jnp.float32)
    mask = mask.at[:, :, -2:].set(1.0)

    params = init_params(k_p)

    out = jax.jit(encoder_layer)(enc_inputs, mask, params)
    out = jax.block_until_ready(out)

    assert out.shape == (B, L, D_MODEL)
    assert bool(jnp.all(jnp.isfinite(out)))
    print("KERNEL_OK")
</pallas_src>

<mosaic_0001>
module attributes {stable_mosaic.version = 11 : i64} {
  func.func @encoder_layer_kernel(%arg0: i32, %arg1: memref<1x8x512xf32, #tpu.memory_space<vmem>>, %arg2: memref<1x8x8xbf16, #tpu.memory_space<vmem>>, %arg3: memref<512x1536xbf16, #tpu.memory_space<vmem>>, %arg4: memref<1x1536xf32, #tpu.memory_space<vmem>>, %arg5: memref<512x512xbf16, #tpu.memory_space<vmem>>, %arg6: memref<1x512xf32, #tpu.memory_space<vmem>>, %arg7: memref<512x2048xbf16, #tpu.memory_space<vmem>>, %arg8: memref<1x2048xf32, #tpu.memory_space<vmem>>, %arg9: memref<2048x512xbf16, #tpu.memory_space<vmem>>, %arg10: memref<1x512xf32, #tpu.memory_space<vmem>>, %arg11: memref<1x8x512xf32, #tpu.memory_space<vmem>>) attributes {dimension_semantics = [#tpu.dimension_semantics<parallel>], iteration_bounds = array<i64: 2>, scalar_prefetch = 0 : i64, scratch_operands = 0 : i64, tpu.core_type = #tpu.core_type<tc>, window_params = [{transform_indices = @transform_0, window_bounds = array<i64: 1, 8, 512>}, {transform_indices = @transform_1, window_bounds = array<i64: 1, 8, 8>}, {pipeline_mode = #tpu.pipeline_mode<synchronous>, transform_indices = @transform_2, window_bounds = array<i64: 512, 1536>}, {pipeline_mode = #tpu.pipeline_mode<synchronous>, transform_indices = @transform_3, window_bounds = array<i64: 1, 1536>}, {pipeline_mode = #tpu.pipeline_mode<synchronous>, transform_indices = @transform_4, window_bounds = array<i64: 512, 512>}, {pipeline_mode = #tpu.pipeline_mode<synchronous>, transform_indices = @transform_5, window_bounds = array<i64: 1, 512>}, {pipeline_mode = #tpu.pipeline_mode<synchronous>, transform_indices = @transform_6, window_bounds = array<i64: 512, 2048>}, {pipeline_mode = #tpu.pipeline_mode<synchronous>, transform_indices = @transform_7, window_bounds = array<i64: 1, 2048>}, {pipeline_mode = #tpu.pipeline_mode<synchronous>, transform_indices = @transform_8, window_bounds = array<i64: 2048, 512>}, {pipeline_mode = #tpu.pipeline_mode<synchronous>, transform_indices = @transform_9, window_bounds = array<i64: 1, 512>}, {transform_indices = @transform_10, window_bounds = array<i64: 1, 8, 512>}]} {
    %c0 = arith.constant 0 : index
    %c0_0 = arith.constant 0 : index
    %c0_1 = arith.constant 0 : index
    %0 = vector.load %arg1[%c0, %c0_0, %c0_1] : memref<1x8x512xf32, #tpu.memory_space<vmem>>, vector<1x8x512xf32>
    %1 = vector.shape_cast %0 : vector<1x8x512xf32> to vector<8x512xf32>
    %c0_2 = arith.constant 0 : index
    %c0_3 = arith.constant 0 : index
    %c0_4 = arith.constant 0 : index
    %2 = vector.load %arg2[%c0_2, %c0_3, %c0_4] : memref<1x8x8xbf16, #tpu.memory_space<vmem>>, vector<1x8x8xbf16>
    %3 = vector.shape_cast %2 : vector<1x8x8xbf16> to vector<8x8xbf16>
    %4 = arith.truncf %1 : vector<8x512xf32> to vector<8x512xbf16>
    %c0_5 = arith.constant 0 : index
    %c0_6 = arith.constant 0 : index
    %5 = vector.load %arg3[%c0_5, %c0_6] : memref<512x1536xbf16, #tpu.memory_space<vmem>>, vector<512x1536xbf16>
    %cst = arith.constant dense<0.000000e+00> : vector<8x1536xf32>
    %6 = tpu.matmul %4, %5, %cst {dimension_numbers = #tpu.dot_dimension_numbers<[1], [0], [0], [1], [0, 0, 1, 1], [], []>} : vector<8x512xbf16>, vector<512x1536xbf16>, vector<8x1536xf32> -> vector<8x1536xf32>
    %c0_7 = arith.constant 0 : index
    %c0_8 = arith.constant 0 : index
    %7 = vector.load %arg4[%c0_7, %c0_8] : memref<1x1536xf32, #tpu.memory_space<vmem>>, vector<1x1536xf32>
    %8 = vector.broadcast %7 : vector<1x1536xf32> to vector<8x1536xf32>
    %9 = arith.addf %6, %8 : vector<8x1536xf32>
    %10 = arith.truncf %9 : vector<8x1536xf32> to vector<8x1536xbf16>
    %11 = vector.extract_strided_slice %10 {offsets = [0, 0], sizes = [8, 64], strides = [1, 1]} : vector<8x1536xbf16> to vector<8x64xbf16>
    %12 = vector.extract_strided_slice %10 {offsets = [0, 64], sizes = [8, 64], strides = [1, 1]} : vector<8x1536xbf16> to vector<8x64xbf16>
    %13 = vector.extract_strided_slice %10 {offsets = [0, 128], sizes = [8, 64], strides = [1, 1]} : vector<8x1536xbf16> to vector<8x64xbf16>
    %14 = vector.extract_strided_slice %10 {offsets = [0, 192], sizes = [8, 64], strides = [1, 1]} : vector<8x1536xbf16> to vector<8x64xbf16>
    %15 = vector.extract_strided_slice %10 {offsets = [0, 256], sizes = [8, 64], strides = [1, 1]} : vector<8x1536xbf16> to vector<8x64xbf16>
    %16 = vector.extract_strided_slice %10 {offsets = [0, 320], sizes = [8, 64], strides = [1, 1]} : vector<8x1536xbf16> to vector<8x64xbf16>
    %17 = vector.extract_strided_slice %10 {offsets = [0, 384], sizes = [8, 64], strides = [1, 1]} : vector<8x1536xbf16> to vector<8x64xbf16>
    %18 = vector.extract_strided_slice %10 {offsets = [0, 448], sizes = [8, 64], strides = [1, 1]} : vector<8x1536xbf16> to vector<8x64xbf16>
    %19 = vector.shape_cast %11 : vector<8x64xbf16> to vector<1x8x64xbf16>
    %20 = vector.shape_cast %12 : vector<8x64xbf16> to vector<1x8x64xbf16>
    %21 = vector.shape_cast %13 : vector<8x64xbf16> to vector<1x8x64xbf16>
    %22 = vector.shape_cast %14 : vector<8x64xbf16> to vector<1x8x64xbf16>
    %23 = vector.shape_cast %15 : vector<8x64xbf16> to vector<1x8x64xbf16>
    %24 = vector.shape_cast %16 : vector<8x64xbf16> to vector<1x8x64xbf16>
    %25 = vector.shape_cast %17 : vector<8x64xbf16> to vector<1x8x64xbf16>
    %26 = vector.shape_cast %18 : vector<8x64xbf16> to vector<1x8x64xbf16>
    %27 = tpu.concatenate %19, %20, %21, %22, %23, %24, %25, %26 in 0 : vector<1x8x64xbf16>, vector<1x8x64xbf16>, vector<1x8x64xbf16>, vector<1x8x64xbf16>, vector<1x8x64xbf16>, vector<1x8x64xbf16>, vector<1x8x64xbf16>, vector<1x8x64xbf16> -> vector<8x8x64xbf16>
    %28 = vector.extract_strided_slice %10 {offsets = [0, 512], sizes = [8, 64], strides = [1, 1]} : vector<8x1536xbf16> to vector<8x64xbf16>
    %29 = vector.extract_strided_slice %10 {offsets = [0, 576], sizes = [8, 64], strides = [1, 1]} : vector<8x1536xbf16> to vector<8x64xbf16>
    %30 = vector.extract_strided_slice %10 {offsets = [0, 640], sizes = [8, 64], strides = [1, 1]} : vector<8x1536xbf16> to vector<8x64xbf16>
    %31 = vector.extract_strided_slice %10 {offsets = [0, 704], sizes = [8, 64], strides = [1, 1]} : vector<8x1536xbf16> to vector<8x64xbf16>
    %32 = vector.extract_strided_slice %10 {offsets = [0, 768], sizes = [8, 64], strides = [1, 1]} : vector<8x1536xbf16> to vector<8x64xbf16>
    %33 = vector.extract_strided_slice %10 {offsets = [0, 832], sizes = [8, 64], strides = [1, 1]} : vector<8x1536xbf16> to vector<8x64xbf16>
    %34 = vector.extract_strided_slice %10 {offsets = [0, 896], sizes = [8, 64], strides = [1, 1]} : vector<8x1536xbf16> to vector<8x64xbf16>
    %35 = vector.extract_strided_slice %10 {offsets = [0, 960], sizes = [8, 64], strides = [1, 1]} : vector<8x1536xbf16> to vector<8x64xbf16>
    %36 = vector.shape_cast %28 : vector<8x64xbf16> to vector<1x8x64xbf16>
    %37 = vector.shape_cast %29 : vector<8x64xbf16> to vector<1x8x64xbf16>
    %38 = vector.shape_cast %30 : vector<8x64xbf16> to vector<1x8x64xbf16>
    %39 = vector.shape_cast %31 : vector<8x64xbf16> to vector<1x8x64xbf16>
    %40 = vector.shape_cast %32 : vector<8x64xbf16> to vector<1x8x64xbf16>
    %41 = vector.shape_cast %33 : vector<8x64xbf16> to vector<1x8x64xbf16>
    %42 = vector.shape_cast %34 : vector<8x64xbf16> to vector<1x8x64xbf16>
    %43 = vector.shape_cast %35 : vector<8x64xbf16> to vector<1x8x64xbf16>
    %44 = tpu.concatenate %36, %37, %38, %39, %40, %41, %42, %43 in 0 : vector<1x8x64xbf16>, vector<1x8x64xbf16>, vector<1x8x64xbf16>, vector<1x8x64xbf16>, vector<1x8x64xbf16>, vector<1x8x64xbf16>, vector<1x8x64xbf16>, vector<1x8x64xbf16> -> vector<8x8x64xbf16>
    %45 = vector.extract_strided_slice %10 {offsets = [0, 1024], sizes = [8, 64], strides = [1, 1]} : vector<8x1536xbf16> to vector<8x64xbf16>
    %46 = vector.extract_strided_slice %10 {offsets = [0, 1088], sizes = [8, 64], strides = [1, 1]} : vector<8x1536xbf16> to vector<8x64xbf16>
    %47 = vector.extract_strided_slice %10 {offsets = [0, 1152], sizes = [8, 64], strides = [1, 1]} : vector<8x1536xbf16> to vector<8x64xbf16>
    %48 = vector.extract_strided_slice %10 {offsets = [0, 1216], sizes = [8, 64], strides = [1, 1]} : vector<8x1536xbf16> to vector<8x64xbf16>
    %49 = vector.extract_strided_slice %10 {offsets = [0, 1280], sizes = [8, 64], strides = [1, 1]} : vector<8x1536xbf16> to vector<8x64xbf16>
    %50 = vector.extract_strided_slice %10 {offsets = [0, 1344], sizes = [8, 64], strides = [1, 1]} : vector<8x1536xbf16> to vector<8x64xbf16>
    %51 = vector.extract_strided_slice %10 {offsets = [0, 1408], sizes = [8, 64], strides = [1, 1]} : vector<8x1536xbf16> to vector<8x64xbf16>
    %52 = vector.extract_strided_slice %10 {offsets = [0, 1472], sizes = [8, 64], strides = [1, 1]} : vector<8x1536xbf16> to vector<8x64xbf16>
    %53 = vector.shape_cast %45 : vector<8x64xbf16> to vector<1x8x64xbf16>
    %54 = vector.shape_cast %46 : vector<8x64xbf16> to vector<1x8x64xbf16>
    %55 = vector.shape_cast %47 : vector<8x64xbf16> to vector<1x8x64xbf16>
    %56 = vector.shape_cast %48 : vector<8x64xbf16> to vector<1x8x64xbf16>
    %57 = vector.shape_cast %49 : vector<8x64xbf16> to vector<1x8x64xbf16>
    %58 = vector.shape_cast %50 : vector<8x64xbf16> to vector<1x8x64xbf16>
    %59 = vector.shape_cast %51 : vector<8x64xbf16> to vector<1x8x64xbf16>
    %60 = vector.shape_cast %52 : vector<8x64xbf16> to vector<1x8x64xbf16>
    %61 = tpu.concatenate %53, %54, %55, %56, %57, %58, %59, %60 in 0 : vector<1x8x64xbf16>, vector<1x8x64xbf16>, vector<1x8x64xbf16>, vector<1x8x64xbf16>, vector<1x8x64xbf16>, vector<1x8x64xbf16>, vector<1x8x64xbf16>, vector<1x8x64xbf16> -> vector<8x8x64xbf16>
    "tpu.trace_start"() <{level = 10 : i32, message = "hld,hmd->hlm"}> : () -> ()
    %cst_9 = arith.constant dense<0.000000e+00> : vector<8x8x8xf32>
    %62 = tpu.matmul %27, %44, %cst_9 {dimension_numbers = #tpu.dot_dimension_numbers<[2], [2], [1], [1], [0, 0, 0, 1, 1, 1], [0], [0]>} : vector<8x8x64xbf16>, vector<8x8x64xbf16>, vector<8x8x8xf32> -> vector<8x8x8xf32>
    "tpu.trace_stop"() : () -> ()
    %63 = vector.shape_cast %3 : vector<8x8xbf16> to vector<1x8x8xbf16>
    %64 = arith.extf %63 : vector<1x8x8xbf16> to vector<1x8x8xf32>
    %65 = vector.broadcast %64 : vector<1x8x8xf32> to vector<8x8x8xf32>
    %66 = arith.addf %62, %65 : vector<8x8x8xf32>
    %cst_10 = arith.constant dense<0xFF800000> : vector<8x8xf32>
    %67 = vector.multi_reduction <maximumf>, %66, %cst_10 [2] : vector<8x8x8xf32> to vector<8x8xf32>
    %68 = vector.shape_cast %67 : vector<8x8xf32> to vector<8x8x1xf32>
    %69 = vector.broadcast %68 : vector<8x8x1xf32> to vector<8x8x8xf32>
    %70 = arith.subf %66, %69 : vector<8x8x8xf32>
    %71 = math.exp %70 : vector<8x8x8xf32>
    %cst_11 = arith.constant dense<0.000000e+00> : vector<8x8xf32>
    %72 = vector.multi_reduction <add>, %71, %cst_11 [2] : vector<8x8x8xf32> to vector<8x8xf32>
    %73 = vector.shape_cast %72 : vector<8x8xf32> to vector<8x8x1xf32>
    %74 = tpu.reciprocal %73 {approx = true} : vector<8x8x1xf32> -> vector<8x8x1xf32>
    %75 = vector.broadcast %74 : vector<8x8x1xf32> to vector<8x8x8xf32>
    %76 = arith.mulf %71, %75 : vector<8x8x8xf32>
    %77 = arith.truncf %76 : vector<8x8x8xf32> to vector<8x8x8xbf16>
    "tpu.trace_start"() <{level = 10 : i32, message = "hlm,hmd->hld"}> : () -> ()
    %cst_12 = arith.constant dense<0.000000e+00> : vector<8x8x64xf32>
    %78 = tpu.matmul %77, %61, %cst_12 {dimension_numbers = #tpu.dot_dimension_numbers<[2], [1], [1], [2], [0, 0, 0, 1, 1, 2], [0], [0]>} : vector<8x8x8xbf16>, vector<8x8x64xbf16>, vector<8x8x64xf32> -> vector<8x8x64xf32>
    "tpu.trace_stop"() : () -> ()
    %79 = arith.truncf %78 : vector<8x8x64xf32> to vector<8x8x64xbf16>
    %80 = vector.extract_strided_slice %79 {offsets = [0, 0, 0], sizes = [1, 8, 64], strides = [1, 1, 1]} : vector<8x8x64xbf16> to vector<1x8x64xbf16>
    %81 = vector.shape_cast %80 : vector<1x8x64xbf16> to vector<8x64xbf16>
    %82 = vector.extract_strided_slice %79 {offsets = [1, 0, 0], sizes = [1, 8, 64], strides = [1, 1, 1]} : vector<8x8x64xbf16> to vector<1x8x64xbf16>
    %83 = vector.shape_cast %82 : vector<1x8x64xbf16> to vector<8x64xbf16>
    %84 = vector.extract_strided_slice %79 {offsets = [2, 0, 0], sizes = [1, 8, 64], strides = [1, 1, 1]} : vector<8x8x64xbf16> to vector<1x8x64xbf16>
    %85 = vector.shape_cast %84 : vector<1x8x64xbf16> to vector<8x64xbf16>
    %86 = vector.extract_strided_slice %79 {offsets = [3, 0, 0], sizes = [1, 8, 64], strides = [1, 1, 1]} : vector<8x8x64xbf16> to vector<1x8x64xbf16>
    %87 = vector.shape_cast %86 : vector<1x8x64xbf16> to vector<8x64xbf16>
    %88 = vector.extract_strided_slice %79 {offsets = [4, 0, 0], sizes = [1, 8, 64], strides = [1, 1, 1]} : vector<8x8x64xbf16> to vector<1x8x64xbf16>
    %89 = vector.shape_cast %88 : vector<1x8x64xbf16> to vector<8x64xbf16>
    %90 = vector.extract_strided_slice %79 {offsets = [5, 0, 0], sizes = [1, 8, 64], strides = [1, 1, 1]} : vector<8x8x64xbf16> to vector<1x8x64xbf16>
    %91 = vector.shape_cast %90 : vector<1x8x64xbf16> to vector<8x64xbf16>
    %92 = vector.extract_strided_slice %79 {offsets = [6, 0, 0], sizes = [1, 8, 64], strides = [1, 1, 1]} : vector<8x8x64xbf16> to vector<1x8x64xbf16>
    %93 = vector.shape_cast %92 : vector<1x8x64xbf16> to vector<8x64xbf16>
    %94 = vector.extract_strided_slice %79 {offsets = [7, 0, 0], sizes = [1, 8, 64], strides = [1, 1, 1]} : vector<8x8x64xbf16> to vector<1x8x64xbf16>
    %95 = vector.shape_cast %94 : vector<1x8x64xbf16> to vector<8x64xbf16>
    %96 = tpu.concatenate %81, %83, %85, %87, %89, %91, %93, %95 in 1 : vector<8x64xbf16>, vector<8x64xbf16>, vector<8x64xbf16>, vector<8x64xbf16>, vector<8x64xbf16>, vector<8x64xbf16>, vector<8x64xbf16>, vector<8x64xbf16> -> vector<8x512xbf16>
    %c0_13 = arith.constant 0 : index
    %c0_14 = arith.constant 0 : index
    %97 = vector.load %arg5[%c0_13, %c0_14] : memref<512x512xbf16, #tpu.memory_space<vmem>>, vector<512x512xbf16>
    %cst_15 = arith.constant dense<0.000000e+00> : vector<8x512xf32>
    %98 = tpu.matmul %96, %97, %cst_15 {dimension_numbers = #tpu.dot_dimension_numbers<[1], [0], [0], [1], [0, 0, 1, 1], [], []>} : vector<8x512xbf16>, vector<512x512xbf16>, vector<8x512xf32> -> vector<8x512xf32>
    %c0_16 = arith.constant 0 : index
    %c0_17 = arith.constant 0 : index
    %99 = vector.load %arg6[%c0_16, %c0_17] : memref<1x512xf32, #tpu.memory_space<vmem>>, vector<1x512xf32>
    %100 = vector.broadcast %99 : vector<1x512xf32> to vector<8x512xf32>
    %101 = arith.addf %98, %100 : vector<8x512xf32>
    %102 = arith.addf %101, %1 : vector<8x512xf32>
    %cst_18 = arith.constant dense<0.000000e+00> : vector<8xf32>
    %103 = vector.multi_reduction <add>, %102, %cst_18 [1] : vector<8x512xf32> to vector<8xf32>
    %104 = vector.shape_cast %103 : vector<8xf32> to vector<8x1xf32>
    %cst_19 = arith.constant 5.120000e+02 : f32
    %105 = vector.broadcast %cst_19 : f32 to vector<8x1xf32>
    %106 = arith.divf %104, %105 : vector<8x1xf32>
    %107 = vector.broadcast %106 : vector<8x1xf32> to vector<8x512xf32>
    %108 = arith.subf %102, %107 : vector<8x512xf32>
    %109 = arith.mulf %108, %108 : vector<8x512xf32>
    %cst_20 = arith.constant dense<0.000000e+00> : vector<8xf32>
    %110 = vector.multi_reduction <add>, %109, %cst_20 [1] : vector<8x512xf32> to vector<8xf32>
    %111 = vector.shape_cast %110 : vector<8xf32> to vector<8x1xf32>
    %cst_21 = arith.constant 5.120000e+02 : f32
    %112 = vector.broadcast %cst_21 : f32 to vector<8x1xf32>
    %113 = arith.divf %111, %112 : vector<8x1xf32>
    %114 = vector.broadcast %106 : vector<8x1xf32> to vector<8x512xf32>
    %115 = arith.subf %102, %114 : vector<8x512xf32>
    %cst_22 = arith.constant 9.99999974E-6 : f32
    %116 = vector.broadcast %cst_22 : f32 to vector<8x1xf32>
    %117 = arith.addf %113, %116 : vector<8x1xf32>
    %118 = math.rsqrt %117 : vector<8x1xf32>
    %119 = vector.broadcast %118 : vector<8x1xf32> to vector<8x512xf32>
    %120 = arith.mulf %115, %119 : vector<8x512xf32>
    %121 = arith.truncf %120 : vector<8x512xf32> to vector<8x512xbf16>
    %c0_23 = arith.constant 0 : index
    %c0_24 = arith.constant 0 : index
    %122 = vector.load %arg7[%c0_23, %c0_24] : memref<512x2048xbf16, #tpu.memory_space<vmem>>, vector<512x2048xbf16>
    %cst_25 = arith.constant dense<0.000000e+00> : vector<8x2048xf32>
    %123 = tpu.matmul %121, %122, %cst_25 {dimension_numbers = #tpu.dot_dimension_numbers<[1], [0], [0], [1], [0, 0, 1, 1], [], []>} : vector<8x512xbf16>, vector<512x2048xbf16>, vector<8x2048xf32> -> vector<8x2048xf32>
    %c0_26 = arith.constant 0 : index
    %c0_27 = arith.constant 0 : index
    %124 = vector.load %arg8[%c0_26, %c0_27] : memref<1x2048xf32, #tpu.memory_space<vmem>>, vector<1x2048xf32>
    %125 = vector.broadcast %124 : vector<1x2048xf32> to vector<8x2048xf32>
    %126 = arith.addf %123, %125 : vector<8x2048xf32>
    %cst_28 = arith.constant 0.000000e+00 : f32
    %127 = vector.broadcast %cst_28 : f32 to vector<8x2048xf32>
    %128 = arith.maximumf %126, %127 : vector<8x2048xf32>
    %129 = arith.truncf %128 : vector<8x2048xf32> to vector<8x2048xbf16>
    %c0_29 = arith.constant 0 : index
    %c0_30 = arith.constant 0 : index
    %130 = vector.load %arg9[%c0_29, %c0_30] : memref<2048x512xbf16, #tpu.memory_space<vmem>>, vector<2048x512xbf16>
    %cst_31 = arith.constant dense<0.000000e+00> : vector<8x512xf32>
    %131 = tpu.matmul %129, %130, %cst_31 {dimension_numbers = #tpu.dot_dimension_numbers<[1], [0], [0], [1], [0, 0, 1, 1], [], []>} : vector<8x2048xbf16>, vector<2048x512xbf16>, vector<8x512xf32> -> vector<8x512xf32>
    %c0_32 = arith.constant 0 : index
    %c0_33 = arith.constant 0 : index
    %132 = vector.load %arg10[%c0_32, %c0_33] : memref<1x512xf32, #tpu.memory_space<vmem>>, vector<1x512xf32>
    %133 = vector.broadcast %132 : vector<1x512xf32> to vector<8x512xf32>
    %134 = arith.addf %131, %133 : vector<8x512xf32>
    %135 = arith.addf %134, %120 : vector<8x512xf32>
    %cst_34 = arith.constant dense<0.000000e+00> : vector<8xf32>
    %136 = vector.multi_reduction <add>, %135, %cst_34 [1] : vector<8x512xf32> to vector<8xf32>
    %137 = vector.shape_cast %136 : vector<8xf32> to vector<8x1xf32>
    %cst_35 = arith.constant 5.120000e+02 : f32
    %138 = vector.broadcast %cst_35 : f32 to vector<8x1xf32>
    %139 = arith.divf %137, %138 : vector<8x1xf32>
    %140 = vector.broadcast %139 : vector<8x1xf32> to vector<8x512xf32>
    %141 = arith.subf %135, %140 : vector<8x512xf32>
    %142 = arith.mulf %141, %141 : vector<8x512xf32>
    %cst_36 = arith.constant dense<0.000000e+00> : vector<8xf32>
    %143 = vector.multi_reduction <add>, %142, %cst_36 [1] : vector<8x512xf32> to vector<8xf32>
    %144 = vector.shape_cast %143 : vector<8xf32> to vector<8x1xf32>
    %cst_37 = arith.constant 5.120000e+02 : f32
    %145 = vector.broadcast %cst_37 : f32 to vector<8x1xf32>
    %146 = arith.divf %144, %145 : vector<8x1xf32>
    %147 = vector.broadcast %139 : vector<8x1xf32> to vector<8x512xf32>
    %148 = arith.subf %135, %147 : vector<8x512xf32>
    %cst_38 = arith.constant 9.99999974E-6 : f32
    %149 = vector.broadcast %cst_38 : f32 to vector<8x1xf32>
    %150 = arith.addf %146, %149 : vector<8x1xf32>
    %151 = math.rsqrt %150 : vector<8x1xf32>
    %152 = vector.broadcast %151 : vector<8x1xf32> to vector<8x512xf32>
    %153 = arith.mulf %148, %152 : vector<8x512xf32>
    %c0_39 = arith.constant 0 : index
    %c0_40 = arith.constant 0 : index
    %c0_41 = arith.constant 0 : index
    %154 = vector.load %arg11[%c0_39, %c0_40, %c0_41] : memref<1x8x512xf32, #tpu.memory_space<vmem>>, vector<1x8x512xf32>
    %155 = vector.shape_cast %154 : vector<1x8x512xf32> to vector<8x512xf32>
    %156 = vector.shape_cast %153 : vector<8x512xf32> to vector<1x8x512xf32>
    tpu.vector_store %arg11[%c0_39, %c0_40, %c0_41], %156 {strides = array<i32>} : memref<1x8x512xf32, #tpu.memory_space<vmem>>, vector<1x8x512xf32>,
    return
  }
  func.func @transform_0(%arg0: i32) -> (i32, i32, i32) {
    %c0_i32 = arith.constant 0 : i32
    %c0_i32_0 = arith.constant 0 : i32
    %c0_i32_1 = arith.constant 0 : i32
    return %arg0, %c0_i32, %c0_i32_0 : i32, i32, i32
  }
  func.func @transform_1(%arg0: i32) -> (i32, i32, i32) {
    %c0_i32 = arith.constant 0 : i32
    %c0_i32_0 = arith.constant 0 : i32
    %c0_i32_1 = arith.constant 0 : i32
    return %arg0, %c0_i32, %c0_i32_0 : i32, i32, i32
  }
  func.func @transform_2(%arg0: i32) -> (i32, i32) {
    %c0_i32 = arith.constant 0 : i32
    %c0_i32_0 = arith.constant 0 : i32
    %c0_i32_1 = arith.constant 0 : i32
    return %c0_i32, %c0_i32_0 : i32, i32
  }
  func.func @transform_3(%arg0: i32) -> (i32, i32) {
    %c0_i32 = arith.constant 0 : i32
    %c0_i32_0 = arith.constant 0 : i32
    %c0_i32_1 = arith.constant 0 : i32
    return %c0_i32, %c0_i32_0 : i32, i32
  }
  func.func @transform_4(%arg0: i32) -> (i32, i32) {
    %c0_i32 = arith.constant 0 : i32
    %c0_i32_0 = arith.constant 0 : i32
    %c0_i32_1 = arith.constant 0 : i32
    return %c0_i32, %c0_i32_0 : i32, i32
  }
  func.func @transform_5(%arg0: i32) -> (i32, i32) {
    %c0_i32 = arith.constant 0 : i32
    %c0_i32_0 = arith.constant 0 : i32
    %c0_i32_1 = arith.constant 0 : i32
    return %c0_i32, %c0_i32_0 : i32, i32
  }
  func.func @transform_6(%arg0: i32) -> (i32, i32) {
    %c0_i32 = arith.constant 0 : i32
    %c0_i32_0 = arith.constant 0 : i32
    %c0_i32_1 = arith.constant 0 : i32
    return %c0_i32, %c0_i32_0 : i32, i32
  }
  func.func @transform_7(%arg0: i32) -> (i32, i32) {
    %c0_i32 = arith.constant 0 : i32
    %c0_i32_0 = arith.constant 0 : i32
    %c0_i32_1 = arith.constant 0 : i32
    return %c0_i32, %c0_i32_0 : i32, i32
  }
  func.func @transform_8(%arg0: i32) -> (i32, i32) {
    %c0_i32 = arith.constant 0 : i32
    %c0_i32_0 = arith.constant 0 : i32
    %c0_i32_1 = arith.constant 0 : i32
    return %c0_i32, %c0_i32_0 : i32, i32
  }
  func.func @transform_9(%arg0: i32) -> (i32, i32) {
    %c0_i32 = arith.constant 0 : i32
    %c0_i32_0 = arith.constant 0 : i32
    %c0_i32_1 = arith.constant 0 : i32
    return %c0_i32, %c0_i32_0 : i32, i32
  }
  func.func @transform_10(%arg0: i32) -> (i32, i32, i32) {
    %c0_i32 = arith.constant 0 : i32
    %c0_i32_0 = arith.constant 0 : i32
    %c0_i32_1 = arith.constant 0 : i32
    return %arg0, %c0_i32, %c0_i32_0 : i32, i32, i32
  }
}

</mosaic_0001>

<llo_original>
// kernel: encoder_layer.1
$region0: #{encoder_layer.1}
  #allocation0 [shape = 'u32[]', space=smem, size = 0x4, offset = 0x4, fixed_abs, tag = 'smem constant byte address 0x4 - core index']
  #allocation1 [shape = 'u32[144,128]{1,0:T(1,128)}', space=vmem, size = 0x12000, scoped, tag = 'internal scratch']
  %s0 = inlined_call_operand.hbm [shape: f32[2,8,512], index: 0, kind: input, shape index: {}]
  %s1 = inlined_call_operand.vmem [shape: bf16[2,8,8], index: 1, kind: input, shape index: {}]
  %s2 = inlined_call_operand.hbm [shape: bf16[512,1536], index: 2, kind: input, shape index: {}]
  %s3 = inlined_call_operand.hbm [shape: f32[1,1536], index: 3, kind: input, shape index: {}]
  %s4 = inlined_call_operand.hbm [shape: bf16[512,512], index: 4, kind: input, shape index: {}]
  %s5 = inlined_call_operand.hbm [shape: f32[1,512], index: 5, kind: input, shape index: {}]
  %s6 = inlined_call_operand.hbm [shape: bf16[512,2048], index: 6, kind: input, shape index: {}]
  %s7 = inlined_call_operand.hbm [shape: f32[1,2048], index: 7, kind: input, shape index: {}]
  %s8 = inlined_call_operand.hbm [shape: bf16[2048,512], index: 8, kind: input, shape index: {}]
  %s9 = inlined_call_operand.hbm [shape: f32[1,512], index: 9, kind: input, shape index: {}]
  %s10 = inlined_call_operand.hbm [shape: f32[2,8,512], index: 10, kind: output, shape index: {}]
  %s11 = sld [smem:[#allocation0]]
  $region109: #{encoder_layer.1} parent=0
    _
  %s13 = ssub.s32 1, %s11
  %s14 = scalar_select 0, %s13, %s11
  $region1: #{encoder_layer.1} parent=0
    #allocation2 [shape = 'u8[32768]{0}', space=vmem, size = 0x8000, scoped, tag = 'input window, operand 0']
    #allocation3 [shape = 's32[2]{0}', space=sflag, size = 0x8, scoped, tag = 'scoped memory for encoder_layer.1']
    #allocation4 [shape = 's32[2]{0}', space=sflag, size = 0x8, scoped, tag = 'scoped memory for encoder_layer.1']
    #allocation5 [shape = 'u8[1572864]{0}', space=vmem, size = 0x180000, scoped, tag = 'input window, operand 2, single buffered']
    #allocation6 [shape = 's32[1]{0}', space=sflag, size = 0x4, scoped, tag = 'scoped memory for encoder_layer.1']
    #allocation7 [shape = 'u8[6144]{0}', space=vmem, size = 0x1800, scoped, tag = 'input window, operand 3, single buffered']
    #allocation8 [shape = 'u8[524288]{0}', space=vmem, size = 0x80000, scoped, tag = 'input window, operand 4, single buffered']
    #allocation9 [shape = 's32[1]{0}', space=sflag, size = 0x4, scoped, tag = 'scoped memory for encoder_layer.1']
    #allocation10 [shape = 'u8[2048]{0}', space=vmem, size = 0x800, scoped, tag = 'input window, operand 5, single buffered']
    #allocation11 [shape = 'u8[2097152]{0}', space=vmem, size = 0x200000, scoped, tag = 'input window, operand 6, single buffered']
    #allocation12 [shape = 's32[1]{0}', space=sflag, size = 0x4, scoped, tag = 'scoped memory for encoder_layer.1']
    #allocation13 [shape = 'u8[8192]{0}', space=vmem, size = 0x2000, scoped, tag = 'input window, operand 7, single buffered']
    #allocation14 [shape = 'u8[2097152]{0}', space=vmem, size = 0x200000, scoped, tag = 'input window, operand 8, single buffered']
    #allocation15 [shape = 's32[1]{0}', space=sflag, size = 0x4, scoped, tag = 'scoped memory for encoder_layer.1']
    #allocation16 [shape = 'u8[2048]{0}', space=vmem, size = 0x800, scoped, tag = 'input window, operand 9, single buffered']
    #allocation17 [shape = 'u8[32768]{0}', space=vmem, size = 0x8000, scoped, tag = 'output window, operand 0']
    %15 = vsyncpa [#allocation3], 0
    %s16 = scalar_lea.sflag [#allocation3], 1
    %17 = vsyncpa %s16, 0
    %18 = vsyncpa [#allocation6], 0
    %19 = vsyncpa [#allocation9], 0
    %20 = vsyncpa [#allocation12], 0
    %21 = vsyncpa [#allocation15], 0
    %22 = vsyncpa [#allocation4], 0
    %s23 = scalar_lea.sflag [#allocation4], 1
    %24 = vsyncpa %s23, 0
    loop: start=0, step=1, limit=4
    $region2: #{encoder_layer.1} parent=1 // loop_pre_header
      _
    $region3: #{encoder_layer.1} parent=1 // loop_header
      %s26 = sphi 0, %s30
      %p27 = scmp.ge.s32.totalorder %s26, 4
      %s36 = sphi 0, %s38
      %s39 = sphi 0, %s36
      %s40 = sphi 0, %s39
      %s56 = sphi 0, %s40
      %s62 = sphi 0, %s64
      %s65 = sphi 0, %s62
      %s66 = sphi 0, %s65
      %s82 = sphi 0, %s66
      %s86 = sphi 0, %s86
      %s88 = sphi 0, %s86
      %s89 = sphi 0, %s88
      %s103 = sphi 0, %s89
      %s107 = sphi 0, %s107
      %s109 = sphi 0, %s107
      %s110 = sphi 0, %s109
      %s124 = sphi 0, %s110
      %s128 = sphi 0, %s128
      %s130 = sphi 0, %s128
      %s131 = sphi 0, %s130
      %s145 = sphi 0, %s131
      %s149 = sphi 0, %s149
      %s151 = sphi 0, %s149
      %s152 = sphi 0, %s151
      %s166 = sphi 0, %s152
      %s170 = sphi 0, %s170
      %s172 = sphi 0, %s170
      %s173 = sphi 0, %s172
      %s187 = sphi 0, %s173
      %s191 = sphi 0, %s191
      %s193 = sphi 0, %s191
      %s194 = sphi 0, %s193
      %s208 = sphi 0, %s194
      %s212 = sphi 0, %s212
      %s214 = sphi 0, %s212
      %s215 = sphi 0, %s214
      %s229 = sphi 0, %s215
      %s233 = sphi 0, %s233
      %s235 = sphi 0, %s233
      %s236 = sphi 0, %s235
      %s250 = sphi 0, %s236
      %s256 = sphi 0, %s258
      %s259 = sphi 0, %s256
      %s260 = sphi 0, %s259
      %s276 = sphi 0, %s260
    $region4: #{encoder_layer.1} parent=1 // loop_header_branch
      %29 = sbr.rel (%p27) target = $region8
    $region5: #{encoder_layer.1} parent=1 // loop_body
      %s31 = ssub.s32 %s26, 1
      %s32 = ssub.s32 %s26, 2
      %s33 = sadd.s32 %s26, 1
      %s34 = ssub.s32 %s26, %s33
      %p35 = scmp.eq.s32.totalorder %s34, 0
      %s37 = sadd.s32 %s36, 1
      %s38 = scalar_select %p35, %s36, %s37
      %p41 = pneg %p35
      %p42 = scmp.eq.s32.totalorder %s26, 1
      %p43 = por %p41, %p42
      %p44 = scmp.ne.s32.totalorder %s36, %s39
      %p45 = scmp.eq.s32.totalorder %s26, 0
      %p46 = por %p44, %p45
      %p47 = scmp.ne.s32.totalorder %s36, %s39
      %p48 = scmp.eq.s32.totalorder %s31, 1
      %p49 = por %p47, %p48
      %p50 = scmp.ne.s32.totalorder %s39, %s40
      %p51 = scmp.eq.s32.totalorder %s31, 0
      %p52 = por %p50, %p51
      %p53 = scmp.ne.s32.totalorder %s39, %s40
      %p54 = scmp.eq.s32.totalorder %s32, 1
      %p55 = por %p53, %p54
      %p57 = scmp.ne.s32.totalorder %s40, %s56
      %p58 = scmp.eq.s32.totalorder %s32, 0
      %p59 = por %p57, %p58
      %s60 = ssub.s32 %s26, %s33
      %p61 = scmp.eq.s32.totalorder %s60, 0
      %s63 = sadd.s32 %s62, 1
      %s64 = scalar_select %p61, %s62, %s63
      %p67 = pneg %p61
      %p68 = scmp.eq.s32.totalorder %s26, 1
      %p69 = por %p67, %p68
      %p70 = scmp.ne.s32.totalorder %s62, %s65
      %p71 = scmp.eq.s32.totalorder %s26, 0
      %p72 = por %p70, %p71
      %p73 = scmp.ne.s32.totalorder %s62, %s65
      %p74 = scmp.eq.s32.totalorder %s31, 1
      %p75 = por %p73, %p74
      %p76 = scmp.ne.s32.totalorder %s65, %s66
      %p77 = scmp.eq.s32.totalorder %s31, 0
      %p78 = por %p76, %p77
      %p79 = scmp.ne.s32.totalorder %s65, %s66
      %p80 = scmp.eq.s32.totalorder %s32, 1
      %p81 = por %p79, %p80
      %p83 = scmp.ne.s32.totalorder %s66, %s82
      %p84 = scmp.eq.s32.totalorder %s32, 0
      %p85 = por %p83, %p84
      %s87 = sadd.s32 %s86, 1
      %p90 = scmp.eq.s32.totalorder %s26, 1
      %p91 = scmp.ne.s32.totalorder %s86, %s88
      %p92 = scmp.eq.s32.totalorder %s26, 0
      %p93 = por %p91, %p92
      %p94 = scmp.ne.s32.totalorder %s86, %s88
      %p95 = scmp.eq.s32.totalorder %s31, 1
      %p96 = por %p94, %p95
      %p97 = scmp.ne.s32.totalorder %s88, %s89
      %p98 = scmp.eq.s32.totalorder %s31, 0
      %p99 = por %p97, %p98
      %p100 = scmp.ne.s32.totalorder %s88, %s89
      %p101 = scmp.eq.s32.totalorder %s32, 1
      %p102 = por %p100, %p101
      %p104 = scmp.ne.s32.totalorder %s89, %s103
      %p105 = scmp.eq.s32.totalorder %s32, 0
      %p106 = por %p104, %p105
      %s108 = sadd.s32 %s107, 1
      %p111 = scmp.eq.s32.totalorder %s26, 1
      %p112 = scmp.ne.s32.totalorder %s107, %s109
      %p113 = scmp.eq.s32.totalorder %s26, 0
      %p114 = por %p112, %p113
      %p115 = scmp.ne.s32.totalorder %s107, %s109
      %p116 = scmp.eq.s32.totalorder %s31, 1
      %p117 = por %p115, %p116
      %p118 = scmp.ne.s32.totalorder %s109, %s110
      %p119 = scmp.eq.s32.totalorder %s31, 0
      %p120 = por %p118, %p119
      %p121 = scmp.ne.s32.totalorder %s109, %s110
      %p122 = scmp.eq.s32.totalorder %s32, 1
      %p123 = por %p121, %p122
      %p125 = scmp.ne.s32.totalorder %s110, %s124
      %p126 = scmp.eq.s32.totalorder %s32, 0
      %p127 = por %p125, %p126
      %s129 = sadd.s32 %s128, 1
      %p132 = scmp.eq.s32.totalorder %s26, 1
      %p133 = scmp.ne.s32.totalorder %s128, %s130
      %p134 = scmp.eq.s32.totalorder %s26, 0
      %p135 = por %p133, %p134
      %p136 = scmp.ne.s32.totalorder %s128, %s130
      %p137 = scmp.eq.s32.totalorder %s31, 1
      %p138 = por %p136, %p137
      %p139 = scmp.ne.s32.totalorder %s130, %s131
      %p140 = scmp.eq.s32.totalorder %s31, 0
      %p141 = por %p139, %p140
      %p142 = scmp.ne.s32.totalorder %s130, %s131
      %p143 = scmp.eq.s32.totalorder %s32, 1
      %p144 = por %p142, %p143
      %p146 = scmp.ne.s32.totalorder %s131, %s145
      %p147 = scmp.eq.s32.totalorder %s32, 0
      %p148 = por %p146, %p147
      %s150 = sadd.s32 %s149, 1
      %p153 = scmp.eq.s32.totalorder %s26, 1
      %p154 = scmp.ne.s32.totalorder %s149, %s151
      %p155 = scmp.eq.s32.totalorder %s26, 0
      %p156 = por %p154, %p155
      %p157 = scmp.ne.s32.totalorder %s149, %s151
      %p158 = scmp.eq.s32.totalorder %s31, 1
      %p159 = por %p157, %p158
      %p160 = scmp.ne.s32.totalorder %s151, %s152
      %p161 = scmp.eq.s32.totalorder %s31, 0
      %p162 = por %p160, %p161
      %p163 = scmp.ne.s32.totalorder %s151, %s152
      %p164 = scmp.eq.s32.totalorder %s32, 1
      %p165 = por %p163, %p164
      %p167 = scmp.ne.s32.totalorder %s152, %s166
      %p168 = scmp.eq.s32.totalorder %s32, 0
      %p169 = por %p167, %p168
      %s171 = sadd.s32 %s170, 1
      %p174 = scmp.eq.s32.totalorder %s26, 1
      %p175 = scmp.ne.s32.totalorder %s170, %s172
      %p176 = scmp.eq.s32.totalorder %s26, 0
      %p177 = por %p175, %p176
      %p178 = scmp.ne.s32.totalorder %s170, %s172
      %p179 = scmp.eq.s32.totalorder %s31, 1
      %p180 = por %p178, %p179
      %p181 = scmp.ne.s32.totalorder %s172, %s173
      %p182 = scmp.eq.s32.totalorder %s31, 0
      %p183 = por %p181, %p182
      %p184 = scmp.ne.s32.totalorder %s172, %s173
      %p185 = scmp.eq.s32.totalorder %s32, 1
      %p186 = por %p184, %p185
      %p188 = scmp.ne.s32.totalorder %s173, %s187
      %p189 = scmp.eq.s32.totalorder %s32, 0
      %p190 = por %p188, %p189
      %s192 = sadd.s32 %s191, 1
      %p195 = scmp.eq.s32.totalorder %s26, 1
      %p196 = scmp.ne.s32.totalorder %s191, %s193
      %p197 = scmp.eq.s32.totalorder %s26, 0
      %p198 = por %p196, %p197
      %p199 = scmp.ne.s32.totalorder %s191, %s193
      %p200 = scmp.eq.s32.totalorder %s31, 1
      %p201 = por %p199, %p200
      %p202 = scmp.ne.s32.totalorder %s193, %s194
      %p203 = scmp.eq.s32.totalorder %s31, 0
      %p204 = por %p202, %p203
      %p205 = scmp.ne.s32.totalorder %s193, %s194
      %p206 = scmp.eq.s32.totalorder %s32, 1
      %p207 = por %p205, %p206
      %p209 = scmp.ne.s32.totalorder %s194, %s208
      %p210 = scmp.eq.s32.totalorder %s32, 0
      %p211 = por %p209, %p210
      %s213 = sadd.s32 %s212, 1
      %p216 = scmp.eq.s32.totalorder %s26, 1
      %p217 = scmp.ne.s32.totalorder %s212, %s214
      %p218 = scmp.eq.s32.totalorder %s26, 0
      %p219 = por %p217, %p218
      %p220 = scmp.ne.s32.totalorder %s212, %s214
      %p221 = scmp.eq.s32.totalorder %s31, 1
      %p222 = por %p220, %p221
      %p223 = scmp.ne.s32.totalorder %s214, %s215
      %p224 = scmp.eq.s32.totalorder %s31, 0
      %p225 = por %p223, %p224
      %p226 = scmp.ne.s32.totalorder %s214, %s215
      %p227 = scmp.eq.s32.totalorder %s32, 1
      %p228 = por %p226, %p227
      %p230 = scmp.ne.s32.totalorder %s215, %s229
      %p231 = scmp.eq.s32.totalorder %s32, 0
      %p232 = por %p230, %p231
      %s234 = sadd.s32 %s233, 1
      %p237 = scmp.eq.s32.totalorder %s26, 1
      %p238 = scmp.ne.s32.totalorder %s233, %s235
      %p239 = scmp.eq.s32.totalorder %s26, 0
      %p240 = por %p238, %p239
      %p241 = scmp.ne.s32.totalorder %s233, %s235
      %p242 = scmp.eq.s32.totalorder %s31, 1
      %p243 = por %p241, %p242
      %p244 = scmp.ne.s32.totalorder %s235, %s236
      %p245 = scmp.eq.s32.totalorder %s31, 0
      %p246 = por %p244, %p245
      %p247 = scmp.ne.s32.totalorder %s235, %s236
      %p248 = scmp.eq.s32.totalorder %s32, 1
      %p249 = por %p247, %p248
      %p251 = scmp.ne.s32.totalorder %s236, %s250
      %p252 = scmp.eq.s32.totalorder %s32, 0
      %p253 = por %p251, %p252
      %s254 = ssub.s32 %s26, %s33
      %p255 = scmp.eq.s32.totalorder %s254, 0
      %s257 = sadd.s32 %s256, 1
      %s258 = scalar_select %p255, %s256, %s257
      %p261 = pneg %p255
      %p262 = scmp.eq.s32.totalorder %s26, 1
      %p263 = por %p261, %p262
      %p264 = scmp.ne.s32.totalorder %s256, %s259
      %p265 = scmp.eq.s32.totalorder %s26, 0
      %p266 = por %p264, %p265
      %p267 = scmp.ne.s32.totalorder %s256, %s259
      %p268 = scmp.eq.s32.totalorder %s31, 1
      %p269 = por %p267, %p268
      %p270 = scmp.ne.s32.totalorder %s259, %s260
      %p271 = scmp.eq.s32.totalorder %s31, 0
      %p272 = por %p270, %p271
      %p273 = scmp.ne.s32.totalorder %s259, %s260
      %p274 = scmp.eq.s32.totalorder %s32, 1
      %p275 = por %p273, %p274
      %p277 = scmp.ne.s32.totalorder %s260, %s276
      %p278 = scmp.eq.s32.totalorder %s32, 0
      %p279 = por %p277, %p278
      %p280 = scmp.le.s32.totalorder 1, %s26
      %p281 = scmp.lt.s32.totalorder %s26, 3
      %p282 = pnand %p280, %p281
      %p283 = pneg %p282
      // Predicated region
      $region9: #{encoder_layer.1} parent=5 // pred_check
        _
      $region10: #{encoder_layer.1} parent=5 // pred_check_branch
        %285 = sbr.rel (%p282) target = $region12
      $region11: #{encoder_layer.1} parent=5 // pred_region
        %s286 = ssub.s32 %s26, 1
        // Predicated region
        $region13: #{encoder_layer.1} parent=11 // pred_check
          %p287 = pneg %p99
        $region14: #{encoder_layer.1} parent=11 // pred_check_branch
          %289 = sbr.rel (%p287) target = $region16
        $region15: #{encoder_layer.1} parent=11 // pred_region
          %s291 = ssub.s32 49152, 49152
          %292 = vsyncadd [#allocation6], %s291
          %s293 = sshll.u32 [#allocation5], 4
          %s294 = int_to_ptr.vmem [resolvable:$true] %s293
          %299 = dma.hbm_to_vmem [thread:$0]  %s2, 49152, %s294, [#allocation6], 768, 768, 48
        $region16: #{encoder_layer.1} parent=11 // pred_fallthru
          _
        // Predicated region
        $region17: #{encoder_layer.1} parent=11 // pred_check
          %p300 = pneg %p120
        $region18: #{encoder_layer.1} parent=11 // pred_check_branch
          %302 = sbr.rel (%p300) target = $region20
        $region19: #{encoder_layer.1} parent=11 // pred_region
          %s304 = ssub.s32 192, 192
          %305 = vsyncadd [#allocation6], %s304
          %s307 = sshll.u32 [#allocation7], 4
          %s308 = int_to_ptr.vmem [resolvable:$true] %s307
          %310 = dma.hbm_to_vmem [thread:$0]  %s3, 192, %s308, [#allocation6]
        $region20: #{encoder_layer.1} parent=11 // pred_fallthru
          _
        // Predicated region
        $region21: #{encoder_layer.1} parent=11 // pred_check
          %p311 = pneg %p141
        $region22: #{encoder_layer.1} parent=11 // pred_check_branch
          %313 = sbr.rel (%p311) target = $region24
        $region23: #{encoder_layer.1} parent=11 // pred_region
          %s315 = ssub.s32 16384, 16384
          %316 = vsyncadd [#allocation9], %s315
          %s317 = sshll.u32 [#allocation8], 4
          %s318 = int_to_ptr.vmem [resolvable:$true] %s317
          %323 = dma.hbm_to_vmem [thread:$0]  %s4, 16384, %s318, [#allocation9], 256, 256, 16
        $region24: #{encoder_layer.1} parent=11 // pred_fallthru
          _
        // Predicated region
        $region25: #{encoder_layer.1} parent=11 // pred_check
          %p324 = pneg %p162
        $region26: #{encoder_layer.1} parent=11 // pred_check_branch
          %326 = sbr.rel (%p324) target = $region28
        $region27: #{encoder_layer.1} parent=11 // pred_region
          %s328 = ssub.s32 64, 64
          %329 = vsyncadd [#allocation9], %s328
          %s331 = sshll.u32 [#allocation10], 4
          %s332 = int_to_ptr.vmem [resolvable:$true] %s331
          %334 = dma.hbm_to_vmem [thread:$0]  %s5, 64, %s332, [#allocation9]
        $region28: #{encoder_layer.1} parent=11 // pred_fallthru
          _
        // Predicated region
        $region29: #{encoder_layer.1} parent=11 // pred_check
          %p335 = pneg %p183
        $region30: #{encoder_layer.1} parent=11 // pred_check_branch
          %337 = sbr.rel (%p335) target = $region32
        $region31: #{encoder_layer.1} parent=11 // pred_region
          %s339 = ssub.s32 65536, 65536
          %340 = vsyncadd [#allocation12], %s339
          %s341 = sshll.u32 [#allocation11], 4
          %s342 = int_to_ptr.vmem [resolvable:$true] %s341
          %347 = dma.hbm_to_vmem [thread:$0]  %s6, 65536, %s342, [#allocation12], 1024, 1024, 64
        $region32: #{encoder_layer.1} parent=11 // pred_fallthru
          _
        // Predicated region
        $region33: #{encoder_layer.1} parent=11 // pred_check
          %p348 = pneg %p204
        $region34: #{encoder_layer.1} parent=11 // pred_check_branch
          %350 = sbr.rel (%p348) target = $region36
        $region35: #{encoder_layer.1} parent=11 // pred_region
          %s352 = ssub.s32 256, 256
          %353 = vsyncadd [#allocation12], %s352
          %s355 = sshll.u32 [#allocation13], 4
          %s356 = int_to_ptr.vmem [resolvable:$true] %s355
          %358 = dma.hbm_to_vmem [thread:$0]  %s7, 256, %s356, [#allocation12]
        $region36: #{encoder_layer.1} parent=11 // pred_fallthru
          _
        // Predicated region
        $region37: #{encoder_layer.1} parent=11 // pred_check
          %p359 = pneg %p225
        $region38: #{encoder_layer.1} parent=11 // pred_check_branch
          %361 = sbr.rel (%p359) target = $region40
        $region39: #{encoder_layer.1} parent=11 // pred_region
          %s363 = ssub.s32 65536, 65536
          %364 = vsyncadd [#allocation15], %s363
          %s365 = sshll.u32 [#allocation14], 4
          %s366 = int_to_ptr.vmem [resolvable:$true] %s365
          %371 = dma.hbm_to_vmem [thread:$0]  %s8, 65536, %s366, [#allocation15], 256, 256, 16
        $region40: #{encoder_layer.1} parent=11 // pred_fallthru
          _
        // Predicated region
        $region41: #{encoder_layer.1} parent=11 // pred_check
          %p372 = pneg %p246
        $region42: #{encoder_layer.1} parent=11 // pred_check_branch
          %374 = sbr.rel (%p372) target = $region44
        $region43: #{encoder_layer.1} parent=11 // pred_region
          %s376 = ssub.s32 64, 64
          %377 = vsyncadd [#allocation15], %s376
          %s379 = sshll.u32 [#allocation16], 4
          %s380 = int_to_ptr.vmem [resolvable:$true] %s379
          %382 = dma.hbm_to_vmem [thread:$0]  %s9, 64, %s380, [#allocation15]
        $region44: #{encoder_layer.1} parent=11 // pred_fallthru
          _
      $region12: #{encoder_layer.1} parent=5 // pred_fallthru
        _
      %p383 = scmp.lt.s32.totalorder %s26, 2
      // Predicated region
      $region45: #{encoder_layer.1} parent=5 // pred_check
        %p384 = pneg %p383
      $region46: #{encoder_layer.1} parent=5 // pred_check_branch
        %386 = sbr.rel (%p384) target = $region48
      $region47: #{encoder_layer.1} parent=5 // pred_region
        // Predicated region
        $region49: #{encoder_layer.1} parent=47 // pred_check
          %p387 = pneg %p46
        $region50: #{encoder_layer.1} parent=47 // pred_check_branch
          %389 = sbr.rel (%p387) target = $region52
        $region51: #{encoder_layer.1} parent=47 // pred_region
          %s390 = sand.u32 %s36, 1
          %s391 = scalar_lea.sflag [#allocation3], %s390
          %s392 = sand.u32 %s36, 1
          %s393 = smul.addr %s392, 32
          %s394 = scalar_lea.vmem [#allocation2], %s393
          %s396 = ssub.s32 512, 512
          %397 = vsyncadd %s391, %s396
          %s398 = smul.addr %s26, 4
          %s399 = smul.addr %s398, 128
          %s400 = scalar_lea.hbm %s0, %s399
          %s402 = sshll.u32 %s394, 4
          %s403 = int_to_ptr.vmem [resolvable:$true] %s402
          %405 = dma.hbm_to_vmem [thread:$0]  %s400, 512, %s403, %s391
        $region52: #{encoder_layer.1} parent=47 // pred_fallthru
          _
        // Predicated region
        $region53: #{encoder_layer.1} parent=47 // pred_check
          %p406 = pneg %p72
        $region54: #{encoder_layer.1} parent=47 // pred_check_branch
          %408 = sbr.rel (%p406) target = $region56
        $region55: #{encoder_layer.1} parent=47 // pred_region
          %p409 = scmp.lt.s32.totalorder %s26, 1
          %s410 = scalar_select %p409, %s26, 1
          %s411 = smul.addr %s410, 4
          %s412 = scalar_lea.vmem %s1, %s411
        $region56: #{encoder_layer.1} parent=47 // pred_fallthru
          _
      $region48: #{encoder_layer.1} parent=5 // pred_fallthru
        _
      %p413 = scmp.le.s32.totalorder 1, %s26
      %p414 = scmp.lt.s32.totalorder %s26, 3
      %p415 = pnand %p413, %p414
      %p416 = pneg %p415
      // Predicated region
      $region57: #{encoder_layer.1} parent=5 // pred_check
        _
      $region58: #{encoder_layer.1} parent=5 // pred_check_branch
        %418 = sbr.rel (%p415) target = $region60
      $region59: #{encoder_layer.1} parent=5 // pred_region
        %s419 = ssub.s32 %s26, 1
        %s420 = sand.u32 %s39, 1
        %s421 = scalar_lea.sflag [#allocation3], %s420
        %s422 = sand.u32 %s39, 1
        %s423 = smul.addr %s422, 32
        %s424 = scalar_lea.vmem [#allocation2], %s423
        // Predicated region
        $region61: #{encoder_layer.1} parent=59 // pred_check
          %p425 = pneg %p52
        $region62: #{encoder_layer.1} parent=59 // pred_check_branch
          %427 = sbr.rel (%p425) target = $region64
        $region63: #{encoder_layer.1} parent=59 // pred_region
          %428 = dma.done %s421, 512
        $region64: #{encoder_layer.1} parent=59 // pred_fallthru
          _
        // Predicated region
        $region65: #{encoder_layer.1} parent=59 // pred_check
          %p429 = pneg %p99
        $region66: #{encoder_layer.1} parent=59 // pred_check_branch
          %431 = sbr.rel (%p429) target = $region68
        $region67: #{encoder_layer.1} parent=59 // pred_region
          %432 = dma.done [#allocation6], 49152
        $region68: #{encoder_layer.1} parent=59 // pred_fallthru
          _
        // Predicated region
        $region69: #{encoder_layer.1} parent=59 // pred_check
          %p433 = pneg %p120
        $region70: #{encoder_layer.1} parent=59 // pred_check_branch
          %435 = sbr.rel (%p433) target = $region72
        $region71: #{encoder_layer.1} parent=59 // pred_region
          %436 = dma.done [#allocation6], 192
        $region72: #{encoder_layer.1} parent=59 // pred_fallthru
          _
        // Predicated region
        $region73: #{encoder_layer.1} parent=59 // pred_check
          %p437 = pneg %p141
        $region74: #{encoder_layer.1} parent=59 // pred_check_branch
          %439 = sbr.rel (%p437) target = $region76
        $region75: #{encoder_layer.1} parent=59 // pred_region
          %440 = dma.done [#allocation9], 16384
        $region76: #{encoder_layer.1} parent=59 // pred_fallthru
          _
        // Predicated region
        $region77: #{encoder_layer.1} parent=59 // pred_check
          %p441 = pneg %p162
        $region78: #{encoder_layer.1} parent=59 // pred_check_branch
          %443 = sbr.rel (%p441) target = $region80
        $region79: #{encoder_layer.1} parent=59 // pred_region
          %444 = dma.done [#allocation9], 64
        $region80: #{encoder_layer.1} parent=59 // pred_fallthru
          _
        // Predicated region
        $region81: #{encoder_layer.1} parent=59 // pred_check
          %p445 = pneg %p183
        $region82: #{encoder_layer.1} parent=59 // pred_check_branch
          %447 = sbr.rel (%p445) target = $region84
        $region83: #{encoder_layer.1} parent=59 // pred_region
          %448 = dma.done [#allocation12], 65536
        $region84: #{encoder_layer.1} parent=59 // pred_fallthru
          _
        // Predicated region
        $region85: #{encoder_layer.1} parent=59 // pred_check
          %p449 = pneg %p204
        $region86: #{encoder_layer.1} parent=59 // pred_check_branch
          %451 = sbr.rel (%p449) target = $region88
        $region87: #{encoder_layer.1} parent=59 // pred_region
          %452 = dma.done [#allocation12], 256
        $region88: #{encoder_layer.1} parent=59 // pred_fallthru
          _
        // Predicated region
        $region89: #{encoder_layer.1} parent=59 // pred_check
          %p453 = pneg %p225
        $region90: #{encoder_layer.1} parent=59 // pred_check_branch
          %455 = sbr.rel (%p453) target = $region92
        $region91: #{encoder_layer.1} parent=59 // pred_region
          %456 = dma.done [#allocation15], 65536
        $region92: #{encoder_layer.1} parent=59 // pred_fallthru
          _
        // Predicated region
        $region93: #{encoder_layer.1} parent=59 // pred_check
          %p457 = pneg %p246
        $region94: #{encoder_layer.1} parent=59 // pred_check_branch
          %459 = sbr.rel (%p457) target = $region96
        $region95: #{encoder_layer.1} parent=59 // pred_region
          %460 = dma.done [#allocation15], 64
        $region96: #{encoder_layer.1} parent=59 // pred_fallthru
          _
        %s461 = sand.u32 %s39, 1
        %s462 = scalar_lea.sflag [#allocation3], %s461
        %s463 = sand.u32 %s39, 1
        %s464 = smul.addr %s463, 32
        %s465 = scalar_lea.vmem [#allocation2], %s464
        %p466 = pneg %p52
        %p467 = pneg %p49
        %p468 = scmp.lt.s32.totalorder %s31, 1
        %s469 = scalar_select %p468, %s31, 1
        %s470 = smul.addr %s469, 4
        %s471 = scalar_lea.vmem %s1, %s470
        %p472 = pneg %p78
        %p473 = pneg %p75
        %p474 = pneg %p99
        %p475 = pneg %p96
        %p476 = pneg %p120
        %p477 = pneg %p117
        %p478 = pneg %p141
        %p479 = pneg %p138
        %p480 = pneg %p162
        %p481 = pneg %p159
        %p482 = pneg %p183
        %p483 = pneg %p180
        %p484 = pneg %p204
        %p485 = pneg %p201
        %p486 = pneg %p225
        %p487 = pneg %p222
        %p488 = pneg %p246
        %p489 = pneg %p243
        %p490 = pneg %p272
        %p491 = pneg %p269
        %s492 = sand.u32 %s259, 1
        %s493 = scalar_lea.sflag [#allocation4], %s492
        %s494 = sand.u32 %s259, 1
        %s495 = smul.addr %s494, 32
        %s496 = scalar_lea.vmem [#allocation17], %s495
        %p497 = scmp.lt.s32.totalorder %s31, 1
        %s498 = scalar_select %p497, %s31, 1
        %s499 = smul.addr %s498, 4
        %s500 = scalar_lea.vmem %s1, %s499
        %v502 = vld [vmem:[%s424] sm:$0xff]
        %v503 = vld [vmem:[%s424 + $0x8] sm:$0xff]
        %v504 = vld [vmem:[%s424 + $0x10] sm:$0xff]
        %v505 = vld [vmem:[%s424 + $0x18] sm:$0xff]
        %v506 = vld [vmem:[%s500] sm:$0xf]
        %v507 = vpack.c.bf16 %v502, %v502
        %v508 = vpack.c.bf16 %v503, %v503
        %v509 = vpack.c.bf16 %v504, %v504
        %v510 = vpack.c.bf16 %v505, %v505
        %v511 = vld [vmem:[#allocation5] sm:$0xff]
        %v512 = vld [vmem:[#allocation5 + $0x8] sm:$0xff]
        %v513 = vld [vmem:[#allocation5 + $0x10] sm:$0xff]
        %v514 = vld [vmem:[#allocation5 + $0x18] sm:$0xff]
        %v515 = vld [vmem:[#allocation5 + $0x20] sm:$0xff]
        %v516 = vld [vmem:[#allocation5 + $0x28] sm:$0xff]
        %v517 = vld [vmem:[#allocation5 + $0x30] sm:$0xff]
        %v518 = vld [vmem:[#allocation5 + $0x38] sm:$0xff]
        %v519 = vld [vmem:[#allocation5 + $0x40] sm:$0xff]
        %v520 = vld [vmem:[#allocation5 + $0x48] sm:$0xff]
        %v521 = vld [vmem:[#allocation5 + $0x50] sm:$0xff]
        %v522 = vld [vmem:[#allocation5 + $0x58] sm:$0xff]
        %v523 = vld [vmem:[#allocation5 + $0x60] sm:$0xff]
        %v524 = vld [vmem:[#allocation5 + $0x68] sm:$0xff]
        %v525 = vld [vmem:[#allocation5 + $0x70] sm:$0xff]
        %v526 = vld [vmem:[#allocation5 + $0x78] sm:$0xff]
        %v527 = vld [vmem:[#allocation5 + $0x80] sm:$0xff]
        %v528 = vld [vmem:[#allocation5 + $0x88] sm:$0xff]
        %v529 = vld [vmem:[#allocation5 + $0x90] sm:$0xff]
        %v530 = vld [vmem:[#allocation5 + $0x98] sm:$0xff]
        %v531 = vld [vmem:[#allocation5 + $0xa0] sm:$0xff]
        %v532 = vld [vmem:[#allocation5 + $0xa8] sm:$0xff]
        %v533 = vld [vmem:[#allocation5 + $0xb0] sm:$0xff]
        %v534 = vld [vmem:[#allocation5 + $0xb8] sm:$0xff]
        %v535 = vld [vmem:[#allocation5 + $0xc0] sm:$0xff]
        %v536 = vld [vmem:[#allocation5 + $0xc8] sm:$0xff]
        %v537 = vld [vmem:[#allocation5 + $0xd0] sm:$0xff]
        %v538 = vld [vmem:[#allocation5 + $0xd8] sm:$0xff]
        %v539 = vld [vmem:[#allocation5 + $0xe0] sm:$0xff]
        %v540 = vld [vmem:[#allocation5 + $0xe8] sm:$0xff]
        %v541 = vld [vmem:[#allocation5 + $0xf0] sm:$0xff]
        %v542 = vld [vmem:[#allocation5 + $0xf8] sm:$0xff]
        %v543 = vld [vmem:[#allocation5 + $0x100] sm:$0xff]
        %v544 = vld [vmem:[#allocation5 + $0x108] sm:$0xff]
        %v545 = vld [vmem:[#allocation5 + $0x110] sm:$0xff]
        %v546 = vld [vmem:[#allocation5 + $0x118] sm:$0xff]
        %v547 = vld [vmem:[#allocation5 + $0x120] sm:$0xff]
        %v548 = vld [vmem:[#allocation5 + $0x128] sm:$0xff]
        %v549 = vld [vmem:[#allocation5 + $0x130] sm:$0xff]
        %v550 = vld [vmem:[#allocation5 + $0x138] sm:$0xff]
        %v551 = vld [vmem:[#allocation5 + $0x140] sm:$0xff]
        %v552 = vld [vmem:[#allocation5 + $0x148] sm:$0xff]
        %v553 = vld [vmem:[#allocation5 + $0x150] sm:$0xff]
        %v554 = vld [vmem:[#allocation5 + $0x158] sm:$0xff]
        %v555 = vld [vmem:[#allocation5 + $0x160] sm:$0xff]
        %v556 = vld [vmem:[#allocation5 + $0x168] sm:$0xff]
        %v557 = vld [vmem:[#allocation5 + $0x170] sm:$0xff]
        %v558 = vld [vmem:[#allocation5 + $0x178] sm:$0xff]
        %v559 = vld [vmem:[#allocation5 + $0x180] sm:$0xff]
        %v560 = vld [vmem:[#allocation5 + $0x188] sm:$0xff]
        %v561 = vld [vmem:[#allocation5 + $0x190] sm:$0xff]
        %v562 = vld [vmem:[#allocation5 + $0x198] sm:$0xff]
        %v563 = vld [vmem:[#allocation5 + $0x1a0] sm:$0xff]
        %v564 = vld [vmem:[#allocation5 + $0x1a8] sm:$0xff]
        %v565 = vld [vmem:[#allocation5 + $0x1b0] sm:$0xff]
        %v566 = vld [vmem:[#allocation5 + $0x1b8] sm:$0xff]
        %v567 = vld [vmem:[#allocation5 + $0x1c0] sm:$0xff]
        %v568 = vld [vmem:[#allocation5 + $0x1c8] sm:$0xff]
        %v569 = vld [vmem:[#allocation5 + $0x1d0] sm:$0xff]
        %v570 = vld [vmem:[#allocation5 + $0x1d8] sm:$0xff]
        %v571 = vld [vmem:[#allocation5 + $0x1e0] sm:$0xff]
        %v572 = vld [vmem:[#allocation5 + $0x1e8] sm:$0xff]
        %v573 = vld [vmem:[#allocation5 + $0x1f0] sm:$0xff]
        %v574 = vld [vmem:[#allocation5 + $0x1f8] sm:$0xff]
        %v575 = vld [vmem:[#allocation5 + $0x200] sm:$0xff]
        %v576 = vld [vmem:[#allocation5 + $0x208] sm:$0xff]
        %v577 = vld [vmem:[#allocation5 + $0x210] sm:$0xff]
        %v578 = vld [vmem:[#allocation5 + $0x218] sm:$0xff]
        %v579 = vld [vmem:[#allocation5 + $0x220] sm:$0xff]
        %v580 = vld [vmem:[#allocation5 + $0x228] sm:$0xff]
        %v581 = vld [vmem:[#allocation5 + $0x230] sm:$0xff]
        %v582 = vld [vmem:[#allocation5 + $0x238] sm:$0xff]
        %v583 = vld [vmem:[#allocation5 + $0x240] sm:$0xff]
        %v584 = vld [vmem:[#allocation5 + $0x248] sm:$0xff]
        %v585 = vld [vmem:[#allocation5 + $0x250] sm:$0xff]
        %v586 = vld [vmem:[#allocation5 + $0x258] sm:$0xff]
        %v587 = vld [vmem:[#allocation5 + $0x260] sm:$0xff]
        %v588 = vld [vmem:[#allocation5 + $0x268] sm:$0xff]
        %v589 = vld [vmem:[#allocation5 + $0x270] sm:$0xff]
        %v590 = vld [vmem:[#allocation5 + $0x278] sm:$0xff]
        %v591 = vld [vmem:[#allocation5 + $0x280] sm:$0xff]
        %v592 = vld [vmem:[#allocation5 + $0x288] sm:$0xff]
        %v593 = vld [vmem:[#allocation5 + $0x290] sm:$0xff]
        %v594 = vld [vmem:[#allocation5 + $0x298] sm:$0xff]
        %v595 = vld [vmem:[#allocation5 + $0x2a0] sm:$0xff]
        %v596 = vld [vmem:[#allocation5 + $0x2a8] sm:$0xff]
        %v597 = vld [vmem:[#allocation5 + $0x2b0] sm:$0xff]
        %v598 = vld [vmem:[#allocation5 + $0x2b8] sm:$0xff]
        %v599 = vld [vmem:[#allocation5 + $0x2c0] sm:$0xff]
        %v600 = vld [vmem:[#allocation5 + $0x2c8] sm:$0xff]
        %v601 = vld [vmem:[#allocation5 + $0x2d0] sm:$0xff]
        %v602 = vld [vmem:[#allocation5 + $0x2d8] sm:$0xff]
        %v603 = vld [vmem:[#allocation5 + $0x2e0] sm:$0xff]
        %v604 = vld [vmem:[#allocation5 + $0x2e8] sm:$0xff]
        %v605 = vld [vmem:[#allocation5 + $0x2f0] sm:$0xff]
        %v606 = vld [vmem:[#allocation5 + $0x2f8] sm:$0xff]
        %v607 = vld [vmem:[#allocation5 + $0x300] sm:$0xff]
        %v608 = vld [vmem:[#allocation5 + $0x308] sm:$0xff]
        %v609 = vld [vmem:[#allocation5 + $0x310] sm:$0xff]
        %v610 = vld [vmem:[#allocation5 + $0x318] sm:$0xff]
        %v611 = vld [vmem:[#allocation5 + $0x320] sm:$0xff]
        %v612 = vld [vmem:[#allocation5 + $0x328] sm:$0xff]
        %v613 = vld [vmem:[#allocation5 + $0x330] sm:$0xff]
        %v614 = vld [vmem:[#allocation5 + $0x338] sm:$0xff]
        %v615 = vld [vmem:[#allocation5 + $0x340] sm:$0xff]
        %v616 = vld [vmem:[#allocation5 + $0x348] sm:$0xff]
        %v617 = vld [vmem:[#allocation5 + $0x350] sm:$0xff]
        %v618 = vld [vmem:[#allocation5 + $0x358] sm:$0xff]
        %v619 = vld [vmem:[#allocation5 + $0x360] sm:$0xff]
        %v620 = vld [vmem:[#allocation5 + $0x368] sm:$0xff]
        %v621 = vld [vmem:[#allocation5 + $0x370] sm:$0xff]
        %v622 = vld [vmem:[#allocation5 + $0x378] sm:$0xff]
        %v623 = vld [vmem:[#allocation5 + $0x380] sm:$0xff]
        %v624 = vld [vmem:[#allocation5 + $0x388] sm:$0xff]
        %v625 = vld [vmem:[#allocation5 + $0x390] sm:$0xff]
        %v626 = vld [vmem:[#allocation5 + $0x398] sm:$0xff]
        %v627 = vld [vmem:[#allocation5 + $0x3a0] sm:$0xff]
        %v628 = vld [vmem:[#allocation5 + $0x3a8] sm:$0xff]
        %v629 = vld [vmem:[#allocation5 + $0x3b0] sm:$0xff]
        %v630 = vld [vmem:[#allocation5 + $0x3b8] sm:$0xff]
        %v631 = vld [vmem:[#allocation5 + $0x3c0] sm:$0xff]
        %v632 = vld [vmem:[#allocation5 + $0x3c8] sm:$0xff]
        %v633 = vld [vmem:[#allocation5 + $0x3d0] sm:$0xff]
        %v634 = vld [vmem:[#allocation5 + $0x3d8] sm:$0xff]
        %v635 = vld [vmem:[#allocation5 + $0x3e0] sm:$0xff]
        %v636 = vld [vmem:[#allocation5 + $0x3e8] sm:$0xff]
        %v637 = vld [vmem:[#allocation5 + $0x3f0] sm:$0xff]
        %v638 = vld [vmem:[#allocation5 + $0x3f8] sm:$0xff]
        %v639 = vld [vmem:[#allocation5 + $0x400] sm:$0xff]
        %v640 = vld [vmem:[#allocation5 + $0x408] sm:$0xff]
        %v641 = vld [vmem:[#allocation5 + $0x410] sm:$0xff]
        %v642 = vld [vmem:[#allocation5 + $0x418] sm:$0xff]
        %v643 = vld [vmem:[#allocation5 + $0x420] sm:$0xff]
        %v644 = vld [vmem:[#allocation5 + $0x428] sm:$0xff]
        %v645 = vld [vmem:[#allocation5 + $0x430] sm:$0xff]
        %v646 = vld [vmem:[#allocation5 + $0x438] sm:$0xff]
        %v647 = vld [vmem:[#allocation5 + $0x440] sm:$0xff]
        %v648 = vld [vmem:[#allocation5 + $0x448] sm:$0xff]
        %v649 = vld [vmem:[#allocation5 + $0x450] sm:$0xff]
        %v650 = vld [vmem:[#allocation5 + $0x458] sm:$0xff]
        %v651 = vld [vmem:[#allocation5 + $0x460] sm:$0xff]
        %v652 = vld [vmem:[#allocation5 + $0x468] sm:$0xff]
        %v653 = vld [vmem:[#allocation5 + $0x470] sm:$0xff]
        %v654 = vld [vmem:[#allocation5 + $0x478] sm:$0xff]
        %v655 = vld [vmem:[#allocation5 + $0x480] sm:$0xff]
        %v656 = vld [vmem:[#allocation5 + $0x488] sm:$0xff]
        %v657 = vld [vmem:[#allocation5 + $0x490] sm:$0xff]
        %v658 = vld [vmem:[#allocation5 + $0x498] sm:$0xff]
        %v659 = vld [vmem:[#allocation5 + $0x4a0] sm:$0xff]
        %v660 = vld [vmem:[#allocation5 + $0x4a8] sm:$0xff]
        %v661 = vld [vmem:[#allocation5 + $0x4b0] sm:$0xff]
        %v662 = vld [vmem:[#allocation5 + $0x4b8] sm:$0xff]
        %v663 = vld [vmem:[#allocation5 + $0x4c0] sm:$0xff]
        %v664 = vld [vmem:[#allocation5 + $0x4c8] sm:$0xff]
        %v665 = vld [vmem:[#allocation5 + $0x4d0] sm:$0xff]
        %v666 = vld [vmem:[#allocation5 + $0x4d8] sm:$0xff]
        %v667 = vld [vmem:[#allocation5 + $0x4e0] sm:$0xff]
        %v668 = vld [vmem:[#allocation5 + $0x4e8] sm:$0xff]
        %v669 = vld [vmem:[#allocation5 + $0x4f0] sm:$0xff]
        %v670 = vld [vmem:[#allocation5 + $0x4f8] sm:$0xff]
        %v671 = vld [vmem:[#allocation5 + $0x500] sm:$0xff]
        %v672 = vld [vmem:[#allocation5 + $0x508] sm:$0xff]
        %v673 = vld [vmem:[#allocation5 + $0x510] sm:$0xff]
        %v674 = vld [vmem:[#allocation5 + $0x518] sm:$0xff]
        %v675 = vld [vmem:[#allocation5 + $0x520] sm:$0xff]
        %v676 = vld [vmem:[#allocation5 + $0x528] sm:$0xff]
        %v677 = vld [vmem:[#allocation5 + $0x530] sm:$0xff]
        %v678 = vld [vmem:[#allocation5 + $0x538] sm:$0xff]
        %v679 = vld [vmem:[#allocation5 + $0x540] sm:$0xff]
        %v680 = vld [vmem:[#allocation5 + $0x548] sm:$0xff]
        %v681 = vld [vmem:[#allocation5 + $0x550] sm:$0xff]
        %v682 = vld [vmem:[#allocation5 + $0x558] sm:$0xff]
        %v683 = vld [vmem:[#allocation5 + $0x560] sm:$0xff]
        %v684 = vld [vmem:[#allocation5 + $0x568] sm:$0xff]
        %v685 = vld [vmem:[#allocation5 + $0x570] sm:$0xff]
        %v686 = vld [vmem:[#allocation5 + $0x578] sm:$0xff]
        %v687 = vld [vmem:[#allocation5 + $0x580] sm:$0xff]
        %v688 = vld [vmem:[#allocation5 + $0x588] sm:$0xff]
        %v689 = vld [vmem:[#allocation5 + $0x590] sm:$0xff]
        %v690 = vld [vmem:[#allocation5 + $0x598] sm:$0xff]
        %v691 = vld [vmem:[#allocation5 + $0x5a0] sm:$0xff]
        %v692 = vld [vmem:[#allocation5 + $0x5a8] sm:$0xff]
        %v693 = vld [vmem:[#allocation5 + $0x5b0] sm:$0xff]
        %v694 = vld [vmem:[#allocation5 + $0x5b8] sm:$0xff]
        %v695 = vld [vmem:[#allocation5 + $0x5c0] sm:$0xff]
        %v696 = vld [vmem:[#allocation5 + $0x5c8] sm:$0xff]
        %v697 = vld [vmem:[#allocation5 + $0x5d0] sm:$0xff]
        %v698 = vld [vmem:[#allocation5 + $0x5d8] sm:$0xff]
        %v699 = vld [vmem:[#allocation5 + $0x5e0] sm:$0xff]
        %v700 = vld [vmem:[#allocation5 + $0x5e8] sm:$0xff]
        %v701 = vld [vmem:[#allocation5 + $0x5f0] sm:$0xff]
        %v702 = vld [vmem:[#allocation5 + $0x5f8] sm:$0xff]
        %v703 = vld [vmem:[#allocation5 + $0x600] sm:$0xff]
        %v704 = vld [vmem:[#allocation5 + $0x608] sm:$0xff]
        %v705 = vld [vmem:[#allocation5 + $0x610] sm:$0xff]
        %v706 = vld [vmem:[#allocation5 + $0x618] sm:$0xff]
        %v707 = vld [vmem:[#allocation5 + $0x620] sm:$0xff]
        %v708 = vld [vmem:[#allocation5 + $0x628] sm:$0xff]
        %v709 = vld [vmem:[#allocation5 + $0x630] sm:$0xff]
        %v710 = vld [vmem:[#allocation5 + $0x638] sm:$0xff]
        %v711 = vld [vmem:[#allocation5 + $0x640] sm:$0xff]
        %v712 = vld [vmem:[#allocation5 + $0x648] sm:$0xff]
        %v713 = vld [vmem:[#allocation5 + $0x650] sm:$0xff]
        %v714 = vld [vmem:[#allocation5 + $0x658] sm:$0xff]
        %v715 = vld [vmem:[#allocation5 + $0x660] sm:$0xff]
        %v716 = vld [vmem:[#allocation5 + $0x668] sm:$0xff]
        %v717 = vld [vmem:[#allocation5 + $0x670] sm:$0xff]
        %v718 = vld [vmem:[#allocation5 + $0x678] sm:$0xff]
        %v719 = vld [vmem:[#allocation5 + $0x680] sm:$0xff]
        %v720 = vld [vmem:[#allocation5 + $0x688] sm:$0xff]
        %v721 = vld [vmem:[#allocation5 + $0x690] sm:$0xff]
        %v722 = vld [vmem:[#allocation5 + $0x698] sm:$0xff]
        %v723 = vld [vmem:[#allocation5 + $0x6a0] sm:$0xff]
        %v724 = vld [vmem:[#allocation5 + $0x6a8] sm:$0xff]
        %v725 = vld [vmem:[#allocation5 + $0x6b0] sm:$0xff]
        %v726 = vld [vmem:[#allocation5 + $0x6b8] sm:$0xff]
        %v727 = vld [vmem:[#allocation5 + $0x6c0] sm:$0xff]
        %v728 = vld [vmem:[#allocation5 + $0x6c8] sm:$0xff]
        %v729 = vld [vmem:[#allocation5 + $0x6d0] sm:$0xff]
        %v730 = vld [vmem:[#allocation5 + $0x6d8] sm:$0xff]
        %v731 = vld [vmem:[#allocation5 + $0x6e0] sm:$0xff]
        %v732 = vld [vmem:[#allocation5 + $0x6e8] sm:$0xff]
        %v733 = vld [vmem:[#allocation5 + $0x6f0] sm:$0xff]
        %v734 = vld [vmem:[#allocation5 + $0x6f8] sm:$0xff]
        %v735 = vld [vmem:[#allocation5 + $0x700] sm:$0xff]
        %v736 = vld [vmem:[#allocation5 + $0x708] sm:$0xff]
        %v737 = vld [vmem:[#allocation5 + $0x710] sm:$0xff]
        %v738 = vld [vmem:[#allocation5 + $0x718] sm:$0xff]
        %v739 = vld [vmem:[#allocation5 + $0x720] sm:$0xff]
        %v740 = vld [vmem:[#allocation5 + $0x728] sm:$0xff]
        %v741 = vld [vmem:[#allocation5 + $0x730] sm:$0xff]
        %v742 = vld [vmem:[#allocation5 + $0x738] sm:$0xff]
        %v743 = vld [vmem:[#allocation5 + $0x740] sm:$0xff]
        %v744 = vld [vmem:[#allocation5 + $0x748] sm:$0xff]
        %v745 = vld [vmem:[#allocation5 + $0x750] sm:$0xff]
        %v746 = vld [vmem:[#allocation5 + $0x758] sm:$0xff]
        %v747 = vld [vmem:[#allocation5 + $0x760] sm:$0xff]
        %v748 = vld [vmem:[#allocation5 + $0x768] sm:$0xff]
        %v749 = vld [vmem:[#allocation5 + $0x770] sm:$0xff]
        %v750 = vld [vmem:[#allocation5 + $0x778] sm:$0xff]
        %v751 = vld [vmem:[#allocation5 + $0x780] sm:$0xff]
        %v752 = vld [vmem:[#allocation5 + $0x788] sm:$0xff]
        %v753 = vld [vmem:[#allocation5 + $0x790] sm:$0xff]
        %v754 = vld [vmem:[#allocation5 + $0x798] sm:$0xff]
        %v755 = vld [vmem:[#allocation5 + $0x7a0] sm:$0xff]
        %v756 = vld [vmem:[#allocation5 + $0x7a8] sm:$0xff]
        %v757 = vld [vmem:[#allocation5 + $0x7b0] sm:$0xff]
        %v758 = vld [vmem:[#allocation5 + $0x7b8] sm:$0xff]
        %v759 = vld [vmem:[#allocation5 + $0x7c0] sm:$0xff]
        %v760 = vld [vmem:[#allocation5 + $0x7c8] sm:$0xff]
        %v761 = vld [vmem:[#allocation5 + $0x7d0] sm:$0xff]
        %v762 = vld [vmem:[#allocation5 + $0x7d8] sm:$0xff]
        %v763 = vld [vmem:[#allocation5 + $0x7e0] sm:$0xff]
        %v764 = vld [vmem:[#allocation5 + $0x7e8] sm:$0xff]
        %v765 = vld [vmem:[#allocation5 + $0x7f0] sm:$0xff]
        %v766 = vld [vmem:[#allocation5 + $0x7f8] sm:$0xff]
        %v767 = vld [vmem:[#allocation5 + $0x800] sm:$0xff]
        %v768 = vld [vmem:[#allocation5 + $0x808] sm:$0xff]
        %v769 = vld [vmem:[#allocation5 + $0x810] sm:$0xff]
        %v770 = vld [vmem:[#allocation5 + $0x818] sm:$0xff]
        %v771 = vld [vmem:[#allocation5 + $0x820] sm:$0xff]
        %v772 = vld [vmem:[#allocation5 + $0x828] sm:$0xff]
        %v773 = vld [vmem:[#allocation5 + $0x830] sm:$0xff]
        %v774 = vld [vmem:[#allocation5 + $0x838] sm:$0xff]
        %v775 = vld [vmem:[#allocation5 + $0x840] sm:$0xff]
        %v776 = vld [vmem:[#allocation5 + $0x848] sm:$0xff]
        %v777 = vld [vmem:[#allocation5 + $0x850] sm:$0xff]
        %v778 = vld [vmem:[#allocation5 + $0x858] sm:$0xff]
        %v779 = vld [vmem:[#allocation5 + $0x860] sm:$0xff]
        %v780 = vld [vmem:[#allocation5 + $0x868] sm:$0xff]
        %v781 = vld [vmem:[#allocation5 + $0x870] sm:$0xff]
        %v782 = vld [vmem:[#allocation5 + $0x878] sm:$0xff]
        %v783 = vld [vmem:[#allocation5 + $0x880] sm:$0xff]
        %v784 = vld [vmem:[#allocation5 + $0x888] sm:$0xff]
        %v785 = vld [vmem:[#allocation5 + $0x890] sm:$0xff]
        %v786 = vld [vmem:[#allocation5 + $0x898] sm:$0xff]
        %v787 = vld [vmem:[#allocation5 + $0x8a0] sm:$0xff]
        %v788 = vld [vmem:[#allocation5 + $0x8a8] sm:$0xff]
        %v789 = vld [vmem:[#allocation5 + $0x8b0] sm:$0xff]
        %v790 = vld [vmem:[#allocation5 + $0x8b8] sm:$0xff]
        %v791 = vld [vmem:[#allocation5 + $0x8c0] sm:$0xff]
        %v792 = vld [vmem:[#allocation5 + $0x8c8] sm:$0xff]
        %v793 = vld [vmem:[#allocation5 + $0x8d0] sm:$0xff]
        %v794 = vld [vmem:[#allocation5 + $0x8d8] sm:$0xff]
        %v795 = vld [vmem:[#allocation5 + $0x8e0] sm:$0xff]
        %v796 = vld [vmem:[#allocation5 + $0x8e8] sm:$0xff]
        %v797 = vld [vmem:[#allocation5 + $0x8f0] sm:$0xff]
        %v798 = vld [vmem:[#allocation5 + $0x8f8] sm:$0xff]
        %v799 = vld [vmem:[#allocation5 + $0x900] sm:$0xff]
        %v800 = vld [vmem:[#allocation5 + $0x908] sm:$0xff]
        %v801 = vld [vmem:[#allocation5 + $0x910] sm:$0xff]
        %v802 = vld [vmem:[#allocation5 + $0x918] sm:$0xff]
        %v803 = vld [vmem:[#allocation5 + $0x920] sm:$0xff]
        %v804 = vld [vmem:[#allocation5 + $0x928] sm:$0xff]
        %v805 = vld [vmem:[#allocation5 + $0x930] sm:$0xff]
        %v806 = vld [vmem:[#allocation5 + $0x938] sm:$0xff]
        %v807 = vld [vmem:[#allocation5 + $0x940] sm:$0xff]
        %v808 = vld [vmem:[#allocation5 + $0x948] sm:$0xff]
        %v809 = vld [vmem:[#allocation5 + $0x950] sm:$0xff]
        %v810 = vld [vmem:[#allocation5 + $0x958] sm:$0xff]
        %v811 = vld [vmem:[#allocation5 + $0x960] sm:$0xff]
        %v812 = vld [vmem:[#allocation5 + $0x968] sm:$0xff]
        %v813 = vld [vmem:[#allocation5 + $0x970] sm:$0xff]
        %v814 = vld [vmem:[#allocation5 + $0x978] sm:$0xff]
        %v815 = vld [vmem:[#allocation5 + $0x980] sm:$0xff]
        %v816 = vld [vmem:[#allocation5 + $0x988] sm:$0xff]
        %v817 = vld [vmem:[#allocation5 + $0x990] sm:$0xff]
        %v818 = vld [vmem:[#allocation5 + $0x998] sm:$0xff]
        %v819 = vld [vmem:[#allocation5 + $0x9a0] sm:$0xff]
        %v820 = vld [vmem:[#allocation5 + $0x9a8] sm:$0xff]
        %v821 = vld [vmem:[#allocation5 + $0x9b0] sm:$0xff]
        %v822 = vld [vmem:[#allocation5 + $0x9b8] sm:$0xff]
        %v823 = vld [vmem:[#allocation5 + $0x9c0] sm:$0xff]
        %v824 = vld [vmem:[#allocation5 + $0x9c8] sm:$0xff]
        %v825 = vld [vmem:[#allocation5 + $0x9d0] sm:$0xff]
        %v826 = vld [vmem:[#allocation5 + $0x9d8] sm:$0xff]
        %v827 = vld [vmem:[#allocation5 + $0x9e0] sm:$0xff]
        %v828 = vld [vmem:[#allocation5 + $0x9e8] sm:$0xff]
        %v829 = vld [vmem:[#allocation5 + $0x9f0] sm:$0xff]
        %v830 = vld [vmem:[#allocation5 + $0x9f8] sm:$0xff]
        %v831 = vld [vmem:[#allocation5 + $0xa00] sm:$0xff]
        %v832 = vld [vmem:[#allocation5 + $0xa08] sm:$0xff]
        %v833 = vld [vmem:[#allocation5 + $0xa10] sm:$0xff]
        %v834 = vld [vmem:[#allocation5 + $0xa18] sm:$0xff]
        %v835 = vld [vmem:[#allocation5 + $0xa20] sm:$0xff]
        %v836 = vld [vmem:[#allocation5 + $0xa28] sm:$0xff]
        %v837 = vld [vmem:[#allocation5 + $0xa30] sm:$0xff]
        %v838 = vld [vmem:[#allocation5 + $0xa38] sm:$0xff]
        %v839 = vld [vmem:[#allocation5 + $0xa40] sm:$0xff]
        %v840 = vld [vmem:[#allocation5 + $0xa48] sm:$0xff]
        %v841 = vld [vmem:[#allocation5 + $0xa50] sm:$0xff]
        %v842 = vld [vmem:[#allocation5 + $0xa58] sm:$0xff]
        %v843 = vld [vmem:[#allocation5 + $0xa60] sm:$0xff]
        %v844 = vld [vmem:[#allocation5 + $0xa68] sm:$0xff]
        %v845 = vld [vmem:[#allocation5 + $0xa70] sm:$0xff]
        %v846 = vld [vmem:[#allocation5 + $0xa78] sm:$0xff]
        %v847 = vld [vmem:[#allocation5 + $0xa80] sm:$0xff]
        %v848 = vld [vmem:[#allocation5 + $0xa88] sm:$0xff]
        %v849 = vld [vmem:[#allocation5 + $0xa90] sm:$0xff]
        %v850 = vld [vmem:[#allocation5 + $0xa98] sm:$0xff]
        %v851 = vld [vmem:[#allocation5 + $0xaa0] sm:$0xff]
        %v852 = vld [vmem:[#allocation5 + $0xaa8] sm:$0xff]
        %v853 = vld [vmem:[#allocation5 + $0xab0] sm:$0xff]
        %v854 = vld [vmem:[#allocation5 + $0xab8] sm:$0xff]
        %v855 = vld [vmem:[#allocation5 + $0xac0] sm:$0xff]
        %v856 = vld [vmem:[#allocation5 + $0xac8] sm:$0xff]
        %v857 = vld [vmem:[#allocation5 + $0xad0] sm:$0xff]
        %v858 = vld [vmem:[#allocation5 + $0xad8] sm:$0xff]
        %v859 = vld [vmem:[#allocation5 + $0xae0] sm:$0xff]
        %v860 = vld [vmem:[#allocation5 + $0xae8] sm:$0xff]
        %v861 = vld [vmem:[#allocation5 + $0xaf0] sm:$0xff]
        %v862 = vld [vmem:[#allocation5 + $0xaf8] sm:$0xff]
        %v863 = vld [vmem:[#allocation5 + $0xb00] sm:$0xff]
        %v864 = vld [vmem:[#allocation5 + $0xb08] sm:$0xff]
        %v865 = vld [vmem:[#allocation5 + $0xb10] sm:$0xff]
        %v866 = vld [vmem:[#allocation5 + $0xb18] sm:$0xff]
        %v867 = vld [vmem:[#allocation5 + $0xb20] sm:$0xff]
        %v868 = vld [vmem:[#allocation5 + $0xb28] sm:$0xff]
        %v869 = vld [vmem:[#allocation5 + $0xb30] sm:$0xff]
        %v870 = vld [vmem:[#allocation5 + $0xb38] sm:$0xff]
        %v871 = vld [vmem:[#allocation5 + $0xb40] sm:$0xff]
        %v872 = vld [vmem:[#allocation5 + $0xb48] sm:$0xff]
        %v873 = vld [vmem:[#allocation5 + $0xb50] sm:$0xff]
        %v874 = vld [vmem:[#allocation5 + $0xb58] sm:$0xff]
        %v875 = vld [vmem:[#allocation5 + $0xb60] sm:$0xff]
        %v876 = vld [vmem:[#allocation5 + $0xb68] sm:$0xff]
        %v877 = vld [vmem:[#allocation5 + $0xb70] sm:$0xff]
        %v878 = vld [vmem:[#allocation5 + $0xb78] sm:$0xff]
        %v879 = vld [vmem:[#allocation5 + $0xb80] sm:$0xff]
        %v880 = vld [vmem:[#allocation5 + $0xb88] sm:$0xff]
        %v881 = vld [vmem:[#allocation5 + $0xb90] sm:$0xff]
        %v882 = vld [vmem:[#allocation5 + $0xb98] sm:$0xff]
        %v883 = vld [vmem:[#allocation5 + $0xba0] sm:$0xff]
        %v884 = vld [vmem:[#allocation5 + $0xba8] sm:$0xff]
        %v885 = vld [vmem:[#allocation5 + $0xbb0] sm:$0xff]
        %v886 = vld [vmem:[#allocation5 + $0xbb8] sm:$0xff]
        %v887 = vld [vmem:[#allocation5 + $0xbc0] sm:$0xff]
        %v888 = vld [vmem:[#allocation5 + $0xbc8] sm:$0xff]
        %v889 = vld [vmem:[#allocation5 + $0xbd0] sm:$0xff]
        %v890 = vld [vmem:[#allocation5 + $0xbd8] sm:$0xff]
        %v891 = vld [vmem:[#allocation5 + $0xbe0] sm:$0xff]
        %v892 = vld [vmem:[#allocation5 + $0xbe8] sm:$0xff]
        %v893 = vld [vmem:[#allocation5 + $0xbf0] sm:$0xff]
        %v894 = vld [vmem:[#allocation5 + $0xbf8] sm:$0xff]
        %v895 = vld [vmem:[#allocation7] sm:$0xff]
        %v896 = vld [vmem:[#allocation7 + $0x8] sm:$0xf]
        %v899 = vlaneseq
        %v900 = vshrl.u32 %v899, 7
        %v901 = vsub.s32 0, %v900
        %v902 = vrot.slane %v895, %v901
        %v903 = vlaneseq
        %v904 = vshrl.u32 %v903, 7
        %v905 = vsub.s32 1, %v904
        %v906 = vrot.slane %v895, %v905
        %v907 = vlaneseq
        %v908 = vshrl.u32 %v907, 7
        %v909 = vsub.s32 2, %v908
        %v910 = vrot.slane %v895, %v909
        %v911 = vlaneseq
        %v912 = vshrl.u32 %v911, 7
        %v913 = vsub.s32 3, %v912
        %v914 = vrot.slane %v895, %v913
        %v915 = vlaneseq
        %v916 = vshrl.u32 %v915, 7
        %v917 = vsub.s32 4, %v916
        %v918 = vrot.slane %v895, %v917
        %v919 = vlaneseq
        %v920 = vshrl.u32 %v919, 7
        %v921 = vsub.s32 5, %v920
        %v922 = vrot.slane %v895, %v921
        %v923 = vlaneseq
        %v924 = vshrl.u32 %v923, 7
        %v925 = vsub.s32 6, %v924
        %v926 = vrot.slane %v895, %v925
        %v927 = vlaneseq
        %v928 = vshrl.u32 %v927, 7
        %v929 = vsub.s32 7, %v928
        %v930 = vrot.slane %v895, %v929
        %v931 = vlaneseq
        %v932 = vshrl.u32 %v931, 7
        %v933 = vsub.s32 0, %v932
        %v934 = vrot.slane %v896, %v933
        %v935 = vlaneseq
        %v936 = vshrl.u32 %v935, 7
        %v937 = vsub.s32 1, %v936
        %v938 = vrot.slane %v896, %v937
        %v939 = vlaneseq
        %v940 = vshrl.u32 %v939, 7
        %v941 = vsub.s32 2, %v940
        %v942 = vrot.slane %v896, %v941
        %v943 = vlaneseq
        %v944 = vshrl.u32 %v943, 7
        %v945 = vsub.s32 3, %v944
        %v946 = vrot.slane %v896, %v945
        %v1343 = vunpack.c.l.b16 %v511
        %v1344 = vunpack.c.h.b16 %v511
        %v1345 = vunpack.c.l.b16 %v512
        %v1346 = vunpack.c.h.b16 %v512
        %v1347 = vunpack.c.l.b16 %v513
        %v1348 = vunpack.c.h.b16 %v513
        %v1349 = vunpack.c.l.b16 %v514
        %v1350 = vunpack.c.h.b16 %v514
        %v1351 = vunpack.c.l.b16 %v515
        %v1352 = vunpack.c.h.b16 %v515
        %v1353 = vunpack.c.l.b16 %v516
        %v1354 = vunpack.c.h.b16 %v516
        %v1355 = vunpack.c.l.b16 %v517
        %v1356 = vunpack.c.h.b16 %v517
        %v1357 = vunpack.c.l.b16 %v518
        %v1358 = vunpack.c.h.b16 %v518
        %v1359 = vunpack.c.l.b16 %v519
        %v1360 = vunpack.c.h.b16 %v519
        %v1361 = vunpack.c.l.b16 %v520
        %v1362 = vunpack.c.h.b16 %v520
        %v1363 = vunpack.c.l.b16 %v521
        %v1364 = vunpack.c.h.b16 %v521
        %v1365 = vunpack.c.l.b16 %v522
        %v1366 = vunpack.c.h.b16 %v522
        %v1367 = vunpack.c.l.b16 %v523
        %v1368 = vunpack.c.h.b16 %v523
        %v1369 = vunpack.c.l.b16 %v524
        %v1370 = vunpack.c.h.b16 %v524
        %v1371 = vunpack.c.l.b16 %v525
        %v1372 = vunpack.c.h.b16 %v525
        %v1373 = vunpack.c.l.b16 %v526
        %v1374 = vunpack.c.h.b16 %v526
        %v1375 = vunpack.c.l.b16 %v527
        %v1376 = vunpack.c.h.b16 %v527
        %v1377 = vunpack.c.l.b16 %v528
        %v1378 = vunpack.c.h.b16 %v528
        %v1379 = vunpack.c.l.b16 %v529
        %v1380 = vunpack.c.h.b16 %v529
        %v1381 = vunpack.c.l.b16 %v530
        %v1382 = vunpack.c.h.b16 %v530
        %v1383 = vunpack.c.l.b16 %v531
        %v1384 = vunpack.c.h.b16 %v531
        %v1385 = vunpack.c.l.b16 %v532
        %v1386 = vunpack.c.h.b16 %v532
        %v1387 = vunpack.c.l.b16 %v533
        %v1388 = vunpack.c.h.b16 %v533
        %v1389 = vunpack.c.l.b16 %v534
        %v1390 = vunpack.c.h.b16 %v534
        %v1391 = vunpack.c.l.b16 %v535
        %v1392 = vunpack.c.h.b16 %v535
        %v1393 = vunpack.c.l.b16 %v536
        %v1394 = vunpack.c.h.b16 %v536
        %v1395 = vunpack.c.l.b16 %v537
        %v1396 = vunpack.c.h.b16 %v537
        %v1397 = vunpack.c.l.b16 %v538
        %v1398 = vunpack.c.h.b16 %v538
        %v1399 = vunpack.c.l.b16 %v539
        %v1400 = vunpack.c.h.b16 %v539
        %v1401 = vunpack.c.l.b16 %v540
        %v1402 = vunpack.c.h.b16 %v540
        %v1403 = vunpack.c.l.b16 %v541
        %v1404 = vunpack.c.h.b16 %v541
        %v1405 = vunpack.c.l.b16 %v542
        %v1406 = vunpack.c.h.b16 %v542
        %v1407 = vunpack.c.l.b16 %v543
        %v1408 = vunpack.c.h.b16 %v543
        %v1409 = vunpack.c.l.b16 %v544
        %v1410 = vunpack.c.h.b16 %v544
        %v1411 = vunpack.c.l.b16 %v545
        %v1412 = vunpack.c.h.b16 %v545
        %v1413 = vunpack.c.l.b16 %v546
        %v1414 = vunpack.c.h.b16 %v546
        %v1415 = vunpack.c.l.b16 %v547
        %v1416 = vunpack.c.h.b16 %v547
        %v1417 = vunpack.c.l.b16 %v548
        %v1418 = vunpack.c.h.b16 %v548
        %v1419 = vunpack.c.l.b16 %v549
        %v1420 = vunpack.c.h.b16 %v549
        %v1421 = vunpack.c.l.b16 %v550
        %v1422 = vunpack.c.h.b16 %v550
        %v1423 = vunpack.c.l.b16 %v551
        %v1424 = vunpack.c.h.b16 %v551
        %v1425 = vunpack.c.l.b16 %v552
        %v1426 = vunpack.c.h.b16 %v552
        %v1427 = vunpack.c.l.b16 %v553
        %v1428 = vunpack.c.h.b16 %v553
        %v1429 = vunpack.c.l.b16 %v554
        %v1430 = vunpack.c.h.b16 %v554
        %v1431 = vunpack.c.l.b16 %v555
        %v1432 = vunpack.c.h.b16 %v555
        %v1433 = vunpack.c.l.b16 %v556
        %v1434 = vunpack.c.h.b16 %v556
        %v1435 = vunpack.c.l.b16 %v557
        %v1436 = vunpack.c.h.b16 %v557
        %v1437 = vunpack.c.l.b16 %v558
        %v1438 = vunpack.c.h.b16 %v558
        %v1439 = vunpack.c.l.b16 %v559
        %v1440 = vunpack.c.h.b16 %v559
        %v1441 = vunpack.c.l.b16 %v560
        %v1442 = vunpack.c.h.b16 %v560
        %v1443 = vunpack.c.l.b16 %v561
        %v1444 = vunpack.c.h.b16 %v561
        %v1445 = vunpack.c.l.b16 %v562
        %v1446 = vunpack.c.h.b16 %v562
        %v1447 = vunpack.c.l.b16 %v563
        %v1448 = vunpack.c.h.b16 %v563
        %v1449 = vunpack.c.l.b16 %v564
        %v1450 = vunpack.c.h.b16 %v564
        %v1451 = vunpack.c.l.b16 %v565
        %v1452 = vunpack.c.h.b16 %v565
        %v1453 = vunpack.c.l.b16 %v566
        %v1454 = vunpack.c.h.b16 %v566
        %v1455 = vunpack.c.l.b16 %v567
        %v1456 = vunpack.c.h.b16 %v567
        %v1457 = vunpack.c.l.b16 %v568
        %v1458 = vunpack.c.h.b16 %v568
        %v1459 = vunpack.c.l.b16 %v569
        %v1460 = vunpack.c.h.b16 %v569
        %v1461 = vunpack.c.l.b16 %v570
        %v1462 = vunpack.c.h.b16 %v570
        %v1463 = vunpack.c.l.b16 %v571
        %v1464 = vunpack.c.h.b16 %v571
        %v1465 = vunpack.c.l.b16 %v572
        %v1466 = vunpack.c.h.b16 %v572
        %v1467 = vunpack.c.l.b16 %v573
        %v1468 = vunpack.c.h.b16 %v573
        %v1469 = vunpack.c.l.b16 %v574
        %v1470 = vunpack.c.h.b16 %v574
        %v1471 = vunpack.c.l.b16 %v575
        %v1472 = vunpack.c.h.b16 %v575
        %v1473 = vunpack.c.l.b16 %v576
        %v1474 = vunpack.c.h.b16 %v576
        %v1475 = vunpack.c.l.b16 %v577
        %v1476 = vunpack.c.h.b16 %v577
        %v1477 = vunpack.c.l.b16 %v578
        %v1478 = vunpack.c.h.b16 %v578
        %v1479 = vunpack.c.l.b16 %v579
        %v1480 = vunpack.c.h.b16 %v579
        %v1481 = vunpack.c.l.b16 %v580
        %v1482 = vunpack.c.h.b16 %v580
        %v1483 = vunpack.c.l.b16 %v581
        %v1484 = vunpack.c.h.b16 %v581
        %v1485 = vunpack.c.l.b16 %v582
        %v1486 = vunpack.c.h.b16 %v582
        %v1487 = vunpack.c.l.b16 %v583
        %v1488 = vunpack.c.h.b16 %v583
        %v1489 = vunpack.c.l.b16 %v584
        %v1490 = vunpack.c.h.b16 %v584
        %v1491 = vunpack.c.l.b16 %v585
        %v1492 = vunpack.c.h.b16 %v585
        %v1493 = vunpack.c.l.b16 %v586
        %v1494 = vunpack.c.h.b16 %v586
        %v1495 = vunpack.c.l.b16 %v587
        %v1496 = vunpack.c.h.b16 %v587
        %v1497 = vunpack.c.l.b16 %v588
        %v1498 = vunpack.c.h.b16 %v588
        %v1499 = vunpack.c.l.b16 %v589
        %v1500 = vunpack.c.h.b16 %v589
        %v1501 = vunpack.c.l.b16 %v590
        %v1502 = vunpack.c.h.b16 %v590
        %v1503 = vunpack.c.l.b16 %v591
        %v1504 = vunpack.c.h.b16 %v591
        %v1505 = vunpack.c.l.b16 %v592
        %v1506 = vunpack.c.h.b16 %v592
        %v1507 = vunpack.c.l.b16 %v593
        %v1508 = vunpack.c.h.b16 %v593
        %v1509 = vunpack.c.l.b16 %v594
        %v1510 = vunpack.c.h.b16 %v594
        %v1511 = vunpack.c.l.b16 %v595
        %v1512 = vunpack.c.h.b16 %v595
        %v1513 = vunpack.c.l.b16 %v596
        %v1514 = vunpack.c.h.b16 %v596
        %v1515 = vunpack.c.l.b16 %v597
        %v1516 = vunpack.c.h.b16 %v597
        %v1517 = vunpack.c.l.b16 %v598
        %v1518 = vunpack.c.h.b16 %v598
        %v1519 = vunpack.c.l.b16 %v599
        %v1520 = vunpack.c.h.b16 %v599
        %v1521 = vunpack.c.l.b16 %v600
        %v1522 = vunpack.c.h.b16 %v600
        %v1523 = vunpack.c.l.b16 %v601
        %v1524 = vunpack.c.h.b16 %v601
        %v1525 = vunpack.c.l.b16 %v602
        %v1526 = vunpack.c.h.b16 %v602
        %v1527 = vunpack.c.l.b16 %v603
        %v1528 = vunpack.c.h.b16 %v603
        %v1529 = vunpack.c.l.b16 %v604
        %v1530 = vunpack.c.h.b16 %v604
        %v1531 = vunpack.c.l.b16 %v605
        %v1532 = vunpack.c.h.b16 %v605
        %v1533 = vunpack.c.l.b16 %v606
        %v1534 = vunpack.c.h.b16 %v606
        %v1535 = vunpack.c.l.b16 %v607
        %v1536 = vunpack.c.h.b16 %v607
        %v1537 = vunpack.c.l.b16 %v608
        %v1538 = vunpack.c.h.b16 %v608
        %v1539 = vunpack.c.l.b16 %v609
        %v1540 = vunpack.c.h.b16 %v609
        %v1541 = vunpack.c.l.b16 %v610
        %v1542 = vunpack.c.h.b16 %v610
        %v1543 = vunpack.c.l.b16 %v611
        %v1544 = vunpack.c.h.b16 %v611
        %v1545 = vunpack.c.l.b16 %v612
        %v1546 = vunpack.c.h.b16 %v612
        %v1547 = vunpack.c.l.b16 %v613
        %v1548 = vunpack.c.h.b16 %v613
        %v1549 = vunpack.c.l.b16 %v614
        %v1550 = vunpack.c.h.b16 %v614
        %v1551 = vunpack.c.l.b16 %v615
        %v1552 = vunpack.c.h.b16 %v615
        %v1553 = vunpack.c.l.b16 %v616
        %v1554 = vunpack.c.h.b16 %v616
        %v1555 = vunpack.c.l.b16 %v617
        %v1556 = vunpack.c.h.b16 %v617
        %v1557 = vunpack.c.l.b16 %v618
        %v1558 = vunpack.c.h.b16 %v618
        %v1559 = vunpack.c.l.b16 %v619
        %v1560 = vunpack.c.h.b16 %v619
        %v1561 = vunpack.c.l.b16 %v620
        %v1562 = vunpack.c.h.b16 %v620
        %v1563 = vunpack.c.l.b16 %v621
        %v1564 = vunpack.c.h.b16 %v621
        %v1565 = vunpack.c.l.b16 %v622
        %v1566 = vunpack.c.h.b16 %v622
        %v1567 = vunpack.c.l.b16 %v623
        %v1568 = vunpack.c.h.b16 %v623
        %v1569 = vunpack.c.l.b16 %v624
        %v1570 = vunpack.c.h.b16 %v624
        %v1571 = vunpack.c.l.b16 %v625
        %v1572 = vunpack.c.h.b16 %v625
        %v1573 = vunpack.c.l.b16 %v626
        %v1574 = vunpack.c.h.b16 %v626
        %v1575 = vunpack.c.l.b16 %v627
        %v1576 = vunpack.c.h.b16 %v627
        %v1577 = vunpack.c.l.b16 %v628
        %v1578 = vunpack.c.h.b16 %v628
        %v1579 = vunpack.c.l.b16 %v629
        %v1580 = vunpack.c.h.b16 %v629
        %v1581 = vunpack.c.l.b16 %v630
        %v1582 = vunpack.c.h.b16 %v630
        %v1583 = vunpack.c.l.b16 %v631
        %v1584 = vunpack.c.h.b16 %v631
        %v1585 = vunpack.c.l.b16 %v632
        %v1586 = vunpack.c.h.b16 %v632
        %v1587 = vunpack.c.l.b16 %v633
        %v1588 = vunpack.c.h.b16 %v633
        %v1589 = vunpack.c.l.b16 %v634
        %v1590 = vunpack.c.h.b16 %v634
        %v1591 = vunpack.c.l.b16 %v635
        %v1592 = vunpack.c.h.b16 %v635
        %v1593 = vunpack.c.l.b16 %v636
        %v1594 = vunpack.c.h.b16 %v636
        %v1595 = vunpack.c.l.b16 %v637
        %v1596 = vunpack.c.h.b16 %v637
        %v1597 = vunpack.c.l.b16 %v638
        %v1598 = vunpack.c.h.b16 %v638
        %v1599 = vunpack.c.l.b16 %v639
        %v1600 = vunpack.c.h.b16 %v639
        %v1601 = vunpack.c.l.b16 %v640
        %v1602 = vunpack.c.h.b16 %v640
        %v1603 = vunpack.c.l.b16 %v641
        %v1604 = vunpack.c.h.b16 %v641
        %v1605 = vunpack.c.l.b16 %v642
        %v1606 = vunpack.c.h.b16 %v642
        %v1607 = vunpack.c.l.b16 %v643
        %v1608 = vunpack.c.h.b16 %v643
        %v1609 = vunpack.c.l.b16 %v644
        %v1610 = vunpack.c.h.b16 %v644
        %v1611 = vunpack.c.l.b16 %v645
        %v1612 = vunpack.c.h.b16 %v645
        %v1613 = vunpack.c.l.b16 %v646
        %v1614 = vunpack.c.h.b16 %v646
        %v1615 = vunpack.c.l.b16 %v647
        %v1616 = vunpack.c.h.b16 %v647
        %v1617 = vunpack.c.l.b16 %v648
        %v1618 = vunpack.c.h.b16 %v648
        %v1619 = vunpack.c.l.b16 %v649
        %v1620 = vunpack.c.h.b16 %v649
        %v1621 = vunpack.c.l.b16 %v650
        %v1622 = vunpack.c.h.b16 %v650
        %v1623 = vunpack.c.l.b16 %v651
        %v1624 = vunpack.c.h.b16 %v651
        %v1625 = vunpack.c.l.b16 %v652
        %v1626 = vunpack.c.h.b16 %v652
        %v1627 = vunpack.c.l.b16 %v653
        %v1628 = vunpack.c.h.b16 %v653
        %v1629 = vunpack.c.l.b16 %v654
        %v1630 = vunpack.c.h.b16 %v654
        %v1631 = vunpack.c.l.b16 %v655
        %v1632 = vunpack.c.h.b16 %v655
        %v1633 = vunpack.c.l.b16 %v656
        %v1634 = vunpack.c.h.b16 %v656
        %v1635 = vunpack.c.l.b16 %v657
        %v1636 = vunpack.c.h.b16 %v657
        %v1637 = vunpack.c.l.b16 %v658
        %v1638 = vunpack.c.h.b16 %v658
        %v1639 = vunpack.c.l.b16 %v659
        %v1640 = vunpack.c.h.b16 %v659
        %v1641 = vunpack.c.l.b16 %v660
        %v1642 = vunpack.c.h.b16 %v660
        %v1643 = vunpack.c.l.b16 %v661
        %v1644 = vunpack.c.h.b16 %v661
        %v1645 = vunpack.c.l.b16 %v662
        %v1646 = vunpack.c.h.b16 %v662
        %v1647 = vunpack.c.l.b16 %v663
        %v1648 = vunpack.c.h.b16 %v663
        %v1649 = vunpack.c.l.b16 %v664
        %v1650 = vunpack.c.h.b16 %v664
        %v1651 = vunpack.c.l.b16 %v665
        %v1652 = vunpack.c.h.b16 %v665
        %v1653 = vunpack.c.l.b16 %v666
        %v1654 = vunpack.c.h.b16 %v666
        %v1655 = vunpack.c.l.b16 %v667
        %v1656 = vunpack.c.h.b16 %v667
        %v1657 = vunpack.c.l.b16 %v668
        %v1658 = vunpack.c.h.b16 %v668
        %v1659 = vunpack.c.l.b16 %v669
        %v1660 = vunpack.c.h.b16 %v669
        %v1661 = vunpack.c.l.b16 %v670
        %v1662 = vunpack.c.h.b16 %v670
        %v1663 = vunpack.c.l.b16 %v671
        %v1664 = vunpack.c.h.b16 %v671
        %v1665 = vunpack.c.l.b16 %v672
        %v1666 = vunpack.c.h.b16 %v672
        %v1667 = vunpack.c.l.b16 %v673
        %v1668 = vunpack.c.h.b16 %v673
        %v1669 = vunpack.c.l.b16 %v674
        %v1670 = vunpack.c.h.b16 %v674
        %v1671 = vunpack.c.l.b16 %v675
        %v1672 = vunpack.c.h.b16 %v675
        %v1673 = vunpack.c.l.b16 %v676
        %v1674 = vunpack.c.h.b16 %v676
        %v1675 = vunpack.c.l.b16 %v677
        %v1676 = vunpack.c.h.b16 %v677
        %v1677 = vunpack.c.l.b16 %v678
        %v1678 = vunpack.c.h.b16 %v678
        %v1679 = vunpack.c.l.b16 %v679
        %v1680 = vunpack.c.h.b16 %v679
        %v1681 = vunpack.c.l.b16 %v680
        %v1682 = vunpack.c.h.b16 %v680
        %v1683 = vunpack.c.l.b16 %v681
        %v1684 = vunpack.c.h.b16 %v681
        %v1685 = vunpack.c.l.b16 %v682
        %v1686 = vunpack.c.h.b16 %v682
        %v1687 = vunpack.c.l.b16 %v683
        %v1688 = vunpack.c.h.b16 %v683
        %v1689 = vunpack.c.l.b16 %v684
        %v1690 = vunpack.c.h.b16 %v684
        %v1691 = vunpack.c.l.b16 %v685
        %v1692 = vunpack.c.h.b16 %v685
        %v1693 = vunpack.c.l.b16 %v686
        %v1694 = vunpack.c.h.b16 %v686
        %v1695 = vunpack.c.l.b16 %v687
        %v1696 = vunpack.c.h.b16 %v687
        %v1697 = vunpack.c.l.b16 %v688
        %v1698 = vunpack.c.h.b16 %v688
        %v1699 = vunpack.c.l.b16 %v689
        %v1700 = vunpack.c.h.b16 %v689
        %v1701 = vunpack.c.l.b16 %v690
        %v1702 = vunpack.c.h.b16 %v690
        %v1703 = vunpack.c.l.b16 %v691
        %v1704 = vunpack.c.h.b16 %v691
        %v1705 = vunpack.c.l.b16 %v692
        %v1706 = vunpack.c.h.b16 %v692
        %v1707 = vunpack.c.l.b16 %v693
        %v1708 = vunpack.c.h.b16 %v693
        %v1709 = vunpack.c.l.b16 %v694
        %v1710 = vunpack.c.h.b16 %v694
        %v1711 = vunpack.c.l.b16 %v695
        %v1712 = vunpack.c.h.b16 %v695
        %v1713 = vunpack.c.l.b16 %v696
        %v1714 = vunpack.c.h.b16 %v696
        %v1715 = vunpack.c.l.b16 %v697
        %v1716 = vunpack.c.h.b16 %v697
        %v1717 = vunpack.c.l.b16 %v698
        %v1718 = vunpack.c.h.b16 %v698
        %v1719 = vunpack.c.l.b16 %v699
        %v1720 = vunpack.c.h.b16 %v699
        %v1721 = vunpack.c.l.b16 %v700
        %v1722 = vunpack.c.h.b16 %v700
        %v1723 = vunpack.c.l.b16 %v701
        %v1724 = vunpack.c.h.b16 %v701
        %v1725 = vunpack.c.l.b16 %v702
        %v1726 = vunpack.c.h.b16 %v702
        %v1727 = vunpack.c.l.b16 %v703
        %v1728 = vunpack.c.h.b16 %v703
        %v1729 = vunpack.c.l.b16 %v704
        %v1730 = vunpack.c.h.b16 %v704
        %v1731 = vunpack.c.l.b16 %v705
        %v1732 = vunpack.c.h.b16 %v705
        %v1733 = vunpack.c.l.b16 %v706
        %v1734 = vunpack.c.h.b16 %v706
        %v1735 = vunpack.c.l.b16 %v707
        %v1736 = vunpack.c.h.b16 %v707
        %v1737 = vunpack.c.l.b16 %v708
        %v1738 = vunpack.c.h.b16 %v708
        %v1739 = vunpack.c.l.b16 %v709
        %v1740 = vunpack.c.h.b16 %v709
        %v1741 = vunpack.c.l.b16 %v710
        %v1742 = vunpack.c.h.b16 %v710
        %v1743 = vunpack.c.l.b16 %v711
        %v1744 = vunpack.c.h.b16 %v711
        %v1745 = vunpack.c.l.b16 %v712
        %v1746 = vunpack.c.h.b16 %v712
        %v1747 = vunpack.c.l.b16 %v713
        %v1748 = vunpack.c.h.b16 %v713
        %v1749 = vunpack.c.l.b16 %v714
        %v1750 = vunpack.c.h.b16 %v714
        %v1751 = vunpack.c.l.b16 %v715
        %v1752 = vunpack.c.h.b16 %v715
        %v1753 = vunpack.c.l.b16 %v716
        %v1754 = vunpack.c.h.b16 %v716
        %v1755 = vunpack.c.l.b16 %v717
        %v1756 = vunpack.c.h.b16 %v717
        %v1757 = vunpack.c.l.b16 %v718
        %v1758 = vunpack.c.h.b16 %v718
        %v1759 = vunpack.c.l.b16 %v719
        %v1760 = vunpack.c.h.b16 %v719
        %v1761 = vunpack.c.l.b16 %v720
        %v1762 = vunpack.c.h.b16 %v720
        %v1763 = vunpack.c.l.b16 %v721
        %v1764 = vunpack.c.h.b16 %v721
        %v1765 = vunpack.c.l.b16 %v722
        %v1766 = vunpack.c.h.b16 %v722
        %v1767 = vunpack.c.l.b16 %v723
        %v1768 = vunpack.c.h.b16 %v723
        %v1769 = vunpack.c.l.b16 %v724
        %v1770 = vunpack.c.h.b16 %v724
        %v1771 = vunpack.c.l.b16 %v725
        %v1772 = vunpack.c.h.b16 %v725
        %v1773 = vunpack.c.l.b16 %v726
        %v1774 = vunpack.c.h.b16 %v726
        %v1775 = vunpack.c.l.b16 %v727
        %v1776 = vunpack.c.h.b16 %v727
        %v1777 = vunpack.c.l.b16 %v728
        %v1778 = vunpack.c.h.b16 %v728
        %v1779 = vunpack.c.l.b16 %v729
        %v1780 = vunpack.c.h.b16 %v729
        %v1781 = vunpack.c.l.b16 %v730
        %v1782 = vunpack.c.h.b16 %v730
        %v1783 = vunpack.c.l.b16 %v731
        %v1784 = vunpack.c.h.b16 %v731
        %v1785 = vunpack.c.l.b16 %v732
        %v1786 = vunpack.c.h.b16 %v732
        %v1787 = vunpack.c.l.b16 %v733
        %v1788 = vunpack.c.h.b16 %v733
        %v1789 = vunpack.c.l.b16 %v734
        %v1790 = vunpack.c.h.b16 %v734
        %v1791 = vunpack.c.l.b16 %v735
        %v1792 = vunpack.c.h.b16 %v735
        %v1793 = vunpack.c.l.b16 %v736
        %v1794 = vunpack.c.h.b16 %v736
        %v1795 = vunpack.c.l.b16 %v737
        %v1796 = vunpack.c.h.b16 %v737
        %v1797 = vunpack.c.l.b16 %v738
        %v1798 = vunpack.c.h.b16 %v738
        %v1799 = vunpack.c.l.b16 %v739
        %v1800 = vunpack.c.h.b16 %v739
        %v1801 = vunpack.c.l.b16 %v740
        %v1802 = vunpack.c.h.b16 %v740
        %v1803 = vunpack.c.l.b16 %v741
        %v1804 = vunpack.c.h.b16 %v741
        %v1805 = vunpack.c.l.b16 %v742
        %v1806 = vunpack.c.h.b16 %v742
        %v1807 = vunpack.c.l.b16 %v743
        %v1808 = vunpack.c.h.b16 %v743
        %v1809 = vunpack.c.l.b16 %v744
        %v1810 = vunpack.c.h.b16 %v744
        %v1811 = vunpack.c.l.b16 %v745
        %v1812 = vunpack.c.h.b16 %v745
        %v1813 = vunpack.c.l.b16 %v746
        %v1814 = vunpack.c.h.b16 %v746
        %v1815 = vunpack.c.l.b16 %v747
        %v1816 = vunpack.c.h.b16 %v747
        %v1817 = vunpack.c.l.b16 %v748
        %v1818 = vunpack.c.h.b16 %v748
        %v1819 = vunpack.c.l.b16 %v749
        %v1820 = vunpack.c.h.b16 %v749
        %v1821 = vunpack.c.l.b16 %v750
        %v1822 = vunpack.c.h.b16 %v750
        %v1823 = vunpack.c.l.b16 %v751
        %v1824 = vunpack.c.h.b16 %v751
        %v1825 = vunpack.c.l.b16 %v752
        %v1826 = vunpack.c.h.b16 %v752
        %v1827 = vunpack.c.l.b16 %v753
        %v1828 = vunpack.c.h.b16 %v753
        %v1829 = vunpack.c.l.b16 %v754
        %v1830 = vunpack.c.h.b16 %v754
        %v1831 = vunpack.c.l.b16 %v755
        %v1832 = vunpack.c.h.b16 %v755
        %v1833 = vunpack.c.l.b16 %v756
        %v1834 = vunpack.c.h.b16 %v756
        %v1835 = vunpack.c.l.b16 %v757
        %v1836 = vunpack.c.h.b16 %v757
        %v1837 = vunpack.c.l.b16 %v758
        %v1838 = vunpack.c.h.b16 %v758
        %v1839 = vunpack.c.l.b16 %v759
        %v1840 = vunpack.c.h.b16 %v759
        %v1841 = vunpack.c.l.b16 %v760
        %v1842 = vunpack.c.h.b16 %v760
        %v1843 = vunpack.c.l.b16 %v761
        %v1844 = vunpack.c.h.b16 %v761
        %v1845 = vunpack.c.l.b16 %v762
        %v1846 = vunpack.c.h.b16 %v762
        %v1847 = vunpack.c.l.b16 %v763
        %v1848 = vunpack.c.h.b16 %v763
        %v1849 = vunpack.c.l.b16 %v764
        %v1850 = vunpack.c.h.b16 %v764
        %v1851 = vunpack.c.l.b16 %v765
        %v1852 = vunpack.c.h.b16 %v765
        %v1853 = vunpack.c.l.b16 %v766
        %v1854 = vunpack.c.h.b16 %v766
        %v1855 = vunpack.c.l.b16 %v767
        %v1856 = vunpack.c.h.b16 %v767
        %v1857 = vunpack.c.l.b16 %v768
        %v1858 = vunpack.c.h.b16 %v768
        %v1859 = vunpack.c.l.b16 %v769
        %v1860 = vunpack.c.h.b16 %v769
        %v1861 = vunpack.c.l.b16 %v770
        %v1862 = vunpack.c.h.b16 %v770
        %v1863 = vunpack.c.l.b16 %v771
        %v1864 = vunpack.c.h.b16 %v771
        %v1865 = vunpack.c.l.b16 %v772
        %v1866 = vunpack.c.h.b16 %v772
        %v1867 = vunpack.c.l.b16 %v773
        %v1868 = vunpack.c.h.b16 %v773
        %v1869 = vunpack.c.l.b16 %v774
        %v1870 = vunpack.c.h.b16 %v774
        %v1871 = vunpack.c.l.b16 %v775
        %v1872 = vunpack.c.h.b16 %v775
        %v1873 = vunpack.c.l.b16 %v776
        %v1874 = vunpack.c.h.b16 %v776
        %v1875 = vunpack.c.l.b16 %v777
        %v1876 = vunpack.c.h.b16 %v777
        %v1877 = vunpack.c.l.b16 %v778
        %v1878 = vunpack.c.h.b16 %v778
        %v1879 = vunpack.c.l.b16 %v779
        %v1880 = vunpack.c.h.b16 %v779
        %v1881 = vunpack.c.l.b16 %v780
        %v1882 = vunpack.c.h.b16 %v780
        %v1883 = vunpack.c.l.b16 %v781
        %v1884 = vunpack.c.h.b16 %v781
        %v1885 = vunpack.c.l.b16 %v782
        %v1886 = vunpack.c.h.b16 %v782
        %v1887 = vunpack.c.l.b16 %v783
        %v1888 = vunpack.c.h.b16 %v783
        %v1889 = vunpack.c.l.b16 %v784
        %v1890 = vunpack.c.h.b16 %v784
        %v1891 = vunpack.c.l.b16 %v785
        %v1892 = vunpack.c.h.b16 %v785
        %v1893 = vunpack.c.l.b16 %v786
        %v1894 = vunpack.c.h.b16 %v786
        %v1895 = vunpack.c.l.b16 %v787
        %v1896 = vunpack.c.h.b16 %v787
        %v1897 = vunpack.c.l.b16 %v788
        %v1898 = vunpack.c.h.b16 %v788
        %v1899 = vunpack.c.l.b16 %v789
        %v1900 = vunpack.c.h.b16 %v789
        %v1901 = vunpack.c.l.b16 %v790
        %v1902 = vunpack.c.h.b16 %v790
        %v1903 = vunpack.c.l.b16 %v791
        %v1904 = vunpack.c.h.b16 %v791
        %v1905 = vunpack.c.l.b16 %v792
        %v1906 = vunpack.c.h.b16 %v792
        %v1907 = vunpack.c.l.b16 %v793
        %v1908 = vunpack.c.h.b16 %v793
        %v1909 = vunpack.c.l.b16 %v794
        %v1910 = vunpack.c.h.b16 %v794
        %v1911 = vunpack.c.l.b16 %v795
        %v1912 = vunpack.c.h.b16 %v795
        %v1913 = vunpack.c.l.b16 %v796
        %v1914 = vunpack.c.h.b16 %v796
        %v1915 = vunpack.c.l.b16 %v797
        %v1916 = vunpack.c.h.b16 %v797
        %v1917 = vunpack.c.l.b16 %v798
        %v1918 = vunpack.c.h.b16 %v798
        %v1919 = vunpack.c.l.b16 %v799
        %v1920 = vunpack.c.h.b16 %v799
        %v1921 = vunpack.c.l.b16 %v800
        %v1922 = vunpack.c.h.b16 %v800
        %v1923 = vunpack.c.l.b16 %v801
        %v1924 = vunpack.c.h.b16 %v801
        %v1925 = vunpack.c.l.b16 %v802
        %v1926 = vunpack.c.h.b16 %v802
        %v1927 = vunpack.c.l.b16 %v803
        %v1928 = vunpack.c.h.b16 %v803
        %v1929 = vunpack.c.l.b16 %v804
        %v1930 = vunpack.c.h.b16 %v804
        %v1931 = vunpack.c.l.b16 %v805
        %v1932 = vunpack.c.h.b16 %v805
        %v1933 = vunpack.c.l.b16 %v806
        %v1934 = vunpack.c.h.b16 %v806
        %v1935 = vunpack.c.l.b16 %v807
        %v1936 = vunpack.c.h.b16 %v807
        %v1937 = vunpack.c.l.b16 %v808
        %v1938 = vunpack.c.h.b16 %v808
        %v1939 = vunpack.c.l.b16 %v809
        %v1940 = vunpack.c.h.b16 %v809
        %v1941 = vunpack.c.l.b16 %v810
        %v1942 = vunpack.c.h.b16 %v810
        %v1943 = vunpack.c.l.b16 %v811
        %v1944 = vunpack.c.h.b16 %v811
        %v1945 = vunpack.c.l.b16 %v812
        %v1946 = vunpack.c.h.b16 %v812
        %v1947 = vunpack.c.l.b16 %v813
        %v1948 = vunpack.c.h.b16 %v813
        %v1949 = vunpack.c.l.b16 %v814
        %v1950 = vunpack.c.h.b16 %v814
        %v1951 = vunpack.c.l.b16 %v815
        %v1952 = vunpack.c.h.b16 %v815
        %v1953 = vunpack.c.l.b16 %v816
        %v1954 = vunpack.c.h.b16 %v816
        %v1955 = vunpack.c.l.b16 %v817
        %v1956 = vunpack.c.h.b16 %v817
        %v1957 = vunpack.c.l.b16 %v818
        %v1958 = vunpack.c.h.b16 %v818
        %v1959 = vunpack.c.l.b16 %v819
        %v1960 = vunpack.c.h.b16 %v819
        %v1961 = vunpack.c.l.b16 %v820
        %v1962 = vunpack.c.h.b16 %v820
        %v1963 = vunpack.c.l.b16 %v821
        %v1964 = vunpack.c.h.b16 %v821
        %v1965 = vunpack.c.l.b16 %v822
        %v1966 = vunpack.c.h.b16 %v822
        %v1967 = vunpack.c.l.b16 %v823
        %v1968 = vunpack.c.h.b16 %v823
        %v1969 = vunpack.c.l.b16 %v824
        %v1970 = vunpack.c.h.b16 %v824
        %v1971 = vunpack.c.l.b16 %v825
        %v1972 = vunpack.c.h.b16 %v825
        %v1973 = vunpack.c.l.b16 %v826
        %v1974 = vunpack.c.h.b16 %v826
        %v1975 = vunpack.c.l.b16 %v827
        %v1976 = vunpack.c.h.b16 %v827
        %v1977 = vunpack.c.l.b16 %v828
        %v1978 = vunpack.c.h.b16 %v828
        %v1979 = vunpack.c.l.b16 %v829
        %v1980 = vunpack.c.h.b16 %v829
        %v1981 = vunpack.c.l.b16 %v830
        %v1982 = vunpack.c.h.b16 %v830
        %v1983 = vunpack.c.l.b16 %v831
        %v1984 = vunpack.c.h.b16 %v831
        %v1985 = vunpack.c.l.b16 %v832
        %v1986 = vunpack.c.h.b16 %v832
        %v1987 = vunpack.c.l.b16 %v833
        %v1988 = vunpack.c.h.b16 %v833
        %v1989 = vunpack.c.l.b16 %v834
        %v1990 = vunpack.c.h.b16 %v834
        %v1991 = vunpack.c.l.b16 %v835
        %v1992 = vunpack.c.h.b16 %v835
        %v1993 = vunpack.c.l.b16 %v836
        %v1994 = vunpack.c.h.b16 %v836
        %v1995 = vunpack.c.l.b16 %v837
        %v1996 = vunpack.c.h.b16 %v837
        %v1997 = vunpack.c.l.b16 %v838
        %v1998 = vunpack.c.h.b16 %v838
        %v1999 = vunpack.c.l.b16 %v839
        %v2000 = vunpack.c.h.b16 %v839
        %v2001 = vunpack.c.l.b16 %v840
        %v2002 = vunpack.c.h.b16 %v840
        %v2003 = vunpack.c.l.b16 %v841
        %v2004 = vunpack.c.h.b16 %v841
        %v2005 = vunpack.c.l.b16 %v842
        %v2006 = vunpack.c.h.b16 %v842
        %v2007 = vunpack.c.l.b16 %v843
        %v2008 = vunpack.c.h.b16 %v843
        %v2009 = vunpack.c.l.b16 %v844
        %v2010 = vunpack.c.h.b16 %v844
        %v2011 = vunpack.c.l.b16 %v845
        %v2012 = vunpack.c.h.b16 %v845
        %v2013 = vunpack.c.l.b16 %v846
        %v2014 = vunpack.c.h.b16 %v846
        %v2015 = vunpack.c.l.b16 %v847
        %v2016 = vunpack.c.h.b16 %v847
        %v2017 = vunpack.c.l.b16 %v848
        %v2018 = vunpack.c.h.b16 %v848
        %v2019 = vunpack.c.l.b16 %v849
        %v2020 = vunpack.c.h.b16 %v849
        %v2021 = vunpack.c.l.b16 %v850
        %v2022 = vunpack.c.h.b16 %v850
        %v2023 = vunpack.c.l.b16 %v851
        %v2024 = vunpack.c.h.b16 %v851
        %v2025 = vunpack.c.l.b16 %v852
        %v2026 = vunpack.c.h.b16 %v852
        %v2027 = vunpack.c.l.b16 %v853
        %v2028 = vunpack.c.h.b16 %v853
        %v2029 = vunpack.c.l.b16 %v854
        %v2030 = vunpack.c.h.b16 %v854
        %v2031 = vunpack.c.l.b16 %v855
        %v2032 = vunpack.c.h.b16 %v855
        %v2033 = vunpack.c.l.b16 %v856
        %v2034 = vunpack.c.h.b16 %v856
        %v2035 = vunpack.c.l.b16 %v857
        %v2036 = vunpack.c.h.b16 %v857
        %v2037 = vunpack.c.l.b16 %v858
        %v2038 = vunpack.c.h.b16 %v858
        %v2039 = vunpack.c.l.b16 %v859
        %v2040 = vunpack.c.h.b16 %v859
        %v2041 = vunpack.c.l.b16 %v860
        %v2042 = vunpack.c.h.b16 %v860
        %v2043 = vunpack.c.l.b16 %v861
        %v2044 = vunpack.c.h.b16 %v861
        %v2045 = vunpack.c.l.b16 %v862
        %v2046 = vunpack.c.h.b16 %v862
        %v2047 = vunpack.c.l.b16 %v863
        %v2048 = vunpack.c.h.b16 %v863
        %v2049 = vunpack.c.l.b16 %v864
        %v2050 = vunpack.c.h.b16 %v864
        %v2051 = vunpack.c.l.b16 %v865
        %v2052 = vunpack.c.h.b16 %v865
        %v2053 = vunpack.c.l.b16 %v866
        %v2054 = vunpack.c.h.b16 %v866
        %v2055 = vunpack.c.l.b16 %v867
        %v2056 = vunpack.c.h.b16 %v867
        %v2057 = vunpack.c.l.b16 %v868
        %v2058 = vunpack.c.h.b16 %v868
        %v2059 = vunpack.c.l.b16 %v869
        %v2060 = vunpack.c.h.b16 %v869
        %v2061 = vunpack.c.l.b16 %v870
        %v2062 = vunpack.c.h.b16 %v870
        %v2063 = vunpack.c.l.b16 %v871
        %v2064 = vunpack.c.h.b16 %v871
        %v2065 = vunpack.c.l.b16 %v872
        %v2066 = vunpack.c.h.b16 %v872
        %v2067 = vunpack.c.l.b16 %v873
        %v2068 = vunpack.c.h.b16 %v873
        %v2069 = vunpack.c.l.b16 %v874
        %v2070 = vunpack.c.h.b16 %v874
        %v2071 = vunpack.c.l.b16 %v875
        %v2072 = vunpack.c.h.b16 %v875
        %v2073 = vunpack.c.l.b16 %v876
        %v2074 = vunpack.c.h.b16 %v876
        %v2075 = vunpack.c.l.b16 %v877
        %v2076 = vunpack.c.h.b16 %v877
        %v2077 = vunpack.c.l.b16 %v878
        %v2078 = vunpack.c.h.b16 %v878
        %v2079 = vunpack.c.l.b16 %v879
        %v2080 = vunpack.c.h.b16 %v879
        %v2081 = vunpack.c.l.b16 %v880
        %v2082 = vunpack.c.h.b16 %v880
        %v2083 = vunpack.c.l.b16 %v881
        %v2084 = vunpack.c.h.b16 %v881
        %v2085 = vunpack.c.l.b16 %v882
        %v2086 = vunpack.c.h.b16 %v882
        %v2087 = vunpack.c.l.b16 %v883
        %v2088 = vunpack.c.h.b16 %v883
        %v2089 = vunpack.c.l.b16 %v884
        %v2090 = vunpack.c.h.b16 %v884
        %v2091 = vunpack.c.l.b16 %v885
        %v2092 = vunpack.c.h.b16 %v885
        %v2093 = vunpack.c.l.b16 %v886
        %v2094 = vunpack.c.h.b16 %v886
        %v2095 = vunpack.c.l.b16 %v887
        %v2096 = vunpack.c.h.b16 %v887
        %v2097 = vunpack.c.l.b16 %v888
        %v2098 = vunpack.c.h.b16 %v888
        %v2099 = vunpack.c.l.b16 %v889
        %v2100 = vunpack.c.h.b16 %v889
        %v2101 = vunpack.c.l.b16 %v890
        %v2102 = vunpack.c.h.b16 %v890
        %v2103 = vunpack.c.l.b16 %v891
        %v2104 = vunpack.c.h.b16 %v891
        %v2105 = vunpack.c.l.b16 %v892
        %v2106 = vunpack.c.h.b16 %v892
        %v2107 = vunpack.c.l.b16 %v893
        %v2108 = vunpack.c.h.b16 %v893
        %v2109 = vunpack.c.l.b16 %v894
        %v2110 = vunpack.c.h.b16 %v894
        %v2111 = vpack.c.b16 %v1355, %v1343
        %v2112 = vpack.c.b16 %v1356, %v1344
        %v2113 = vpack.c.b16 %v1357, %v1345
        %v2114 = vpack.c.b16 %v1358, %v1346
        %v2115 = vpack.c.b16 %v1359, %v1347
        %v2116 = vpack.c.b16 %v1360, %v1348
        %v2117 = vpack.c.b16 %v1361, %v1349
        %v2118 = vpack.c.b16 %v1362, %v1350
        %v2119 = vpack.c.b16 %v1363, %v1351
        %v2120 = vpack.c.b16 %v1364, %v1352
        %v2121 = vpack.c.b16 %v1365, %v1353
        %v2122 = vpack.c.b16 %v1366, %v1354
        %v2123 = vpack.c.b16 %v1379, %v1367
        %v2124 = vpack.c.b16 %v1380, %v1368
        %v2125 = vpack.c.b16 %v1381, %v1369
        %v2126 = vpack.c.b16 %v1382, %v1370
        %v2127 = vpack.c.b16 %v1383, %v1371
        %v2128 = vpack.c.b16 %v1384, %v1372
        %v2129 = vpack.c.b16 %v1385, %v1373
        %v2130 = vpack.c.b16 %v1386, %v1374
        %v2131 = vpack.c.b16 %v1387, %v1375
        %v2132 = vpack.c.b16 %v1388, %v1376
        %v2133 = vpack.c.b16 %v1389, %v1377
        %v2134 = vpack.c.b16 %v1390, %v1378
        %v2135 = vpack.c.b16 %v1403, %v1391
        %v2136 = vpack.c.b16 %v1404, %v1392
        %v2137 = vpack.c.b16 %v1405, %v1393
        %v2138 = vpack.c.b16 %v1406, %v1394
        %v2139 = vpack.c.b16 %v1407, %v1395
        %v2140 = vpack.c.b16 %v1408, %v1396
        %v2141 = vpack.c.b16 %v1409, %v1397
        %v2142 = vpack.c.b16 %v1410, %v1398
        %v2143 = vpack.c.b16 %v1411, %v1399
        %v2144 = vpack.c.b16 %v1412, %v1400
        %v2145 = vpack.c.b16 %v1413, %v1401
        %v2146 = vpack.c.b16 %v1414, %v1402
        %v2147 = vpack.c.b16 %v1427, %v1415
        %v2148 = vpack.c.b16 %v1428, %v1416
        %v2149 = vpack.c.b16 %v1429, %v1417
        %v2150 = vpack.c.b16 %v1430, %v1418
        %v2151 = vpack.c.b16 %v1431, %v1419
        %v2152 = vpack.c.b16 %v1432, %v1420
        %v2153 = vpack.c.b16 %v1433, %v1421
        %v2154 = vpack.c.b16 %v1434, %v1422
        %v2155 = vpack.c.b16 %v1435, %v1423
        %v2156 = vpack.c.b16 %v1436, %v1424
        %v2157 = vpack.c.b16 %v1437, %v1425
        %v2158 = vpack.c.b16 %v1438, %v1426
        %v2159 = vpack.c.b16 %v1451, %v1439
        %v2160 = vpack.c.b16 %v1452, %v1440
        %v2161 = vpack.c.b16 %v1453, %v1441
        %v2162 = vpack.c.b16 %v1454, %v1442
        %v2163 = vpack.c.b16 %v1455, %v1443
        %v2164 = vpack.c.b16 %v1456, %v1444
        %v2165 = vpack.c.b16 %v1457, %v1445
        %v2166 = vpack.c.b16 %v1458, %v1446
        %v2167 = vpack.c.b16 %v1459, %v1447
        %v2168 = vpack.c.b16 %v1460, %v1448
        %v2169 = vpack.c.b16 %v1461, %v1449
        %v2170 = vpack.c.b16 %v1462, %v1450
        %v2171 = vpack.c.b16 %v1475, %v1463
        %v2172 = vpack.c.b16 %v1476, %v1464
        %v2173 = vpack.c.b16 %v1477, %v1465
        %v2174 = vpack.c.b16 %v1478, %v1466
        %v2175 = vpack.c.b16 %v1479, %v1467
        %v2176 = vpack.c.b16 %v1480, %v1468
        %v2177 = vpack.c.b16 %v1481, %v1469
        %v2178 = vpack.c.b16 %v1482, %v1470
        %v2179 = vpack.c.b16 %v1483, %v1471
        %v2180 = vpack.c.b16 %v1484, %v1472
        %v2181 = vpack.c.b16 %v1485, %v1473
        %v2182 = vpack.c.b16 %v1486, %v1474
        %v2183 = vpack.c.b16 %v1499, %v1487
        %v2184 = vpack.c.b16 %v1500, %v1488
        %v2185 = vpack.c.b16 %v1501, %v1489
        %v2186 = vpack.c.b16 %v1502, %v1490
        %v2187 = vpack.c.b16 %v1503, %v1491
        %v2188 = vpack.c.b16 %v1504, %v1492
        %v2189 = vpack.c.b16 %v1505, %v1493
        %v2190 = vpack.c.b16 %v1506, %v1494
        %v2191 = vpack.c.b16 %v1507, %v1495
        %v2192 = vpack.c.b16 %v1508, %v1496
        %v2193 = vpack.c.b16 %v1509, %v1497
        %v2194 = vpack.c.b16 %v1510, %v1498
        %v2195 = vpack.c.b16 %v1523, %v1511
        %v2196 = vpack.c.b16 %v1524, %v1512
        %v2197 = vpack.c.b16 %v1525, %v1513
        %v2198 = vpack.c.b16 %v1526, %v1514
        %v2199 = vpack.c.b16 %v1527, %v1515
        %v2200 = vpack.c.b16 %v1528, %v1516
        %v2201 = vpack.c.b16 %v1529, %v1517
        %v2202 = vpack.c.b16 %v1530, %v1518
        %v2203 = vpack.c.b16 %v1531, %v1519
        %v2204 = vpack.c.b16 %v1532, %v1520
        %v2205 = vpack.c.b16 %v1533, %v1521
        %v2206 = vpack.c.b16 %v1534, %v1522
        %v2207 = vpack.c.b16 %v1547, %v1535
        %v2208 = vpack.c.b16 %v1548, %v1536
        %v2209 = vpack.c.b16 %v1549, %v1537
        %v2210 = vpack.c.b16 %v1550, %v1538
        %v2211 = vpack.c.b16 %v1551, %v1539
        %v2212 = vpack.c.b16 %v1552, %v1540
        %v2213 = vpack.c.b16 %v1553, %v1541
        %v2214 = vpack.c.b16 %v1554, %v1542
        %v2215 = vpack.c.b16 %v1555, %v1543
        %v2216 = vpack.c.b16 %v1556, %v1544
        %v2217 = vpack.c.b16 %v1557, %v1545
        %v2218 = vpack.c.b16 %v1558, %v1546
        %v2219 = vpack.c.b16 %v1571, %v1559
        %v2220 = vpack.c.b16 %v1572, %v1560
        %v2221 = vpack.c.b16 %v1573, %v1561
        %v2222 = vpack.c.b16 %v1574, %v1562
        %v2223 = vpack.c.b16 %v1575, %v1563
        %v2224 = vpack.c.b16 %v1576, %v1564
        %v2225 = vpack.c.b16 %v1577, %v1565
        %v2226 = vpack.c.b16 %v1578, %v1566
        %v2227 = vpack.c.b16 %v1579, %v1567
        %v2228 = vpack.c.b16 %v1580, %v1568
        %v2229 = vpack.c.b16 %v1581, %v1569
        %v2230 = vpack.c.b16 %v1582, %v1570
        %v2231 = vpack.c.b16 %v1595, %v1583
        %v2232 = vpack.c.b16 %v1596, %v1584
        %v2233 = vpack.c.b16 %v1597, %v1585
        %v2234 = vpack.c.b16 %v1598, %v1586
        %v2235 = vpack.c.b16 %v1599, %v1587
        %v2236 = vpack.c.b16 %v1600, %v1588
        %v2237 = vpack.c.b16 %v1601, %v1589
        %v2238 = vpack.c.b16 %v1602, %v1590
        %v2239 = vpack.c.b16 %v1603, %v1591
        %v2240 = vpack.c.b16 %v1604, %v1592
        %v2241 = vpack.c.b16 %v1605, %v1593
        %v2242 = vpack.c.b16 %v1606, %v1594
        %v2243 = vpack.c.b16 %v1619, %v1607
        %v2244 = vpack.c.b16 %v1620, %v1608
        %v2245 = vpack.c.b16 %v1621, %v1609
        %v2246 = vpack.c.b16 %v1622, %v1610
        %v2247 = vpack.c.b16 %v1623, %v1611
        %v2248 = vpack.c.b16 %v1624, %v1612
        %v2249 = vpack.c.b16 %v1625, %v1613
        %v2250 = vpack.c.b16 %v1626, %v1614
        %v2251 = vpack.c.b16 %v1627, %v1615
        %v2252 = vpack.c.b16 %v1628, %v1616
        %v2253 = vpack.c.b16 %v1629, %v1617
        %v2254 = vpack.c.b16 %v1630, %v1618
        %v2255 = vpack.c.b16 %v1643, %v1631
        %v2256 = vpack.c.b16 %v1644, %v1632
        %v2257 = vpack.c.b16 %v1645, %v1633
        %v2258 = vpack.c.b16 %v1646, %v1634
        %v2259 = vpack.c.b16 %v1647, %v1635
        %v2260 = vpack.c.b16 %v1648, %v1636
        %v2261 = vpack.c.b16 %v1649, %v1637
        %v2262 = vpack.c.b16 %v1650, %v1638
        %v2263 = vpack.c.b16 %v1651, %v1639
        %v2264 = vpack.c.b16 %v1652, %v1640
        %v2265 = vpack.c.b16 %v1653, %v1641
        %v2266 = vpack.c.b16 %v1654, %v1642
        %v2267 = vpack.c.b16 %v1667, %v1655
        %v2268 = vpack.c.b16 %v1668, %v1656
        %v2269 = vpack.c.b16 %v1669, %v1657
        %v2270 = vpack.c.b16 %v1670, %v1658
        %v2271 = vpack.c.b16 %v1671, %v1659
        %v2272 = vpack.c.b16 %v1672, %v1660
        %v2273 = vpack.c.b16 %v1673, %v1661
        %v2274 = vpack.c.b16 %v1674, %v1662
        %v2275 = vpack.c.b16 %v1675, %v1663
        %v2276 = vpack.c.b16 %v1676, %v1664
        %v2277 = vpack.c.b16 %v1677, %v1665
        %v2278 = vpack.c.b16 %v1678, %v1666
        %v2279 = vpack.c.b16 %v1691, %v1679
        %v2280 = vpack.c.b16 %v1692, %v1680
        %v2281 = vpack.c.b16 %v1693, %v1681
        %v2282 = vpack.c.b16 %v1694, %v1682
        %v2283 = vpack.c.b16 %v1695, %v1683
        %v2284 = vpack.c.b16 %v1696, %v1684
        %v2285 = vpack.c.b16 %v1697, %v1685
        %v2286 = vpack.c.b16 %v1698, %v1686
        %v2287 = vpack.c.b16 %v1699, %v1687
        %v2288 = vpack.c.b16 %v1700, %v1688
        %v2289 = vpack.c.b16 %v1701, %v1689
        %v2290 = vpack.c.b16 %v1702, %v1690
        %v2291 = vpack.c.b16 %v1715, %v1703
        %v2292 = vpack.c.b16 %v1716, %v1704
        %v2293 = vpack.c.b16 %v1717, %v1705
        %v2294 = vpack.c.b16 %v1718, %v1706
        %v2295 = vpack.c.b16 %v1719, %v1707
        %v2296 = vpack.c.b16 %v1720, %v1708
        %v2297 = vpack.c.b16 %v1721, %v1709
        %v2298 = vpack.c.b16 %v1722, %v1710
        %v2299 = vpack.c.b16 %v1723, %v1711
        %v2300 = vpack.c.b16 %v1724, %v1712
        %v2301 = vpack.c.b16 %v1725, %v1713
        %v2302 = vpack.c.b16 %v1726, %v1714
        %v2303 = vpack.c.b16 %v1739, %v1727
        %v2304 = vpack.c.b16 %v1740, %v1728
        %v2305 = vpack.c.b16 %v1741, %v1729
        %v2306 = vpack.c.b16 %v1742, %v1730
        %v2307 = vpack.c.b16 %v1743, %v1731
        %v2308 = vpack.c.b16 %v1744, %v1732
        %v2309 = vpack.c.b16 %v1745, %v1733
        %v2310 = vpack.c.b16 %v1746, %v1734
        %v2311 = vpack.c.b16 %v1747, %v1735
        %v2312 = vpack.c.b16 %v1748, %v1736
        %v2313 = vpack.c.b16 %v1749, %v1737
        %v2314 = vpack.c.b16 %v1750, %v1738
        %v2315 = vpack.c.b16 %v1763, %v1751
        %v2316 = vpack.c.b16 %v1764, %v1752
        %v2317 = vpack.c.b16 %v1765, %v1753
        %v2318 = vpack.c.b16 %v1766, %v1754
        %v2319 = vpack.c.b16 %v1767, %v1755
        %v2320 = vpack.c.b16 %v1768, %v1756
        %v2321 = vpack.c.b16 %v1769, %v1757
        %v2322 = vpack.c.b16 %v1770, %v1758
        %v2323 = vpack.c.b16 %v1771, %v1759
        %v2324 = vpack.c.b16 %v1772, %v1760
        %v2325 = vpack.c.b16 %v1773, %v1761
        %v2326 = vpack.c.b16 %v1774, %v1762
        %v2327 = vpack.c.b16 %v1787, %v1775
        %v2328 = vpack.c.b16 %v1788, %v1776
        %v2329 = vpack.c.b16 %v1789, %v1777
        %v2330 = vpack.c.b16 %v1790, %v1778
        %v2331 = vpack.c.b16 %v1791, %v1779
        %v2332 = vpack.c.b16 %v1792, %v1780
        %v2333 = vpack.c.b16 %v1793, %v1781
        %v2334 = vpack.c.b16 %v1794, %v1782
        %v2335 = vpack.c.b16 %v1795, %v1783
        %v2336 = vpack.c.b16 %v1796, %v1784
        %v2337 = vpack.c.b16 %v1797, %v1785
        %v2338 = vpack.c.b16 %v1798, %v1786
        %v2339 = vpack.c.b16 %v1811, %v1799
        %v2340 = vpack.c.b16 %v1812, %v1800
        %v2341 = vpack.c.b16 %v1813, %v1801
        %v2342 = vpack.c.b16 %v1814, %v1802
        %v2343 = vpack.c.b16 %v1815, %v1803
        %v2344 = vpack.c.b16 %v1816, %v1804
        %v2345 = vpack.c.b16 %v1817, %v1805
        %v2346 = vpack.c.b16 %v1818, %v1806
        %v2347 = vpack.c.b16 %v1819, %v1807
        %v2348 = vpack.c.b16 %v1820, %v1808
        %v2349 = vpack.c.b16 %v1821, %v1809
        %v2350 = vpack.c.b16 %v1822, %v1810
        %v2351 = vpack.c.b16 %v1835, %v1823
        %v2352 = vpack.c.b16 %v1836, %v1824
        %v2353 = vpack.c.b16 %v1837, %v1825
        %v2354 = vpack.c.b16 %v1838, %v1826
        %v2355 = vpack.c.b16 %v1839, %v1827
        %v2356 = vpack.c.b16 %v1840, %v1828
        %v2357 = vpack.c.b16 %v1841, %v1829
        %v2358 = vpack.c.b16 %v1842, %v1830
        %v2359 = vpack.c.b16 %v1843, %v1831
        %v2360 = vpack.c.b16 %v1844, %v1832
        %v2361 = vpack.c.b16 %v1845, %v1833
        %v2362 = vpack.c.b16 %v1846, %v1834
        %v2363 = vpack.c.b16 %v1859, %v1847
        %v2364 = vpack.c.b16 %v1860, %v1848
        %v2365 = vpack.c.b16 %v1861, %v1849
        %v2366 = vpack.c.b16 %v1862, %v1850
        %v2367 = vpack.c.b16 %v1863, %v1851
        %v2368 = vpack.c.b16 %v1864, %v1852
        %v2369 = vpack.c.b16 %v1865, %v1853
        %v2370 = vpack.c.b16 %v1866, %v1854
        %v2371 = vpack.c.b16 %v1867, %v1855
        %v2372 = vpack.c.b16 %v1868, %v1856
        %v2373 = vpack.c.b16 %v1869, %v1857
        %v2374 = vpack.c.b16 %v1870, %v1858
        %v2375 = vpack.c.b16 %v1883, %v1871
        %v2376 = vpack.c.b16 %v1884, %v1872
        %v2377 = vpack.c.b16 %v1885, %v1873
        %v2378 = vpack.c.b16 %v1886, %v1874
        %v2379 = vpack.c.b16 %v1887, %v1875
        %v2380 = vpack.c.b16 %v1888, %v1876
        %v2381 = vpack.c.b16 %v1889, %v1877
        %v2382 = vpack.c.b16 %v1890, %v1878
        %v2383 = vpack.c.b16 %v1891, %v1879
        %v2384 = vpack.c.b16 %v1892, %v1880
        %v2385 = vpack.c.b16 %v1893, %v1881
        %v2386 = vpack.c.b16 %v1894, %v1882
        %v2387 = vpack.c.b16 %v1907, %v1895
        %v2388 = vpack.c.b16 %v1908, %v1896
        %v2389 = vpack.c.b16 %v1909, %v1897
        %v2390 = vpack.c.b16 %v1910, %v1898
        %v2391 = vpack.c.b16 %v1911, %v1899
        %v2392 = vpack.c.b16 %v1912, %v1900
        %v2393 = vpack.c.b16 %v1913, %v1901
        %v2394 = vpack.c.b16 %v1914, %v1902
        %v2395 = vpack.c.b16 %v1915, %v1903
        %v2396 = vpack.c.b16 %v1916, %v1904
        %v2397 = vpack.c.b16 %v1917, %v1905
        %v2398 = vpack.c.b16 %v1918, %v1906
        %v2399 = vpack.c.b16 %v1931, %v1919
        %v2400 = vpack.c.b16 %v1932, %v1920
        %v2401 = vpack.c.b16 %v1933, %v1921
        %v2402 = vpack.c.b16 %v1934, %v1922
        %v2403 = vpack.c.b16 %v1935, %v1923
        %v2404 = vpack.c.b16 %v1936, %v1924
        %v2405 = vpack.c.b16 %v1937, %v1925
        %v2406 = vpack.c.b16 %v1938, %v1926
        %v2407 = vpack.c.b16 %v1939, %v1927
        %v2408 = vpack.c.b16 %v1940, %v1928
        %v2409 = vpack.c.b16 %v1941, %v1929
        %v2410 = vpack.c.b16 %v1942, %v1930
        %v2411 = vpack.c.b16 %v1955, %v1943
        %v2412 = vpack.c.b16 %v1956, %v1944
        %v2413 = vpack.c.b16 %v1957, %v1945
        %v2414 = vpack.c.b16 %v1958, %v1946
        %v2415 = vpack.c.b16 %v1959, %v1947
        %v2416 = vpack.c.b16 %v1960, %v1948
        %v2417 = vpack.c.b16 %v1961, %v1949
        %v2418 = vpack.c.b16 %v1962, %v1950
        %v2419 = vpack.c.b16 %v1963, %v1951
        %v2420 = vpack.c.b16 %v1964, %v1952
        %v2421 = vpack.c.b16 %v1965, %v1953
        %v2422 = vpack.c.b16 %v1966, %v1954
        %v2423 = vpack.c.b16 %v1979, %v1967
        %v2424 = vpack.c.b16 %v1980, %v1968
        %v2425 = vpack.c.b16 %v1981, %v1969
        %v2426 = vpack.c.b16 %v1982, %v1970
        %v2427 = vpack.c.b16 %v1983, %v1971
        %v2428 = vpack.c.b16 %v1984, %v1972
        %v2429 = vpack.c.b16 %v1985, %v1973
        %v2430 = vpack.c.b16 %v1986, %v1974
        %v2431 = vpack.c.b16 %v1987, %v1975
        %v2432 = vpack.c.b16 %v1988, %v1976
        %v2433 = vpack.c.b16 %v1989, %v1977
        %v2434 = vpack.c.b16 %v1990, %v1978
        %v2435 = vpack.c.b16 %v2003, %v1991
        %v2436 = vpack.c.b16 %v2004, %v1992
        %v2437 = vpack.c.b16 %v2005, %v1993
        %v2438 = vpack.c.b16 %v2006, %v1994
        %v2439 = vpack.c.b16 %v2007, %v1995
        %v2440 = vpack.c.b16 %v2008, %v1996
        %v2441 = vpack.c.b16 %v2009, %v1997
        %v2442 = vpack.c.b16 %v2010, %v1998
        %v2443 = vpack.c.b16 %v2011, %v1999
        %v2444 = vpack.c.b16 %v2012, %v2000
        %v2445 = vpack.c.b16 %v2013, %v2001
        %v2446 = vpack.c.b16 %v2014, %v2002
        %v2447 = vpack.c.b16 %v2027, %v2015
        %v2448 = vpack.c.b16 %v2028, %v2016
        %v2449 = vpack.c.b16 %v2029, %v2017
        %v2450 = vpack.c.b16 %v2030, %v2018
        %v2451 = vpack.c.b16 %v2031, %v2019
        %v2452 = vpack.c.b16 %v2032, %v2020
        %v2453 = vpack.c.b16 %v2033, %v2021
        %v2454 = vpack.c.b16 %v2034, %v2022
        %v2455 = vpack.c.b16 %v2035, %v2023
        %v2456 = vpack.c.b16 %v2036, %v2024
        %v2457 = vpack.c.b16 %v2037, %v2025
        %v2458 = vpack.c.b16 %v2038, %v2026
        %v2459 = vpack.c.b16 %v2051, %v2039
        %v2460 = vpack.c.b16 %v2052, %v2040
        %v2461 = vpack.c.b16 %v2053, %v2041
        %v2462 = vpack.c.b16 %v2054, %v2042
        %v2463 = vpack.c.b16 %v2055, %v2043
        %v2464 = vpack.c.b16 %v2056, %v2044
        %v2465 = vpack.c.b16 %v2057, %v2045
        %v2466 = vpack.c.b16 %v2058, %v2046
        %v2467 = vpack.c.b16 %v2059, %v2047
        %v2468 = vpack.c.b16 %v2060, %v2048
        %v2469 = vpack.c.b16 %v2061, %v2049
        %v2470 = vpack.c.b16 %v2062, %v2050
        %v2471 = vpack.c.b16 %v2075, %v2063
        %v2472 = vpack.c.b16 %v2076, %v2064
        %v2473 = vpack.c.b16 %v2077, %v2065
        %v2474 = vpack.c.b16 %v2078, %v2066
        %v2475 = vpack.c.b16 %v2079, %v2067
        %v2476 = vpack.c.b16 %v2080, %v2068
        %v2477 = vpack.c.b16 %v2081, %v2069
        %v2478 = vpack.c.b16 %v2082, %v2070
        %v2479 = vpack.c.b16 %v2083, %v2071
        %v2480 = vpack.c.b16 %v2084, %v2072
        %v2481 = vpack.c.b16 %v2085, %v2073
        %v2482 = vpack.c.b16 %v2086, %v2074
        %v2483 = vpack.c.b16 %v2099, %v2087
        %v2484 = vpack.c.b16 %v2100, %v2088
        %v2485 = vpack.c.b16 %v2101, %v2089
        %v2486 = vpack.c.b16 %v2102, %v2090
        %v2487 = vpack.c.b16 %v2103, %v2091
        %v2488 = vpack.c.b16 %v2104, %v2092
        %v2489 = vpack.c.b16 %v2105, %v2093
        %v2490 = vpack.c.b16 %v2106, %v2094
        %v2491 = vpack.c.b16 %v2107, %v2095
        %v2492 = vpack.c.b16 %v2108, %v2096
        %v2493 = vpack.c.b16 %v2109, %v2097
        %v2494 = vpack.c.b16 %v2110, %v2098
        %2879 = vmatprep.subr.bf16.mxu0 %v2112
        %2880 = vmatpush1.bf16.msra.mxu0 %v2111
        %2881 = vmatprep.subr.bf16.mxu0 %v2124
        %2882 = vmatpush1.bf16.msra.mxu0 %v2123
        %2883 = vmatprep.subr.bf16.mxu0 %v2136
        %2884 = vmatpush1.bf16.msra.mxu0 %v2135
        %2885 = vmatprep.subr.bf16.mxu0 %v2148
        %2886 = vmatpush1.bf16.msra.mxu0 %v2147
        %2887 = vmatprep.subr.bf16.mxu0 %v2160
        %2888 = vmatpush1.bf16.msra.mxu0 %v2159
        %2889 = vmatprep.subr.bf16.mxu0 %v2172
        %2890 = vmatpush1.bf16.msra.mxu0 %v2171
        %2891 = vmatprep.subr.bf16.mxu0 %v2184
        %2892 = vmatpush1.bf16.msra.mxu0 %v2183
        %2893 = vmatprep.subr.bf16.mxu0 %v2196
        %2894 = vmatpush1.bf16.msra.mxu0 %v2195
        %2895 = vmatprep.subr.bf16.mxu0 %v2208
        %2896 = vmatpush1.bf16.msra.mxu0 %v2207
        %2897 = vmatprep.subr.bf16.mxu0 %v2220
        %2898 = vmatpush1.bf16.msra.mxu0 %v2219
        %2899 = vmatprep.subr.bf16.mxu0 %v2232
        %2900 = vmatpush1.bf16.msra.mxu0 %v2231
        %2901 = vmatprep.subr.bf16.mxu0 %v2244
        %2902 = vmatpush1.bf16.msra.mxu0 %v2243
        %2903 = vmatprep.subr.bf16.mxu0 %v2256
        %2904 = vmatpush1.bf16.msra.mxu0 %v2255
        %2905 = vmatprep.subr.bf16.mxu0 %v2268
        %2906 = vmatpush1.bf16.msra.mxu0 %v2267
        %2907 = vmatprep.subr.bf16.mxu0 %v2280
        %2908 = vmatpush1.bf16.msra.mxu0 %v2279
        %2909 = vmatprep.subr.bf16.mxu0 %v2292
        %2910 = vmatpush1.bf16.msra.mxu0 %v2291
        %2911 = vmatprep.mubr.bf16.mxu0 %v508
        %2912 = vmatmul.mubr.bf16.gmra.mrb[0].mxu0 %v507
        %v2913 = vpop.f32.mrb[0].mxu0
        %v2914 = vadd.f32 %v902, %v2913
        %v2915 = vpop.f32.mrb[0].mxu0
        %v2916 = vadd.f32 %v906, %v2915
        %v2917 = vpop.f32.mrb[0].mxu0
        %v2918 = vpop.f32.mrb[0].mxu0
        %2919 = vdwg.mxu0
        %2920 = vmatprep.subr.bf16.mxu0 %v2304
        %2921 = vmatpush1.bf16.msra.mxu0 %v2303
        %2922 = vmatprep.subr.bf16.mxu0 %v2316
        %2923 = vmatpush1.bf16.msra.mxu0 %v2315
        %2924 = vmatprep.subr.bf16.mxu0 %v2328
        %2925 = vmatpush1.bf16.msra.mxu0 %v2327
        %2926 = vmatprep.subr.bf16.mxu0 %v2340
        %2927 = vmatpush1.bf16.msra.mxu0 %v2339
        %2928 = vmatprep.subr.bf16.mxu0 %v2352
        %2929 = vmatpush1.bf16.msra.mxu0 %v2351
        %2930 = vmatprep.subr.bf16.mxu0 %v2364
        %2931 = vmatpush1.bf16.msra.mxu0 %v2363
        %2932 = vmatprep.subr.bf16.mxu0 %v2376
        %2933 = vmatpush1.bf16.msra.mxu0 %v2375
        %2934 = vmatprep.subr.bf16.mxu0 %v2388
        %2935 = vmatpush1.bf16.msra.mxu0 %v2387
        %2936 = vmatprep.subr.bf16.mxu0 %v2400
        %2937 = vmatpush1.bf16.msra.mxu0 %v2399
        %2938 = vmatprep.subr.bf16.mxu0 %v2412
        %2939 = vmatpush1.bf16.msra.mxu0 %v2411
        %2940 = vmatprep.subr.bf16.mxu0 %v2424
        %2941 = vmatpush1.bf16.msra.mxu0 %v2423
        %2942 = vmatprep.subr.bf16.mxu0 %v2436
        %2943 = vmatpush1.bf16.msra.mxu0 %v2435
        %2944 = vmatprep.subr.bf16.mxu0 %v2448
        %2945 = vmatpush1.bf16.msra.mxu0 %v2447
        %2946 = vmatprep.subr.bf16.mxu0 %v2460
        %2947 = vmatpush1.bf16.msra.mxu0 %v2459
        %2948 = vmatprep.subr.bf16.mxu0 %v2472
        %2949 = vmatpush1.bf16.msra.mxu0 %v2471
        %2950 = vmatprep.subr.bf16.mxu0 %v2484
        %2951 = vmatpush1.bf16.msra.mxu0 %v2483
        %2952 = vmatprep.mubr.bf16.mxu0 %v510
        %2953 = vmatmul.mubr.bf16.gmra.mrb[0].mxu0 %v509
        %v2954 = vpop.f32.mrb[0].mxu0
        %v2955 = vadd.f32 %v2914, %v2954
        %v2956 = vpop.f32.mrb[0].mxu0
        %v2957 = vadd.f32 %v2916, %v2956
        %v2958 = vpop.f32.mrb[0].mxu0
        %v2959 = vpop.f32.mrb[0].mxu0
        %2960 = vdwg.mxu0
        %2961 = vmatprep.subr.bf16.mxu0 %v2114
        %2962 = vmatpush1.bf16.msra.mxu0 %v2113
        %2963 = vmatprep.subr.bf16.mxu0 %v2126
        %2964 = vmatpush1.bf16.msra.mxu0 %v2125
        %2965 = vmatprep.subr.bf16.mxu0 %v2138
        %2966 = vmatpush1.bf16.msra.mxu0 %v2137
        %2967 = vmatprep.subr.bf16.mxu0 %v2150
        %2968 = vmatpush1.bf16.msra.mxu0 %v2149
        %2969 = vmatprep.subr.bf16.mxu0 %v2162
        %2970 = vmatpush1.bf16.msra.mxu0 %v2161
        %2971 = vmatprep.subr.bf16.mxu0 %v2174
        %2972 = vmatpush1.bf16.msra.mxu0 %v2173
        %2973 = vmatprep.subr.bf16.mxu0 %v2186
        %2974 = vmatpush1.bf16.msra.mxu0 %v2185
        %2975 = vmatprep.subr.bf16.mxu0 %v2198
        %2976 = vmatpush1.bf16.msra.mxu0 %v2197
        %2977 = vmatprep.subr.bf16.mxu0 %v2210
        %2978 = vmatpush1.bf16.msra.mxu0 %v2209
        %2979 = vmatprep.subr.bf16.mxu0 %v2222
        %2980 = vmatpush1.bf16.msra.mxu0 %v2221
        %2981 = vmatprep.subr.bf16.mxu0 %v2234
        %2982 = vmatpush1.bf16.msra.mxu0 %v2233
        %2983 = vmatprep.subr.bf16.mxu0 %v2246
        %2984 = vmatpush1.bf16.msra.mxu0 %v2245
        %2985 = vmatprep.subr.bf16.mxu0 %v2258
        %2986 = vmatpush1.bf16.msra.mxu0 %v2257
        %2987 = vmatprep.subr.bf16.mxu0 %v2270
        %2988 = vmatpush1.bf16.msra.mxu0 %v2269
        %2989 = vmatprep.subr.bf16.mxu0 %v2282
        %2990 = vmatpush1.bf16.msra.mxu0 %v2281
        %2991 = vmatprep.subr.bf16.mxu0 %v2294
        %2992 = vmatpush1.bf16.msra.mxu0 %v2293
        %2993 = vmatprep.mubr.bf16.mxu0 %v508
        %2994 = vmatmul.mubr.bf16.gmra.mrb[0].mxu0 %v507
        %v2995 = vpop.f32.mrb[0].mxu0
        %v2996 = vadd.f32 %v910, %v2995
        %v2997 = vpop.f32.mrb[0].mxu0
        %v2998 = vadd.f32 %v914, %v2997
        %v2999 = vpop.f32.mrb[0].mxu0
        %v3000 = vpop.f32.mrb[0].mxu0
        %3001 = vdwg.mxu0
        %3002 = vmatprep.subr.bf16.mxu0 %v2306
        %3003 = vmatpush1.bf16.msra.mxu0 %v2305
        %3004 = vmatprep.subr.bf16.mxu0 %v2318
        %3005 = vmatpush1.bf16.msra.mxu0 %v2317
        %3006 = vmatprep.subr.bf16.mxu0 %v2330
        %3007 = vmatpush1.bf16.msra.mxu0 %v2329
        %3008 = vmatprep.subr.bf16.mxu0 %v2342
        %3009 = vmatpush1.bf16.msra.mxu0 %v2341
        %3010 = vmatprep.subr.bf16.mxu0 %v2354
        %3011 = vmatpush1.bf16.msra.mxu0 %v2353
        %3012 = vmatprep.subr.bf16.mxu0 %v2366
        %3013 = vmatpush1.bf16.msra.mxu0 %v2365
        %3014 = vmatprep.subr.bf16.mxu0 %v2378
        %3015 = vmatpush1.bf16.msra.mxu0 %v2377
        %3016 = vmatprep.subr.bf16.mxu0 %v2390
        %3017 = vmatpush1.bf16.msra.mxu0 %v2389
        %3018 = vmatprep.subr.bf16.mxu0 %v2402
        %3019 = vmatpush1.bf16.msra.mxu0 %v2401
        %3020 = vmatprep.subr.bf16.mxu0 %v2414
        %3021 = vmatpush1.bf16.msra.mxu0 %v2413
        %3022 = vmatprep.subr.bf16.mxu0 %v2426
        %3023 = vmatpush1.bf16.msra.mxu0 %v2425
        %3024 = vmatprep.subr.bf16.mxu0 %v2438
        %3025 = vmatpush1.bf16.msra.mxu0 %v2437
        %3026 = vmatprep.subr.bf16.mxu0 %v2450
        %3027 = vmatpush1.bf16.msra.mxu0 %v2449
        %3028 = vmatprep.subr.bf16.mxu0 %v2462
        %3029 = vmatpush1.bf16.msra.mxu0 %v2461
        %3030 = vmatprep.subr.bf16.mxu0 %v2474
        %3031 = vmatpush1.bf16.msra.mxu0 %v2473
        %3032 = vmatprep.subr.bf16.mxu0 %v2486
        %3033 = vmatpush1.bf16.msra.mxu0 %v2485
        %3034 = vmatprep.mubr.bf16.mxu0 %v510
        %3035 = vmatmul.mubr.bf16.gmra.mrb[0].mxu0 %v509
        %v3036 = vpop.f32.mrb[0].mxu0
        %v3037 = vadd.f32 %v2996, %v3036
        %v3038 = vpop.f32.mrb[0].mxu0
        %v3039 = vadd.f32 %v2998, %v3038
        %v3040 = vpop.f32.mrb[0].mxu0
        %v3041 = vpop.f32.mrb[0].mxu0
        %3042 = vdwg.mxu0
        %3043 = vmatprep.subr.bf16.mxu0 %v2116
        %3044 = vmatpush1.bf16.msra.mxu0 %v2115
        %3045 = vmatprep.subr.bf16.mxu0 %v2128
        %3046 = vmatpush1.bf16.msra.mxu0 %v2127
        %3047 = vmatprep.subr.bf16.mxu0 %v2140
        %3048 = vmatpush1.bf16.msra.mxu0 %v2139
        %3049 = vmatprep.subr.bf16.mxu0 %v2152
        %3050 = vmatpush1.bf16.msra.mxu0 %v2151
        %3051 = vmatprep.subr.bf16.mxu0 %v2164
        %3052 = vmatpush1.bf16.msra.mxu0 %v2163
        %3053 = vmatprep.subr.bf16.mxu0 %v2176
        %3054 = vmatpush1.bf16.msra.mxu0 %v2175
        %3055 = vmatprep.subr.bf16.mxu0 %v2188
        %3056 = vmatpush1.bf16.msra.mxu0 %v2187
        %3057 = vmatprep.subr.bf16.mxu0 %v2200
        %3058 = vmatpush1.bf16.msra.mxu0 %v2199
        %3059 = vmatprep.subr.bf16.mxu0 %v2212
        %3060 = vmatpush1.bf16.msra.mxu0 %v2211
        %3061 = vmatprep.subr.bf16.mxu0 %v2224
        %3062 = vmatpush1.bf16.msra.mxu0 %v2223
        %3063 = vmatprep.subr.bf16.mxu0 %v2236
        %3064 = vmatpush1.bf16.msra.mxu0 %v2235
        %3065 = vmatprep.subr.bf16.mxu0 %v2248
        %3066 = vmatpush1.bf16.msra.mxu0 %v2247
        %3067 = vmatprep.subr.bf16.mxu0 %v2260
        %3068 = vmatpush1.bf16.msra.mxu0 %v2259
        %3069 = vmatprep.subr.bf16.mxu0 %v2272
        %3070 = vmatpush1.bf16.msra.mxu0 %v2271
        %3071 = vmatprep.subr.bf16.mxu0 %v2284
        %3072 = vmatpush1.bf16.msra.mxu0 %v2283
        %3073 = vmatprep.subr.bf16.mxu0 %v2296
        %3074 = vmatpush1.bf16.msra.mxu0 %v2295
        %3075 = vmatprep.mubr.bf16.mxu0 %v508
        %3076 = vmatmul.mubr.bf16.gmra.mrb[0].mxu0 %v507
        %v3077 = vpop.f32.mrb[0].mxu0
        %v3078 = vadd.f32 %v918, %v3077
        %v3079 = vpop.f32.mrb[0].mxu0
        %v3080 = vadd.f32 %v922, %v3079
        %v3081 = vpop.f32.mrb[0].mxu0
        %v3082 = vpop.f32.mrb[0].mxu0
        %3083 = vdwg.mxu0
        %3084 = vmatprep.subr.bf16.mxu0 %v2308
        %3085 = vmatpush1.bf16.msra.mxu0 %v2307
        %3086 = vmatprep.subr.bf16.mxu0 %v2320
        %3087 = vmatpush1.bf16.msra.mxu0 %v2319
        %3088 = vmatprep.subr.bf16.mxu0 %v2332
        %3089 = vmatpush1.bf16.msra.mxu0 %v2331
        %3090 = vmatprep.subr.bf16.mxu0 %v2344
        %3091 = vmatpush1.bf16.msra.mxu0 %v2343
        %3092 = vmatprep.subr.bf16.mxu0 %v2356
        %3093 = vmatpush1.bf16.msra.mxu0 %v2355
        %3094 = vmatprep.subr.bf16.mxu0 %v2368
        %3095 = vmatpush1.bf16.msra.mxu0 %v2367
        %3096 = vmatprep.subr.bf16.mxu0 %v2380
        %3097 = vmatpush1.bf16.msra.mxu0 %v2379
        %3098 = vmatprep.subr.bf16.mxu0 %v2392
        %3099 = vmatpush1.bf16.msra.mxu0 %v2391
        %3100 = vmatprep.subr.bf16.mxu0 %v2404
        %3101 = vmatpush1.bf16.msra.mxu0 %v2403
        %3102 = vmatprep.subr.bf16.mxu0 %v2416
        %3103 = vmatpush1.bf16.msra.mxu0 %v2415
        %3104 = vmatprep.subr.bf16.mxu0 %v2428
        %3105 = vmatpush1.bf16.msra.mxu0 %v2427
        %3106 = vmatprep.subr.bf16.mxu0 %v2440
        %3107 = vmatpush1.bf16.msra.mxu0 %v2439
        %3108 = vmatprep.subr.bf16.mxu0 %v2452
        %3109 = vmatpush1.bf16.msra.mxu0 %v2451
        %3110 = vmatprep.subr.bf16.mxu0 %v2464
        %3111 = vmatpush1.bf16.msra.mxu0 %v2463
        %3112 = vmatprep.subr.bf16.mxu0 %v2476
        %3113 = vmatpush1.bf16.msra.mxu0 %v2475
        %3114 = vmatprep.subr.bf16.mxu0 %v2488
        %3115 = vmatpush1.bf16.msra.mxu0 %v2487
        %3116 = vmatprep.mubr.bf16.mxu0 %v510
        %3117 = vmatmul.mubr.bf16.gmra.mrb[0].mxu0 %v509
        %v3118 = vpop.f32.mrb[0].mxu0
        %v3119 = vadd.f32 %v3078, %v3118
        %v3120 = vpop.f32.mrb[0].mxu0
        %v3121 = vadd.f32 %v3080, %v3120
        %v3122 = vpop.f32.mrb[0].mxu0
        %v3123 = vpop.f32.mrb[0].mxu0
        %3124 = vdwg.mxu0
        %3125 = vmatprep.subr.bf16.mxu0 %v2118
        %3126 = vmatpush1.bf16.msra.mxu0 %v2117
        %3127 = vmatprep.subr.bf16.mxu0 %v2130
        %3128 = vmatpush1.bf16.msra.mxu0 %v2129
        %3129 = vmatprep.subr.bf16.mxu0 %v2142
        %3130 = vmatpush1.bf16.msra.mxu0 %v2141
        %3131 = vmatprep.subr.bf16.mxu0 %v2154
        %3132 = vmatpush1.bf16.msra.mxu0 %v2153
        %3133 = vmatprep.subr.bf16.mxu0 %v2166
        %3134 = vmatpush1.bf16.msra.mxu0 %v2165
        %3135 = vmatprep.subr.bf16.mxu0 %v2178
        %3136 = vmatpush1.bf16.msra.mxu0 %v2177
        %3137 = vmatprep.subr.bf16.mxu0 %v2190
        %3138 = vmatpush1.bf16.msra.mxu0 %v2189
        %3139 = vmatprep.subr.bf16.mxu0 %v2202
        %3140 = vmatpush1.bf16.msra.mxu0 %v2201
        %3141 = vmatprep.subr.bf16.mxu0 %v2214
        %3142 = vmatpush1.bf16.msra.mxu0 %v2213
        %3143 = vmatprep.subr.bf16.mxu0 %v2226
        %3144 = vmatpush1.bf16.msra.mxu0 %v2225
        %3145 = vmatprep.subr.bf16.mxu0 %v2238
        %3146 = vmatpush1.bf16.msra.mxu0 %v2237
        %3147 = vmatprep.subr.bf16.mxu0 %v2250
        %3148 = vmatpush1.bf16.msra.mxu0 %v2249
        %3149 = vmatprep.subr.bf16.mxu0 %v2262
        %3150 = vmatpush1.bf16.msra.mxu0 %v2261
        %3151 = vmatprep.subr.bf16.mxu0 %v2274
        %3152 = vmatpush1.bf16.msra.mxu0 %v2273
        %3153 = vmatprep.subr.bf16.mxu0 %v2286
        %3154 = vmatpush1.bf16.msra.mxu0 %v2285
        %3155 = vmatprep.subr.bf16.mxu0 %v2298
        %3156 = vmatpush1.bf16.msra.mxu0 %v2297
        %3157 = vmatprep.mubr.bf16.mxu0 %v508
        %3158 = vmatmul.mubr.bf16.gmra.mrb[0].mxu0 %v507
        %v3159 = vpop.f32.mrb[0].mxu0
        %v3160 = vadd.f32 %v926, %v3159
        %v3161 = vpop.f32.mrb[0].mxu0
        %v3162 = vadd.f32 %v930, %v3161
        %v3163 = vpop.f32.mrb[0].mxu0
        %v3164 = vpop.f32.mrb[0].mxu0
        %3165 = vdwg.mxu0
        %3166 = vmatprep.subr.bf16.mxu0 %v2310
        %3167 = vmatpush1.bf16.msra.mxu0 %v2309
        %3168 = vmatprep.subr.bf16.mxu0 %v2322
        %3169 = vmatpush1.bf16.msra.mxu0 %v2321
        %3170 = vmatprep.subr.bf16.mxu0 %v2334
        %3171 = vmatpush1.bf16.msra.mxu0 %v2333
        %3172 = vmatprep.subr.bf16.mxu0 %v2346
        %3173 = vmatpush1.bf16.msra.mxu0 %v2345
        %3174 = vmatprep.subr.bf16.mxu0 %v2358
        %3175 = vmatpush1.bf16.msra.mxu0 %v2357
        %3176 = vmatprep.subr.bf16.mxu0 %v2370
        %3177 = vmatpush1.bf16.msra.mxu0 %v2369
        %3178 = vmatprep.subr.bf16.mxu0 %v2382
        %3179 = vmatpush1.bf16.msra.mxu0 %v2381
        %3180 = vmatprep.subr.bf16.mxu0 %v2394
        %3181 = vmatpush1.bf16.msra.mxu0 %v2393
        %3182 = vmatprep.subr.bf16.mxu0 %v2406
        %3183 = vmatpush1.bf16.msra.mxu0 %v2405
        %3184 = vmatprep.subr.bf16.mxu0 %v2418
        %3185 = vmatpush1.bf16.msra.mxu0 %v2417
        %3186 = vmatprep.subr.bf16.mxu0 %v2430
        %3187 = vmatpush1.bf16.msra.mxu0 %v2429
        %3188 = vmatprep.subr.bf16.mxu0 %v2442
        %3189 = vmatpush1.bf16.msra.mxu0 %v2441
        %3190 = vmatprep.subr.bf16.mxu0 %v2454
        %3191 = vmatpush1.bf16.msra.mxu0 %v2453
        %3192 = vmatprep.subr.bf16.mxu0 %v2466
        %3193 = vmatpush1.bf16.msra.mxu0 %v2465
        %3194 = vmatprep.subr.bf16.mxu0 %v2478
        %3195 = vmatpush1.bf16.msra.mxu0 %v2477
        %3196 = vmatprep.subr.bf16.mxu0 %v2490
        %3197 = vmatpush1.bf16.msra.mxu0 %v2489
        %3198 = vmatprep.mubr.bf16.mxu0 %v510
        %3199 = vmatmul.mubr.bf16.gmra.mrb[0].mxu0 %v509
        %v3200 = vpop.f32.mrb[0].mxu0
        %v3201 = vadd.f32 %v3160, %v3200
        %v3202 = vpop.f32.mrb[0].mxu0
        %v3203 = vadd.f32 %v3162, %v3202
        %v3204 = vpop.f32.mrb[0].mxu0
        %v3205 = vpop.f32.mrb[0].mxu0
        %3206 = vdwg.mxu0
        %3207 = vmatprep.subr.bf16.mxu0 %v2120
        %3208 = vmatpush1.bf16.msra.mxu0 %v2119
        %3209 = vmatprep.subr.bf16.mxu0 %v2132
        %3210 = vmatpush1.bf16.msra.mxu0 %v2131
        %3211 = vmatprep.subr.bf16.mxu0 %v2144
        %3212 = vmatpush1.bf16.msra.mxu0 %v2143
        %3213 = vmatprep.subr.bf16.mxu0 %v2156
        %3214 = vmatpush1.bf16.msra.mxu0 %v2155
        %3215 = vmatprep.subr.bf16.mxu0 %v2168
        %3216 = vmatpush1.bf16.msra.mxu0 %v2167
        %3217 = vmatprep.subr.bf16.mxu0 %v2180
        %3218 = vmatpush1.bf16.msra.mxu0 %v2179
        %3219 = vmatprep.subr.bf16.mxu0 %v2192
        %3220 = vmatpush1.bf16.msra.mxu0 %v2191
        %3221 = vmatprep.subr.bf16.mxu0 %v2204
        %3222 = vmatpush1.bf16.msra.mxu0 %v2203
        %3223 = vmatprep.subr.bf16.mxu0 %v2216
        %3224 = vmatpush1.bf16.msra.mxu0 %v2215
        %3225 = vmatprep.subr.bf16.mxu0 %v2228
        %3226 = vmatpush1.bf16.msra.mxu0 %v2227
        %3227 = vmatprep.subr.bf16.mxu0 %v2240
        %3228 = vmatpush1.bf16.msra.mxu0 %v2239
        %3229 = vmatprep.subr.bf16.mxu0 %v2252
        %3230 = vmatpush1.bf16.msra.mxu0 %v2251
        %3231 = vmatprep.subr.bf16.mxu0 %v2264
        %3232 = vmatpush1.bf16.msra.mxu0 %v2263
        %3233 = vmatprep.subr.bf16.mxu0 %v2276
        %3234 = vmatpush1.bf16.msra.mxu0 %v2275
        %3235 = vmatprep.subr.bf16.mxu0 %v2288
        %3236 = vmatpush1.bf16.msra.mxu0 %v2287
        %3237 = vmatprep.subr.bf16.mxu0 %v2300
        %3238 = vmatpush1.bf16.msra.mxu0 %v2299
        %3239 = vmatprep.mubr.bf16.mxu0 %v508
        %3240 = vmatmul.mubr.bf16.gmra.mrb[0].mxu0 %v507
        %v3241 = vpop.f32.mrb[0].mxu0
        %v3242 = vadd.f32 %v934, %v3241
        %v3243 = vpop.f32.mrb[0].mxu0
        %v3244 = vadd.f32 %v938, %v3243
        %v3245 = vpop.f32.mrb[0].mxu0
        %v3246 = vpop.f32.mrb[0].mxu0
        %3247 = vdwg.mxu0
        %3248 = vmatprep.subr.bf16.mxu0 %v2312
        %3249 = vmatpush1.bf16.msra.mxu0 %v2311
        %3250 = vmatprep.subr.bf16.mxu0 %v2324
        %3251 = vmatpush1.bf16.msra.mxu0 %v2323
        %3252 = vmatprep.subr.bf16.mxu0 %v2336
        %3253 = vmatpush1.bf16.msra.mxu0 %v2335
        %3254 = vmatprep.subr.bf16.mxu0 %v2348
        %3255 = vmatpush1.bf16.msra.mxu0 %v2347
        %3256 = vmatprep.subr.bf16.mxu0 %v2360
        %3257 = vmatpush1.bf16.msra.mxu0 %v2359
        %3258 = vmatprep.subr.bf16.mxu0 %v2372
        %3259 = vmatpush1.bf16.msra.mxu0 %v2371
        %3260 = vmatprep.subr.bf16.mxu0 %v2384
        %3261 = vmatpush1.bf16.msra.mxu0 %v2383
        %3262 = vmatprep.subr.bf16.mxu0 %v2396
        %3263 = vmatpush1.bf16.msra.mxu0 %v2395
        %3264 = vmatprep.subr.bf16.mxu0 %v2408
        %3265 = vmatpush1.bf16.msra.mxu0 %v2407
        %3266 = vmatprep.subr.bf16.mxu0 %v2420
        %3267 = vmatpush1.bf16.msra.mxu0 %v2419
        %3268 = vmatprep.subr.bf16.mxu0 %v2432
        %3269 = vmatpush1.bf16.msra.mxu0 %v2431
        %3270 = vmatprep.subr.bf16.mxu0 %v2444
        %3271 = vmatpush1.bf16.msra.mxu0 %v2443
        %3272 = vmatprep.subr.bf16.mxu0 %v2456
        %3273 = vmatpush1.bf16.msra.mxu0 %v2455
        %3274 = vmatprep.subr.bf16.mxu0 %v2468
        %3275 = vmatpush1.bf16.msra.mxu0 %v2467
        %3276 = vmatprep.subr.bf16.mxu0 %v2480
        %3277 = vmatpush1.bf16.msra.mxu0 %v2479
        %3278 = vmatprep.subr.bf16.mxu0 %v2492
        %3279 = vmatpush1.bf16.msra.mxu0 %v2491
        %3280 = vmatprep.mubr.bf16.mxu0 %v510
        %3281 = vmatmul.mubr.bf16.gmra.mrb[0].mxu0 %v509
        %v3282 = vpop.f32.mrb[0].mxu0
        %v3283 = vadd.f32 %v3242, %v3282
        %v3284 = vpop.f32.mrb[0].mxu0
        %v3285 = vadd.f32 %v3244, %v3284
        %v3286 = vpop.f32.mrb[0].mxu0
        %v3287 = vpop.f32.mrb[0].mxu0
        %3288 = vdwg.mxu0
        %3289 = vmatprep.subr.bf16.mxu0 %v2122
        %3290 = vmatpush1.bf16.msra.mxu0 %v2121
        %3291 = vmatprep.subr.bf16.mxu0 %v2134
        %3292 = vmatpush1.bf16.msra.mxu0 %v2133
        %3293 = vmatprep.subr.bf16.mxu0 %v2146
        %3294 = vmatpush1.bf16.msra.mxu0 %v2145
        %3295 = vmatprep.subr.bf16.mxu0 %v2158
        %3296 = vmatpush1.bf16.msra.mxu0 %v2157
        %3297 = vmatprep.subr.bf16.mxu0 %v2170
        %3298 = vmatpush1.bf16.msra.mxu0 %v2169
        %3299 = vmatprep.subr.bf16.mxu0 %v2182
        %3300 = vmatpush1.bf16.msra.mxu0 %v2181
        %3301 = vmatprep.subr.bf16.mxu0 %v2194
        %3302 = vmatpush1.bf16.msra.mxu0 %v2193
        %3303 = vmatprep.subr.bf16.mxu0 %v2206
        %3304 = vmatpush1.bf16.msra.mxu0 %v2205
        %3305 = vmatprep.subr.bf16.mxu0 %v2218
        %3306 = vmatpush1.bf16.msra.mxu0 %v2217
        %3307 = vmatprep.subr.bf16.mxu0 %v2230
        %3308 = vmatpush1.bf16.msra.mxu0 %v2229
        %3309 = vmatprep.subr.bf16.mxu0 %v2242
        %3310 = vmatpush1.bf16.msra.mxu0 %v2241
        %3311 = vmatprep.subr.bf16.mxu0 %v2254
        %3312 = vmatpush1.bf16.msra.mxu0 %v2253
        %3313 = vmatprep.subr.bf16.mxu0 %v2266
        %3314 = vmatpush1.bf16.msra.mxu0 %v2265
        %3315 = vmatprep.subr.bf16.mxu0 %v2278
        %3316 = vmatpush1.bf16.msra.mxu0 %v2277
        %3317 = vmatprep.subr.bf16.mxu0 %v2290
        %3318 = vmatpush1.bf16.msra.mxu0 %v2289
        %3319 = vmatprep.subr.bf16.mxu0 %v2302
        %3320 = vmatpush1.bf16.msra.mxu0 %v2301
        %3321 = vmatprep.mubr.bf16.mxu0 %v508
        %3322 = vmatmul.mubr.bf16.gmra.mrb[0].mxu0 %v507
        %v3323 = vpop.f32.mrb[0].mxu0
        %v3324 = vadd.f32 %v942, %v3323
        %v3325 = vpop.f32.mrb[0].mxu0
        %v3326 = vadd.f32 %v946, %v3325
        %v3327 = vpop.f32.mrb[0].mxu0
        %v3328 = vpop.f32.mrb[0].mxu0
        %3329 = vdwg.mxu0
        %3330 = vmatprep.subr.bf16.mxu0 %v2314
        %3331 = vmatpush1.bf16.msra.mxu0 %v2313
        %3332 = vmatprep.subr.bf16.mxu0 %v2326
        %3333 = vmatpush1.bf16.msra.mxu0 %v2325
        %3334 = vmatprep.subr.bf16.mxu0 %v2338
        %3335 = vmatpush1.bf16.msra.mxu0 %v2337
        %3336 = vmatprep.subr.bf16.mxu0 %v2350
        %3337 = vmatpush1.bf16.msra.mxu0 %v2349
        %3338 = vmatprep.subr.bf16.mxu0 %v2362
        %3339 = vmatpush1.bf16.msra.mxu0 %v2361
        %3340 = vmatprep.subr.bf16.mxu0 %v2374
        %3341 = vmatpush1.bf16.msra.mxu0 %v2373
        %3342 = vmatprep.subr.bf16.mxu0 %v2386
        %3343 = vmatpush1.bf16.msra.mxu0 %v2385
        %3344 = vmatprep.subr.bf16.mxu0 %v2398
        %3345 = vmatpush1.bf16.msra.mxu0 %v2397
        %3346 = vmatprep.subr.bf16.mxu0 %v2410
        %3347 = vmatpush1.bf16.msra.mxu0 %v2409
        %3348 = vmatprep.subr.bf16.mxu0 %v2422
        %3349 = vmatpush1.bf16.msra.mxu0 %v2421
        %3350 = vmatprep.subr.bf16.mxu0 %v2434
        %3351 = vmatpush1.bf16.msra.mxu0 %v2433
        %3352 = vmatprep.subr.bf16.mxu0 %v2446
        %3353 = vmatpush1.bf16.msra.mxu0 %v2445
        %3354 = vmatprep.subr.bf16.mxu0 %v2458
        %3355 = vmatpush1.bf16.msra.mxu0 %v2457
        %3356 = vmatprep.subr.bf16.mxu0 %v2470
        %3357 = vmatpush1.bf16.msra.mxu0 %v2469
        %3358 = vmatprep.subr.bf16.mxu0 %v2482
        %3359 = vmatpush1.bf16.msra.mxu0 %v2481
        %3360 = vmatprep.subr.bf16.mxu0 %v2494
        %3361 = vmatpush1.bf16.msra.mxu0 %v2493
        %3362 = vmatprep.mubr.bf16.mxu0 %v510
        %3363 = vmatmul.mubr.bf16.gmra.mrb[0].mxu0 %v509
        %v3364 = vpop.f32.mrb[0].mxu0
        %v3365 = vadd.f32 %v3324, %v3364
        %v3366 = vpop.f32.mrb[0].mxu0
        %v3367 = vadd.f32 %v3326, %v3366
        %v3368 = vpop.f32.mrb[0].mxu0
        %v3369 = vpop.f32.mrb[0].mxu0
        %3370 = vdwg.mxu0
        %v3371 = vpack.c.bf16 %v2955, %v2955
        %v3372 = vpack.c.bf16 %v2957, %v2957
        %v3373 = vpack.c.bf16 %v3037, %v3037
        %v3374 = vpack.c.bf16 %v3039, %v3039
        %v3375 = vpack.c.bf16 %v3119, %v3119
        %v3376 = vpack.c.bf16 %v3121, %v3121
        %v3377 = vpack.c.bf16 %v3201, %v3201
        %v3378 = vpack.c.bf16 %v3203, %v3203
        %v3379 = vpack.c.bf16 %v3283, %v3283
        %v3380 = vpack.c.bf16 %v3285, %v3285
        %v3381 = vpack.c.bf16 %v3365, %v3365
        %v3382 = vpack.c.bf16 %v3367, %v3367
        %3384 = vrot.lane.b32.xlu0 %v3371, 64
        %v3385 = vpop.permute.xlu0 %3384
        %3387 = vrot.lane.b32.xlu0 %v3372, 64
        %v3388 = vpop.permute.xlu0 %3387
        %3390 = vrot.lane.b32.xlu0 %v3373, 64
        %v3391 = vpop.permute.xlu0 %3390
        %3393 = vrot.lane.b32.xlu0 %v3374, 64
        %v3394 = vpop.permute.xlu0 %3393
        %3396 = vrot.lane.b32.xlu0 %v3375, 64
        %v3397 = vpop.permute.xlu0 %3396
        %3399 = vrot.lane.b32.xlu0 %v3376, 64
        %v3400 = vpop.permute.xlu0 %3399
        %3402 = vrot.lane.b32.xlu0 %v3377, 64
        %v3403 = vpop.permute.xlu0 %3402
        %3405 = vrot.lane.b32.xlu0 %v3378, 64
        %v3406 = vpop.permute.xlu0 %3405
        %3408 = vrot.lane.b32.xlu0 %v3379, 64
        %v3409 = vpop.permute.xlu0 %3408
        %3411 = vrot.lane.b32.xlu0 %v3380, 64
        %v3412 = vpop.permute.xlu0 %3411
        %3414 = vrot.lane.b32.xlu0 %v3381, 64
        %v3415 = vpop.permute.xlu0 %3414
        %3417 = vrot.lane.b32.xlu0 %v3382, 64
        %v3418 = vpop.permute.xlu0 %3417
        %v3419 = vunpack.c.l.bf16 %v506
        %vm3420 = vcmask 523264
        %v3422 = vsel %vm3420, %v3371, 0
        %v3425 = vsel %vm3420, %v3375, 0
        %3427 = vmatprep.subr.bf16.mxu0 0
        %3428 = vmatpush1.bf16.xpose.msra.mxu0 %v3425
        %3429 = vmatprep.subr.bf16.mxu0 0
        %3430 = vmatpush1.bf16.xpose.msra.mxu0 0
        %3431 = vmatprep.subr.bf16.mxu0 0
        %3432 = vmatpush1.bf16.xpose.msra.mxu0 0
        %3433 = vmatprep.subr.bf16.mxu0 0
        %3434 = vmatpush1.bf16.xpose.msra.mxu0 0
        %3435 = vmatprep.subr.bf16.mxu0 0
        %3436 = vmatpush1.bf16.xpose.msra.mxu0 0
        %3437 = vmatprep.subr.bf16.mxu0 0
        %3438 = vmatpush1.bf16.xpose.msra.mxu0 0
        %3439 = vmatprep.subr.bf16.mxu0 0
        %3440 = vmatpush1.bf16.xpose.msra.mxu0 0
        %3441 = vmatprep.subr.bf16.mxu0 0
        %3442 = vmatpush1.bf16.xpose.msra.mxu0 0
        %3443 = vmatprep.subr.bf16.mxu0 0
        %3444 = vmatpush1.bf16.xpose.msra.mxu0 0
        %3445 = vmatprep.subr.bf16.mxu0 0
        %3446 = vmatpush1.bf16.xpose.msra.mxu0 0
        %3447 = vmatprep.subr.bf16.mxu0 0
        %3448 = vmatpush1.bf16.xpose.msra.mxu0 0
        %3449 = vmatprep.subr.bf16.mxu0 0
        %3450 = vmatpush1.bf16.xpose.msra.mxu0 0
        %3451 = vmatprep.subr.bf16.mxu0 0
        %3452 = vmatpush1.bf16.xpose.msra.mxu0 0
        %3453 = vmatprep.subr.bf16.mxu0 0
        %3454 = vmatpush1.bf16.xpose.msra.mxu0 0
        %3455 = vmatprep.subr.bf16.mxu0 0
        %3456 = vmatpush1.bf16.xpose.msra.mxu0 0
        %3457 = vmatprep.subr.bf16.mxu0 0
        %3458 = vmatpush1.bf16.xpose.msra.mxu0 0
        %3459 = vmatprep.mubr.bf16.mxu0 0
        %3460 = vmatmul.mubr.bf16.gmra.mrb[0].mxu0 %v3422
        %v3461 = vpop.f32.mrb[0].mxu0
        %v3462 = vadd.f32 %v3419, %v3461
        %v3463 = vpop.f32.mrb[0].mxu0
        %v3464 = vpop.f32.mrb[0].mxu0
        %v3465 = vpop.f32.mrb[0].mxu0
        %3466 = vdwg.mxu0
        %v3468 = vsel %vm3420, %v3385, 0
        %v3471 = vsel %vm3420, %v3397, 0
        %3473 = vmatprep.subr.bf16.mxu0 0
        %3474 = vmatpush1.bf16.xpose.msra.mxu0 %v3471
        %3475 = vmatprep.subr.bf16.mxu0 0
        %3476 = vmatpush1.bf16.xpose.msra.mxu0 0
        %3477 = vmatprep.subr.bf16.mxu0 0
        %3478 = vmatpush1.bf16.xpose.msra.mxu0 0
        %3479 = vmatprep.subr.bf16.mxu0 0
        %3480 = vmatpush1.bf16.xpose.msra.mxu0 0
        %3481 = vmatprep.subr.bf16.mxu0 0
        %3482 = vmatpush1.bf16.xpose.msra.mxu0 0
        %3483 = vmatprep.subr.bf16.mxu0 0
        %3484 = vmatpush1.bf16.xpose.msra.mxu0 0
        %3485 = vmatprep.subr.bf16.mxu0 0
        %3486 = vmatpush1.bf16.xpose.msra.mxu0 0
        %3487 = vmatprep.subr.bf16.mxu0 0
        %3488 = vmatpush1.bf16.xpose.msra.mxu0 0
        %3489 = vmatprep.subr.bf16.mxu0 0
        %3490 = vmatpush1.bf16.xpose.msra.mxu0 0
        %3491 = vmatprep.subr.bf16.mxu0 0
        %3492 = vmatpush1.bf16.xpose.msra.mxu0 0
        %3493 = vmatprep.subr.bf16.mxu0 0
        %3494 = vmatpush1.bf16.xpose.msra.mxu0 0
        %3495 = vmatprep.subr.bf16.mxu0 0
        %3496 = vmatpush1.bf16.xpose.msra.mxu0 0
        %3497 = vmatprep.subr.bf16.mxu0 0
        %3498 = vmatpush1.bf16.xpose.msra.mxu0 0
        %3499 = vmatprep.subr.bf16.mxu0 0
        %3500 = vmatpush1.bf16.xpose.msra.mxu0 0
        %3501 = vmatprep.subr.bf16.mxu0 0
        %3502 = vmatpush1.bf16.xpose.msra.mxu0 0
        %3503 = vmatprep.subr.bf16.mxu0 0
        %3504 = vmatpush1.bf16.xpose.msra.mxu0 0
        %3505 = vmatprep.mubr.bf16.mxu0 0
        %3506 = vmatmul.mubr.bf16.gmra.mrb[0].mxu0 %v3468
        %v3507 = vpop.f32.mrb[0].mxu0
        %v3508 = vadd.f32 %v3419, %v3507
        %v3509 = vpop.f32.mrb[0].mxu0
        %v3510 = vpop.f32.mrb[0].mxu0
        %v3511 = vpop.f32.mrb[0].mxu0
        %3512 = vdwg.mxu0
        %v3514 = vsel %vm3420, %v3372, 0
        %v3517 = vsel %vm3420, %v3376, 0
        %3519 = vmatprep.subr.bf16.mxu0 0
        %3520 = vmatpush1.bf16.xpose.msra.mxu0 %v3517
        %3521 = vmatprep.subr.bf16.mxu0 0
        %3522 = vmatpush1.bf16.xpose.msra.mxu0 0
        %3523 = vmatprep.subr.bf16.mxu0 0
        %3524 = vmatpush1.bf16.xpose.msra.mxu0 0
        %3525 = vmatprep.subr.bf16.mxu0 0
        %3526 = vmatpush1.bf16.xpose.msra.mxu0 0
        %3527 = vmatprep.subr.bf16.mxu0 0
        %3528 = vmatpush1.bf16.xpose.msra.mxu0 0
        %3529 = vmatprep.subr.bf16.mxu0 0
        %3530 = vmatpush1.bf16.xpose.msra.mxu0 0
        %3531 = vmatprep.subr.bf16.mxu0 0
        %3532 = vmatpush1.bf16.xpose.msra.mxu0 0
        %3533 = vmatprep.subr.bf16.mxu0 0
        %3534 = vmatpush1.bf16.xpose.msra.mxu0 0
        %3535 = vmatprep.subr.bf16.mxu0 0
        %3536 = vmatpush1.bf16.xpose.msra.mxu0 0
        %3537 = vmatprep.subr.bf16.mxu0 0
        %3538 = vmatpush1.bf16.xpose.msra.mxu0 0
        %3539 = vmatprep.subr.bf16.mxu0 0
        %3540 = vmatpush1.bf16.xpose.msra.mxu0 0
        %3541 = vmatprep.subr.bf16.mxu0 0
        %3542 = vmatpush1.bf16.xpose.msra.mxu0 0
        %3543 = vmatprep.subr.bf16.mxu0 0
        %3544 = vmatpush1.bf16.xpose.msra.mxu0 0
        %3545 = vmatprep.subr.bf16.mxu0 0
        %3546 = vmatpush1.bf16.xpose.msra.mxu0 0
        %3547 = vmatprep.subr.bf16.mxu0 0
        %3548 = vmatpush1.bf16.xpose.msra.mxu0 0
        %3549 = vmatprep.subr.bf16.mxu0 0
        %3550 = vmatpush1.bf16.xpose.msra.mxu0 0
        %3551 = vmatprep.mubr.bf16.mxu0 0
        %3552 = vmatmul.mubr.bf16.gmra.mrb[0].mxu0 %v3514
        %v3553 = vpop.f32.mrb[0].mxu0
        %v3554 = vadd.f32 %v3419, %v3553
        %v3555 = vpop.f32.mrb[0].mxu0
        %v3556 = vpop.f32.mrb[0].mxu0
        %v3557 = vpop.f32.mrb[0].mxu0
        %3558 = vdwg.mxu0
        %v3560 = vsel %vm3420, %v3388, 0
        %v3563 = vsel %vm3420, %v3400, 0
        %3565 = vmatprep.subr.bf16.mxu0 0
        %3566 = vmatpush1.bf16.xpose.msra.mxu0 %v3563
        %3567 = vmatprep.subr.bf16.mxu0 0
        %3568 = vmatpush1.bf16.xpose.msra.mxu0 0
        %3569 = vmatprep.subr.bf16.mxu0 0
        %3570 = vmatpush1.bf16.xpose.msra.mxu0 0
        %3571 = vmatprep.subr.bf16.mxu0 0
        %3572 = vmatpush1.bf16.xpose.msra.mxu0 0
        %3573 = vmatprep.subr.bf16.mxu0 0
        %3574 = vmatpush1.bf16.xpose.msra.mxu0 0
        %3575 = vmatprep.subr.bf16.mxu0 0
        %3576 = vmatpush1.bf16.xpose.msra.mxu0 0
        %3577 = vmatprep.subr.bf16.mxu0 0
        %3578 = vmatpush1.bf16.xpose.msra.mxu0 0
        %3579 = vmatprep.subr.bf16.mxu0 0
        %3580 = vmatpush1.bf16.xpose.msra.mxu0 0
        %3581 = vmatprep.subr.bf16.mxu0 0
        %3582 = vmatpush1.bf16.xpose.msra.mxu0 0
        %3583 = vmatprep.subr.bf16.mxu0 0
        %3584 = vmatpush1.bf16.xpose.msra.mxu0 0
        %3585 = vmatprep.subr.bf16.mxu0 0
        %3586 = vmatpush1.bf16.xpose.msra.mxu0 0
        %3587 = vmatprep.subr.bf16.mxu0 0
        %3588 = vmatpush1.bf16.xpose.msra.mxu0 0
        %3589 = vmatprep.subr.bf16.mxu0 0
        %3590 = vmatpush1.bf16.xpose.msra.mxu0 0
        %3591 = vmatprep.subr.bf16.mxu0 0
        %3592 = vmatpush1.bf16.xpose.msra.mxu0 0
        %3593 = vmatprep.subr.bf16.mxu0 0
        %3594 = vmatpush1.bf16.xpose.msra.mxu0 0
        %3595 = vmatprep.subr.bf16.mxu0 0
        %3596 = vmatpush1.bf16.xpose.msra.mxu0 0
        %3597 = vmatprep.mubr.bf16.mxu0 0
        %3598 = vmatmul.mubr.bf16.gmra.mrb[0].mxu0 %v3560
        %v3599 = vpop.f32.mrb[0].mxu0
        %v3600 = vadd.f32 %v3419, %v3599
        %v3601 = vpop.f32.mrb[0].mxu0
        %v3602 = vpop.f32.mrb[0].mxu0
        %v3603 = vpop.f32.mrb[0].mxu0
        %3604 = vdwg.mxu0
        %v3606 = vsel %vm3420, %v3373, 0
        %v3609 = vsel %vm3420, %v3377, 0
        %3611 = vmatprep.subr.bf16.mxu0 0
        %3612 = vmatpush1.bf16.xpose.msra.mxu0 %v3609
        %3613 = vmatprep.subr.bf16.mxu0 0
        %3614 = vmatpush1.bf16.xpose.msra.mxu0 0
        %3615 = vmatprep.subr.bf16.mxu0 0
        %3616 = vmatpush1.bf16.xpose.msra.mxu0 0
        %3617 = vmatprep.subr.bf16.mxu0 0
        %3618 = vmatpush1.bf16.xpose.msra.mxu0 0
        %3619 = vmatprep.subr.bf16.mxu0 0
        %3620 = vmatpush1.bf16.xpose.msra.mxu0 0
        %3621 = vmatprep.subr.bf16.mxu0 0
        %3622 = vmatpush1.bf16.xpose.msra.mxu0 0
        %3623 = vmatprep.subr.bf16.mxu0 0
        %3624 = vmatpush1.bf16.xpose.msra.mxu0 0
        %3625 = vmatprep.subr.bf16.mxu0 0
        %3626 = vmatpush1.bf16.xpose.msra.mxu0 0
        %3627 = vmatprep.subr.bf16.mxu0 0
        %3628 = vmatpush1.bf16.xpose.msra.mxu0 0
        %3629 = vmatprep.subr.bf16.mxu0 0
        %3630 = vmatpush1.bf16.xpose.msra.mxu0 0
        %3631 = vmatprep.subr.bf16.mxu0 0
        %3632 = vmatpush1.bf16.xpose.msra.mxu0 0
        %3633 = vmatprep.subr.bf16.mxu0 0
        %3634 = vmatpush1.bf16.xpose.msra.mxu0 0
        %3635 = vmatprep.subr.bf16.mxu0 0
        %3636 = vmatpush1.bf16.xpose.msra.mxu0 0
        %3637 = vmatprep.subr.bf16.mxu0 0
        %3638 = vmatpush1.bf16.xpose.msra.mxu0 0
        %3639 = vmatprep.subr.bf16.mxu0 0
        %3640 = vmatpush1.bf16.xpose.msra.mxu0 0
        %3641 = vmatprep.subr.bf16.mxu0 0
        %3642 = vmatpush1.bf16.xpose.msra.mxu0 0
        %3643 = vmatprep.mubr.bf16.mxu0 0
        %3644 = vmatmul.mubr.bf16.gmra.mrb[0].mxu0 %v3606
        %v3645 = vpop.f32.mrb[0].mxu0
        %v3646 = vadd.f32 %v3419, %v3645
        %v3647 = vpop.f32.mrb[0].mxu0
        %v3648 = vpop.f32.mrb[0].mxu0
        %v3649 = vpop.f32.mrb[0].mxu0
        %3650 = vdwg.mxu0
        %v3652 = vsel %vm3420, %v3391, 0
        %v3655 = vsel %vm3420, %v3403, 0
        %3657 = vmatprep.subr.bf16.mxu0 0
        %3658 = vmatpush1.bf16.xpose.msra.mxu0 %v3655
        %3659 = vmatprep.subr.bf16.mxu0 0
        %3660 = vmatpush1.bf16.xpose.msra.mxu0 0
        %3661 = vmatprep.subr.bf16.mxu0 0
        %3662 = vmatpush1.bf16.xpose.msra.mxu0 0
        %3663 = vmatprep.subr.bf16.mxu0 0
        %3664 = vmatpush1.bf16.xpose.msra.mxu0 0
        %3665 = vmatprep.subr.bf16.mxu0 0
        %3666 = vmatpush1.bf16.xpose.msra.mxu0 0
        %3667 = vmatprep.subr.bf16.mxu0 0
        %3668 = vmatpush1.bf16.xpose.msra.mxu0 0
        %3669 = vmatprep.subr.bf16.mxu0 0
        %3670 = vmatpush1.bf16.xpose.msra.mxu0 0
        %3671 = vmatprep.subr.bf16.mxu0 0
        %3672 = vmatpush1.bf16.xpose.msra.mxu0 0
        %3673 = vmatprep.subr.bf16.mxu0 0
        %3674 = vmatpush1.bf16.xpose.msra.mxu0 0
        %3675 = vmatprep.subr.bf16.mxu0 0
        %3676 = vmatpush1.bf16.xpose.msra.mxu0 0
        %3677 = vmatprep.subr.bf16.mxu0 0
        %3678 = vmatpush1.bf16.xpose.msra.mxu0 0
        %3679 = vmatprep.subr.bf16.mxu0 0
        %3680 = vmatpush1.bf16.xpose.msra.mxu0 0
        %3681 = vmatprep.subr.bf16.mxu0 0
        %3682 = vmatpush1.bf16.xpose.msra.mxu0 0
        %3683 = vmatprep.subr.bf16.mxu0 0
        %3684 = vmatpush1.bf16.xpose.msra.mxu0 0
        %3685 = vmatprep.subr.bf16.mxu0 0
        %3686 = vmatpush1.bf16.xpose.msra.mxu0 0
        %3687 = vmatprep.subr.bf16.mxu0 0
        %3688 = vmatpush1.bf16.xpose.msra.mxu0 0
        %3689 = vmatprep.mubr.bf16.mxu0 0
        %3690 = vmatmul.mubr.bf16.gmra.mrb[0].mxu0 %v3652
        %v3691 = vpop.f32.mrb[0].mxu0
        %v3692 = vadd.f32 %v3419, %v3691
        %v3693 = vpop.f32.mrb[0].mxu0
        %v3694 = vpop.f32.mrb[0].mxu0
        %v3695 = vpop.f32.mrb[0].mxu0
        %3696 = vdwg.mxu0
        %v3698 = vsel %vm3420, %v3374, 0
        %v3701 = vsel %vm3420, %v3378, 0
        %3703 = vmatprep.subr.bf16.mxu0 0
        %3704 = vmatpush1.bf16.xpose.msra.mxu0 %v3701
        %3705 = vmatprep.subr.bf16.mxu0 0
        %3706 = vmatpush1.bf16.xpose.msra.mxu0 0
        %3707 = vmatprep.subr.bf16.mxu0 0
        %3708 = vmatpush1.bf16.xpose.msra.mxu0 0
        %3709 = vmatprep.subr.bf16.mxu0 0
        %3710 = vmatpush1.bf16.xpose.msra.mxu0 0
        %3711 = vmatprep.subr.bf16.mxu0 0
        %3712 = vmatpush1.bf16.xpose.msra.mxu0 0
        %3713 = vmatprep.subr.bf16.mxu0 0
        %3714 = vmatpush1.bf16.xpose.msra.mxu0 0
        %3715 = vmatprep.subr.bf16.mxu0 0
        %3716 = vmatpush1.bf16.xpose.msra.mxu0 0
        %3717 = vmatprep.subr.bf16.mxu0 0
        %3718 = vmatpush1.bf16.xpose.msra.mxu0 0
        %3719 = vmatprep.subr.bf16.mxu0 0
        %3720 = vmatpush1.bf16.xpose.msra.mxu0 0
        %3721 = vmatprep.subr.bf16.mxu0 0
        %3722 = vmatpush1.bf16.xpose.msra.mxu0 0
        %3723 = vmatprep.subr.bf16.mxu0 0
        %3724 = vmatpush1.bf16.xpose.msra.mxu0 0
        %3725 = vmatprep.subr.bf16.mxu0 0
        %3726 = vmatpush1.bf16.xpose.msra.mxu0 0
        %3727 = vmatprep.subr.bf16.mxu0 0
        %3728 = vmatpush1.bf16.xpose.msra.mxu0 0
        %3729 = vmatprep.subr.bf16.mxu0 0
        %3730 = vmatpush1.bf16.xpose.msra.mxu0 0
        %3731 = vmatprep.subr.bf16.mxu0 0
        %3732 = vmatpush1.bf16.xpose.msra.mxu0 0
        %3733 = vmatprep.subr.bf16.mxu0 0
        %3734 = vmatpush1.bf16.xpose.msra.mxu0 0
        %3735 = vmatprep.mubr.bf16.mxu0 0
        %3736 = vmatmul.mubr.bf16.gmra.mrb[0].mxu0 %v3698
        %v3737 = vpop.f32.mrb[0].mxu0
        %v3738 = vadd.f32 %v3419, %v3737
        %v3739 = vpop.f32.mrb[0].mxu0
        %v3740 = vpop.f32.mrb[0].mxu0
        %v3741 = vpop.f32.mrb[0].mxu0
        %3742 = vdwg.mxu0
        %v3744 = vsel %vm3420, %v3394, 0
        %v3747 = vsel %vm3420, %v3406, 0
        %3749 = vmatprep.subr.bf16.mxu0 0
        %3750 = vmatpush1.bf16.xpose.msra.mxu0 %v3747
        %3751 = vmatprep.subr.bf16.mxu0 0
        %3752 = vmatpush1.bf16.xpose.msra.mxu0 0
        %3753 = vmatprep.subr.bf16.mxu0 0
        %3754 = vmatpush1.bf16.xpose.msra.mxu0 0
        %3755 = vmatprep.subr.bf16.mxu0 0
        %3756 = vmatpush1.bf16.xpose.msra.mxu0 0
        %3757 = vmatprep.subr.bf16.mxu0 0
        %3758 = vmatpush1.bf16.xpose.msra.mxu0 0
        %3759 = vmatprep.subr.bf16.mxu0 0
        %3760 = vmatpush1.bf16.xpose.msra.mxu0 0
        %3761 = vmatprep.subr.bf16.mxu0 0
        %3762 = vmatpush1.bf16.xpose.msra.mxu0 0
        %3763 = vmatprep.subr.bf16.mxu0 0
        %3764 = vmatpush1.bf16.xpose.msra.mxu0 0
        %3765 = vmatprep.subr.bf16.mxu0 0
        %3766 = vmatpush1.bf16.xpose.msra.mxu0 0
        %3767 = vmatprep.subr.bf16.mxu0 0
        %3768 = vmatpush1.bf16.xpose.msra.mxu0 0
        %3769 = vmatprep.subr.bf16.mxu0 0
        %3770 = vmatpush1.bf16.xpose.msra.mxu0 0
        %3771 = vmatprep.subr.bf16.mxu0 0
        %3772 = vmatpush1.bf16.xpose.msra.mxu0 0
        %3773 = vmatprep.subr.bf16.mxu0 0
        %3774 = vmatpush1.bf16.xpose.msra.mxu0 0
        %3775 = vmatprep.subr.bf16.mxu0 0
        %3776 = vmatpush1.bf16.xpose.msra.mxu0 0
        %3777 = vmatprep.subr.bf16.mxu0 0
        %3778 = vmatpush1.bf16.xpose.msra.mxu0 0
        %3779 = vmatprep.subr.bf16.mxu0 0
        %3780 = vmatpush1.bf16.xpose.msra.mxu0 0
        %3781 = vmatprep.mubr.bf16.mxu0 0
        %3782 = vmatmul.mubr.bf16.gmra.mrb[0].mxu0 %v3744
        %v3783 = vpop.f32.mrb[0].mxu0
        %v3784 = vadd.f32 %v3419, %v3783
        %v3785 = vpop.f32.mrb[0].mxu0
        %v3786 = vpop.f32.mrb[0].mxu0
        %v3787 = vpop.f32.mrb[0].mxu0
        %3788 = vdwg.mxu0
        %vm3789 = vcmask 64512
        %v3790 = vsel %vm3789, %v3462, -inf
        %3791 = vmax.xlane.f32.xlu0 %v3790
        %v3792 = vpop.xlane.xlu0 %3791
        %v3793 = vsel %vm3789, %v3508, -inf
        %3794 = vmax.xlane.f32.xlu0 %v3793
        %v3795 = vpop.xlane.xlu0 %3794
        %v3796 = vsel %vm3789, %v3554, -inf
        %3797 = vmax.xlane.f32.xlu0 %v3796
        %v3798 = vpop.xlane.xlu0 %3797
        %v3799 = vsel %vm3789, %v3600, -inf
        %3800 = vmax.xlane.f32.xlu0 %v3799
        %v3801 = vpop.xlane.xlu0 %3800
        %v3802 = vsel %vm3789, %v3646, -inf
        %3803 = vmax.xlane.f32.xlu0 %v3802
        %v3804 = vpop.xlane.xlu0 %3803
        %v3805 = vsel %vm3789, %v3692, -inf
        %3806 = vmax.xlane.f32.xlu0 %v3805
        %v3807 = vpop.xlane.xlu0 %3806
        %v3808 = vsel %vm3789, %v3738, -inf
        %3809 = vmax.xlane.f32.xlu0 %v3808
        %v3810 = vpop.xlane.xlu0 %3809
        %v3811 = vsel %vm3789, %v3784, -inf
        %3812 = vmax.xlane.f32.xlu0 %v3811
        %v3813 = vpop.xlane.xlu0 %3812
        %v3814 = vsub.f32 %v3462, %v3792
        %v3815 = vsub.f32 %v3508, %v3795
        %v3816 = vsub.f32 %v3554, %v3798
        %v3817 = vsub.f32 %v3600, %v3801
        %v3818 = vsub.f32 %v3646, %v3804
        %v3819 = vsub.f32 %v3692, %v3807
        %v3820 = vsub.f32 %v3738, %v3810
        %v3821 = vsub.f32 %v3784, %v3813
        %v3822 = vmul.f32 %v3814, 1.442695
        %v3823 = vpow.pop %v3822
        %v3824 = vmul.f32 %v3815, 1.442695
        %v3825 = vpow.pop %v3824
        %v3826 = vmul.f32 %v3816, 1.442695
        %v3827 = vpow.pop %v3826
        %v3828 = vmul.f32 %v3817, 1.442695
        %v3829 = vpow.pop %v3828
        %v3830 = vmul.f32 %v3818, 1.442695
        %v3831 = vpow.pop %v3830
        %v3832 = vmul.f32 %v3819, 1.442695
        %v3833 = vpow.pop %v3832
        %v3834 = vmul.f32 %v3820, 1.442695
        %v3835 = vpow.pop %v3834
        %v3836 = vmul.f32 %v3821, 1.442695
        %v3837 = vpow.pop %v3836
        %v3838 = vsel %vm3789, %v3823, 0.0
        %3839 = vadd.xlane.f32.xlu0 %v3838
        %v3840 = vpop.xlane.xlu0 %3839
        %v3841 = vsel %vm3789, %v3825, 0.0
        %3842 = vadd.xlane.f32.xlu0 %v3841
        %v3843 = vpop.xlane.xlu0 %3842
        %v3844 = vsel %vm3789, %v3827, 0.0
        %3845 = vadd.xlane.f32.xlu0 %v3844
        %v3846 = vpop.xlane.xlu0 %3845
        %v3847 = vsel %vm3789, %v3829, 0.0
        %3848 = vadd.xlane.f32.xlu0 %v3847
        %v3849 = vpop.xlane.xlu0 %3848
        %v3850 = vsel %vm3789, %v3831, 0.0
        %3851 = vadd.xlane.f32.xlu0 %v3850
        %v3852 = vpop.xlane.xlu0 %3851
        %v3853 = vsel %vm3789, %v3833, 0.0
        %3854 = vadd.xlane.f32.xlu0 %v3853
        %v3855 = vpop.xlane.xlu0 %3854
        %v3856 = vsel %vm3789, %v3835, 0.0
        %3857 = vadd.xlane.f32.xlu0 %v3856
        %v3858 = vpop.xlane.xlu0 %3857
        %v3859 = vsel %vm3789, %v3837, 0.0
        %3860 = vadd.xlane.f32.xlu0 %v3859
        %v3861 = vpop.xlane.xlu0 %3860
        %v3862 = vrcp.pop %v3840
        %v3863 = vrcp.pop %v3843
        %v3864 = vrcp.pop %v3846
        %v3865 = vrcp.pop %v3849
        %v3866 = vrcp.pop %v3852
        %v3867 = vrcp.pop %v3855
        %v3868 = vrcp.pop %v3858
        %v3869 = vrcp.pop %v3861
        %v3870 = vmul.f32 %v3823, %v3862
        %v3871 = vmul.f32 %v3825, %v3863
        %v3872 = vmul.f32 %v3827, %v3864
        %v3873 = vmul.f32 %v3829, %v3865
        %v3874 = vmul.f32 %v3831, %v3866
        %v3875 = vmul.f32 %v3833, %v3867
        %v3876 = vmul.f32 %v3835, %v3868
        %v3877 = vmul.f32 %v3837, %v3869
        %v3878 = vpack.c.bf16 %v3870, %v3870
        %v3879 = vpack.c.bf16 %v3871, %v3871
        %v3880 = vpack.c.bf16 %v3872, %v3872
        %v3881 = vpack.c.bf16 %v3873, %v3873
        %v3882 = vpack.c.bf16 %v3874, %v3874
        %v3883 = vpack.c.bf16 %v3875, %v3875
        %v3884 = vpack.c.bf16 %v3876, %v3876
        %v3885 = vpack.c.bf16 %v3877, %v3877
        %v3887 = vsel %vm3789, %v3878, 0
        %vm3889 = vcmask 1043456
        %v3891 = vsel %vm3889, %v3379, 0
        %3893 = vmatprep.subr.bf16.mxu0 0
        %3894 = vmatpush1.bf16.msra.mxu0 %v3891
        %3895 = vmatprep.subr.bf16.mxu0 0
        %3896 = vmatpush1.bf16.msra.mxu0 0
        %3897 = vmatprep.subr.bf16.mxu0 0
        %3898 = vmatpush1.bf16.msra.mxu0 0
        %3899 = vmatprep.subr.bf16.mxu0 0
        %3900 = vmatpush1.bf16.msra.mxu0 0
        %3901 = vmatprep.subr.bf16.mxu0 0
        %3902 = vmatpush1.bf16.msra.mxu0 0
        %3903 = vmatprep.subr.bf16.mxu0 0
        %3904 = vmatpush1.bf16.msra.mxu0 0
        %3905 = vmatprep.subr.bf16.mxu0 0
        %3906 = vmatpush1.bf16.msra.mxu0 0
        %3907 = vmatprep.subr.bf16.mxu0 0
        %3908 = vmatpush1.bf16.msra.mxu0 0
        %3909 = vmatprep.subr.bf16.mxu0 0
        %3910 = vmatpush1.bf16.msra.mxu0 0
        %3911 = vmatprep.subr.bf16.mxu0 0
        %3912 = vmatpush1.bf16.msra.mxu0 0
        %3913 = vmatprep.subr.bf16.mxu0 0
        %3914 = vmatpush1.bf16.msra.mxu0 0
        %3915 = vmatprep.subr.bf16.mxu0 0
        %3916 = vmatpush1.bf16.msra.mxu0 0
        %3917 = vmatprep.subr.bf16.mxu0 0
        %3918 = vmatpush1.bf16.msra.mxu0 0
        %3919 = vmatprep.subr.bf16.mxu0 0
        %3920 = vmatpush1.bf16.msra.mxu0 0
        %3921 = vmatprep.subr.bf16.mxu0 0
        %3922 = vmatpush1.bf16.msra.mxu0 0
        %3923 = vmatprep.subr.bf16.mxu0 0
        %3924 = vmatpush1.bf16.msra.mxu0 0
        %3925 = vmatprep.mubr.bf16.mxu0 0
        %3926 = vmatmul.mubr.bf16.gmra.mrb[0].mxu0 %v3887
        %v3927 = vpop.f32.mrb[0].mxu0
        %v3928 = vadd.f32 0.0, %v3927
        %v3929 = vpop.f32.mrb[0].mxu0
        %v3930 = vpop.f32.mrb[0].mxu0
        %v3931 = vpop.f32.mrb[0].mxu0
        %3932 = vdwg.mxu0
        %v3934 = vsel %vm3789, %v3879, 0
        %v3937 = vsel %vm3889, %v3409, 0
        %3939 = vmatprep.subr.bf16.mxu0 0
        %3940 = vmatpush1.bf16.msra.mxu0 %v3937
        %3941 = vmatprep.subr.bf16.mxu0 0
        %3942 = vmatpush1.bf16.msra.mxu0 0
        %3943 = vmatprep.subr.bf16.mxu0 0
        %3944 = vmatpush1.bf16.msra.mxu0 0
        %3945 = vmatprep.subr.bf16.mxu0 0
        %3946 = vmatpush1.bf16.msra.mxu0 0
        %3947 = vmatprep.subr.bf16.mxu0 0
        %3948 = vmatpush1.bf16.msra.mxu0 0
        %3949 = vmatprep.subr.bf16.mxu0 0
        %3950 = vmatpush1.bf16.msra.mxu0 0
        %3951 = vmatprep.subr.bf16.mxu0 0
        %3952 = vmatpush1.bf16.msra.mxu0 0
        %3953 = vmatprep.subr.bf16.mxu0 0
        %3954 = vmatpush1.bf16.msra.mxu0 0
        %3955 = vmatprep.subr.bf16.mxu0 0
        %3956 = vmatpush1.bf16.msra.mxu0 0
        %3957 = vmatprep.subr.bf16.mxu0 0
        %3958 = vmatpush1.bf16.msra.mxu0 0
        %3959 = vmatprep.subr.bf16.mxu0 0
        %3960 = vmatpush1.bf16.msra.mxu0 0
        %3961 = vmatprep.subr.bf16.mxu0 0
        %3962 = vmatpush1.bf16.msra.mxu0 0
        %3963 = vmatprep.subr.bf16.mxu0 0
        %3964 = vmatpush1.bf16.msra.mxu0 0
        %3965 = vmatprep.subr.bf16.mxu0 0
        %3966 = vmatpush1.bf16.msra.mxu0 0
        %3967 = vmatprep.subr.bf16.mxu0 0
        %3968 = vmatpush1.bf16.msra.mxu0 0
        %3969 = vmatprep.subr.bf16.mxu0 0
        %3970 = vmatpush1.bf16.msra.mxu0 0
        %3971 = vmatprep.mubr.bf16.mxu0 0
        %3972 = vmatmul.mubr.bf16.gmra.mrb[0].mxu0 %v3934
        %v3973 = vpop.f32.mrb[0].mxu0
        %v3974 = vadd.f32 0.0, %v3973
        %v3975 = vpop.f32.mrb[0].mxu0
        %v3976 = vpop.f32.mrb[0].mxu0
        %v3977 = vpop.f32.mrb[0].mxu0
        %3978 = vdwg.mxu0
        %v3980 = vsel %vm3789, %v3880, 0
        %v3983 = vsel %vm3889, %v3380, 0
        %3985 = vmatprep.subr.bf16.mxu0 0
        %3986 = vmatpush1.bf16.msra.mxu0 %v3983
        %3987 = vmatprep.subr.bf16.mxu0 0
        %3988 = vmatpush1.bf16.msra.mxu0 0
        %3989 = vmatprep.subr.bf16.mxu0 0
        %3990 = vmatpush1.bf16.msra.mxu0 0
        %3991 = vmatprep.subr.bf16.mxu0 0
        %3992 = vmatpush1.bf16.msra.mxu0 0
        %3993 = vmatprep.subr.bf16.mxu0 0
        %3994 = vmatpush1.bf16.msra.mxu0 0
        %3995 = vmatprep.subr.bf16.mxu0 0
        %3996 = vmatpush1.bf16.msra.mxu0 0
        %3997 = vmatprep.subr.bf16.mxu0 0
        %3998 = vmatpush1.bf16.msra.mxu0 0
        %3999 = vmatprep.subr.bf16.mxu0 0
        %4000 = vmatpush1.bf16.msra.mxu0 0
        %4001 = vmatprep.subr.bf16.mxu0 0
        %4002 = vmatpush1.bf16.msra.mxu0 0
        %4003 = vmatprep.subr.bf16.mxu0 0
        %4004 = vmatpush1.bf16.msra.mxu0 0
        %4005 = vmatprep.subr.bf16.mxu0 0
        %4006 = vmatpush1.bf16.msra.mxu0 0
        %4007 = vmatprep.subr.bf16.mxu0 0
        %4008 = vmatpush1.bf16.msra.mxu0 0
        %4009 = vmatprep.subr.bf16.mxu0 0
        %4010 = vmatpush1.bf16.msra.mxu0 0
        %4011 = vmatprep.subr.bf16.mxu0 0
        %4012 = vmatpush1.bf16.msra.mxu0 0
        %4013 = vmatprep.subr.bf16.mxu0 0
        %4014 = vmatpush1.bf16.msra.mxu0 0
        %4015 = vmatprep.subr.bf16.mxu0 0
        %4016 = vmatpush1.bf16.msra.mxu0 0
        %4017 = vmatprep.mubr.bf16.mxu0 0
        %4018 = vmatmul.mubr.bf16.gmra.mrb[0].mxu0 %v3980
        %v4019 = vpop.f32.mrb[0].mxu0
        %v4020 = vadd.f32 0.0, %v4019
        %v4021 = vpop.f32.mrb[0].mxu0
        %v4022 = vpop.f32.mrb[0].mxu0
        %v4023 = vpop.f32.mrb[0].mxu0
        %4024 = vdwg.mxu0
        %v4026 = vsel %vm3789, %v3881, 0
        %v4029 = vsel %vm3889, %v3412, 0
        %4031 = vmatprep.subr.bf16.mxu0 0
        %4032 = vmatpush1.bf16.msra.mxu0 %v4029
        %4033 = vmatprep.subr.bf16.mxu0 0
        %4034 = vmatpush1.bf16.msra.mxu0 0
        %4035 = vmatprep.subr.bf16.mxu0 0
        %4036 = vmatpush1.bf16.msra.mxu0 0
        %4037 = vmatprep.subr.bf16.mxu0 0
        %4038 = vmatpush1.bf16.msra.mxu0 0
        %4039 = vmatprep.subr.bf16.mxu0 0
        %4040 = vmatpush1.bf16.msra.mxu0 0
        %4041 = vmatprep.subr.bf16.mxu0 0
        %4042 = vmatpush1.bf16.msra.mxu0 0
        %4043 = vmatprep.subr.bf16.mxu0 0
        %4044 = vmatpush1.bf16.msra.mxu0 0
        %4045 = vmatprep.subr.bf16.mxu0 0
        %4046 = vmatpush1.bf16.msra.mxu0 0
        %4047 = vmatprep.subr.bf16.mxu0 0
        %4048 = vmatpush1.bf16.msra.mxu0 0
        %4049 = vmatprep.subr.bf16.mxu0 0
        %4050 = vmatpush1.bf16.msra.mxu0 0
        %4051 = vmatprep.subr.bf16.mxu0 0
        %4052 = vmatpush1.bf16.msra.mxu0 0
        %4053 = vmatprep.subr.bf16.mxu0 0
        %4054 = vmatpush1.bf16.msra.mxu0 0
        %4055 = vmatprep.subr.bf16.mxu0 0
        %4056 = vmatpush1.bf16.msra.mxu0 0
        %4057 = vmatprep.subr.bf16.mxu0 0
        %4058 = vmatpush1.bf16.msra.mxu0 0
        %4059 = vmatprep.subr.bf16.mxu0 0
        %4060 = vmatpush1.bf16.msra.mxu0 0
        %4061 = vmatprep.subr.bf16.mxu0 0
        %4062 = vmatpush1.bf16.msra.mxu0 0
        %4063 = vmatprep.mubr.bf16.mxu0 0
        %4064 = vmatmul.mubr.bf16.gmra.mrb[0].mxu0 %v4026
        %v4065 = vpop.f32.mrb[0].mxu0
        %v4066 = vadd.f32 0.0, %v4065
        %v4067 = vpop.f32.mrb[0].mxu0
        %v4068 = vpop.f32.mrb[0].mxu0
        %v4069 = vpop.f32.mrb[0].mxu0
        %4070 = vdwg.mxu0
        %v4072 = vsel %vm3789, %v3882, 0
        %v4075 = vsel %vm3889, %v3381, 0
        %4077 = vmatprep.subr.bf16.mxu0 0
        %4078 = vmatpush1.bf16.msra.mxu0 %v4075
        %4079 = vmatprep.subr.bf16.mxu0 0
        %4080 = vmatpush1.bf16.msra.mxu0 0
        %4081 = vmatprep.subr.bf16.mxu0 0
        %4082 = vmatpush1.bf16.msra.mxu0 0
        %4083 = vmatprep.subr.bf16.mxu0 0
        %4084 = vmatpush1.bf16.msra.mxu0 0
        %4085 = vmatprep.subr.bf16.mxu0 0
        %4086 = vmatpush1.bf16.msra.mxu0 0
        %4087 = vmatprep.subr.bf16.mxu0 0
        %4088 = vmatpush1.bf16.msra.mxu0 0
        %4089 = vmatprep.subr.bf16.mxu0 0
        %4090 = vmatpush1.bf16.msra.mxu0 0
        %4091 = vmatprep.subr.bf16.mxu0 0
        %4092 = vmatpush1.bf16.msra.mxu0 0
        %4093 = vmatprep.subr.bf16.mxu0 0
        %4094 = vmatpush1.bf16.msra.mxu0 0
        %4095 = vmatprep.subr.bf16.mxu0 0
        %4096 = vmatpush1.bf16.msra.mxu0 0
        %4097 = vmatprep.subr.bf16.mxu0 0
        %4098 = vmatpush1.bf16.msra.mxu0 0
        %4099 = vmatprep.subr.bf16.mxu0 0
        %4100 = vmatpush1.bf16.msra.mxu0 0
        %4101 = vmatprep.subr.bf16.mxu0 0
        %4102 = vmatpush1.bf16.msra.mxu0 0
        %4103 = vmatprep.subr.bf16.mxu0 0
        %4104 = vmatpush1.bf16.msra.mxu0 0
        %4105 = vmatprep.subr.bf16.mxu0 0
        %4106 = vmatpush1.bf16.msra.mxu0 0
        %4107 = vmatprep.subr.bf16.mxu0 0
        %4108 = vmatpush1.bf16.msra.mxu0 0
        %4109 = vmatprep.mubr.bf16.mxu0 0
        %4110 = vmatmul.mubr.bf16.gmra.mrb[0].mxu0 %v4072
        %v4111 = vpop.f32.mrb[0].mxu0
        %v4112 = vadd.f32 0.0, %v4111
        %v4113 = vpop.f32.mrb[0].mxu0
        %v4114 = vpop.f32.mrb[0].mxu0
        %v4115 = vpop.f32.mrb[0].mxu0
        %4116 = vdwg.mxu0
        %v4118 = vsel %vm3789, %v3883, 0
        %v4121 = vsel %vm3889, %v3415, 0
        %4123 = vmatprep.subr.bf16.mxu0 0
        %4124 = vmatpush1.bf16.msra.mxu0 %v4121
        %4125 = vmatprep.subr.bf16.mxu0 0
        %4126 = vmatpush1.bf16.msra.mxu0 0
        %4127 = vmatprep.subr.bf16.mxu0 0
        %4128 = vmatpush1.bf16.msra.mxu0 0
        %4129 = vmatprep.subr.bf16.mxu0 0
        %4130 = vmatpush1.bf16.msra.mxu0 0
        %4131 = vmatprep.subr.bf16.mxu0 0
        %4132 = vmatpush1.bf16.msra.mxu0 0
        %4133 = vmatprep.subr.bf16.mxu0 0
        %4134 = vmatpush1.bf16.msra.mxu0 0
        %4135 = vmatprep.subr.bf16.mxu0 0
        %4136 = vmatpush1.bf16.msra.mxu0 0
        %4137 = vmatprep.subr.bf16.mxu0 0
        %4138 = vmatpush1.bf16.msra.mxu0 0
        %4139 = vmatprep.subr.bf16.mxu0 0
        %4140 = vmatpush1.bf16.msra.mxu0 0
        %4141 = vmatprep.subr.bf16.mxu0 0
        %4142 = vmatpush1.bf16.msra.mxu0 0
        %4143 = vmatprep.subr.bf16.mxu0 0
        %4144 = vmatpush1.bf16.msra.mxu0 0
        %4145 = vmatprep.subr.bf16.mxu0 0
        %4146 = vmatpush1.bf16.msra.mxu0 0
        %4147 = vmatprep.subr.bf16.mxu0 0
        %4148 = vmatpush1.bf16.msra.mxu0 0
        %4149 = vmatprep.subr.bf16.mxu0 0
        %4150 = vmatpush1.bf16.msra.mxu0 0
        %4151 = vmatprep.subr.bf16.mxu0 0
        %4152 = vmatpush1.bf16.msra.mxu0 0
        %4153 = vmatprep.subr.bf16.mxu0 0
        %4154 = vmatpush1.bf16.msra.mxu0 0
        %4155 = vmatprep.mubr.bf16.mxu0 0
        %4156 = vmatmul.mubr.bf16.gmra.mrb[0].mxu0 %v4118
        %v4157 = vpop.f32.mrb[0].mxu0
        %v4158 = vadd.f32 0.0, %v4157
        %v4159 = vpop.f32.mrb[0].mxu0
        %v4160 = vpop.f32.mrb[0].mxu0
        %v4161 = vpop.f32.mrb[0].mxu0
        %4162 = vdwg.mxu0
        %v4164 = vsel %vm3789, %v3884, 0
        %v4167 = vsel %vm3889, %v3382, 0
        %4169 = vmatprep.subr.bf16.mxu0 0
        %4170 = vmatpush1.bf16.msra.mxu0 %v4167
        %4171 = vmatprep.subr.bf16.mxu0 0
        %4172 = vmatpush1.bf16.msra.mxu0 0
        %4173 = vmatprep.subr.bf16.mxu0 0
        %4174 = vmatpush1.bf16.msra.mxu0 0
        %4175 = vmatprep.subr.bf16.mxu0 0
        %4176 = vmatpush1.bf16.msra.mxu0 0
        %4177 = vmatprep.subr.bf16.mxu0 0
        %4178 = vmatpush1.bf16.msra.mxu0 0
        %4179 = vmatprep.subr.bf16.mxu0 0
        %4180 = vmatpush1.bf16.msra.mxu0 0
        %4181 = vmatprep.subr.bf16.mxu0 0
        %4182 = vmatpush1.bf16.msra.mxu0 0
        %4183 = vmatprep.subr.bf16.mxu0 0
        %4184 = vmatpush1.bf16.msra.mxu0 0
        %4185 = vmatprep.subr.bf16.mxu0 0
        %4186 = vmatpush1.bf16.msra.mxu0 0
        %4187 = vmatprep.subr.bf16.mxu0 0
        %4188 = vmatpush1.bf16.msra.mxu0 0
        %4189 = vmatprep.subr.bf16.mxu0 0
        %4190 = vmatpush1.bf16.msra.mxu0 0
        %4191 = vmatprep.subr.bf16.mxu0 0
        %4192 = vmatpush1.bf16.msra.mxu0 0
        %4193 = vmatprep.subr.bf16.mxu0 0
        %4194 = vmatpush1.bf16.msra.mxu0 0
        %4195 = vmatprep.subr.bf16.mxu0 0
        %4196 = vmatpush1.bf16.msra.mxu0 0
        %4197 = vmatprep.subr.bf16.mxu0 0
        %4198 = vmatpush1.bf16.msra.mxu0 0
        %4199 = vmatprep.subr.bf16.mxu0 0
        %4200 = vmatpush1.bf16.msra.mxu0 0
        %4201 = vmatprep.mubr.bf16.mxu0 0
        %4202 = vmatmul.mubr.bf16.gmra.mrb[0].mxu0 %v4164
        %v4203 = vpop.f32.mrb[0].mxu0
        %v4204 = vadd.f32 0.0, %v4203
        %v4205 = vpop.f32.mrb[0].mxu0
        %v4206 = vpop.f32.mrb[0].mxu0
        %v4207 = vpop.f32.mrb[0].mxu0
        %4208 = vdwg.mxu0
        %v4210 = vsel %vm3789, %v3885, 0
        %v4213 = vsel %vm3889, %v3418, 0
        %4215 = vmatprep.subr.bf16.mxu0 0
        %4216 = vmatpush1.bf16.msra.mxu0 %v4213
        %4217 = vmatprep.subr.bf16.mxu0 0
        %4218 = vmatpush1.bf16.msra.mxu0 0
        %4219 = vmatprep.subr.bf16.mxu0 0
        %4220 = vmatpush1.bf16.msra.mxu0 0
        %4221 = vmatprep.subr.bf16.mxu0 0
        %4222 = vmatpush1.bf16.msra.mxu0 0
        %4223 = vmatprep.subr.bf16.mxu0 0
        %4224 = vmatpush1.bf16.msra.mxu0 0
        %4225 = vmatprep.subr.bf16.mxu0 0
        %4226 = vmatpush1.bf16.msra.mxu0 0
        %4227 = vmatprep.subr.bf16.mxu0 0
        %4228 = vmatpush1.bf16.msra.mxu0 0
        %4229 = vmatprep.subr.bf16.mxu0 0
        %4230 = vmatpush1.bf16.msra.mxu0 0
        %4231 = vmatprep.subr.bf16.mxu0 0
        %4232 = vmatpush1.bf16.msra.mxu0 0
        %4233 = vmatprep.subr.bf16.mxu0 0
        %4234 = vmatpush1.bf16.msra.mxu0 0
        %4235 = vmatprep.subr.bf16.mxu0 0
        %4236 = vmatpush1.bf16.msra.mxu0 0
        %4237 = vmatprep.subr.bf16.mxu0 0
        %4238 = vmatpush1.bf16.msra.mxu0 0
        %4239 = vmatprep.subr.bf16.mxu0 0
        %4240 = vmatpush1.bf16.msra.mxu0 0
        %4241 = vmatprep.subr.bf16.mxu0 0
        %4242 = vmatpush1.bf16.msra.mxu0 0
        %4243 = vmatprep.subr.bf16.mxu0 0
        %4244 = vmatpush1.bf16.msra.mxu0 0
        %4245 = vmatprep.subr.bf16.mxu0 0
        %4246 = vmatpush1.bf16.msra.mxu0 0
        %4247 = vmatprep.mubr.bf16.mxu0 0
        %4248 = vmatmul.mubr.bf16.gmra.mrb[0].mxu0 %v4210
        %v4249 = vpop.f32.mrb[0].mxu0
        %v4250 = vadd.f32 0.0, %v4249
        %v4251 = vpop.f32.mrb[0].mxu0
        %v4252 = vpop.f32.mrb[0].mxu0
        %v4253 = vpop.f32.mrb[0].mxu0
        %4254 = vdwg.mxu0
        %v4255 = vpack.c.bf16 %v3928, %v3928
        %v4256 = vpack.c.bf16 %v3974, %v3974
        %v4257 = vpack.c.bf16 %v4020, %v4020
        %v4258 = vpack.c.bf16 %v4066, %v4066
        %v4259 = vpack.c.bf16 %v4112, %v4112
        %v4260 = vpack.c.bf16 %v4158, %v4158
        %v4261 = vpack.c.bf16 %v4204, %v4204
        %v4262 = vpack.c.bf16 %v4250, %v4250
        %4264 = vrot.lane.b32.xlu0 %v4256, 64
        %v4265 = vpop.permute.xlu0 %4264
        %4267 = vrot.lane.b32.xlu0 %v4258, 64
        %v4268 = vpop.permute.xlu0 %4267
        %4270 = vrot.lane.b32.xlu0 %v4260, 64
        %v4271 = vpop.permute.xlu0 %4270
        %4273 = vrot.lane.b32.xlu0 %v4262, 64
        %v4274 = vpop.permute.xlu0 %4273
        %v4277 = vsel %vm3420, %v4255, %v4265
        %v4281 = vsel %vm3420, %v4257, %v4268
        %v4285 = vsel %vm3420, %v4259, %v4271
        %v4289 = vsel %vm3420, %v4261, %v4274
        %v4291 = vld [vmem:[#allocation8] sm:$0xff]
        %v4292 = vld [vmem:[#allocation8 + $0x8] sm:$0xff]
        %v4293 = vld [vmem:[#allocation8 + $0x10] sm:$0xff]
        %v4294 = vld [vmem:[#allocation8 + $0x18] sm:$0xff]
        %v4295 = vld [vmem:[#allocation8 + $0x20] sm:$0xff]
        %v4296 = vld [vmem:[#allocation8 + $0x28] sm:$0xff]
        %v4297 = vld [vmem:[#allocation8 + $0x30] sm:$0xff]
        %v4298 = vld [vmem:[#allocation8 + $0x38] sm:$0xff]
        %v4299 = vld [vmem:[#allocation8 + $0x40] sm:$0xff]
        %v4300 = vld [vmem:[#allocation8 + $0x48] sm:$0xff]
        %v4301 = vld [vmem:[#allocation8 + $0x50] sm:$0xff]
        %v4302 = vld [vmem:[#allocation8 + $0x58] sm:$0xff]
        %v4303 = vld [vmem:[#allocation8 + $0x60] sm:$0xff]
        %v4304 = vld [vmem:[#allocation8 + $0x68] sm:$0xff]
        %v4305 = vld [vmem:[#allocation8 + $0x70] sm:$0xff]
        %v4306 = vld [vmem:[#allocation8 + $0x78] sm:$0xff]
        %v4307 = vld [vmem:[#allocation8 + $0x80] sm:$0xff]
        %v4308 = vld [vmem:[#allocation8 + $0x88] sm:$0xff]
        %v4309 = vld [vmem:[#allocation8 + $0x90] sm:$0xff]
        %v4310 = vld [vmem:[#allocation8 + $0x98] sm:$0xff]
        %v4311 = vld [vmem:[#allocation8 + $0xa0] sm:$0xff]
        %v4312 = vld [vmem:[#allocation8 + $0xa8] sm:$0xff]
        %v4313 = vld [vmem:[#allocation8 + $0xb0] sm:$0xff]
        %v4314 = vld [vmem:[#allocation8 + $0xb8] sm:$0xff]
        %v4315 = vld [vmem:[#allocation8 + $0xc0] sm:$0xff]
        %v4316 = vld [vmem:[#allocation8 + $0xc8] sm:$0xff]
        %v4317 = vld [vmem:[#allocation8 + $0xd0] sm:$0xff]
        %v4318 = vld [vmem:[#allocation8 + $0xd8] sm:$0xff]
        %v4319 = vld [vmem:[#allocation8 + $0xe0] sm:$0xff]
        %v4320 = vld [vmem:[#allocation8 + $0xe8] sm:$0xff]
        %v4321 = vld [vmem:[#allocation8 + $0xf0] sm:$0xff]
        %v4322 = vld [vmem:[#allocation8 + $0xf8] sm:$0xff]
        %v4323 = vld [vmem:[#allocation8 + $0x100] sm:$0xff]
        %v4324 = vld [vmem:[#allocation8 + $0x108] sm:$0xff]
        %v4325 = vld [vmem:[#allocation8 + $0x110] sm:$0xff]
        %v4326 = vld [vmem:[#allocation8 + $0x118] sm:$0xff]
        %v4327 = vld [vmem:[#allocation8 + $0x120] sm:$0xff]
        %v4328 = vld [vmem:[#allocation8 + $0x128] sm:$0xff]
        %v4329 = vld [vmem:[#allocation8 + $0x130] sm:$0xff]
        %v4330 = vld [vmem:[#allocation8 + $0x138] sm:$0xff]
        %v4331 = vld [vmem:[#allocation8 + $0x140] sm:$0xff]
        %v4332 = vld [vmem:[#allocation8 + $0x148] sm:$0xff]
        %v4333 = vld [vmem:[#allocation8 + $0x150] sm:$0xff]
        %v4334 = vld [vmem:[#allocation8 + $0x158] sm:$0xff]
        %v4335 = vld [vmem:[#allocation8 + $0x160] sm:$0xff]
        %v4336 = vld [vmem:[#allocation8 + $0x168] sm:$0xff]
        %v4337 = vld [vmem:[#allocation8 + $0x170] sm:$0xff]
        %v4338 = vld [vmem:[#allocation8 + $0x178] sm:$0xff]
        %v4339 = vld [vmem:[#allocation8 + $0x180] sm:$0xff]
        %v4340 = vld [vmem:[#allocation8 + $0x188] sm:$0xff]
        %v4341 = vld [vmem:[#allocation8 + $0x190] sm:$0xff]
        %v4342 = vld [vmem:[#allocation8 + $0x198] sm:$0xff]
        %v4343 = vld [vmem:[#allocation8 + $0x1a0] sm:$0xff]
        %v4344 = vld [vmem:[#allocation8 + $0x1a8] sm:$0xff]
        %v4345 = vld [vmem:[#allocation8 + $0x1b0] sm:$0xff]
        %v4346 = vld [vmem:[#allocation8 + $0x1b8] sm:$0xff]
        %v4347 = vld [vmem:[#allocation8 + $0x1c0] sm:$0xff]
        %v4348 = vld [vmem:[#allocation8 + $0x1c8] sm:$0xff]
        %v4349 = vld [vmem:[#allocation8 + $0x1d0] sm:$0xff]
        %v4350 = vld [vmem:[#allocation8 + $0x1d8] sm:$0xff]
        %v4351 = vld [vmem:[#allocation8 + $0x1e0] sm:$0xff]
        %v4352 = vld [vmem:[#allocation8 + $0x1e8] sm:$0xff]
        %v4353 = vld [vmem:[#allocation8 + $0x1f0] sm:$0xff]
        %v4354 = vld [vmem:[#allocation8 + $0x1f8] sm:$0xff]
        %v4355 = vld [vmem:[#allocation8 + $0x200] sm:$0xff]
        %v4356 = vld [vmem:[#allocation8 + $0x208] sm:$0xff]
        %v4357 = vld [vmem:[#allocation8 + $0x210] sm:$0xff]
        %v4358 = vld [vmem:[#allocation8 + $0x218] sm:$0xff]
        %v4359 = vld [vmem:[#allocation8 + $0x220] sm:$0xff]
        %v4360 = vld [vmem:[#allocation8 + $0x228] sm:$0xff]
        %v4361 = vld [vmem:[#allocation8 + $0x230] sm:$0xff]
        %v4362 = vld [vmem:[#allocation8 + $0x238] sm:$0xff]
        %v4363 = vld [vmem:[#allocation8 + $0x240] sm:$0xff]
        %v4364 = vld [vmem:[#allocation8 + $0x248] sm:$0xff]
        %v4365 = vld [vmem:[#allocation8 + $0x250] sm:$0xff]
        %v4366 = vld [vmem:[#allocation8 + $0x258] sm:$0xff]
        %v4367 = vld [vmem:[#allocation8 + $0x260] sm:$0xff]
        %v4368 = vld [vmem:[#allocation8 + $0x268] sm:$0xff]
        %v4369 = vld [vmem:[#allocation8 + $0x270] sm:$0xff]
        %v4370 = vld [vmem:[#allocation8 + $0x278] sm:$0xff]
        %v4371 = vld [vmem:[#allocation8 + $0x280] sm:$0xff]
        %v4372 = vld [vmem:[#allocation8 + $0x288] sm:$0xff]
        %v4373 = vld [vmem:[#allocation8 + $0x290] sm:$0xff]
        %v4374 = vld [vmem:[#allocation8 + $0x298] sm:$0xff]
        %v4375 = vld [vmem:[#allocation8 + $0x2a0] sm:$0xff]
        %v4376 = vld [vmem:[#allocation8 + $0x2a8] sm:$0xff]
        %v4377 = vld [vmem:[#allocation8 + $0x2b0] sm:$0xff]
        %v4378 = vld [vmem:[#allocation8 + $0x2b8] sm:$0xff]
        %v4379 = vld [vmem:[#allocation8 + $0x2c0] sm:$0xff]
        %v4380 = vld [vmem:[#allocation8 + $0x2c8] sm:$0xff]
        %v4381 = vld [vmem:[#allocation8 + $0x2d0] sm:$0xff]
        %v4382 = vld [vmem:[#allocation8 + $0x2d8] sm:$0xff]
        %v4383 = vld [vmem:[#allocation8 + $0x2e0] sm:$0xff]
        %v4384 = vld [vmem:[#allocation8 + $0x2e8] sm:$0xff]
        %v4385 = vld [vmem:[#allocation8 + $0x2f0] sm:$0xff]
        %v4386 = vld [vmem:[#allocation8 + $0x2f8] sm:$0xff]
        %v4387 = vld [vmem:[#allocation8 + $0x300] sm:$0xff]
        %v4388 = vld [vmem:[#allocation8 + $0x308] sm:$0xff]
        %v4389 = vld [vmem:[#allocation8 + $0x310] sm:$0xff]
        %v4390 = vld [vmem:[#allocation8 + $0x318] sm:$0xff]
        %v4391 = vld [vmem:[#allocation8 + $0x320] sm:$0xff]
        %v4392 = vld [vmem:[#allocation8 + $0x328] sm:$0xff]
        %v4393 = vld [vmem:[#allocation8 + $0x330] sm:$0xff]
        %v4394 = vld [vmem:[#allocation8 + $0x338] sm:$0xff]
        %v4395 = vld [vmem:[#allocation8 + $0x340] sm:$0xff]
        %v4396 = vld [vmem:[#allocation8 + $0x348] sm:$0xff]
        %v4397 = vld [vmem:[#allocation8 + $0x350] sm:$0xff]
        %v4398 = vld [vmem:[#allocation8 + $0x358] sm:$0xff]
        %v4399 = vld [vmem:[#allocation8 + $0x360] sm:$0xff]
        %v4400 = vld [vmem:[#allocation8 + $0x368] sm:$0xff]
        %v4401 = vld [vmem:[#allocation8 + $0x370] sm:$0xff]
        %v4402 = vld [vmem:[#allocation8 + $0x378] sm:$0xff]
        %v4403 = vld [vmem:[#allocation8 + $0x380] sm:$0xff]
        %v4404 = vld [vmem:[#allocation8 + $0x388] sm:$0xff]
        %v4405 = vld [vmem:[#allocation8 + $0x390] sm:$0xff]
        %v4406 = vld [vmem:[#allocation8 + $0x398] sm:$0xff]
        %v4407 = vld [vmem:[#allocation8 + $0x3a0] sm:$0xff]
        %v4408 = vld [vmem:[#allocation8 + $0x3a8] sm:$0xff]
        %v4409 = vld [vmem:[#allocation8 + $0x3b0] sm:$0xff]
        %v4410 = vld [vmem:[#allocation8 + $0x3b8] sm:$0xff]
        %v4411 = vld [vmem:[#allocation8 + $0x3c0] sm:$0xff]
        %v4412 = vld [vmem:[#allocation8 + $0x3c8] sm:$0xff]
        %v4413 = vld [vmem:[#allocation8 + $0x3d0] sm:$0xff]
        %v4414 = vld [vmem:[#allocation8 + $0x3d8] sm:$0xff]
        %v4415 = vld [vmem:[#allocation8 + $0x3e0] sm:$0xff]
        %v4416 = vld [vmem:[#allocation8 + $0x3e8] sm:$0xff]
        %v4417 = vld [vmem:[#allocation8 + $0x3f0] sm:$0xff]
        %v4418 = vld [vmem:[#allocation8 + $0x3f8] sm:$0xff]
        %v4419 = vld [vmem:[#allocation10] sm:$0xf]
        %v4421 = vlaneseq
        %v4422 = vshrl.u32 %v4421, 7
        %v4423 = vsub.s32 0, %v4422
        %v4424 = vrot.slane %v4419, %v4423
        %v4425 = vlaneseq
        %v4426 = vshrl.u32 %v4425, 7
        %v4427 = vsub.s32 1, %v4426
        %v4428 = vrot.slane %v4419, %v4427
        %v4429 = vlaneseq
        %v4430 = vshrl.u32 %v4429, 7
        %v4431 = vsub.s32 2, %v4430
        %v4432 = vrot.slane %v4419, %v4431
        %v4433 = vlaneseq
        %v4434 = vshrl.u32 %v4433, 7
        %v4435 = vsub.s32 3, %v4434
        %v4436 = vrot.slane %v4419, %v4435
        %v4569 = vunpack.c.l.b16 %v4291
        %v4570 = vunpack.c.h.b16 %v4291
        %v4571 = vunpack.c.l.b16 %v4292
        %v4572 = vunpack.c.h.b16 %v4292
        %v4573 = vunpack.c.l.b16 %v4293
        %v4574 = vunpack.c.h.b16 %v4293
        %v4575 = vunpack.c.l.b16 %v4294
        %v4576 = vunpack.c.h.b16 %v4294
        %v4577 = vunpack.c.l.b16 %v4295
        %v4578 = vunpack.c.h.b16 %v4295
        %v4579 = vunpack.c.l.b16 %v4296
        %v4580 = vunpack.c.h.b16 %v4296
        %v4581 = vunpack.c.l.b16 %v4297
        %v4582 = vunpack.c.h.b16 %v4297
        %v4583 = vunpack.c.l.b16 %v4298
        %v4584 = vunpack.c.h.b16 %v4298
        %v4585 = vunpack.c.l.b16 %v4299
        %v4586 = vunpack.c.h.b16 %v4299
        %v4587 = vunpack.c.l.b16 %v4300
        %v4588 = vunpack.c.h.b16 %v4300
        %v4589 = vunpack.c.l.b16 %v4301
        %v4590 = vunpack.c.h.b16 %v4301
        %v4591 = vunpack.c.l.b16 %v4302
        %v4592 = vunpack.c.h.b16 %v4302
        %v4593 = vunpack.c.l.b16 %v4303
        %v4594 = vunpack.c.h.b16 %v4303
        %v4595 = vunpack.c.l.b16 %v4304
        %v4596 = vunpack.c.h.b16 %v4304
        %v4597 = vunpack.c.l.b16 %v4305
        %v4598 = vunpack.c.h.b16 %v4305
        %v4599 = vunpack.c.l.b16 %v4306
        %v4600 = vunpack.c.h.b16 %v4306
        %v4601 = vunpack.c.l.b16 %v4307
        %v4602 = vunpack.c.h.b16 %v4307
        %v4603 = vunpack.c.l.b16 %v4308
        %v4604 = vunpack.c.h.b16 %v4308
        %v4605 = vunpack.c.l.b16 %v4309
        %v4606 = vunpack.c.h.b16 %v4309
        %v4607 = vunpack.c.l.b16 %v4310
        %v4608 = vunpack.c.h.b16 %v4310
        %v4609 = vunpack.c.l.b16 %v4311
        %v4610 = vunpack.c.h.b16 %v4311
        %v4611 = vunpack.c.l.b16 %v4312
        %v4612 = vunpack.c.h.b16 %v4312
        %v4613 = vunpack.c.l.b16 %v4313
        %v4614 = vunpack.c.h.b16 %v4313
        %v4615 = vunpack.c.l.b16 %v4314
        %v4616 = vunpack.c.h.b16 %v4314
        %v4617 = vunpack.c.l.b16 %v4315
        %v4618 = vunpack.c.h.b16 %v4315
        %v4619 = vunpack.c.l.b16 %v4316
        %v4620 = vunpack.c.h.b16 %v4316
        %v4621 = vunpack.c.l.b16 %v4317
        %v4622 = vunpack.c.h.b16 %v4317
        %v4623 = vunpack.c.l.b16 %v4318
        %v4624 = vunpack.c.h.b16 %v4318
        %v4625 = vunpack.c.l.b16 %v4319
        %v4626 = vunpack.c.h.b16 %v4319
        %v4627 = vunpack.c.l.b16 %v4320
        %v4628 = vunpack.c.h.b16 %v4320
        %v4629 = vunpack.c.l.b16 %v4321
        %v4630 = vunpack.c.h.b16 %v4321
        %v4631 = vunpack.c.l.b16 %v4322
        %v4632 = vunpack.c.h.b16 %v4322
        %v4633 = vunpack.c.l.b16 %v4323
        %v4634 = vunpack.c.h.b16 %v4323
        %v4635 = vunpack.c.l.b16 %v4324
        %v4636 = vunpack.c.h.b16 %v4324
        %v4637 = vunpack.c.l.b16 %v4325
        %v4638 = vunpack.c.h.b16 %v4325
        %v4639 = vunpack.c.l.b16 %v4326
        %v4640 = vunpack.c.h.b16 %v4326
        %v4641 = vunpack.c.l.b16 %v4327
        %v4642 = vunpack.c.h.b16 %v4327
        %v4643 = vunpack.c.l.b16 %v4328
        %v4644 = vunpack.c.h.b16 %v4328
        %v4645 = vunpack.c.l.b16 %v4329
        %v4646 = vunpack.c.h.b16 %v4329
        %v4647 = vunpack.c.l.b16 %v4330
        %v4648 = vunpack.c.h.b16 %v4330
        %v4649 = vunpack.c.l.b16 %v4331
        %v4650 = vunpack.c.h.b16 %v4331
        %v4651 = vunpack.c.l.b16 %v4332
        %v4652 = vunpack.c.h.b16 %v4332
        %v4653 = vunpack.c.l.b16 %v4333
        %v4654 = vunpack.c.h.b16 %v4333
        %v4655 = vunpack.c.l.b16 %v4334
        %v4656 = vunpack.c.h.b16 %v4334
        %v4657 = vunpack.c.l.b16 %v4335
        %v4658 = vunpack.c.h.b16 %v4335
        %v4659 = vunpack.c.l.b16 %v4336
        %v4660 = vunpack.c.h.b16 %v4336
        %v4661 = vunpack.c.l.b16 %v4337
        %v4662 = vunpack.c.h.b16 %v4337
        %v4663 = vunpack.c.l.b16 %v4338
        %v4664 = vunpack.c.h.b16 %v4338
        %v4665 = vunpack.c.l.b16 %v4339
        %v4666 = vunpack.c.h.b16 %v4339
        %v4667 = vunpack.c.l.b16 %v4340
        %v4668 = vunpack.c.h.b16 %v4340
        %v4669 = vunpack.c.l.b16 %v4341
        %v4670 = vunpack.c.h.b16 %v4341
        %v4671 = vunpack.c.l.b16 %v4342
        %v4672 = vunpack.c.h.b16 %v4342
        %v4673 = vunpack.c.l.b16 %v4343
        %v4674 = vunpack.c.h.b16 %v4343
        %v4675 = vunpack.c.l.b16 %v4344
        %v4676 = vunpack.c.h.b16 %v4344
        %v4677 = vunpack.c.l.b16 %v4345
        %v4678 = vunpack.c.h.b16 %v4345
        %v4679 = vunpack.c.l.b16 %v4346
        %v4680 = vunpack.c.h.b16 %v4346
        %v4681 = vunpack.c.l.b16 %v4347
        %v4682 = vunpack.c.h.b16 %v4347
        %v4683 = vunpack.c.l.b16 %v4348
        %v4684 = vunpack.c.h.b16 %v4348
        %v4685 = vunpack.c.l.b16 %v4349
        %v4686 = vunpack.c.h.b16 %v4349
        %v4687 = vunpack.c.l.b16 %v4350
        %v4688 = vunpack.c.h.b16 %v4350
        %v4689 = vunpack.c.l.b16 %v4351
        %v4690 = vunpack.c.h.b16 %v4351
        %v4691 = vunpack.c.l.b16 %v4352
        %v4692 = vunpack.c.h.b16 %v4352
        %v4693 = vunpack.c.l.b16 %v4353
        %v4694 = vunpack.c.h.b16 %v4353
        %v4695 = vunpack.c.l.b16 %v4354
        %v4696 = vunpack.c.h.b16 %v4354
        %v4697 = vunpack.c.l.b16 %v4355
        %v4698 = vunpack.c.h.b16 %v4355
        %v4699 = vunpack.c.l.b16 %v4356
        %v4700 = vunpack.c.h.b16 %v4356
        %v4701 = vunpack.c.l.b16 %v4357
        %v4702 = vunpack.c.h.b16 %v4357
        %v4703 = vunpack.c.l.b16 %v4358
        %v4704 = vunpack.c.h.b16 %v4358
        %v4705 = vunpack.c.l.b16 %v4359
        %v4706 = vunpack.c.h.b16 %v4359
        %v4707 = vunpack.c.l.b16 %v4360
        %v4708 = vunpack.c.h.b16 %v4360
        %v4709 = vunpack.c.l.b16 %v4361
        %v4710 = vunpack.c.h.b16 %v4361
        %v4711 = vunpack.c.l.b16 %v4362
        %v4712 = vunpack.c.h.b16 %v4362
        %v4713 = vunpack.c.l.b16 %v4363
        %v4714 = vunpack.c.h.b16 %v4363
        %v4715 = vunpack.c.l.b16 %v4364
        %v4716 = vunpack.c.h.b16 %v4364
        %v4717 = vunpack.c.l.b16 %v4365
        %v4718 = vunpack.c.h.b16 %v4365
        %v4719 = vunpack.c.l.b16 %v4366
        %v4720 = vunpack.c.h.b16 %v4366
        %v4721 = vunpack.c.l.b16 %v4367
        %v4722 = vunpack.c.h.b16 %v4367
        %v4723 = vunpack.c.l.b16 %v4368
        %v4724 = vunpack.c.h.b16 %v4368
        %v4725 = vunpack.c.l.b16 %v4369
        %v4726 = vunpack.c.h.b16 %v4369
        %v4727 = vunpack.c.l.b16 %v4370
        %v4728 = vunpack.c.h.b16 %v4370
        %v4729 = vunpack.c.l.b16 %v4371
        %v4730 = vunpack.c.h.b16 %v4371
        %v4731 = vunpack.c.l.b16 %v4372
        %v4732 = vunpack.c.h.b16 %v4372
        %v4733 = vunpack.c.l.b16 %v4373
        %v4734 = vunpack.c.h.b16 %v4373
        %v4735 = vunpack.c.l.b16 %v4374
        %v4736 = vunpack.c.h.b16 %v4374
        %v4737 = vunpack.c.l.b16 %v4375
        %v4738 = vunpack.c.h.b16 %v4375
        %v4739 = vunpack.c.l.b16 %v4376
        %v4740 = vunpack.c.h.b16 %v4376
        %v4741 = vunpack.c.l.b16 %v4377
        %v4742 = vunpack.c.h.b16 %v4377
        %v4743 = vunpack.c.l.b16 %v4378
        %v4744 = vunpack.c.h.b16 %v4378
        %v4745 = vunpack.c.l.b16 %v4379
        %v4746 = vunpack.c.h.b16 %v4379
        %v4747 = vunpack.c.l.b16 %v4380
        %v4748 = vunpack.c.h.b16 %v4380
        %v4749 = vunpack.c.l.b16 %v4381
        %v4750 = vunpack.c.h.b16 %v4381
        %v4751 = vunpack.c.l.b16 %v4382
        %v4752 = vunpack.c.h.b16 %v4382
        %v4753 = vunpack.c.l.b16 %v4383
        %v4754 = vunpack.c.h.b16 %v4383
        %v4755 = vunpack.c.l.b16 %v4384
        %v4756 = vunpack.c.h.b16 %v4384
        %v4757 = vunpack.c.l.b16 %v4385
        %v4758 = vunpack.c.h.b16 %v4385
        %v4759 = vunpack.c.l.b16 %v4386
        %v4760 = vunpack.c.h.b16 %v4386
        %v4761 = vunpack.c.l.b16 %v4387
        %v4762 = vunpack.c.h.b16 %v4387
        %v4763 = vunpack.c.l.b16 %v4388
        %v4764 = vunpack.c.h.b16 %v4388
        %v4765 = vunpack.c.l.b16 %v4389
        %v4766 = vunpack.c.h.b16 %v4389
        %v4767 = vunpack.c.l.b16 %v4390
        %v4768 = vunpack.c.h.b16 %v4390
        %v4769 = vunpack.c.l.b16 %v4391
        %v4770 = vunpack.c.h.b16 %v4391
        %v4771 = vunpack.c.l.b16 %v4392
        %v4772 = vunpack.c.h.b16 %v4392
        %v4773 = vunpack.c.l.b16 %v4393
        %v4774 = vunpack.c.h.b16 %v4393
        %v4775 = vunpack.c.l.b16 %v4394
        %v4776 = vunpack.c.h.b16 %v4394
        %v4777 = vunpack.c.l.b16 %v4395
        %v4778 = vunpack.c.h.b16 %v4395
        %v4779 = vunpack.c.l.b16 %v4396
        %v4780 = vunpack.c.h.b16 %v4396
        %v4781 = vunpack.c.l.b16 %v4397
        %v4782 = vunpack.c.h.b16 %v4397
        %v4783 = vunpack.c.l.b16 %v4398
        %v4784 = vunpack.c.h.b16 %v4398
        %v4785 = vunpack.c.l.b16 %v4399
        %v4786 = vunpack.c.h.b16 %v4399
        %v4787 = vunpack.c.l.b16 %v4400
        %v4788 = vunpack.c.h.b16 %v4400
        %v4789 = vunpack.c.l.b16 %v4401
        %v4790 = vunpack.c.h.b16 %v4401
        %v4791 = vunpack.c.l.b16 %v4402
        %v4792 = vunpack.c.h.b16 %v4402
        %v4793 = vunpack.c.l.b16 %v4403
        %v4794 = vunpack.c.h.b16 %v4403
        %v4795 = vunpack.c.l.b16 %v4404
        %v4796 = vunpack.c.h.b16 %v4404
        %v4797 = vunpack.c.l.b16 %v4405
        %v4798 = vunpack.c.h.b16 %v4405
        %v4799 = vunpack.c.l.b16 %v4406
        %v4800 = vunpack.c.h.b16 %v4406
        %v4801 = vunpack.c.l.b16 %v4407
        %v4802 = vunpack.c.h.b16 %v4407
        %v4803 = vunpack.c.l.b16 %v4408
        %v4804 = vunpack.c.h.b16 %v4408
        %v4805 = vunpack.c.l.b16 %v4409
        %v4806 = vunpack.c.h.b16 %v4409
        %v4807 = vunpack.c.l.b16 %v4410
        %v4808 = vunpack.c.h.b16 %v4410
        %v4809 = vunpack.c.l.b16 %v4411
        %v4810 = vunpack.c.h.b16 %v4411
        %v4811 = vunpack.c.l.b16 %v4412
        %v4812 = vunpack.c.h.b16 %v4412
        %v4813 = vunpack.c.l.b16 %v4413
        %v4814 = vunpack.c.h.b16 %v4413
        %v4815 = vunpack.c.l.b16 %v4414
        %v4816 = vunpack.c.h.b16 %v4414
        %v4817 = vunpack.c.l.b16 %v4415
        %v4818 = vunpack.c.h.b16 %v4415
        %v4819 = vunpack.c.l.b16 %v4416
        %v4820 = vunpack.c.h.b16 %v4416
        %v4821 = vunpack.c.l.b16 %v4417
        %v4822 = vunpack.c.h.b16 %v4417
        %v4823 = vunpack.c.l.b16 %v4418
        %v4824 = vunpack.c.h.b16 %v4418
        %v4825 = vpack.c.b16 %v4573, %v4569
        %v4826 = vpack.c.b16 %v4574, %v4570
        %v4827 = vpack.c.b16 %v4575, %v4571
        %v4828 = vpack.c.b16 %v4576, %v4572
        %v4829 = vpack.c.b16 %v4581, %v4577
        %v4830 = vpack.c.b16 %v4582, %v4578
        %v4831 = vpack.c.b16 %v4583, %v4579
        %v4832 = vpack.c.b16 %v4584, %v4580
        %v4833 = vpack.c.b16 %v4589, %v4585
        %v4834 = vpack.c.b16 %v4590, %v4586
        %v4835 = vpack.c.b16 %v4591, %v4587
        %v4836 = vpack.c.b16 %v4592, %v4588
        %v4837 = vpack.c.b16 %v4597, %v4593
        %v4838 = vpack.c.b16 %v4598, %v4594
        %v4839 = vpack.c.b16 %v4599, %v4595
        %v4840 = vpack.c.b16 %v4600, %v4596
        %v4841 = vpack.c.b16 %v4605, %v4601
        %v4842 = vpack.c.b16 %v4606, %v4602
        %v4843 = vpack.c.b16 %v4607, %v4603
        %v4844 = vpack.c.b16 %v4608, %v4604
        %v4845 = vpack.c.b16 %v4613, %v4609
        %v4846 = vpack.c.b16 %v4614, %v4610
        %v4847 = vpack.c.b16 %v4615, %v4611
        %v4848 = vpack.c.b16 %v4616, %v4612
        %v4849 = vpack.c.b16 %v4621, %v4617
        %v4850 = vpack.c.b16 %v4622, %v4618
        %v4851 = vpack.c.b16 %v4623, %v4619
        %v4852 = vpack.c.b16 %v4624, %v4620
        %v4853 = vpack.c.b16 %v4629, %v4625
        %v4854 = vpack.c.b16 %v4630, %v4626
        %v4855 = vpack.c.b16 %v4631, %v4627
        %v4856 = vpack.c.b16 %v4632, %v4628
        %v4857 = vpack.c.b16 %v4637, %v4633
        %v4858 = vpack.c.b16 %v4638, %v4634
        %v4859 = vpack.c.b16 %v4639, %v4635
        %v4860 = vpack.c.b16 %v4640, %v4636
        %v4861 = vpack.c.b16 %v4645, %v4641
        %v4862 = vpack.c.b16 %v4646, %v4642
        %v4863 = vpack.c.b16 %v4647, %v4643
        %v4864 = vpack.c.b16 %v4648, %v4644
        %v4865 = vpack.c.b16 %v4653, %v4649
        %v4866 = vpack.c.b16 %v4654, %v4650
        %v4867 = vpack.c.b16 %v4655, %v4651
        %v4868 = vpack.c.b16 %v4656, %v4652
        %v4869 = vpack.c.b16 %v4661, %v4657
        %v4870 = vpack.c.b16 %v4662, %v4658
        %v4871 = vpack.c.b16 %v4663, %v4659
        %v4872 = vpack.c.b16 %v4664, %v4660
        %v4873 = vpack.c.b16 %v4669, %v4665
        %v4874 = vpack.c.b16 %v4670, %v4666
        %v4875 = vpack.c.b16 %v4671, %v4667
        %v4876 = vpack.c.b16 %v4672, %v4668
        %v4877 = vpack.c.b16 %v4677, %v4673
        %v4878 = vpack.c.b16 %v4678, %v4674
        %v4879 = vpack.c.b16 %v4679, %v4675
        %v4880 = vpack.c.b16 %v4680, %v4676
        %v4881 = vpack.c.b16 %v4685, %v4681
        %v4882 = vpack.c.b16 %v4686, %v4682
        %v4883 = vpack.c.b16 %v4687, %v4683
        %v4884 = vpack.c.b16 %v4688, %v4684
        %v4885 = vpack.c.b16 %v4693, %v4689
        %v4886 = vpack.c.b16 %v4694, %v4690
        %v4887 = vpack.c.b16 %v4695, %v4691
        %v4888 = vpack.c.b16 %v4696, %v4692
        %v4889 = vpack.c.b16 %v4701, %v4697
        %v4890 = vpack.c.b16 %v4702, %v4698
        %v4891 = vpack.c.b16 %v4703, %v4699
        %v4892 = vpack.c.b16 %v4704, %v4700
        %v4893 = vpack.c.b16 %v4709, %v4705
        %v4894 = vpack.c.b16 %v4710, %v4706
        %v4895 = vpack.c.b16 %v4711, %v4707
        %v4896 = vpack.c.b16 %v4712, %v4708
        %v4897 = vpack.c.b16 %v4717, %v4713
        %v4898 = vpack.c.b16 %v4718, %v4714
        %v4899 = vpack.c.b16 %v4719, %v4715
        %v4900 = vpack.c.b16 %v4720, %v4716
        %v4901 = vpack.c.b16 %v4725, %v4721
        %v4902 = vpack.c.b16 %v4726, %v4722
        %v4903 = vpack.c.b16 %v4727, %v4723
        %v4904 = vpack.c.b16 %v4728, %v4724
        %v4905 = vpack.c.b16 %v4733, %v4729
        %v4906 = vpack.c.b16 %v4734, %v4730
        %v4907 = vpack.c.b16 %v4735, %v4731
        %v4908 = vpack.c.b16 %v4736, %v4732
        %v4909 = vpack.c.b16 %v4741, %v4737
        %v4910 = vpack.c.b16 %v4742, %v4738
        %v4911 = vpack.c.b16 %v4743, %v4739
        %v4912 = vpack.c.b16 %v4744, %v4740
        %v4913 = vpack.c.b16 %v4749, %v4745
        %v4914 = vpack.c.b16 %v4750, %v4746
        %v4915 = vpack.c.b16 %v4751, %v4747
        %v4916 = vpack.c.b16 %v4752, %v4748
        %v4917 = vpack.c.b16 %v4757, %v4753
        %v4918 = vpack.c.b16 %v4758, %v4754
        %v4919 = vpack.c.b16 %v4759, %v4755
        %v4920 = vpack.c.b16 %v4760, %v4756
        %v4921 = vpack.c.b16 %v4765, %v4761
        %v4922 = vpack.c.b16 %v4766, %v4762
        %v4923 = vpack.c.b16 %v4767, %v4763
        %v4924 = vpack.c.b16 %v4768, %v4764
        %v4925 = vpack.c.b16 %v4773, %v4769
        %v4926 = vpack.c.b16 %v4774, %v4770
        %v4927 = vpack.c.b16 %v4775, %v4771
        %v4928 = vpack.c.b16 %v4776, %v4772
        %v4929 = vpack.c.b16 %v4781, %v4777
        %v4930 = vpack.c.b16 %v4782, %v4778
        %v4931 = vpack.c.b16 %v4783, %v4779
        %v4932 = vpack.c.b16 %v4784, %v4780
        %v4933 = vpack.c.b16 %v4789, %v4785
        %v4934 = vpack.c.b16 %v4790, %v4786
        %v4935 = vpack.c.b16 %v4791, %v4787
        %v4936 = vpack.c.b16 %v4792, %v4788
        %v4937 = vpack.c.b16 %v4797, %v4793
        %v4938 = vpack.c.b16 %v4798, %v4794
        %v4939 = vpack.c.b16 %v4799, %v4795
        %v4940 = vpack.c.b16 %v4800, %v4796
        %v4941 = vpack.c.b16 %v4805, %v4801
        %v4942 = vpack.c.b16 %v4806, %v4802
        %v4943 = vpack.c.b16 %v4807, %v4803
        %v4944 = vpack.c.b16 %v4808, %v4804
        %v4945 = vpack.c.b16 %v4813, %v4809
        %v4946 = vpack.c.b16 %v4814, %v4810
        %v4947 = vpack.c.b16 %v4815, %v4811
        %v4948 = vpack.c.b16 %v4816, %v4812
        %v4949 = vpack.c.b16 %v4821, %v4817
        %v4950 = vpack.c.b16 %v4822, %v4818
        %v4951 = vpack.c.b16 %v4823, %v4819
        %v4952 = vpack.c.b16 %v4824, %v4820
        %5081 = vmatprep.subr.bf16.mxu0 %v4826
        %5082 = vmatpush1.bf16.msra.mxu0 %v4825
        %5083 = vmatprep.subr.bf16.mxu0 %v4830
        %5084 = vmatpush1.bf16.msra.mxu0 %v4829
        %5085 = vmatprep.subr.bf16.mxu0 %v4834
        %5086 = vmatpush1.bf16.msra.mxu0 %v4833
        %5087 = vmatprep.subr.bf16.mxu0 %v4838
        %5088 = vmatpush1.bf16.msra.mxu0 %v4837
        %5089 = vmatprep.subr.bf16.mxu0 %v4842
        %5090 = vmatpush1.bf16.msra.mxu0 %v4841
        %5091 = vmatprep.subr.bf16.mxu0 %v4846
        %5092 = vmatpush1.bf16.msra.mxu0 %v4845
        %5093 = vmatprep.subr.bf16.mxu0 %v4850
        %5094 = vmatpush1.bf16.msra.mxu0 %v4849
        %5095 = vmatprep.subr.bf16.mxu0 %v4854
        %5096 = vmatpush1.bf16.msra.mxu0 %v4853
        %5097 = vmatprep.subr.bf16.mxu0 %v4858
        %5098 = vmatpush1.bf16.msra.mxu0 %v4857
        %5099 = vmatprep.subr.bf16.mxu0 %v4862
        %5100 = vmatpush1.bf16.msra.mxu0 %v4861
        %5101 = vmatprep.subr.bf16.mxu0 %v4866
        %5102 = vmatpush1.bf16.msra.mxu0 %v4865
        %5103 = vmatprep.subr.bf16.mxu0 %v4870
        %5104 = vmatpush1.bf16.msra.mxu0 %v4869
        %5105 = vmatprep.subr.bf16.mxu0 %v4874
        %5106 = vmatpush1.bf16.msra.mxu0 %v4873
        %5107 = vmatprep.subr.bf16.mxu0 %v4878
        %5108 = vmatpush1.bf16.msra.mxu0 %v4877
        %5109 = vmatprep.subr.bf16.mxu0 %v4882
        %5110 = vmatpush1.bf16.msra.mxu0 %v4881
        %5111 = vmatprep.subr.bf16.mxu0 %v4886
        %5112 = vmatpush1.bf16.msra.mxu0 %v4885
        %5113 = vmatprep.mubr.bf16.mxu0 %v4281
        %5114 = vmatmul.mubr.bf16.gmra.mrb[0].mxu0 %v4277
        %v5115 = vpop.f32.mrb[0].mxu0
        %v5116 = vadd.f32 %v4424, %v5115
        %v5117 = vpop.f32.mrb[0].mxu0
        %v5118 = vadd.f32 %v4428, %v5117
        %v5119 = vpop.f32.mrb[0].mxu0
        %v5120 = vpop.f32.mrb[0].mxu0
        %5121 = vdwg.mxu0
        %5122 = vmatprep.subr.bf16.mxu0 %v4890
        %5123 = vmatpush1.bf16.msra.mxu0 %v4889
        %5124 = vmatprep.subr.bf16.mxu0 %v4894
        %5125 = vmatpush1.bf16.msra.mxu0 %v4893
        %5126 = vmatprep.subr.bf16.mxu0 %v4898
        %5127 = vmatpush1.bf16.msra.mxu0 %v4897
        %5128 = vmatprep.subr.bf16.mxu0 %v4902
        %5129 = vmatpush1.bf16.msra.mxu0 %v4901
        %5130 = vmatprep.subr.bf16.mxu0 %v4906
        %5131 = vmatpush1.bf16.msra.mxu0 %v4905
        %5132 = vmatprep.subr.bf16.mxu0 %v4910
        %5133 = vmatpush1.bf16.msra.mxu0 %v4909
        %5134 = vmatprep.subr.bf16.mxu0 %v4914
        %5135 = vmatpush1.bf16.msra.mxu0 %v4913
        %5136 = vmatprep.subr.bf16.mxu0 %v4918
        %5137 = vmatpush1.bf16.msra.mxu0 %v4917
        %5138 = vmatprep.subr.bf16.mxu0 %v4922
        %5139 = vmatpush1.bf16.msra.mxu0 %v4921
        %5140 = vmatprep.subr.bf16.mxu0 %v4926
        %5141 = vmatpush1.bf16.msra.mxu0 %v4925
        %5142 = vmatprep.subr.bf16.mxu0 %v4930
        %5143 = vmatpush1.bf16.msra.mxu0 %v4929
        %5144 = vmatprep.subr.bf16.mxu0 %v4934
        %5145 = vmatpush1.bf16.msra.mxu0 %v4933
        %5146 = vmatprep.subr.bf16.mxu0 %v4938
        %5147 = vmatpush1.bf16.msra.mxu0 %v4937
        %5148 = vmatprep.subr.bf16.mxu0 %v4942
        %5149 = vmatpush1.bf16.msra.mxu0 %v4941
        %5150 = vmatprep.subr.bf16.mxu0 %v4946
        %5151 = vmatpush1.bf16.msra.mxu0 %v4945
        %5152 = vmatprep.subr.bf16.mxu0 %v4950
        %5153 = vmatpush1.bf16.msra.mxu0 %v4949
        %5154 = vmatprep.mubr.bf16.mxu0 %v4289
        %5155 = vmatmul.mubr.bf16.gmra.mrb[0].mxu0 %v4285
        %v5156 = vpop.f32.mrb[0].mxu0
        %v5157 = vadd.f32 %v5116, %v5156
        %v5158 = vpop.f32.mrb[0].mxu0
        %v5159 = vadd.f32 %v5118, %v5158
        %v5160 = vpop.f32.mrb[0].mxu0
        %v5161 = vpop.f32.mrb[0].mxu0
        %5162 = vdwg.mxu0
        %5163 = vmatprep.subr.bf16.mxu0 %v4828
        %5164 = vmatpush1.bf16.msra.mxu0 %v4827
        %5165 = vmatprep.subr.bf16.mxu0 %v4832
        %5166 = vmatpush1.bf16.msra.mxu0 %v4831
        %5167 = vmatprep.subr.bf16.mxu0 %v4836
        %5168 = vmatpush1.bf16.msra.mxu0 %v4835
        %5169 = vmatprep.subr.bf16.mxu0 %v4840
        %5170 = vmatpush1.bf16.msra.mxu0 %v4839
        %5171 = vmatprep.subr.bf16.mxu0 %v4844
        %5172 = vmatpush1.bf16.msra.mxu0 %v4843
        %5173 = vmatprep.subr.bf16.mxu0 %v4848
        %5174 = vmatpush1.bf16.msra.mxu0 %v4847
        %5175 = vmatprep.subr.bf16.mxu0 %v4852
        %5176 = vmatpush1.bf16.msra.mxu0 %v4851
        %5177 = vmatprep.subr.bf16.mxu0 %v4856
        %5178 = vmatpush1.bf16.msra.mxu0 %v4855
        %5179 = vmatprep.subr.bf16.mxu0 %v4860
        %5180 = vmatpush1.bf16.msra.mxu0 %v4859
        %5181 = vmatprep.subr.bf16.mxu0 %v4864
        %5182 = vmatpush1.bf16.msra.mxu0 %v4863
        %5183 = vmatprep.subr.bf16.mxu0 %v4868
        %5184 = vmatpush1.bf16.msra.mxu0 %v4867
        %5185 = vmatprep.subr.bf16.mxu0 %v4872
        %5186 = vmatpush1.bf16.msra.mxu0 %v4871
        %5187 = vmatprep.subr.bf16.mxu0 %v4876
        %5188 = vmatpush1.bf16.msra.mxu0 %v4875
        %5189 = vmatprep.subr.bf16.mxu0 %v4880
        %5190 = vmatpush1.bf16.msra.mxu0 %v4879
        %5191 = vmatprep.subr.bf16.mxu0 %v4884
        %5192 = vmatpush1.bf16.msra.mxu0 %v4883
        %5193 = vmatprep.subr.bf16.mxu0 %v4888
        %5194 = vmatpush1.bf16.msra.mxu0 %v4887
        %5195 = vmatprep.mubr.bf16.mxu0 %v4281
        %5196 = vmatmul.mubr.bf16.gmra.mrb[0].mxu0 %v4277
        %v5197 = vpop.f32.mrb[0].mxu0
        %v5198 = vadd.f32 %v4432, %v5197
        %v5199 = vpop.f32.mrb[0].mxu0
        %v5200 = vadd.f32 %v4436, %v5199
        %v5201 = vpop.f32.mrb[0].mxu0
        %v5202 = vpop.f32.mrb[0].mxu0
        %5203 = vdwg.mxu0
        %5204 = vmatprep.subr.bf16.mxu0 %v4892
        %5205 = vmatpush1.bf16.msra.mxu0 %v4891
        %5206 = vmatprep.subr.bf16.mxu0 %v4896
        %5207 = vmatpush1.bf16.msra.mxu0 %v4895
        %5208 = vmatprep.subr.bf16.mxu0 %v4900
        %5209 = vmatpush1.bf16.msra.mxu0 %v4899
        %5210 = vmatprep.subr.bf16.mxu0 %v4904
        %5211 = vmatpush1.bf16.msra.mxu0 %v4903
        %5212 = vmatprep.subr.bf16.mxu0 %v4908
        %5213 = vmatpush1.bf16.msra.mxu0 %v4907
        %5214 = vmatprep.subr.bf16.mxu0 %v4912
        %5215 = vmatpush1.bf16.msra.mxu0 %v4911
        %5216 = vmatprep.subr.bf16.mxu0 %v4916
        %5217 = vmatpush1.bf16.msra.mxu0 %v4915
        %5218 = vmatprep.subr.bf16.mxu0 %v4920
        %5219 = vmatpush1.bf16.msra.mxu0 %v4919
        %5220 = vmatprep.subr.bf16.mxu0 %v4924
        %5221 = vmatpush1.bf16.msra.mxu0 %v4923
        %5222 = vmatprep.subr.bf16.mxu0 %v4928
        %5223 = vmatpush1.bf16.msra.mxu0 %v4927
        %5224 = vmatprep.subr.bf16.mxu0 %v4932
        %5225 = vmatpush1.bf16.msra.mxu0 %v4931
        %5226 = vmatprep.subr.bf16.mxu0 %v4936
        %5227 = vmatpush1.bf16.msra.mxu0 %v4935
        %5228 = vmatprep.subr.bf16.mxu0 %v4940
        %5229 = vmatpush1.bf16.msra.mxu0 %v4939
        %5230 = vmatprep.subr.bf16.mxu0 %v4944
        %5231 = vmatpush1.bf16.msra.mxu0 %v4943
        %5232 = vmatprep.subr.bf16.mxu0 %v4948
        %5233 = vmatpush1.bf16.msra.mxu0 %v4947
        %5234 = vmatprep.subr.bf16.mxu0 %v4952
        %5235 = vmatpush1.bf16.msra.mxu0 %v4951
        %5236 = vmatprep.mubr.bf16.mxu0 %v4289
        %5237 = vmatmul.mubr.bf16.gmra.mrb[0].mxu0 %v4285
        %v5238 = vpop.f32.mrb[0].mxu0
        %v5239 = vadd.f32 %v5198, %v5238
        %v5240 = vpop.f32.mrb[0].mxu0
        %v5241 = vadd.f32 %v5200, %v5240
        %v5242 = vpop.f32.mrb[0].mxu0
        %v5243 = vpop.f32.mrb[0].mxu0
        %5244 = vdwg.mxu0
        %v5245 = vadd.f32 %v5157, %v502
        %v5246 = vadd.f32 %v5159, %v503
        %v5247 = vadd.f32 %v5239, %v504
        %v5248 = vadd.f32 %v5241, %v505
        %v5249 = vadd.f32 %v5245, %v5246
        %v5250 = vadd.f32 %v5249, %v5247
        %v5251 = vadd.f32 %v5250, %v5248
        %5252 = vadd.xlane.f32.xlu0 %v5251
        %v5253 = vpop.xlane.xlu0 %5252
        %v5254 = vrcp.pop 512.0
        %v5255 = vmul.f32 %v5253, %v5254
        %v5256 = vsub.f32 %v5245, %v5255
        %v5257 = vsub.f32 %v5246, %v5255
        %v5258 = vsub.f32 %v5247, %v5255
        %v5259 = vsub.f32 %v5248, %v5255
        %v5260 = vmul.f32 %v5256, %v5256
        %v5261 = vmul.f32 %v5257, %v5257
        %v5262 = vmul.f32 %v5258, %v5258
        %v5263 = vmul.f32 %v5259, %v5259
        %v5264 = vadd.f32 %v5260, %v5261
        %v5265 = vadd.f32 %v5264, %v5262
        %v5266 = vadd.f32 %v5265, %v5263
        %5267 = vadd.xlane.f32.xlu0 %v5266
        %v5268 = vpop.xlane.xlu0 %5267
        %v5269 = vmul.f32 %v5268, %v5254
        %v5270 = vadd.f32 %v5269, 1e-05
        %v5271 = vrsqrt.pop %v5270
        %v5272 = vmul.f32 %v5256, %v5271
        %v5273 = vmul.f32 %v5257, %v5271
        %v5274 = vmul.f32 %v5258, %v5271
        %v5275 = vmul.f32 %v5259, %v5271
        %v5276 = vpack.c.bf16 %v5272, %v5272
        %v5277 = vpack.c.bf16 %v5273, %v5273
        %v5278 = vpack.c.bf16 %v5274, %v5274
        %v5279 = vpack.c.bf16 %v5275, %v5275
        %v5280 = vld [vmem:[#allocation11] sm:$0xff]
        %v5281 = vld [vmem:[#allocation11 + $0x8] sm:$0xff]
        %v5282 = vld [vmem:[#allocation11 + $0x10] sm:$0xff]
        %v5283 = vld [vmem:[#allocation11 + $0x18] sm:$0xff]
        %v5284 = vld [vmem:[#allocation11 + $0x20] sm:$0xff]
        %v5285 = vld [vmem:[#allocation11 + $0x28] sm:$0xff]
        %v5286 = vld [vmem:[#allocation11 + $0x30] sm:$0xff]
        %v5287 = vld [vmem:[#allocation11 + $0x38] sm:$0xff]
        %v5288 = vld [vmem:[#allocation11 + $0x40] sm:$0xff]
        %v5289 = vld [vmem:[#allocation11 + $0x48] sm:$0xff]
        %v5290 = vld [vmem:[#allocation11 + $0x50] sm:$0xff]
        %v5291 = vld [vmem:[#allocation11 + $0x58] sm:$0xff]
        %v5292 = vld [vmem:[#allocation11 + $0x60] sm:$0xff]
        %v5293 = vld [vmem:[#allocation11 + $0x68] sm:$0xff]
        %v5294 = vld [vmem:[#allocation11 + $0x70] sm:$0xff]
        %v5295 = vld [vmem:[#allocation11 + $0x78] sm:$0xff]
        %v5296 = vld [vmem:[#allocation11 + $0x80] sm:$0xff]
        %v5297 = vld [vmem:[#allocation11 + $0x88] sm:$0xff]
        %v5298 = vld [vmem:[#allocation11 + $0x90] sm:$0xff]
        %v5299 = vld [vmem:[#allocation11 + $0x98] sm:$0xff]
        %v5300 = vld [vmem:[#allocation11 + $0xa0] sm:$0xff]
        %v5301 = vld [vmem:[#allocation11 + $0xa8] sm:$0xff]
        %v5302 = vld [vmem:[#allocation11 + $0xb0] sm:$0xff]
        %v5303 = vld [vmem:[#allocation11 + $0xb8] sm:$0xff]
        %v5304 = vld [vmem:[#allocation11 + $0xc0] sm:$0xff]
        %v5305 = vld [vmem:[#allocation11 + $0xc8] sm:$0xff]
        %v5306 = vld [vmem:[#allocation11 + $0xd0] sm:$0xff]
        %v5307 = vld [vmem:[#allocation11 + $0xd8] sm:$0xff]
        %v5308 = vld [vmem:[#allocation11 + $0xe0] sm:$0xff]
        %v5309 = vld [vmem:[#allocation11 + $0xe8] sm:$0xff]
        %v5310 = vld [vmem:[#allocation11 + $0xf0] sm:$0xff]
        %v5311 = vld [vmem:[#allocation11 + $0xf8] sm:$0xff]
        %v5312 = vld [vmem:[#allocation11 + $0x100] sm:$0xff]
        %v5313 = vld [vmem:[#allocation11 + $0x108] sm:$0xff]
        %v5314 = vld [vmem:[#allocation11 + $0x110] sm:$0xff]
        %v5315 = vld [vmem:[#allocation11 + $0x118] sm:$0xff]
        %v5316 = vld [vmem:[#allocation11 + $0x120] sm:$0xff]
        %v5317 = vld [vmem:[#allocation11 + $0x128] sm:$0xff]
        %v5318 = vld [vmem:[#allocation11 + $0x130] sm:$0xff]
        %v5319 = vld [vmem:[#allocation11 + $0x138] sm:$0xff]
        %v5320 = vld [vmem:[#allocation11 + $0x140] sm:$0xff]
        %v5321 = vld [vmem:[#allocation11 + $0x148] sm:$0xff]
        %v5322 = vld [vmem:[#allocation11 + $0x150] sm:$0xff]
        %v5323 = vld [vmem:[#allocation11 + $0x158] sm:$0xff]
        %v5324 = vld [vmem:[#allocation11 + $0x160] sm:$0xff]
        %v5325 = vld [vmem:[#allocation11 + $0x168] sm:$0xff]
        %v5326 = vld [vmem:[#allocation11 + $0x170] sm:$0xff]
        %v5327 = vld [vmem:[#allocation11 + $0x178] sm:$0xff]
        %v5328 = vld [vmem:[#allocation11 + $0x180] sm:$0xff]
        %v5329 = vld [vmem:[#allocation11 + $0x188] sm:$0xff]
        %v5330 = vld [vmem:[#allocation11 + $0x190] sm:$0xff]
        %v5331 = vld [vmem:[#allocation11 + $0x198] sm:$0xff]
        %v5332 = vld [vmem:[#allocation11 + $0x1a0] sm:$0xff]
        %v5333 = vld [vmem:[#allocation11 + $0x1a8] sm:$0xff]
        %v5334 = vld [vmem:[#allocation11 + $0x1b0] sm:$0xff]
        %v5335 = vld [vmem:[#allocation11 + $0x1b8] sm:$0xff]
        %v5336 = vld [vmem:[#allocation11 + $0x1c0] sm:$0xff]
        %v5337 = vld [vmem:[#allocation11 + $0x1c8] sm:$0xff]
        %v5338 = vld [vmem:[#allocation11 + $0x1d0] sm:$0xff]
        %v5339 = vld [vmem:[#allocation11 + $0x1d8] sm:$0xff]
        %v5340 = vld [vmem:[#allocation11 + $0x1e0] sm:$0xff]
        %v5341 = vld [vmem:[#allocation11 + $0x1e8] sm:$0xff]
        %v5342 = vld [vmem:[#allocation11 + $0x1f0] sm:$0xff]
        %v5343 = vld [vmem:[#allocation11 + $0x1f8] sm:$0xff]
        %v5344 = vld [vmem:[#allocation11 + $0x200] sm:$0xff]
        %v5345 = vld [vmem:[#allocation11 + $0x208] sm:$0xff]
        %v5346 = vld [vmem:[#allocation11 + $0x210] sm:$0xff]
        %v5347 = vld [vmem:[#allocation11 + $0x218] sm:$0xff]
        %v5348 = vld [vmem:[#allocation11 + $0x220] sm:$0xff]
        %v5349 = vld [vmem:[#allocation11 + $0x228] sm:$0xff]
        %v5350 = vld [vmem:[#allocation11 + $0x230] sm:$0xff]
        %v5351 = vld [vmem:[#allocation11 + $0x238] sm:$0xff]
        %v5352 = vld [vmem:[#allocation11 + $0x240] sm:$0xff]
        %v5353 = vld [vmem:[#allocation11 + $0x248] sm:$0xff]
        %v5354 = vld [vmem:[#allocation11 + $0x250] sm:$0xff]
        %v5355 = vld [vmem:[#allocation11 + $0x258] sm:$0xff]
        %v5356 = vld [vmem:[#allocation11 + $0x260] sm:$0xff]
        %v5357 = vld [vmem:[#allocation11 + $0x268] sm:$0xff]
        %v5358 = vld [vmem:[#allocation11 + $0x270] sm:$0xff]
        %v5359 = vld [vmem:[#allocation11 + $0x278] sm:$0xff]
        %v5360 = vld [vmem:[#allocation11 + $0x280] sm:$0xff]
        %v5361 = vld [vmem:[#allocation11 + $0x288] sm:$0xff]
        %v5362 = vld [vmem:[#allocation11 + $0x290] sm:$0xff]
        %v5363 = vld [vmem:[#allocation11 + $0x298] sm:$0xff]
        %v5364 = vld [vmem:[#allocation11 + $0x2a0] sm:$0xff]
        %v5365 = vld [vmem:[#allocation11 + $0x2a8] sm:$0xff]
        %v5366 = vld [vmem:[#allocation11 + $0x2b0] sm:$0xff]
        %v5367 = vld [vmem:[#allocation11 + $0x2b8] sm:$0xff]
        %v5368 = vld [vmem:[#allocation11 + $0x2c0] sm:$0xff]
        %v5369 = vld [vmem:[#allocation11 + $0x2c8] sm:$0xff]
        %v5370 = vld [vmem:[#allocation11 + $0x2d0] sm:$0xff]
        %v5371 = vld [vmem:[#allocation11 + $0x2d8] sm:$0xff]
        %v5372 = vld [vmem:[#allocation11 + $0x2e0] sm:$0xff]
        %v5373 = vld [vmem:[#allocation11 + $0x2e8] sm:$0xff]
        %v5374 = vld [vmem:[#allocation11 + $0x2f0] sm:$0xff]
        %v5375 = vld [vmem:[#allocation11 + $0x2f8] sm:$0xff]
        %v5376 = vld [vmem:[#allocation11 + $0x300] sm:$0xff]
        %v5377 = vld [vmem:[#allocation11 + $0x308] sm:$0xff]
        %v5378 = vld [vmem:[#allocation11 + $0x310] sm:$0xff]
        %v5379 = vld [vmem:[#allocation11 + $0x318] sm:$0xff]
        %v5380 = vld [vmem:[#allocation11 + $0x320] sm:$0xff]
        %v5381 = vld [vmem:[#allocation11 + $0x328] sm:$0xff]
        %v5382 = vld [vmem:[#allocation11 + $0x330] sm:$0xff]
        %v5383 = vld [vmem:[#allocation11 + $0x338] sm:$0xff]
        %v5384 = vld [vmem:[#allocation11 + $0x340] sm:$0xff]
        %v5385 = vld [vmem:[#allocation11 + $0x348] sm:$0xff]
        %v5386 = vld [vmem:[#allocation11 + $0x350] sm:$0xff]
        %v5387 = vld [vmem:[#allocation11 + $0x358] sm:$0xff]
        %v5388 = vld [vmem:[#allocation11 + $0x360] sm:$0xff]
        %v5389 = vld [vmem:[#allocation11 + $0x368] sm:$0xff]
        %v5390 = vld [vmem:[#allocation11 + $0x370] sm:$0xff]
        %v5391 = vld [vmem:[#allocation11 + $0x378] sm:$0xff]
        %v5392 = vld [vmem:[#allocation11 + $0x380] sm:$0xff]
        %v5393 = vld [vmem:[#allocation11 + $0x388] sm:$0xff]
        %v5394 = vld [vmem:[#allocation11 + $0x390] sm:$0xff]
        %v5395 = vld [vmem:[#allocation11 + $0x398] sm:$0xff]
        %v5396 = vld [vmem:[#allocation11 + $0x3a0] sm:$0xff]
        %v5397 = vld [vmem:[#allocation11 + $0x3a8] sm:$0xff]
        %v5398 = vld [vmem:[#allocation11 + $0x3b0] sm:$0xff]
        %v5399 = vld [vmem:[#allocation11 + $0x3b8] sm:$0xff]
        %v5400 = vld [vmem:[#allocation11 + $0x3c0] sm:$0xff]
        %v5401 = vld [vmem:[#allocation11 + $0x3c8] sm:$0xff]
        %v5402 = vld [vmem:[#allocation11 + $0x3d0] sm:$0xff]
        %v5403 = vld [vmem:[#allocation11 + $0x3d8] sm:$0xff]
        %v5404 = vld [vmem:[#allocation11 + $0x3e0] sm:$0xff]
        %v5405 = vld [vmem:[#allocation11 + $0x3e8] sm:$0xff]
        %v5406 = vld [vmem:[#allocation11 + $0x3f0] sm:$0xff]
        %v5407 = vld [vmem:[#allocation11 + $0x3f8] sm:$0xff]
        %v5408 = vld [vmem:[#allocation11 + $0x400] sm:$0xff]
        %v5409 = vld [vmem:[#allocation11 + $0x408] sm:$0xff]
        %v5410 = vld [vmem:[#allocation11 + $0x410] sm:$0xff]
        %v5411 = vld [vmem:[#allocation11 + $0x418] sm:$0xff]
        %v5412 = vld [vmem:[#allocation11 + $0x420] sm:$0xff]
        %v5413 = vld [vmem:[#allocation11 + $0x428] sm:$0xff]
        %v5414 = vld [vmem:[#allocation11 + $0x430] sm:$0xff]
        %v5415 = vld [vmem:[#allocation11 + $0x438] sm:$0xff]
        %v5416 = vld [vmem:[#allocation11 + $0x440] sm:$0xff]
        %v5417 = vld [vmem:[#allocation11 + $0x448] sm:$0xff]
        %v5418 = vld [vmem:[#allocation11 + $0x450] sm:$0xff]
        %v5419 = vld [vmem:[#allocation11 + $0x458] sm:$0xff]
        %v5420 = vld [vmem:[#allocation11 + $0x460] sm:$0xff]
        %v5421 = vld [vmem:[#allocation11 + $0x468] sm:$0xff]
        %v5422 = vld [vmem:[#allocation11 + $0x470] sm:$0xff]
        %v5423 = vld [vmem:[#allocation11 + $0x478] sm:$0xff]
        %v5424 = vld [vmem:[#allocation11 + $0x480] sm:$0xff]
        %v5425 = vld [vmem:[#allocation11 + $0x488] sm:$0xff]
        %v5426 = vld [vmem:[#allocation11 + $0x490] sm:$0xff]
        %v5427 = vld [vmem:[#allocation11 + $0x498] sm:$0xff]
        %v5428 = vld [vmem:[#allocation11 + $0x4a0] sm:$0xff]
        %v5429 = vld [vmem:[#allocation11 + $0x4a8] sm:$0xff]
        %v5430 = vld [vmem:[#allocation11 + $0x4b0] sm:$0xff]
        %v5431 = vld [vmem:[#allocation11 + $0x4b8] sm:$0xff]
        %v5432 = vld [vmem:[#allocation11 + $0x4c0] sm:$0xff]
        %v5433 = vld [vmem:[#allocation11 + $0x4c8] sm:$0xff]
        %v5434 = vld [vmem:[#allocation11 + $0x4d0] sm:$0xff]
        %v5435 = vld [vmem:[#allocation11 + $0x4d8] sm:$0xff]
        %v5436 = vld [vmem:[#allocation11 + $0x4e0] sm:$0xff]
        %v5437 = vld [vmem:[#allocation11 + $0x4e8] sm:$0xff]
        %v5438 = vld [vmem:[#allocation11 + $0x4f0] sm:$0xff]
        %v5439 = vld [vmem:[#allocation11 + $0x4f8] sm:$0xff]
        %v5440 = vld [vmem:[#allocation11 + $0x500] sm:$0xff]
        %v5441 = vld [vmem:[#allocation11 + $0x508] sm:$0xff]
        %v5442 = vld [vmem:[#allocation11 + $0x510] sm:$0xff]
        %v5443 = vld [vmem:[#allocation11 + $0x518] sm:$0xff]
        %v5444 = vld [vmem:[#allocation11 + $0x520] sm:$0xff]
        %v5445 = vld [vmem:[#allocation11 + $0x528] sm:$0xff]
        %v5446 = vld [vmem:[#allocation11 + $0x530] sm:$0xff]
        %v5447 = vld [vmem:[#allocation11 + $0x538] sm:$0xff]
        %v5448 = vld [vmem:[#allocation11 + $0x540] sm:$0xff]
        %v5449 = vld [vmem:[#allocation11 + $0x548] sm:$0xff]
        %v5450 = vld [vmem:[#allocation11 + $0x550] sm:$0xff]
        %v5451 = vld [vmem:[#allocation11 + $0x558] sm:$0xff]
        %v5452 = vld [vmem:[#allocation11 + $0x560] sm:$0xff]
        %v5453 = vld [vmem:[#allocation11 + $0x568] sm:$0xff]
        %v5454 = vld [vmem:[#allocation11 + $0x570] sm:$0xff]
        %v5455 = vld [vmem:[#allocation11 + $0x578] sm:$0xff]
        %v5456 = vld [vmem:[#allocation11 + $0x580] sm:$0xff]
        %v5457 = vld [vmem:[#allocation11 + $0x588] sm:$0xff]
        %v5458 = vld [vmem:[#allocation11 + $0x590] sm:$0xff]
        %v5459 = vld [vmem:[#allocation11 + $0x598] sm:$0xff]
        %v5460 = vld [vmem:[#allocation11 + $0x5a0] sm:$0xff]
        %v5461 = vld [vmem:[#allocation11 + $0x5a8] sm:$0xff]
        %v5462 = vld [vmem:[#allocation11 + $0x5b0] sm:$0xff]
        %v5463 = vld [vmem:[#allocation11 + $0x5b8] sm:$0xff]
        %v5464 = vld [vmem:[#allocation11 + $0x5c0] sm:$0xff]
        %v5465 = vld [vmem:[#allocation11 + $0x5c8] sm:$0xff]
        %v5466 = vld [vmem:[#allocation11 + $0x5d0] sm:$0xff]
        %v5467 = vld [vmem:[#allocation11 + $0x5d8] sm:$0xff]
        %v5468 = vld [vmem:[#allocation11 + $0x5e0] sm:$0xff]
        %v5469 = vld [vmem:[#allocation11 + $0x5e8] sm:$0xff]
        %v5470 = vld [vmem:[#allocation11 + $0x5f0] sm:$0xff]
        %v5471 = vld [vmem:[#allocation11 + $0x5f8] sm:$0xff]
        %v5472 = vld [vmem:[#allocation11 + $0x600] sm:$0xff]
        %v5473 = vld [vmem:[#allocation11 + $0x608] sm:$0xff]
        %v5474 = vld [vmem:[#allocation11 + $0x610] sm:$0xff]
        %v5475 = vld [vmem:[#allocation11 + $0x618] sm:$0xff]
        %v5476 = vld [vmem:[#allocation11 + $0x620] sm:$0xff]
        %v5477 = vld [vmem:[#allocation11 + $0x628] sm:$0xff]
        %v5478 = vld [vmem:[#allocation11 + $0x630] sm:$0xff]
        %v5479 = vld [vmem:[#allocation11 + $0x638] sm:$0xff]
        %v5480 = vld [vmem:[#allocation11 + $0x640] sm:$0xff]
        %v5481 = vld [vmem:[#allocation11 + $0x648] sm:$0xff]
        %v5482 = vld [vmem:[#allocation11 + $0x650] sm:$0xff]
        %v5483 = vld [vmem:[#allocation11 + $0x658] sm:$0xff]
        %v5484 = vld [vmem:[#allocation11 + $0x660] sm:$0xff]
        %v5485 = vld [vmem:[#allocation11 + $0x668] sm:$0xff]
        %v5486 = vld [vmem:[#allocation11 + $0x670] sm:$0xff]
        %v5487 = vld [vmem:[#allocation11 + $0x678] sm:$0xff]
        %v5488 = vld [vmem:[#allocation11 + $0x680] sm:$0xff]
        %v5489 = vld [vmem:[#allocation11 + $0x688] sm:$0xff]
        %v5490 = vld [vmem:[#allocation11 + $0x690] sm:$0xff]
        %v5491 = vld [vmem:[#allocation11 + $0x698] sm:$0xff]
        %v5492 = vld [vmem:[#allocation11 + $0x6a0] sm:$0xff]
        %v5493 = vld [vmem:[#allocation11 + $0x6a8] sm:$0xff]
        %v5494 = vld [vmem:[#allocation11 + $0x6b0] sm:$0xff]
        %v5495 = vld [vmem:[#allocation11 + $0x6b8] sm:$0xff]
        %v5496 = vld [vmem:[#allocation11 + $0x6c0] sm:$0xff]
        %v5497 = vld [vmem:[#allocation11 + $0x6c8] sm:$0xff]
        %v5498 = vld [vmem:[#allocation11 + $0x6d0] sm:$0xff]
        %v5499 = vld [vmem:[#allocation11 + $0x6d8] sm:$0xff]
        %v5500 = vld [vmem:[#allocation11 + $0x6e0] sm:$0xff]
        %v5501 = vld [vmem:[#allocation11 + $0x6e8] sm:$0xff]
        %v5502 = vld [vmem:[#allocation11 + $0x6f0] sm:$0xff]
        %v5503 = vld [vmem:[#allocation11 + $0x6f8] sm:$0xff]
        %v5504 = vld [vmem:[#allocation11 + $0x700] sm:$0xff]
        %v5505 = vld [vmem:[#allocation11 + $0x708] sm:$0xff]
        %v5506 = vld [vmem:[#allocation11 + $0x710] sm:$0xff]
        %v5507 = vld [vmem:[#allocation11 + $0x718] sm:$0xff]
        %v5508 = vld [vmem:[#allocation11 + $0x720] sm:$0xff]
        %v5509 = vld [vmem:[#allocation11 + $0x728] sm:$0xff]
        %v5510 = vld [vmem:[#allocation11 + $0x730] sm:$0xff]
        %v5511 = vld [vmem:[#allocation11 + $0x738] sm:$0xff]
        %v5512 = vld [vmem:[#allocation11 + $0x740] sm:$0xff]
        %v5513 = vld [vmem:[#allocation11 + $0x748] sm:$0xff]
        %v5514 = vld [vmem:[#allocation11 + $0x750] sm:$0xff]
        %v5515 = vld [vmem:[#allocation11 + $0x758] sm:$0xff]
        %v5516 = vld [vmem:[#allocation11 + $0x760] sm:$0xff]
        %v5517 = vld [vmem:[#allocation11 + $0x768] sm:$0xff]
        %v5518 = vld [vmem:[#allocation11 + $0x770] sm:$0xff]
        %v5519 = vld [vmem:[#allocation11 + $0x778] sm:$0xff]
        %v5520 = vld [vmem:[#allocation11 + $0x780] sm:$0xff]
        %v5521 = vld [vmem:[#allocation11 + $0x788] sm:$0xff]
        %v5522 = vld [vmem:[#allocation11 + $0x790] sm:$0xff]
        %v5523 = vld [vmem:[#allocation11 + $0x798] sm:$0xff]
        %v5524 = vld [vmem:[#allocation11 + $0x7a0] sm:$0xff]
        %v5525 = vld [vmem:[#allocation11 + $0x7a8] sm:$0xff]
        %v5526 = vld [vmem:[#allocation11 + $0x7b0] sm:$0xff]
        %v5527 = vld [vmem:[#allocation11 + $0x7b8] sm:$0xff]
        %v5528 = vld [vmem:[#allocation11 + $0x7c0] sm:$0xff]
        %v5529 = vld [vmem:[#allocation11 + $0x7c8] sm:$0xff]
        %v5530 = vld [vmem:[#allocation11 + $0x7d0] sm:$0xff]
        %v5531 = vld [vmem:[#allocation11 + $0x7d8] sm:$0xff]
        %v5532 = vld [vmem:[#allocation11 + $0x7e0] sm:$0xff]
        %v5533 = vld [vmem:[#allocation11 + $0x7e8] sm:$0xff]
        %v5534 = vld [vmem:[#allocation11 + $0x7f0] sm:$0xff]
        %v5535 = vld [vmem:[#allocation11 + $0x7f8] sm:$0xff]
        %v5536 = vld [vmem:[#allocation11 + $0x800] sm:$0xff]
        %v5537 = vld [vmem:[#allocation11 + $0x808] sm:$0xff]
        %v5538 = vld [vmem:[#allocation11 + $0x810] sm:$0xff]
        %v5539 = vld [vmem:[#allocation11 + $0x818] sm:$0xff]
        %v5540 = vld [vmem:[#allocation11 + $0x820] sm:$0xff]
        %v5541 = vld [vmem:[#allocation11 + $0x828] sm:$0xff]
        %v5542 = vld [vmem:[#allocation11 + $0x830] sm:$0xff]
        %v5543 = vld [vmem:[#allocation11 + $0x838] sm:$0xff]
        %v5544 = vld [vmem:[#allocation11 + $0x840] sm:$0xff]
        %v5545 = vld [vmem:[#allocation11 + $0x848] sm:$0xff]
        %v5546 = vld [vmem:[#allocation11 + $0x850] sm:$0xff]
        %v5547 = vld [vmem:[#allocation11 + $0x858] sm:$0xff]
        %v5548 = vld [vmem:[#allocation11 + $0x860] sm:$0xff]
        %v5549 = vld [vmem:[#allocation11 + $0x868] sm:$0xff]
        %v5550 = vld [vmem:[#allocation11 + $0x870] sm:$0xff]
        %v5551 = vld [vmem:[#allocation11 + $0x878] sm:$0xff]
        %v5552 = vld [vmem:[#allocation11 + $0x880] sm:$0xff]
        %v5553 = vld [vmem:[#allocation11 + $0x888] sm:$0xff]
        %v5554 = vld [vmem:[#allocation11 + $0x890] sm:$0xff]
        %v5555 = vld [vmem:[#allocation11 + $0x898] sm:$0xff]
        %v5556 = vld [vmem:[#allocation11 + $0x8a0] sm:$0xff]
        %v5557 = vld [vmem:[#allocation11 + $0x8a8] sm:$0xff]
        %v5558 = vld [vmem:[#allocation11 + $0x8b0] sm:$0xff]
        %v5559 = vld [vmem:[#allocation11 + $0x8b8] sm:$0xff]
        %v5560 = vld [vmem:[#allocation11 + $0x8c0] sm:$0xff]
        %v5561 = vld [vmem:[#allocation11 + $0x8c8] sm:$0xff]
        %v5562 = vld [vmem:[#allocation11 + $0x8d0] sm:$0xff]
        %v5563 = vld [vmem:[#allocation11 + $0x8d8] sm:$0xff]
        %v5564 = vld [vmem:[#allocation11 + $0x8e0] sm:$0xff]
        %v5565 = vld [vmem:[#allocation11 + $0x8e8] sm:$0xff]
        %v5566 = vld [vmem:[#allocation11 + $0x8f0] sm:$0xff]
        %v5567 = vld [vmem:[#allocation11 + $0x8f8] sm:$0xff]
        %v5568 = vld [vmem:[#allocation11 + $0x900] sm:$0xff]
        %v5569 = vld [vmem:[#allocation11 + $0x908] sm:$0xff]
        %v5570 = vld [vmem:[#allocation11 + $0x910] sm:$0xff]
        %v5571 = vld [vmem:[#allocation11 + $0x918] sm:$0xff]
        %v5572 = vld [vmem:[#allocation11 + $0x920] sm:$0xff]
        %v5573 = vld [vmem:[#allocation11 + $0x928] sm:$0xff]
        %v5574 = vld [vmem:[#allocation11 + $0x930] sm:$0xff]
        %v5575 = vld [vmem:[#allocation11 + $0x938] sm:$0xff]
        %v5576 = vld [vmem:[#allocation11 + $0x940] sm:$0xff]
        %v5577 = vld [vmem:[#allocation11 + $0x948] sm:$0xff]
        %v5578 = vld [vmem:[#allocation11 + $0x950] sm:$0xff]
        %v5579 = vld [vmem:[#allocation11 + $0x958] sm:$0xff]
        %v5580 = vld [vmem:[#allocation11 + $0x960] sm:$0xff]
        %v5581 = vld [vmem:[#allocation11 + $0x968] sm:$0xff]
        %v5582 = vld [vmem:[#allocation11 + $0x970] sm:$0xff]
        %v5583 = vld [vmem:[#allocation11 + $0x978] sm:$0xff]
        %v5584 = vld [vmem:[#allocation11 + $0x980] sm:$0xff]
        %v5585 = vld [vmem:[#allocation11 + $0x988] sm:$0xff]
        %v5586 = vld [vmem:[#allocation11 + $0x990] sm:$0xff]
        %v5587 = vld [vmem:[#allocation11 + $0x998] sm:$0xff]
        %v5588 = vld [vmem:[#allocation11 + $0x9a0] sm:$0xff]
        %v5589 = vld [vmem:[#allocation11 + $0x9a8] sm:$0xff]
        %v5590 = vld [vmem:[#allocation11 + $0x9b0] sm:$0xff]
        %v5591 = vld [vmem:[#allocation11 + $0x9b8] sm:$0xff]
        %v5592 = vld [vmem:[#allocation11 + $0x9c0] sm:$0xff]
        %v5593 = vld [vmem:[#allocation11 + $0x9c8] sm:$0xff]
        %v5594 = vld [vmem:[#allocation11 + $0x9d0] sm:$0xff]
        %v5595 = vld [vmem:[#allocation11 + $0x9d8] sm:$0xff]
        %v5596 = vld [vmem:[#allocation11 + $0x9e0] sm:$0xff]
        %v5597 = vld [vmem:[#allocation11 + $0x9e8] sm:$0xff]
        %v5598 = vld [vmem:[#allocation11 + $0x9f0] sm:$0xff]
        %v5599 = vld [vmem:[#allocation11 + $0x9f8] sm:$0xff]
        %v5600 = vld [vmem:[#allocation11 + $0xa00] sm:$0xff]
        %v5601 = vld [vmem:[#allocation11 + $0xa08] sm:$0xff]
        %v5602 = vld [vmem:[#allocation11 + $0xa10] sm:$0xff]
        %v5603 = vld [vmem:[#allocation11 + $0xa18] sm:$0xff]
        %v5604 = vld [vmem:[#allocation11 + $0xa20] sm:$0xff]
        %v5605 = vld [vmem:[#allocation11 + $0xa28] sm:$0xff]
        %v5606 = vld [vmem:[#allocation11 + $0xa30] sm:$0xff]
        %v5607 = vld [vmem:[#allocation11 + $0xa38] sm:$0xff]
        %v5608 = vld [vmem:[#allocation11 + $0xa40] sm:$0xff]
        %v5609 = vld [vmem:[#allocation11 + $0xa48] sm:$0xff]
        %v5610 = vld [vmem:[#allocation11 + $0xa50] sm:$0xff]
        %v5611 = vld [vmem:[#allocation11 + $0xa58] sm:$0xff]
        %v5612 = vld [vmem:[#allocation11 + $0xa60] sm:$0xff]
        %v5613 = vld [vmem:[#allocation11 + $0xa68] sm:$0xff]
        %v5614 = vld [vmem:[#allocation11 + $0xa70] sm:$0xff]
        %v5615 = vld [vmem:[#allocation11 + $0xa78] sm:$0xff]
        %v5616 = vld [vmem:[#allocation11 + $0xa80] sm:$0xff]
        %v5617 = vld [vmem:[#allocation11 + $0xa88] sm:$0xff]
        %v5618 = vld [vmem:[#allocation11 + $0xa90] sm:$0xff]
        %v5619 = vld [vmem:[#allocation11 + $0xa98] sm:$0xff]
        %v5620 = vld [vmem:[#allocation11 + $0xaa0] sm:$0xff]
        %v5621 = vld [vmem:[#allocation11 + $0xaa8] sm:$0xff]
        %v5622 = vld [vmem:[#allocation11 + $0xab0] sm:$0xff]
        %v5623 = vld [vmem:[#allocation11 + $0xab8] sm:$0xff]
        %v5624 = vld [vmem:[#allocation11 + $0xac0] sm:$0xff]
        %v5625 = vld [vmem:[#allocation11 + $0xac8] sm:$0xff]
        %v5626 = vld [vmem:[#allocation11 + $0xad0] sm:$0xff]
        %v5627 = vld [vmem:[#allocation11 + $0xad8] sm:$0xff]
        %v5628 = vld [vmem:[#allocation11 + $0xae0] sm:$0xff]
        %v5629 = vld [vmem:[#allocation11 + $0xae8] sm:$0xff]
        %v5630 = vld [vmem:[#allocation11 + $0xaf0] sm:$0xff]
        %v5631 = vld [vmem:[#allocation11 + $0xaf8] sm:$0xff]
        %v5632 = vld [vmem:[#allocation11 + $0xb00] sm:$0xff]
        %v5633 = vld [vmem:[#allocation11 + $0xb08] sm:$0xff]
        %v5634 = vld [vmem:[#allocation11 + $0xb10] sm:$0xff]
        %v5635 = vld [vmem:[#allocation11 + $0xb18] sm:$0xff]
        %v5636 = vld [vmem:[#allocation11 + $0xb20] sm:$0xff]
        %v5637 = vld [vmem:[#allocation11 + $0xb28] sm:$0xff]
        %v5638 = vld [vmem:[#allocation11 + $0xb30] sm:$0xff]
        %v5639 = vld [vmem:[#allocation11 + $0xb38] sm:$0xff]
        %v5640 = vld [vmem:[#allocation11 + $0xb40] sm:$0xff]
        %v5641 = vld [vmem:[#allocation11 + $0xb48] sm:$0xff]
        %v5642 = vld [vmem:[#allocation11 + $0xb50] sm:$0xff]
        %v5643 = vld [vmem:[#allocation11 + $0xb58] sm:$0xff]
        %v5644 = vld [vmem:[#allocation11 + $0xb60] sm:$0xff]
        %v5645 = vld [vmem:[#allocation11 + $0xb68] sm:$0xff]
        %v5646 = vld [vmem:[#allocation11 + $0xb70] sm:$0xff]
        %v5647 = vld [vmem:[#allocation11 + $0xb78] sm:$0xff]
        %v5648 = vld [vmem:[#allocation11 + $0xb80] sm:$0xff]
        %v5649 = vld [vmem:[#allocation11 + $0xb88] sm:$0xff]
        %v5650 = vld [vmem:[#allocation11 + $0xb90] sm:$0xff]
        %v5651 = vld [vmem:[#allocation11 + $0xb98] sm:$0xff]
        %v5652 = vld [vmem:[#allocation11 + $0xba0] sm:$0xff]
        %v5653 = vld [vmem:[#allocation11 + $0xba8] sm:$0xff]
        %v5654 = vld [vmem:[#allocation11 + $0xbb0] sm:$0xff]
        %v5655 = vld [vmem:[#allocation11 + $0xbb8] sm:$0xff]
        %v5656 = vld [vmem:[#allocation11 + $0xbc0] sm:$0xff]
        %v5657 = vld [vmem:[#allocation11 + $0xbc8] sm:$0xff]
        %v5658 = vld [vmem:[#allocation11 + $0xbd0] sm:$0xff]
        %v5659 = vld [vmem:[#allocation11 + $0xbd8] sm:$0xff]
        %v5660 = vld [vmem:[#allocation11 + $0xbe0] sm:$0xff]
        %v5661 = vld [vmem:[#allocation11 + $0xbe8] sm:$0xff]
        %v5662 = vld [vmem:[#allocation11 + $0xbf0] sm:$0xff]
        %v5663 = vld [vmem:[#allocation11 + $0xbf8] sm:$0xff]
        %v5664 = vld [vmem:[#allocation11 + $0xc00] sm:$0xff]
        %v5665 = vld [vmem:[#allocation11 + $0xc08] sm:$0xff]
        %v5666 = vld [vmem:[#allocation11 + $0xc10] sm:$0xff]
        %v5667 = vld [vmem:[#allocation11 + $0xc18] sm:$0xff]
        %v5668 = vld [vmem:[#allocation11 + $0xc20] sm:$0xff]
        %v5669 = vld [vmem:[#allocation11 + $0xc28] sm:$0xff]
        %v5670 = vld [vmem:[#allocation11 + $0xc30] sm:$0xff]
        %v5671 = vld [vmem:[#allocation11 + $0xc38] sm:$0xff]
        %v5672 = vld [vmem:[#allocation11 + $0xc40] sm:$0xff]
        %v5673 = vld [vmem:[#allocation11 + $0xc48] sm:$0xff]
        %v5674 = vld [vmem:[#allocation11 + $0xc50] sm:$0xff]
        %v5675 = vld [vmem:[#allocation11 + $0xc58] sm:$0xff]
        %v5676 = vld [vmem:[#allocation11 + $0xc60] sm:$0xff]
        %v5677 = vld [vmem:[#allocation11 + $0xc68] sm:$0xff]
        %v5678 = vld [vmem:[#allocation11 + $0xc70] sm:$0xff]
        %v5679 = vld [vmem:[#allocation11 + $0xc78] sm:$0xff]
        %v5680 = vld [vmem:[#allocation11 + $0xc80] sm:$0xff]
        %v5681 = vld [vmem:[#allocation11 + $0xc88] sm:$0xff]
        %v5682 = vld [vmem:[#allocation11 + $0xc90] sm:$0xff]
        %v5683 = vld [vmem:[#allocation11 + $0xc98] sm:$0xff]
        %v5684 = vld [vmem:[#allocation11 + $0xca0] sm:$0xff]
        %v5685 = vld [vmem:[#allocation11 + $0xca8] sm:$0xff]
        %v5686 = vld [vmem:[#allocation11 + $0xcb0] sm:$0xff]
        %v5687 = vld [vmem:[#allocation11 + $0xcb8] sm:$0xff]
        %v5688 = vld [vmem:[#allocation11 + $0xcc0] sm:$0xff]
        %v5689 = vld [vmem:[#allocation11 + $0xcc8] sm:$0xff]
        %v5690 = vld [vmem:[#allocation11 + $0xcd0] sm:$0xff]
        %v5691 = vld [vmem:[#allocation11 + $0xcd8] sm:$0xff]
        %v5692 = vld [vmem:[#allocation11 + $0xce0] sm:$0xff]
        %v5693 = vld [vmem:[#allocation11 + $0xce8] sm:$0xff]
        %v5694 = vld [vmem:[#allocation11 + $0xcf0] sm:$0xff]
        %v5695 = vld [vmem:[#allocation11 + $0xcf8] sm:$0xff]
        %v5696 = vld [vmem:[#allocation11 + $0xd00] sm:$0xff]
        %v5697 = vld [vmem:[#allocation11 + $0xd08] sm:$0xff]
        %v5698 = vld [vmem:[#allocation11 + $0xd10] sm:$0xff]
        %v5699 = vld [vmem:[#allocation11 + $0xd18] sm:$0xff]
        %v5700 = vld [vmem:[#allocation11 + $0xd20] sm:$0xff]
        %v5701 = vld [vmem:[#allocation11 + $0xd28] sm:$0xff]
        %v5702 = vld [vmem:[#allocation11 + $0xd30] sm:$0xff]
        %v5703 = vld [vmem:[#allocation11 + $0xd38] sm:$0xff]
        %v5704 = vld [vmem:[#allocation11 + $0xd40] sm:$0xff]
        %v5705 = vld [vmem:[#allocation11 + $0xd48] sm:$0xff]
        %v5706 = vld [vmem:[#allocation11 + $0xd50] sm:$0xff]
        %v5707 = vld [vmem:[#allocation11 + $0xd58] sm:$0xff]
        %v5708 = vld [vmem:[#allocation11 + $0xd60] sm:$0xff]
        %v5709 = vld [vmem:[#allocation11 + $0xd68] sm:$0xff]
        %v5710 = vld [vmem:[#allocation11 + $0xd70] sm:$0xff]
        %v5711 = vld [vmem:[#allocation11 + $0xd78] sm:$0xff]
        %v5712 = vld [vmem:[#allocation11 + $0xd80] sm:$0xff]
        %v5713 = vld [vmem:[#allocation11 + $0xd88] sm:$0xff]
        %v5714 = vld [vmem:[#allocation11 + $0xd90] sm:$0xff]
        %v5715 = vld [vmem:[#allocation11 + $0xd98] sm:$0xff]
        %v5716 = vld [vmem:[#allocation11 + $0xda0] sm:$0xff]
        %v5717 = vld [vmem:[#allocation11 + $0xda8] sm:$0xff]
        %v5718 = vld [vmem:[#allocation11 + $0xdb0] sm:$0xff]
        %v5719 = vld [vmem:[#allocation11 + $0xdb8] sm:$0xff]
        %v5720 = vld [vmem:[#allocation11 + $0xdc0] sm:$0xff]
        %v5721 = vld [vmem:[#allocation11 + $0xdc8] sm:$0xff]
        %v5722 = vld [vmem:[#allocation11 + $0xdd0] sm:$0xff]
        %v5723 = vld [vmem:[#allocation11 + $0xdd8] sm:$0xff]
        %v5724 = vld [vmem:[#allocation11 + $0xde0] sm:$0xff]
        %v5725 = vld [vmem:[#allocation11 + $0xde8] sm:$0xff]
        %v5726 = vld [vmem:[#allocation11 + $0xdf0] sm:$0xff]
        %v5727 = vld [vmem:[#allocation11 + $0xdf8] sm:$0xff]
        %v5728 = vld [vmem:[#allocation11 + $0xe00] sm:$0xff]
        %v5729 = vld [vmem:[#allocation11 + $0xe08] sm:$0xff]
        %v5730 = vld [vmem:[#allocation11 + $0xe10] sm:$0xff]
        %v5731 = vld [vmem:[#allocation11 + $0xe18] sm:$0xff]
        %v5732 = vld [vmem:[#allocation11 + $0xe20] sm:$0xff]
        %v5733 = vld [vmem:[#allocation11 + $0xe28] sm:$0xff]
        %v5734 = vld [vmem:[#allocation11 + $0xe30] sm:$0xff]
        %v5735 = vld [vmem:[#allocation11 + $0xe38] sm:$0xff]
        %v5736 = vld [vmem:[#allocation11 + $0xe40] sm:$0xff]
        %v5737 = vld [vmem:[#allocation11 + $0xe48] sm:$0xff]
        %v5738 = vld [vmem:[#allocation11 + $0xe50] sm:$0xff]
        %v5739 = vld [vmem:[#allocation11 + $0xe58] sm:$0xff]
        %v5740 = vld [vmem:[#allocation11 + $0xe60] sm:$0xff]
        %v5741 = vld [vmem:[#allocation11 + $0xe68] sm:$0xff]
        %v5742 = vld [vmem:[#allocation11 + $0xe70] sm:$0xff]
        %v5743 = vld [vmem:[#allocation11 + $0xe78] sm:$0xff]
        %v5744 = vld [vmem:[#allocation11 + $0xe80] sm:$0xff]
        %v5745 = vld [vmem:[#allocation11 + $0xe88] sm:$0xff]
        %v5746 = vld [vmem:[#allocation11 + $0xe90] sm:$0xff]
        %v5747 = vld [vmem:[#allocation11 + $0xe98] sm:$0xff]
        %v5748 = vld [vmem:[#allocation11 + $0xea0] sm:$0xff]
        %v5749 = vld [vmem:[#allocation11 + $0xea8] sm:$0xff]
        %v5750 = vld [vmem:[#allocation11 + $0xeb0] sm:$0xff]
        %v5751 = vld [vmem:[#allocation11 + $0xeb8] sm:$0xff]
        %v5752 = vld [vmem:[#allocation11 + $0xec0] sm:$0xff]
        %v5753 = vld [vmem:[#allocation11 + $0xec8] sm:$0xff]
        %v5754 = vld [vmem:[#allocation11 + $0xed0] sm:$0xff]
        %v5755 = vld [vmem:[#allocation11 + $0xed8] sm:$0xff]
        %v5756 = vld [vmem:[#allocation11 + $0xee0] sm:$0xff]
        %v5757 = vld [vmem:[#allocation11 + $0xee8] sm:$0xff]
        %v5758 = vld [vmem:[#allocation11 + $0xef0] sm:$0xff]
        %v5759 = vld [vmem:[#allocation11 + $0xef8] sm:$0xff]
        %v5760 = vld [vmem:[#allocation11 + $0xf00] sm:$0xff]
        %v5761 = vld [vmem:[#allocation11 + $0xf08] sm:$0xff]
        %v5762 = vld [vmem:[#allocation11 + $0xf10] sm:$0xff]
        %v5763 = vld [vmem:[#allocation11 + $0xf18] sm:$0xff]
        %v5764 = vld [vmem:[#allocation11 + $0xf20] sm:$0xff]
        %v5765 = vld [vmem:[#allocation11 + $0xf28] sm:$0xff]
        %v5766 = vld [vmem:[#allocation11 + $0xf30] sm:$0xff]
        %v5767 = vld [vmem:[#allocation11 + $0xf38] sm:$0xff]
        %v5768 = vld [vmem:[#allocation11 + $0xf40] sm:$0xff]
        %v5769 = vld [vmem:[#allocation11 + $0xf48] sm:$0xff]
        %v5770 = vld [vmem:[#allocation11 + $0xf50] sm:$0xff]
        %v5771 = vld [vmem:[#allocation11 + $0xf58] sm:$0xff]
        %v5772 = vld [vmem:[#allocation11 + $0xf60] sm:$0xff]
        %v5773 = vld [vmem:[#allocation11 + $0xf68] sm:$0xff]
        %v5774 = vld [vmem:[#allocation11 + $0xf70] sm:$0xff]
        %v5775 = vld [vmem:[#allocation11 + $0xf78] sm:$0xff]
        %v5776 = vld [vmem:[#allocation11 + $0xf80] sm:$0xff]
        %v5777 = vld [vmem:[#allocation11 + $0xf88] sm:$0xff]
        %v5778 = vld [vmem:[#allocation11 + $0xf90] sm:$0xff]
        %v5779 = vld [vmem:[#allocation11 + $0xf98] sm:$0xff]
        %v5780 = vld [vmem:[#allocation11 + $0xfa0] sm:$0xff]
        %v5781 = vld [vmem:[#allocation11 + $0xfa8] sm:$0xff]
        %v5782 = vld [vmem:[#allocation11 + $0xfb0] sm:$0xff]
        %v5783 = vld [vmem:[#allocation11 + $0xfb8] sm:$0xff]
        %v5784 = vld [vmem:[#allocation11 + $0xfc0] sm:$0xff]
        %v5785 = vld [vmem:[#allocation11 + $0xfc8] sm:$0xff]
        %v5786 = vld [vmem:[#allocation11 + $0xfd0] sm:$0xff]
        %v5787 = vld [vmem:[#allocation11 + $0xfd8] sm:$0xff]
        %v5788 = vld [vmem:[#allocation11 + $0xfe0] sm:$0xff]
        %v5789 = vld [vmem:[#allocation11 + $0xfe8] sm:$0xff]
        %v5790 = vld [vmem:[#allocation11 + $0xff0] sm:$0xff]
        %v5791 = vld [vmem:[#allocation11 + $0xff8] sm:$0xff]
        %v5792 = vld [vmem:[#allocation13] sm:$0xff]
        %v5793 = vld [vmem:[#allocation13 + $0x8] sm:$0xff]
        %v5796 = vlaneseq
        %v5797 = vshrl.u32 %v5796, 7
        %v5798 = vsub.s32 0, %v5797
        %v5799 = vrot.slane %v5792, %v5798
        %v5800 = vlaneseq
        %v5801 = vshrl.u32 %v5800, 7
        %v5802 = vsub.s32 1, %v5801
        %v5803 = vrot.slane %v5792, %v5802
        %v5804 = vlaneseq
        %v5805 = vshrl.u32 %v5804, 7
        %v5806 = vsub.s32 2, %v5805
        %v5807 = vrot.slane %v5792, %v5806
        %v5808 = vlaneseq
        %v5809 = vshrl.u32 %v5808, 7
        %v5810 = vsub.s32 3, %v5809
        %v5811 = vrot.slane %v5792, %v5810
        %v5812 = vlaneseq
        %v5813 = vshrl.u32 %v5812, 7
        %v5814 = vsub.s32 4, %v5813
        %v5815 = vrot.slane %v5792, %v5814
        %v5816 = vlaneseq
        %v5817 = vshrl.u32 %v5816, 7
        %v5818 = vsub.s32 5, %v5817
        %v5819 = vrot.slane %v5792, %v5818
        %v5820 = vlaneseq
        %v5821 = vshrl.u32 %v5820, 7
        %v5822 = vsub.s32 6, %v5821
        %v5823 = vrot.slane %v5792, %v5822
        %v5824 = vlaneseq
        %v5825 = vshrl.u32 %v5824, 7
        %v5826 = vsub.s32 7, %v5825
        %v5827 = vrot.slane %v5792, %v5826
        %v5828 = vlaneseq
        %v5829 = vshrl.u32 %v5828, 7
        %v5830 = vsub.s32 0, %v5829
        %v5831 = vrot.slane %v5793, %v5830
        %v5832 = vlaneseq
        %v5833 = vshrl.u32 %v5832, 7
        %v5834 = vsub.s32 1, %v5833
        %v5835 = vrot.slane %v5793, %v5834
        %v5836 = vlaneseq
        %v5837 = vshrl.u32 %v5836, 7
        %v5838 = vsub.s32 2, %v5837
        %v5839 = vrot.slane %v5793, %v5838
        %v5840 = vlaneseq
        %v5841 = vshrl.u32 %v5840, 7
        %v5842 = vsub.s32 3, %v5841
        %v5843 = vrot.slane %v5793, %v5842
        %v5844 = vlaneseq
        %v5845 = vshrl.u32 %v5844, 7
        %v5846 = vsub.s32 4, %v5845
        %v5847 = vrot.slane %v5793, %v5846
        %v5848 = vlaneseq
        %v5849 = vshrl.u32 %v5848, 7
        %v5850 = vsub.s32 5, %v5849
        %v5851 = vrot.slane %v5793, %v5850
        %v5852 = vlaneseq
        %v5853 = vshrl.u32 %v5852, 7
        %v5854 = vsub.s32 6, %v5853
        %v5855 = vrot.slane %v5793, %v5854
        %v5856 = vlaneseq
        %v5857 = vshrl.u32 %v5856, 7
        %v5858 = vsub.s32 7, %v5857
        %v5859 = vrot.slane %v5793, %v5858
        %v6388 = vunpack.c.l.b16 %v5280
        %v6389 = vunpack.c.h.b16 %v5280
        %v6390 = vunpack.c.l.b16 %v5281
        %v6391 = vunpack.c.h.b16 %v5281
        %v6392 = vunpack.c.l.b16 %v5282
        %v6393 = vunpack.c.h.b16 %v5282
        %v6394 = vunpack.c.l.b16 %v5283
        %v6395 = vunpack.c.h.b16 %v5283
        %v6396 = vunpack.c.l.b16 %v5284
        %v6397 = vunpack.c.h.b16 %v5284
        %v6398 = vunpack.c.l.b16 %v5285
        %v6399 = vunpack.c.h.b16 %v5285
        %v6400 = vunpack.c.l.b16 %v5286
        %v6401 = vunpack.c.h.b16 %v5286
        %v6402 = vunpack.c.l.b16 %v5287
        %v6403 = vunpack.c.h.b16 %v5287
        %v6404 = vunpack.c.l.b16 %v5288
        %v6405 = vunpack.c.h.b16 %v5288
        %v6406 = vunpack.c.l.b16 %v5289
        %v6407 = vunpack.c.h.b16 %v5289
        %v6408 = vunpack.c.l.b16 %v5290
        %v6409 = vunpack.c.h.b16 %v5290
        %v6410 = vunpack.c.l.b16 %v5291
        %v6411 = vunpack.c.h.b16 %v5291
        %v6412 = vunpack.c.l.b16 %v5292
        %v6413 = vunpack.c.h.b16 %v5292
        %v6414 = vunpack.c.l.b16 %v5293
        %v6415 = vunpack.c.h.b16 %v5293
        %v6416 = vunpack.c.l.b16 %v5294
        %v6417 = vunpack.c.h.b16 %v5294
        %v6418 = vunpack.c.l.b16 %v5295
        %v6419 = vunpack.c.h.b16 %v5295
        %v6420 = vunpack.c.l.b16 %v5296
        %v6421 = vunpack.c.h.b16 %v5296
        %v6422 = vunpack.c.l.b16 %v5297
        %v6423 = vunpack.c.h.b16 %v5297
        %v6424 = vunpack.c.l.b16 %v5298
        %v6425 = vunpack.c.h.b16 %v5298
        %v6426 = vunpack.c.l.b16 %v5299
        %v6427 = vunpack.c.h.b16 %v5299
        %v6428 = vunpack.c.l.b16 %v5300
        %v6429 = vunpack.c.h.b16 %v5300
        %v6430 = vunpack.c.l.b16 %v5301
        %v6431 = vunpack.c.h.b16 %v5301
        %v6432 = vunpack.c.l.b16 %v5302
        %v6433 = vunpack.c.h.b16 %v5302
        %v6434 = vunpack.c.l.b16 %v5303
        %v6435 = vunpack.c.h.b16 %v5303
        %v6436 = vunpack.c.l.b16 %v5304
        %v6437 = vunpack.c.h.b16 %v5304
        %v6438 = vunpack.c.l.b16 %v5305
        %v6439 = vunpack.c.h.b16 %v5305
        %v6440 = vunpack.c.l.b16 %v5306
        %v6441 = vunpack.c.h.b16 %v5306
        %v6442 = vunpack.c.l.b16 %v5307
        %v6443 = vunpack.c.h.b16 %v5307
        %v6444 = vunpack.c.l.b16 %v5308
        %v6445 = vunpack.c.h.b16 %v5308
        %v6446 = vunpack.c.l.b16 %v5309
        %v6447 = vunpack.c.h.b16 %v5309
        %v6448 = vunpack.c.l.b16 %v5310
        %v6449 = vunpack.c.h.b16 %v5310
        %v6450 = vunpack.c.l.b16 %v5311
        %v6451 = vunpack.c.h.b16 %v5311
        %v6452 = vunpack.c.l.b16 %v5312
        %v6453 = vunpack.c.h.b16 %v5312
        %v6454 = vunpack.c.l.b16 %v5313
        %v6455 = vunpack.c.h.b16 %v5313
        %v6456 = vunpack.c.l.b16 %v5314
        %v6457 = vunpack.c.h.b16 %v5314
        %v6458 = vunpack.c.l.b16 %v5315
        %v6459 = vunpack.c.h.b16 %v5315
        %v6460 = vunpack.c.l.b16 %v5316
        %v6461 = vunpack.c.h.b16 %v5316
        %v6462 = vunpack.c.l.b16 %v5317
        %v6463 = vunpack.c.h.b16 %v5317
        %v6464 = vunpack.c.l.b16 %v5318
        %v6465 = vunpack.c.h.b16 %v5318
        %v6466 = vunpack.c.l.b16 %v5319
        %v6467 = vunpack.c.h.b16 %v5319
        %v6468 = vunpack.c.l.b16 %v5320
        %v6469 = vunpack.c.h.b16 %v5320
        %v6470 = vunpack.c.l.b16 %v5321
        %v6471 = vunpack.c.h.b16 %v5321
        %v6472 = vunpack.c.l.b16 %v5322
        %v6473 = vunpack.c.h.b16 %v5322
        %v6474 = vunpack.c.l.b16 %v5323
        %v6475 = vunpack.c.h.b16 %v5323
        %v6476 = vunpack.c.l.b16 %v5324
        %v6477 = vunpack.c.h.b16 %v5324
        %v6478 = vunpack.c.l.b16 %v5325
        %v6479 = vunpack.c.h.b16 %v5325
        %v6480 = vunpack.c.l.b16 %v5326
        %v6481 = vunpack.c.h.b16 %v5326
        %v6482 = vunpack.c.l.b16 %v5327
        %v6483 = vunpack.c.h.b16 %v5327
        %v6484 = vunpack.c.l.b16 %v5328
        %v6485 = vunpack.c.h.b16 %v5328
        %v6486 = vunpack.c.l.b16 %v5329
        %v6487 = vunpack.c.h.b16 %v5329
        %v6488 = vunpack.c.l.b16 %v5330
        %v6489 = vunpack.c.h.b16 %v5330
        %v6490 = vunpack.c.l.b16 %v5331
        %v6491 = vunpack.c.h.b16 %v5331
        %v6492 = vunpack.c.l.b16 %v5332
        %v6493 = vunpack.c.h.b16 %v5332
        %v6494 = vunpack.c.l.b16 %v5333
        %v6495 = vunpack.c.h.b16 %v5333
        %v6496 = vunpack.c.l.b16 %v5334
        %v6497 = vunpack.c.h.b16 %v5334
        %v6498 = vunpack.c.l.b16 %v5335
        %v6499 = vunpack.c.h.b16 %v5335
        %v6500 = vunpack.c.l.b16 %v5336
        %v6501 = vunpack.c.h.b16 %v5336
        %v6502 = vunpack.c.l.b16 %v5337
        %v6503 = vunpack.c.h.b16 %v5337
        %v6504 = vunpack.c.l.b16 %v5338
        %v6505 = vunpack.c.h.b16 %v5338
        %v6506 = vunpack.c.l.b16 %v5339
        %v6507 = vunpack.c.h.b16 %v5339
        %v6508 = vunpack.c.l.b16 %v5340
        %v6509 = vunpack.c.h.b16 %v5340
        %v6510 = vunpack.c.l.b16 %v5341
        %v6511 = vunpack.c.h.b16 %v5341
        %v6512 = vunpack.c.l.b16 %v5342
        %v6513 = vunpack.c.h.b16 %v5342
        %v6514 = vunpack.c.l.b16 %v5343
        %v6515 = vunpack.c.h.b16 %v5343
        %v6516 = vunpack.c.l.b16 %v5344
        %v6517 = vunpack.c.h.b16 %v5344
        %v6518 = vunpack.c.l.b16 %v5345
        %v6519 = vunpack.c.h.b16 %v5345
        %v6520 = vunpack.c.l.b16 %v5346
        %v6521 = vunpack.c.h.b16 %v5346
        %v6522 = vunpack.c.l.b16 %v5347
        %v6523 = vunpack.c.h.b16 %v5347
        %v6524 = vunpack.c.l.b16 %v5348
        %v6525 = vunpack.c.h.b16 %v5348
        %v6526 = vunpack.c.l.b16 %v5349
        %v6527 = vunpack.c.h.b16 %v5349
        %v6528 = vunpack.c.l.b16 %v5350
        %v6529 = vunpack.c.h.b16 %v5350
        %v6530 = vunpack.c.l.b16 %v5351
        %v6531 = vunpack.c.h.b16 %v5351
        %v6532 = vunpack.c.l.b16 %v5352
        %v6533 = vunpack.c.h.b16 %v5352
        %v6534 = vunpack.c.l.b16 %v5353
        %v6535 = vunpack.c.h.b16 %v5353
        %v6536 = vunpack.c.l.b16 %v5354
        %v6537 = vunpack.c.h.b16 %v5354
        %v6538 = vunpack.c.l.b16 %v5355
        %v6539 = vunpack.c.h.b16 %v5355
        %v6540 = vunpack.c.l.b16 %v5356
        %v6541 = vunpack.c.h.b16 %v5356
        %v6542 = vunpack.c.l.b16 %v5357
        %v6543 = vunpack.c.h.b16 %v5357
        %v6544 = vunpack.c.l.b16 %v5358
        %v6545 = vunpack.c.h.b16 %v5358
        %v6546 = vunpack.c.l.b16 %v5359
        %v6547 = vunpack.c.h.b16 %v5359
        %v6548 = vunpack.c.l.b16 %v5360
        %v6549 = vunpack.c.h.b16 %v5360
        %v6550 = vunpack.c.l.b16 %v5361
        %v6551 = vunpack.c.h.b16 %v5361
        %v6552 = vunpack.c.l.b16 %v5362
        %v6553 = vunpack.c.h.b16 %v5362
        %v6554 = vunpack.c.l.b16 %v5363
        %v6555 = vunpack.c.h.b16 %v5363
        %v6556 = vunpack.c.l.b16 %v5364
        %v6557 = vunpack.c.h.b16 %v5364
        %v6558 = vunpack.c.l.b16 %v5365
        %v6559 = vunpack.c.h.b16 %v5365
        %v6560 = vunpack.c.l.b16 %v5366
        %v6561 = vunpack.c.h.b16 %v5366
        %v6562 = vunpack.c.l.b16 %v5367
        %v6563 = vunpack.c.h.b16 %v5367
        %v6564 = vunpack.c.l.b16 %v5368
        %v6565 = vunpack.c.h.b16 %v5368
        %v6566 = vunpack.c.l.b16 %v5369
        %v6567 = vunpack.c.h.b16 %v5369
        %v6568 = vunpack.c.l.b16 %v5370
        %v6569 = vunpack.c.h.b16 %v5370
        %v6570 = vunpack.c.l.b16 %v5371
        %v6571 = vunpack.c.h.b16 %v5371
        %v6572 = vunpack.c.l.b16 %v5372
        %v6573 = vunpack.c.h.b16 %v5372
        %v6574 = vunpack.c.l.b16 %v5373
        %v6575 = vunpack.c.h.b16 %v5373
        %v6576 = vunpack.c.l.b16 %v5374
        %v6577 = vunpack.c.h.b16 %v5374
        %v6578 = vunpack.c.l.b16 %v5375
        %v6579 = vunpack.c.h.b16 %v5375
        %v6580 = vunpack.c.l.b16 %v5376
        %v6581 = vunpack.c.h.b16 %v5376
        %v6582 = vunpack.c.l.b16 %v5377
        %v6583 = vunpack.c.h.b16 %v5377
        %v6584 = vunpack.c.l.b16 %v5378
        %v6585 = vunpack.c.h.b16 %v5378
        %v6586 = vunpack.c.l.b16 %v5379
        %v6587 = vunpack.c.h.b16 %v5379
        %v6588 = vunpack.c.l.b16 %v5380
        %v6589 = vunpack.c.h.b16 %v5380
        %v6590 = vunpack.c.l.b16 %v5381
        %v6591 = vunpack.c.h.b16 %v5381
        %v6592 = vunpack.c.l.b16 %v5382
        %v6593 = vunpack.c.h.b16 %v5382
        %v6594 = vunpack.c.l.b16 %v5383
        %v6595 = vunpack.c.h.b16 %v5383
        %v6596 = vunpack.c.l.b16 %v5384
        %v6597 = vunpack.c.h.b16 %v5384
        %v6598 = vunpack.c.l.b16 %v5385
        %v6599 = vunpack.c.h.b16 %v5385
        %v6600 = vunpack.c.l.b16 %v5386
        %v6601 = vunpack.c.h.b16 %v5386
        %v6602 = vunpack.c.l.b16 %v5387
        %v6603 = vunpack.c.h.b16 %v5387
        %v6604 = vunpack.c.l.b16 %v5388
        %v6605 = vunpack.c.h.b16 %v5388
        %v6606 = vunpack.c.l.b16 %v5389
        %v6607 = vunpack.c.h.b16 %v5389
        %v6608 = vunpack.c.l.b16 %v5390
        %v6609 = vunpack.c.h.b16 %v5390
        %v6610 = vunpack.c.l.b16 %v5391
        %v6611 = vunpack.c.h.b16 %v5391
        %v6612 = vunpack.c.l.b16 %v5392
        %v6613 = vunpack.c.h.b16 %v5392
        %v6614 = vunpack.c.l.b16 %v5393
        %v6615 = vunpack.c.h.b16 %v5393
        %v6616 = vunpack.c.l.b16 %v5394
        %v6617 = vunpack.c.h.b16 %v5394
        %v6618 = vunpack.c.l.b16 %v5395
        %v6619 = vunpack.c.h.b16 %v5395
        %v6620 = vunpack.c.l.b16 %v5396
        %v6621 = vunpack.c.h.b16 %v5396
        %v6622 = vunpack.c.l.b16 %v5397
        %v6623 = vunpack.c.h.b16 %v5397
        %v6624 = vunpack.c.l.b16 %v5398
        %v6625 = vunpack.c.h.b16 %v5398
        %v6626 = vunpack.c.l.b16 %v5399
        %v6627 = vunpack.c.h.b16 %v5399
        %v6628 = vunpack.c.l.b16 %v5400
        %v6629 = vunpack.c.h.b16 %v5400
        %v6630 = vunpack.c.l.b16 %v5401
        %v6631 = vunpack.c.h.b16 %v5401
        %v6632 = vunpack.c.l.b16 %v5402
        %v6633 = vunpack.c.h.b16 %v5402
        %v6634 = vunpack.c.l.b16 %v5403
        %v6635 = vunpack.c.h.b16 %v5403
        %v6636 = vunpack.c.l.b16 %v5404
        %v6637 = vunpack.c.h.b16 %v5404
        %v6638 = vunpack.c.l.b16 %v5405
        %v6639 = vunpack.c.h.b16 %v5405
        %v6640 = vunpack.c.l.b16 %v5406
        %v6641 = vunpack.c.h.b16 %v5406
        %v6642 = vunpack.c.l.b16 %v5407
        %v6643 = vunpack.c.h.b16 %v5407
        %v6644 = vunpack.c.l.b16 %v5408
        %v6645 = vunpack.c.h.b16 %v5408
        %v6646 = vunpack.c.l.b16 %v5409
        %v6647 = vunpack.c.h.b16 %v5409
        %v6648 = vunpack.c.l.b16 %v5410
        %v6649 = vunpack.c.h.b16 %v5410
        %v6650 = vunpack.c.l.b16 %v5411
        %v6651 = vunpack.c.h.b16 %v5411
        %v6652 = vunpack.c.l.b16 %v5412
        %v6653 = vunpack.c.h.b16 %v5412
        %v6654 = vunpack.c.l.b16 %v5413
        %v6655 = vunpack.c.h.b16 %v5413
        %v6656 = vunpack.c.l.b16 %v5414
        %v6657 = vunpack.c.h.b16 %v5414
        %v6658 = vunpack.c.l.b16 %v5415
        %v6659 = vunpack.c.h.b16 %v5415
        %v6660 = vunpack.c.l.b16 %v5416
        %v6661 = vunpack.c.h.b16 %v5416
        %v6662 = vunpack.c.l.b16 %v5417
        %v6663 = vunpack.c.h.b16 %v5417
        %v6664 = vunpack.c.l.b16 %v5418
        %v6665 = vunpack.c.h.b16 %v5418
        %v6666 = vunpack.c.l.b16 %v5419
        %v6667 = vunpack.c.h.b16 %v5419
        %v6668 = vunpack.c.l.b16 %v5420
        %v6669 = vunpack.c.h.b16 %v5420
        %v6670 = vunpack.c.l.b16 %v5421
        %v6671 = vunpack.c.h.b16 %v5421
        %v6672 = vunpack.c.l.b16 %v5422
        %v6673 = vunpack.c.h.b16 %v5422
        %v6674 = vunpack.c.l.b16 %v5423
        %v6675 = vunpack.c.h.b16 %v5423
        %v6676 = vunpack.c.l.b16 %v5424
        %v6677 = vunpack.c.h.b16 %v5424
        %v6678 = vunpack.c.l.b16 %v5425
        %v6679 = vunpack.c.h.b16 %v5425
        %v6680 = vunpack.c.l.b16 %v5426
        %v6681 = vunpack.c.h.b16 %v5426
        %v6682 = vunpack.c.l.b16 %v5427
        %v6683 = vunpack.c.h.b16 %v5427
        %v6684 = vunpack.c.l.b16 %v5428
        %v6685 = vunpack.c.h.b16 %v5428
        %v6686 = vunpack.c.l.b16 %v5429
        %v6687 = vunpack.c.h.b16 %v5429
        %v6688 = vunpack.c.l.b16 %v5430
        %v6689 = vunpack.c.h.b16 %v5430
        %v6690 = vunpack.c.l.b16 %v5431
        %v6691 = vunpack.c.h.b16 %v5431
        %v6692 = vunpack.c.l.b16 %v5432
        %v6693 = vunpack.c.h.b16 %v5432
        %v6694 = vunpack.c.l.b16 %v5433
        %v6695 = vunpack.c.h.b16 %v5433
        %v6696 = vunpack.c.l.b16 %v5434
        %v6697 = vunpack.c.h.b16 %v5434
        %v6698 = vunpack.c.l.b16 %v5435
        %v6699 = vunpack.c.h.b16 %v5435
        %v6700 = vunpack.c.l.b16 %v5436
        %v6701 = vunpack.c.h.b16 %v5436
        %v6702 = vunpack.c.l.b16 %v5437
        %v6703 = vunpack.c.h.b16 %v5437
        %v6704 = vunpack.c.l.b16 %v5438
        %v6705 = vunpack.c.h.b16 %v5438
        %v6706 = vunpack.c.l.b16 %v5439
        %v6707 = vunpack.c.h.b16 %v5439
        %v6708 = vunpack.c.l.b16 %v5440
        %v6709 = vunpack.c.h.b16 %v5440
        %v6710 = vunpack.c.l.b16 %v5441
        %v6711 = vunpack.c.h.b16 %v5441
        %v6712 = vunpack.c.l.b16 %v5442
        %v6713 = vunpack.c.h.b16 %v5442
        %v6714 = vunpack.c.l.b16 %v5443
        %v6715 = vunpack.c.h.b16 %v5443
        %v6716 = vunpack.c.l.b16 %v5444
        %v6717 = vunpack.c.h.b16 %v5444
        %v6718 = vunpack.c.l.b16 %v5445
        %v6719 = vunpack.c.h.b16 %v5445
        %v6720 = vunpack.c.l.b16 %v5446
        %v6721 = vunpack.c.h.b16 %v5446
        %v6722 = vunpack.c.l.b16 %v5447
        %v6723 = vunpack.c.h.b16 %v5447
        %v6724 = vunpack.c.l.b16 %v5448
        %v6725 = vunpack.c.h.b16 %v5448
        %v6726 = vunpack.c.l.b16 %v5449
        %v6727 = vunpack.c.h.b16 %v5449
        %v6728 = vunpack.c.l.b16 %v5450
        %v6729 = vunpack.c.h.b16 %v5450
        %v6730 = vunpack.c.l.b16 %v5451
        %v6731 = vunpack.c.h.b16 %v5451
        %v6732 = vunpack.c.l.b16 %v5452
        %v6733 = vunpack.c.h.b16 %v5452
        %v6734 = vunpack.c.l.b16 %v5453
        %v6735 = vunpack.c.h.b16 %v5453
        %v6736 = vunpack.c.l.b16 %v5454
        %v6737 = vunpack.c.h.b16 %v5454
        %v6738 = vunpack.c.l.b16 %v5455
        %v6739 = vunpack.c.h.b16 %v5455
        %v6740 = vunpack.c.l.b16 %v5456
        %v6741 = vunpack.c.h.b16 %v5456
        %v6742 = vunpack.c.l.b16 %v5457
        %v6743 = vunpack.c.h.b16 %v5457
        %v6744 = vunpack.c.l.b16 %v5458
        %v6745 = vunpack.c.h.b16 %v5458
        %v6746 = vunpack.c.l.b16 %v5459
        %v6747 = vunpack.c.h.b16 %v5459
        %v6748 = vunpack.c.l.b16 %v5460
        %v6749 = vunpack.c.h.b16 %v5460
        %v6750 = vunpack.c.l.b16 %v5461
        %v6751 = vunpack.c.h.b16 %v5461
        %v6752 = vunpack.c.l.b16 %v5462
        %v6753 = vunpack.c.h.b16 %v5462
        %v6754 = vunpack.c.l.b16 %v5463
        %v6755 = vunpack.c.h.b16 %v5463
        %v6756 = vunpack.c.l.b16 %v5464
        %v6757 = vunpack.c.h.b16 %v5464
        %v6758 = vunpack.c.l.b16 %v5465
        %v6759 = vunpack.c.h.b16 %v5465
        %v6760 = vunpack.c.l.b16 %v5466
        %v6761 = vunpack.c.h.b16 %v5466
        %v6762 = vunpack.c.l.b16 %v5467
        %v6763 = vunpack.c.h.b16 %v5467
        %v6764 = vunpack.c.l.b16 %v5468
        %v6765 = vunpack.c.h.b16 %v5468
        %v6766 = vunpack.c.l.b16 %v5469
        %v6767 = vunpack.c.h.b16 %v5469
        %v6768 = vunpack.c.l.b16 %v5470
        %v6769 = vunpack.c.h.b16 %v5470
        %v6770 = vunpack.c.l.b16 %v5471
        %v6771 = vunpack.c.h.b16 %v5471
        %v6772 = vunpack.c.l.b16 %v5472
        %v6773 = vunpack.c.h.b16 %v5472
        %v6774 = vunpack.c.l.b16 %v5473
        %v6775 = vunpack.c.h.b16 %v5473
        %v6776 = vunpack.c.l.b16 %v5474
        %v6777 = vunpack.c.h.b16 %v5474
        %v6778 = vunpack.c.l.b16 %v5475
        %v6779 = vunpack.c.h.b16 %v5475
        %v6780 = vunpack.c.l.b16 %v5476
        %v6781 = vunpack.c.h.b16 %v5476
        %v6782 = vunpack.c.l.b16 %v5477
        %v6783 = vunpack.c.h.b16 %v5477
        %v6784 = vunpack.c.l.b16 %v5478
        %v6785 = vunpack.c.h.b16 %v5478
        %v6786 = vunpack.c.l.b16 %v5479
        %v6787 = vunpack.c.h.b16 %v5479
        %v6788 = vunpack.c.l.b16 %v5480
        %v6789 = vunpack.c.h.b16 %v5480
        %v6790 = vunpack.c.l.b16 %v5481
        %v6791 = vunpack.c.h.b16 %v5481
        %v6792 = vunpack.c.l.b16 %v5482
        %v6793 = vunpack.c.h.b16 %v5482
        %v6794 = vunpack.c.l.b16 %v5483
        %v6795 = vunpack.c.h.b16 %v5483
        %v6796 = vunpack.c.l.b16 %v5484
        %v6797 = vunpack.c.h.b16 %v5484
        %v6798 = vunpack.c.l.b16 %v5485
        %v6799 = vunpack.c.h.b16 %v5485
        %v6800 = vunpack.c.l.b16 %v5486
        %v6801 = vunpack.c.h.b16 %v5486
        %v6802 = vunpack.c.l.b16 %v5487
        %v6803 = vunpack.c.h.b16 %v5487
        %v6804 = vunpack.c.l.b16 %v5488
        %v6805 = vunpack.c.h.b16 %v5488
        %v6806 = vunpack.c.l.b16 %v5489
        %v6807 = vunpack.c.h.b16 %v5489
        %v6808 = vunpack.c.l.b16 %v5490
        %v6809 = vunpack.c.h.b16 %v5490
        %v6810 = vunpack.c.l.b16 %v5491
        %v6811 = vunpack.c.h.b16 %v5491
        %v6812 = vunpack.c.l.b16 %v5492
        %v6813 = vunpack.c.h.b16 %v5492
        %v6814 = vunpack.c.l.b16 %v5493
        %v6815 = vunpack.c.h.b16 %v5493
        %v6816 = vunpack.c.l.b16 %v5494
        %v6817 = vunpack.c.h.b16 %v5494
        %v6818 = vunpack.c.l.b16 %v5495
        %v6819 = vunpack.c.h.b16 %v5495
        %v6820 = vunpack.c.l.b16 %v5496
        %v6821 = vunpack.c.h.b16 %v5496
        %v6822 = vunpack.c.l.b16 %v5497
        %v6823 = vunpack.c.h.b16 %v5497
        %v6824 = vunpack.c.l.b16 %v5498
        %v6825 = vunpack.c.h.b16 %v5498
        %v6826 = vunpack.c.l.b16 %v5499
        %v6827 = vunpack.c.h.b16 %v5499
        %v6828 = vunpack.c.l.b16 %v5500
        %v6829 = vunpack.c.h.b16 %v5500
        %v6830 = vunpack.c.l.b16 %v5501
        %v6831 = vunpack.c.h.b16 %v5501
        %v6832 = vunpack.c.l.b16 %v5502
        %v6833 = vunpack.c.h.b16 %v5502
        %v6834 = vunpack.c.l.b16 %v5503
        %v6835 = vunpack.c.h.b16 %v5503
        %v6836 = vunpack.c.l.b16 %v5504
        %v6837 = vunpack.c.h.b16 %v5504
        %v6838 = vunpack.c.l.b16 %v5505
        %v6839 = vunpack.c.h.b16 %v5505
        %v6840 = vunpack.c.l.b16 %v5506
        %v6841 = vunpack.c.h.b16 %v5506
        %v6842 = vunpack.c.l.b16 %v5507
        %v6843 = vunpack.c.h.b16 %v5507
        %v6844 = vunpack.c.l.b16 %v5508
        %v6845 = vunpack.c.h.b16 %v5508
        %v6846 = vunpack.c.l.b16 %v5509
        %v6847 = vunpack.c.h.b16 %v5509
        %v6848 = vunpack.c.l.b16 %v5510
        %v6849 = vunpack.c.h.b16 %v5510
        %v6850 = vunpack.c.l.b16 %v5511
        %v6851 = vunpack.c.h.b16 %v5511
        %v6852 = vunpack.c.l.b16 %v5512
        %v6853 = vunpack.c.h.b16 %v5512
        %v6854 = vunpack.c.l.b16 %v5513
        %v6855 = vunpack.c.h.b16 %v5513
        %v6856 = vunpack.c.l.b16 %v5514
        %v6857 = vunpack.c.h.b16 %v5514
        %v6858 = vunpack.c.l.b16 %v5515
        %v6859 = vunpack.c.h.b16 %v5515
        %v6860 = vunpack.c.l.b16 %v5516
        %v6861 = vunpack.c.h.b16 %v5516
        %v6862 = vunpack.c.l.b16 %v5517
        %v6863 = vunpack.c.h.b16 %v5517
        %v6864 = vunpack.c.l.b16 %v5518
        %v6865 = vunpack.c.h.b16 %v5518
        %v6866 = vunpack.c.l.b16 %v5519
        %v6867 = vunpack.c.h.b16 %v5519
        %v6868 = vunpack.c.l.b16 %v5520
        %v6869 = vunpack.c.h.b16 %v5520
        %v6870 = vunpack.c.l.b16 %v5521
        %v6871 = vunpack.c.h.b16 %v5521
        %v6872 = vunpack.c.l.b16 %v5522
        %v6873 = vunpack.c.h.b16 %v5522
        %v6874 = vunpack.c.l.b16 %v5523
        %v6875 = vunpack.c.h.b16 %v5523
        %v6876 = vunpack.c.l.b16 %v5524
        %v6877 = vunpack.c.h.b16 %v5524
        %v6878 = vunpack.c.l.b16 %v5525
        %v6879 = vunpack.c.h.b16 %v5525
        %v6880 = vunpack.c.l.b16 %v5526
        %v6881 = vunpack.c.h.b16 %v5526
        %v6882 = vunpack.c.l.b16 %v5527
        %v6883 = vunpack.c.h.b16 %v5527
        %v6884 = vunpack.c.l.b16 %v5528
        %v6885 = vunpack.c.h.b16 %v5528
        %v6886 = vunpack.c.l.b16 %v5529
        %v6887 = vunpack.c.h.b16 %v5529
        %v6888 = vunpack.c.l.b16 %v5530
        %v6889 = vunpack.c.h.b16 %v5530
        %v6890 = vunpack.c.l.b16 %v5531
        %v6891 = vunpack.c.h.b16 %v5531
        %v6892 = vunpack.c.l.b16 %v5532
        %v6893 = vunpack.c.h.b16 %v5532
        %v6894 = vunpack.c.l.b16 %v5533
        %v6895 = vunpack.c.h.b16 %v5533
        %v6896 = vunpack.c.l.b16 %v5534
        %v6897 = vunpack.c.h.b16 %v5534
        %v6898 = vunpack.c.l.b16 %v5535
        %v6899 = vunpack.c.h.b16 %v5535
        %v6900 = vunpack.c.l.b16 %v5536
        %v6901 = vunpack.c.h.b16 %v5536
        %v6902 = vunpack.c.l.b16 %v5537
        %v6903 = vunpack.c.h.b16 %v5537
        %v6904 = vunpack.c.l.b16 %v5538
        %v6905 = vunpack.c.h.b16 %v5538
        %v6906 = vunpack.c.l.b16 %v5539
        %v6907 = vunpack.c.h.b16 %v5539
        %v6908 = vunpack.c.l.b16 %v5540
        %v6909 = vunpack.c.h.b16 %v5540
        %v6910 = vunpack.c.l.b16 %v5541
        %v6911 = vunpack.c.h.b16 %v5541
        %v6912 = vunpack.c.l.b16 %v5542
        %v6913 = vunpack.c.h.b16 %v5542
        %v6914 = vunpack.c.l.b16 %v5543
        %v6915 = vunpack.c.h.b16 %v5543
        %v6916 = vunpack.c.l.b16 %v5544
        %v6917 = vunpack.c.h.b16 %v5544
        %v6918 = vunpack.c.l.b16 %v5545
        %v6919 = vunpack.c.h.b16 %v5545
        %v6920 = vunpack.c.l.b16 %v5546
        %v6921 = vunpack.c.h.b16 %v5546
        %v6922 = vunpack.c.l.b16 %v5547
        %v6923 = vunpack.c.h.b16 %v5547
        %v6924 = vunpack.c.l.b16 %v5548
        %v6925 = vunpack.c.h.b16 %v5548
        %v6926 = vunpack.c.l.b16 %v5549
        %v6927 = vunpack.c.h.b16 %v5549
        %v6928 = vunpack.c.l.b16 %v5550
        %v6929 = vunpack.c.h.b16 %v5550
        %v6930 = vunpack.c.l.b16 %v5551
        %v6931 = vunpack.c.h.b16 %v5551
        %v6932 = vunpack.c.l.b16 %v5552
        %v6933 = vunpack.c.h.b16 %v5552
        %v6934 = vunpack.c.l.b16 %v5553
        %v6935 = vunpack.c.h.b16 %v5553
        %v6936 = vunpack.c.l.b16 %v5554
        %v6937 = vunpack.c.h.b16 %v5554
        %v6938 = vunpack.c.l.b16 %v5555
        %v6939 = vunpack.c.h.b16 %v5555
        %v6940 = vunpack.c.l.b16 %v5556
        %v6941 = vunpack.c.h.b16 %v5556
        %v6942 = vunpack.c.l.b16 %v5557
        %v6943 = vunpack.c.h.b16 %v5557
        %v6944 = vunpack.c.l.b16 %v5558
        %v6945 = vunpack.c.h.b16 %v5558
        %v6946 = vunpack.c.l.b16 %v5559
        %v6947 = vunpack.c.h.b16 %v5559
        %v6948 = vunpack.c.l.b16 %v5560
        %v6949 = vunpack.c.h.b16 %v5560
        %v6950 = vunpack.c.l.b16 %v5561
        %v6951 = vunpack.c.h.b16 %v5561
        %v6952 = vunpack.c.l.b16 %v5562
        %v6953 = vunpack.c.h.b16 %v5562
        %v6954 = vunpack.c.l.b16 %v5563
        %v6955 = vunpack.c.h.b16 %v5563
        %v6956 = vunpack.c.l.b16 %v5564
        %v6957 = vunpack.c.h.b16 %v5564
        %v6958 = vunpack.c.l.b16 %v5565
        %v6959 = vunpack.c.h.b16 %v5565
        %v6960 = vunpack.c.l.b16 %v5566
        %v6961 = vunpack.c.h.b16 %v5566
        %v6962 = vunpack.c.l.b16 %v5567
        %v6963 = vunpack.c.h.b16 %v5567
        %v6964 = vunpack.c.l.b16 %v5568
        %v6965 = vunpack.c.h.b16 %v5568
        %v6966 = vunpack.c.l.b16 %v5569
        %v6967 = vunpack.c.h.b16 %v5569
        %v6968 = vunpack.c.l.b16 %v5570
        %v6969 = vunpack.c.h.b16 %v5570
        %v6970 = vunpack.c.l.b16 %v5571
        %v6971 = vunpack.c.h.b16 %v5571
        %v6972 = vunpack.c.l.b16 %v5572
        %v6973 = vunpack.c.h.b16 %v5572
        %v6974 = vunpack.c.l.b16 %v5573
        %v6975 = vunpack.c.h.b16 %v5573
        %v6976 = vunpack.c.l.b16 %v5574
        %v6977 = vunpack.c.h.b16 %v5574
        %v6978 = vunpack.c.l.b16 %v5575
        %v6979 = vunpack.c.h.b16 %v5575
        %v6980 = vunpack.c.l.b16 %v5576
        %v6981 = vunpack.c.h.b16 %v5576
        %v6982 = vunpack.c.l.b16 %v5577
        %v6983 = vunpack.c.h.b16 %v5577
        %v6984 = vunpack.c.l.b16 %v5578
        %v6985 = vunpack.c.h.b16 %v5578
        %v6986 = vunpack.c.l.b16 %v5579
        %v6987 = vunpack.c.h.b16 %v5579
        %v6988 = vunpack.c.l.b16 %v5580
        %v6989 = vunpack.c.h.b16 %v5580
        %v6990 = vunpack.c.l.b16 %v5581
        %v6991 = vunpack.c.h.b16 %v5581
        %v6992 = vunpack.c.l.b16 %v5582
        %v6993 = vunpack.c.h.b16 %v5582
        %v6994 = vunpack.c.l.b16 %v5583
        %v6995 = vunpack.c.h.b16 %v5583
        %v6996 = vunpack.c.l.b16 %v5584
        %v6997 = vunpack.c.h.b16 %v5584
        %v6998 = vunpack.c.l.b16 %v5585
        %v6999 = vunpack.c.h.b16 %v5585
        %v7000 = vunpack.c.l.b16 %v5586
        %v7001 = vunpack.c.h.b16 %v5586
        %v7002 = vunpack.c.l.b16 %v5587
        %v7003 = vunpack.c.h.b16 %v5587
        %v7004 = vunpack.c.l.b16 %v5588
        %v7005 = vunpack.c.h.b16 %v5588
        %v7006 = vunpack.c.l.b16 %v5589
        %v7007 = vunpack.c.h.b16 %v5589
        %v7008 = vunpack.c.l.b16 %v5590
        %v7009 = vunpack.c.h.b16 %v5590
        %v7010 = vunpack.c.l.b16 %v5591
        %v7011 = vunpack.c.h.b16 %v5591
        %v7012 = vunpack.c.l.b16 %v5592
        %v7013 = vunpack.c.h.b16 %v5592
        %v7014 = vunpack.c.l.b16 %v5593
        %v7015 = vunpack.c.h.b16 %v5593
        %v7016 = vunpack.c.l.b16 %v5594
        %v7017 = vunpack.c.h.b16 %v5594
        %v7018 = vunpack.c.l.b16 %v5595
        %v7019 = vunpack.c.h.b16 %v5595
        %v7020 = vunpack.c.l.b16 %v5596
        %v7021 = vunpack.c.h.b16 %v5596
        %v7022 = vunpack.c.l.b16 %v5597
        %v7023 = vunpack.c.h.b16 %v5597
        %v7024 = vunpack.c.l.b16 %v5598
        %v7025 = vunpack.c.h.b16 %v5598
        %v7026 = vunpack.c.l.b16 %v5599
        %v7027 = vunpack.c.h.b16 %v5599
        %v7028 = vunpack.c.l.b16 %v5600
        %v7029 = vunpack.c.h.b16 %v5600
        %v7030 = vunpack.c.l.b16 %v5601
        %v7031 = vunpack.c.h.b16 %v5601
        %v7032 = vunpack.c.l.b16 %v5602
        %v7033 = vunpack.c.h.b16 %v5602
        %v7034 = vunpack.c.l.b16 %v5603
        %v7035 = vunpack.c.h.b16 %v5603
        %v7036 = vunpack.c.l.b16 %v5604
        %v7037 = vunpack.c.h.b16 %v5604
        %v7038 = vunpack.c.l.b16 %v5605
        %v7039 = vunpack.c.h.b16 %v5605
        %v7040 = vunpack.c.l.b16 %v5606
        %v7041 = vunpack.c.h.b16 %v5606
        %v7042 = vunpack.c.l.b16 %v5607
        %v7043 = vunpack.c.h.b16 %v5607
        %v7044 = vunpack.c.l.b16 %v5608
        %v7045 = vunpack.c.h.b16 %v5608
        %v7046 = vunpack.c.l.b16 %v5609
        %v7047 = vunpack.c.h.b16 %v5609
        %v7048 = vunpack.c.l.b16 %v5610
        %v7049 = vunpack.c.h.b16 %v5610
        %v7050 = vunpack.c.l.b16 %v5611
        %v7051 = vunpack.c.h.b16 %v5611
        %v7052 = vunpack.c.l.b16 %v5612
        %v7053 = vunpack.c.h.b16 %v5612
        %v7054 = vunpack.c.l.b16 %v5613
        %v7055 = vunpack.c.h.b16 %v5613
        %v7056 = vunpack.c.l.b16 %v5614
        %v7057 = vunpack.c.h.b16 %v5614
        %v7058 = vunpack.c.l.b16 %v5615
        %v7059 = vunpack.c.h.b16 %v5615
        %v7060 = vunpack.c.l.b16 %v5616
        %v7061 = vunpack.c.h.b16 %v5616
        %v7062 = vunpack.c.l.b16 %v5617
        %v7063 = vunpack.c.h.b16 %v5617
        %v7064 = vunpack.c.l.b16 %v5618
        %v7065 = vunpack.c.h.b16 %v5618
        %v7066 = vunpack.c.l.b16 %v5619
        %v7067 = vunpack.c.h.b16 %v5619
        %v7068 = vunpack.c.l.b16 %v5620
        %v7069 = vunpack.c.h.b16 %v5620
        %v7070 = vunpack.c.l.b16 %v5621
        %v7071 = vunpack.c.h.b16 %v5621
        %v7072 = vunpack.c.l.b16 %v5622
        %v7073 = vunpack.c.h.b16 %v5622
        %v7074 = vunpack.c.l.b16 %v5623
        %v7075 = vunpack.c.h.b16 %v5623
        %v7076 = vunpack.c.l.b16 %v5624
        %v7077 = vunpack.c.h.b16 %v5624
        %v7078 = vunpack.c.l.b16 %v5625
        %v7079 = vunpack.c.h.b16 %v5625
        %v7080 = vunpack.c.l.b16 %v5626
        %v7081 = vunpack.c.h.b16 %v5626
        %v7082 = vunpack.c.l.b16 %v5627
        %v7083 = vunpack.c.h.b16 %v5627
        %v7084 = vunpack.c.l.b16 %v5628
        %v7085 = vunpack.c.h.b16 %v5628
        %v7086 = vunpack.c.l.b16 %v5629
        %v7087 = vunpack.c.h.b16 %v5629
        %v7088 = vunpack.c.l.b16 %v5630
        %v7089 = vunpack.c.h.b16 %v5630
        %v7090 = vunpack.c.l.b16 %v5631
        %v7091 = vunpack.c.h.b16 %v5631
        %v7092 = vunpack.c.l.b16 %v5632
        %v7093 = vunpack.c.h.b16 %v5632
        %v7094 = vunpack.c.l.b16 %v5633
        %v7095 = vunpack.c.h.b16 %v5633
        %v7096 = vunpack.c.l.b16 %v5634
        %v7097 = vunpack.c.h.b16 %v5634
        %v7098 = vunpack.c.l.b16 %v5635
        %v7099 = vunpack.c.h.b16 %v5635
        %v7100 = vunpack.c.l.b16 %v5636
        %v7101 = vunpack.c.h.b16 %v5636
        %v7102 = vunpack.c.l.b16 %v5637
        %v7103 = vunpack.c.h.b16 %v5637
        %v7104 = vunpack.c.l.b16 %v5638
        %v7105 = vunpack.c.h.b16 %v5638
        %v7106 = vunpack.c.l.b16 %v5639
        %v7107 = vunpack.c.h.b16 %v5639
        %v7108 = vunpack.c.l.b16 %v5640
        %v7109 = vunpack.c.h.b16 %v5640
        %v7110 = vunpack.c.l.b16 %v5641
        %v7111 = vunpack.c.h.b16 %v5641
        %v7112 = vunpack.c.l.b16 %v5642
        %v7113 = vunpack.c.h.b16 %v5642
        %v7114 = vunpack.c.l.b16 %v5643
        %v7115 = vunpack.c.h.b16 %v5643
        %v7116 = vunpack.c.l.b16 %v5644
        %v7117 = vunpack.c.h.b16 %v5644
        %v7118 = vunpack.c.l.b16 %v5645
        %v7119 = vunpack.c.h.b16 %v5645
        %v7120 = vunpack.c.l.b16 %v5646
        %v7121 = vunpack.c.h.b16 %v5646
        %v7122 = vunpack.c.l.b16 %v5647
        %v7123 = vunpack.c.h.b16 %v5647
        %v7124 = vunpack.c.l.b16 %v5648
        %v7125 = vunpack.c.h.b16 %v5648
        %v7126 = vunpack.c.l.b16 %v5649
        %v7127 = vunpack.c.h.b16 %v5649
        %v7128 = vunpack.c.l.b16 %v5650
        %v7129 = vunpack.c.h.b16 %v5650
        %v7130 = vunpack.c.l.b16 %v5651
        %v7131 = vunpack.c.h.b16 %v5651
        %v7132 = vunpack.c.l.b16 %v5652
        %v7133 = vunpack.c.h.b16 %v5652
        %v7134 = vunpack.c.l.b16 %v5653
        %v7135 = vunpack.c.h.b16 %v5653
        %v7136 = vunpack.c.l.b16 %v5654
        %v7137 = vunpack.c.h.b16 %v5654
        %v7138 = vunpack.c.l.b16 %v5655
        %v7139 = vunpack.c.h.b16 %v5655
        %v7140 = vunpack.c.l.b16 %v5656
        %v7141 = vunpack.c.h.b16 %v5656
        %v7142 = vunpack.c.l.b16 %v5657
        %v7143 = vunpack.c.h.b16 %v5657
        %v7144 = vunpack.c.l.b16 %v5658
        %v7145 = vunpack.c.h.b16 %v5658
        %v7146 = vunpack.c.l.b16 %v5659
        %v7147 = vunpack.c.h.b16 %v5659
        %v7148 = vunpack.c.l.b16 %v5660
        %v7149 = vunpack.c.h.b16 %v5660
        %v7150 = vunpack.c.l.b16 %v5661
        %v7151 = vunpack.c.h.b16 %v5661
        %v7152 = vunpack.c.l.b16 %v5662
        %v7153 = vunpack.c.h.b16 %v5662
        %v7154 = vunpack.c.l.b16 %v5663
        %v7155 = vunpack.c.h.b16 %v5663
        %v7156 = vunpack.c.l.b16 %v5664
        %v7157 = vunpack.c.h.b16 %v5664
        %v7158 = vunpack.c.l.b16 %v5665
        %v7159 = vunpack.c.h.b16 %v5665
        %v7160 = vunpack.c.l.b16 %v5666
        %v7161 = vunpack.c.h.b16 %v5666
        %v7162 = vunpack.c.l.b16 %v5667
        %v7163 = vunpack.c.h.b16 %v5667
        %v7164 = vunpack.c.l.b16 %v5668
        %v7165 = vunpack.c.h.b16 %v5668
        %v7166 = vunpack.c.l.b16 %v5669
        %v7167 = vunpack.c.h.b16 %v5669
        %v7168 = vunpack.c.l.b16 %v5670
        %v7169 = vunpack.c.h.b16 %v5670
        %v7170 = vunpack.c.l.b16 %v5671
        %v7171 = vunpack.c.h.b16 %v5671
        %v7172 = vunpack.c.l.b16 %v5672
        %v7173 = vunpack.c.h.b16 %v5672
        %v7174 = vunpack.c.l.b16 %v5673
        %v7175 = vunpack.c.h.b16 %v5673
        %v7176 = vunpack.c.l.b16 %v5674
        %v7177 = vunpack.c.h.b16 %v5674
        %v7178 = vunpack.c.l.b16 %v5675
        %v7179 = vunpack.c.h.b16 %v5675
        %v7180 = vunpack.c.l.b16 %v5676
        %v7181 = vunpack.c.h.b16 %v5676
        %v7182 = vunpack.c.l.b16 %v5677
        %v7183 = vunpack.c.h.b16 %v5677
        %v7184 = vunpack.c.l.b16 %v5678
        %v7185 = vunpack.c.h.b16 %v5678
        %v7186 = vunpack.c.l.b16 %v5679
        %v7187 = vunpack.c.h.b16 %v5679
        %v7188 = vunpack.c.l.b16 %v5680
        %v7189 = vunpack.c.h.b16 %v5680
        %v7190 = vunpack.c.l.b16 %v5681
        %v7191 = vunpack.c.h.b16 %v5681
        %v7192 = vunpack.c.l.b16 %v5682
        %v7193 = vunpack.c.h.b16 %v5682
        %v7194 = vunpack.c.l.b16 %v5683
        %v7195 = vunpack.c.h.b16 %v5683
        %v7196 = vunpack.c.l.b16 %v5684
        %v7197 = vunpack.c.h.b16 %v5684
        %v7198 = vunpack.c.l.b16 %v5685
        %v7199 = vunpack.c.h.b16 %v5685
        %v7200 = vunpack.c.l.b16 %v5686
        %v7201 = vunpack.c.h.b16 %v5686
        %v7202 = vunpack.c.l.b16 %v5687
        %v7203 = vunpack.c.h.b16 %v5687
        %v7204 = vunpack.c.l.b16 %v5688
        %v7205 = vunpack.c.h.b16 %v5688
        %v7206 = vunpack.c.l.b16 %v5689
        %v7207 = vunpack.c.h.b16 %v5689
        %v7208 = vunpack.c.l.b16 %v5690
        %v7209 = vunpack.c.h.b16 %v5690
        %v7210 = vunpack.c.l.b16 %v5691
        %v7211 = vunpack.c.h.b16 %v5691
        %v7212 = vunpack.c.l.b16 %v5692
        %v7213 = vunpack.c.h.b16 %v5692
        %v7214 = vunpack.c.l.b16 %v5693
        %v7215 = vunpack.c.h.b16 %v5693
        %v7216 = vunpack.c.l.b16 %v5694
        %v7217 = vunpack.c.h.b16 %v5694
        %v7218 = vunpack.c.l.b16 %v5695
        %v7219 = vunpack.c.h.b16 %v5695
        %v7220 = vunpack.c.l.b16 %v5696
        %v7221 = vunpack.c.h.b16 %v5696
        %v7222 = vunpack.c.l.b16 %v5697
        %v7223 = vunpack.c.h.b16 %v5697
        %v7224 = vunpack.c.l.b16 %v5698
        %v7225 = vunpack.c.h.b16 %v5698
        %v7226 = vunpack.c.l.b16 %v5699
        %v7227 = vunpack.c.h.b16 %v5699
        %v7228 = vunpack.c.l.b16 %v5700
        %v7229 = vunpack.c.h.b16 %v5700
        %v7230 = vunpack.c.l.b16 %v5701
        %v7231 = vunpack.c.h.b16 %v5701
        %v7232 = vunpack.c.l.b16 %v5702
        %v7233 = vunpack.c.h.b16 %v5702
        %v7234 = vunpack.c.l.b16 %v5703
        %v7235 = vunpack.c.h.b16 %v5703
        %v7236 = vunpack.c.l.b16 %v5704
        %v7237 = vunpack.c.h.b16 %v5704
        %v7238 = vunpack.c.l.b16 %v5705
        %v7239 = vunpack.c.h.b16 %v5705
        %v7240 = vunpack.c.l.b16 %v5706
        %v7241 = vunpack.c.h.b16 %v5706
        %v7242 = vunpack.c.l.b16 %v5707
        %v7243 = vunpack.c.h.b16 %v5707
        %v7244 = vunpack.c.l.b16 %v5708
        %v7245 = vunpack.c.h.b16 %v5708
        %v7246 = vunpack.c.l.b16 %v5709
        %v7247 = vunpack.c.h.b16 %v5709
        %v7248 = vunpack.c.l.b16 %v5710
        %v7249 = vunpack.c.h.b16 %v5710
        %v7250 = vunpack.c.l.b16 %v5711
        %v7251 = vunpack.c.h.b16 %v5711
        %v7252 = vunpack.c.l.b16 %v5712
        %v7253 = vunpack.c.h.b16 %v5712
        %v7254 = vunpack.c.l.b16 %v5713
        %v7255 = vunpack.c.h.b16 %v5713
        %v7256 = vunpack.c.l.b16 %v5714
        %v7257 = vunpack.c.h.b16 %v5714
        %v7258 = vunpack.c.l.b16 %v5715
        %v7259 = vunpack.c.h.b16 %v5715
        %v7260 = vunpack.c.l.b16 %v5716
        %v7261 = vunpack.c.h.b16 %v5716
        %v7262 = vunpack.c.l.b16 %v5717
        %v7263 = vunpack.c.h.b16 %v5717
        %v7264 = vunpack.c.l.b16 %v5718
        %v7265 = vunpack.c.h.b16 %v5718
        %v7266 = vunpack.c.l.b16 %v5719
        %v7267 = vunpack.c.h.b16 %v5719
        %v7268 = vunpack.c.l.b16 %v5720
        %v7269 = vunpack.c.h.b16 %v5720
        %v7270 = vunpack.c.l.b16 %v5721
        %v7271 = vunpack.c.h.b16 %v5721
        %v7272 = vunpack.c.l.b16 %v5722
        %v7273 = vunpack.c.h.b16 %v5722
        %v7274 = vunpack.c.l.b16 %v5723
        %v7275 = vunpack.c.h.b16 %v5723
        %v7276 = vunpack.c.l.b16 %v5724
        %v7277 = vunpack.c.h.b16 %v5724
        %v7278 = vunpack.c.l.b16 %v5725
        %v7279 = vunpack.c.h.b16 %v5725
        %v7280 = vunpack.c.l.b16 %v5726
        %v7281 = vunpack.c.h.b16 %v5726
        %v7282 = vunpack.c.l.b16 %v5727
        %v7283 = vunpack.c.h.b16 %v5727
        %v7284 = vunpack.c.l.b16 %v5728
        %v7285 = vunpack.c.h.b16 %v5728
        %v7286 = vunpack.c.l.b16 %v5729
        %v7287 = vunpack.c.h.b16 %v5729
        %v7288 = vunpack.c.l.b16 %v5730
        %v7289 = vunpack.c.h.b16 %v5730
        %v7290 = vunpack.c.l.b16 %v5731
        %v7291 = vunpack.c.h.b16 %v5731
        %v7292 = vunpack.c.l.b16 %v5732
        %v7293 = vunpack.c.h.b16 %v5732
        %v7294 = vunpack.c.l.b16 %v5733
        %v7295 = vunpack.c.h.b16 %v5733
        %v7296 = vunpack.c.l.b16 %v5734
        %v7297 = vunpack.c.h.b16 %v5734
        %v7298 = vunpack.c.l.b16 %v5735
        %v7299 = vunpack.c.h.b16 %v5735
        %v7300 = vunpack.c.l.b16 %v5736
        %v7301 = vunpack.c.h.b16 %v5736
        %v7302 = vunpack.c.l.b16 %v5737
        %v7303 = vunpack.c.h.b16 %v5737
        %v7304 = vunpack.c.l.b16 %v5738
        %v7305 = vunpack.c.h.b16 %v5738
        %v7306 = vunpack.c.l.b16 %v5739
        %v7307 = vunpack.c.h.b16 %v5739
        %v7308 = vunpack.c.l.b16 %v5740
        %v7309 = vunpack.c.h.b16 %v5740
        %v7310 = vunpack.c.l.b16 %v5741
        %v7311 = vunpack.c.h.b16 %v5741
        %v7312 = vunpack.c.l.b16 %v5742
        %v7313 = vunpack.c.h.b16 %v5742
        %v7314 = vunpack.c.l.b16 %v5743
        %v7315 = vunpack.c.h.b16 %v5743
        %v7316 = vunpack.c.l.b16 %v5744
        %v7317 = vunpack.c.h.b16 %v5744
        %v7318 = vunpack.c.l.b16 %v5745
        %v7319 = vunpack.c.h.b16 %v5745
        %v7320 = vunpack.c.l.b16 %v5746
        %v7321 = vunpack.c.h.b16 %v5746
        %v7322 = vunpack.c.l.b16 %v5747
        %v7323 = vunpack.c.h.b16 %v5747
        %v7324 = vunpack.c.l.b16 %v5748
        %v7325 = vunpack.c.h.b16 %v5748
        %v7326 = vunpack.c.l.b16 %v5749
        %v7327 = vunpack.c.h.b16 %v5749
        %v7328 = vunpack.c.l.b16 %v5750
        %v7329 = vunpack.c.h.b16 %v5750
        %v7330 = vunpack.c.l.b16 %v5751
        %v7331 = vunpack.c.h.b16 %v5751
        %v7332 = vunpack.c.l.b16 %v5752
        %v7333 = vunpack.c.h.b16 %v5752
        %v7334 = vunpack.c.l.b16 %v5753
        %v7335 = vunpack.c.h.b16 %v5753
        %v7336 = vunpack.c.l.b16 %v5754
        %v7337 = vunpack.c.h.b16 %v5754
        %v7338 = vunpack.c.l.b16 %v5755
        %v7339 = vunpack.c.h.b16 %v5755
        %v7340 = vunpack.c.l.b16 %v5756
        %v7341 = vunpack.c.h.b16 %v5756
        %v7342 = vunpack.c.l.b16 %v5757
        %v7343 = vunpack.c.h.b16 %v5757
        %v7344 = vunpack.c.l.b16 %v5758
        %v7345 = vunpack.c.h.b16 %v5758
        %v7346 = vunpack.c.l.b16 %v5759
        %v7347 = vunpack.c.h.b16 %v5759
        %v7348 = vunpack.c.l.b16 %v5760
        %v7349 = vunpack.c.h.b16 %v5760
        %v7350 = vunpack.c.l.b16 %v5761
        %v7351 = vunpack.c.h.b16 %v5761
        %v7352 = vunpack.c.l.b16 %v5762
        %v7353 = vunpack.c.h.b16 %v5762
        %v7354 = vunpack.c.l.b16 %v5763
        %v7355 = vunpack.c.h.b16 %v5763
        %v7356 = vunpack.c.l.b16 %v5764
        %v7357 = vunpack.c.h.b16 %v5764
        %v7358 = vunpack.c.l.b16 %v5765
        %v7359 = vunpack.c.h.b16 %v5765
        %v7360 = vunpack.c.l.b16 %v5766
        %v7361 = vunpack.c.h.b16 %v5766
        %v7362 = vunpack.c.l.b16 %v5767
        %v7363 = vunpack.c.h.b16 %v5767
        %v7364 = vunpack.c.l.b16 %v5768
        %v7365 = vunpack.c.h.b16 %v5768
        %v7366 = vunpack.c.l.b16 %v5769
        %v7367 = vunpack.c.h.b16 %v5769
        %v7368 = vunpack.c.l.b16 %v5770
        %v7369 = vunpack.c.h.b16 %v5770
        %v7370 = vunpack.c.l.b16 %v5771
        %v7371 = vunpack.c.h.b16 %v5771
        %v7372 = vunpack.c.l.b16 %v5772
        %v7373 = vunpack.c.h.b16 %v5772
        %v7374 = vunpack.c.l.b16 %v5773
        %v7375 = vunpack.c.h.b16 %v5773
        %v7376 = vunpack.c.l.b16 %v5774
        %v7377 = vunpack.c.h.b16 %v5774
        %v7378 = vunpack.c.l.b16 %v5775
        %v7379 = vunpack.c.h.b16 %v5775
        %v7380 = vunpack.c.l.b16 %v5776
        %v7381 = vunpack.c.h.b16 %v5776
        %v7382 = vunpack.c.l.b16 %v5777
        %v7383 = vunpack.c.h.b16 %v5777
        %v7384 = vunpack.c.l.b16 %v5778
        %v7385 = vunpack.c.h.b16 %v5778
        %v7386 = vunpack.c.l.b16 %v5779
        %v7387 = vunpack.c.h.b16 %v5779
        %v7388 = vunpack.c.l.b16 %v5780
        %v7389 = vunpack.c.h.b16 %v5780
        %v7390 = vunpack.c.l.b16 %v5781
        %v7391 = vunpack.c.h.b16 %v5781
        %v7392 = vunpack.c.l.b16 %v5782
        %v7393 = vunpack.c.h.b16 %v5782
        %v7394 = vunpack.c.l.b16 %v5783
        %v7395 = vunpack.c.h.b16 %v5783
        %v7396 = vunpack.c.l.b16 %v5784
        %v7397 = vunpack.c.h.b16 %v5784
        %v7398 = vunpack.c.l.b16 %v5785
        %v7399 = vunpack.c.h.b16 %v5785
        %v7400 = vunpack.c.l.b16 %v5786
        %v7401 = vunpack.c.h.b16 %v5786
        %v7402 = vunpack.c.l.b16 %v5787
        %v7403 = vunpack.c.h.b16 %v5787
        %v7404 = vunpack.c.l.b16 %v5788
        %v7405 = vunpack.c.h.b16 %v5788
        %v7406 = vunpack.c.l.b16 %v5789
        %v7407 = vunpack.c.h.b16 %v5789
        %v7408 = vunpack.c.l.b16 %v5790
        %v7409 = vunpack.c.h.b16 %v5790
        %v7410 = vunpack.c.l.b16 %v5791
        %v7411 = vunpack.c.h.b16 %v5791
        %v7412 = vpack.c.b16 %v6404, %v6388
        %v7413 = vpack.c.b16 %v6405, %v6389
        %v7414 = vpack.c.b16 %v6406, %v6390
        %v7415 = vpack.c.b16 %v6407, %v6391
        %v7416 = vpack.c.b16 %v6408, %v6392
        %v7417 = vpack.c.b16 %v6409, %v6393
        %v7418 = vpack.c.b16 %v6410, %v6394
        %v7419 = vpack.c.b16 %v6411, %v6395
        %v7420 = vpack.c.b16 %v6412, %v6396
        %v7421 = vpack.c.b16 %v6413, %v6397
        %v7422 = vpack.c.b16 %v6414, %v6398
        %v7423 = vpack.c.b16 %v6415, %v6399
        %v7424 = vpack.c.b16 %v6416, %v6400
        %v7425 = vpack.c.b16 %v6417, %v6401
        %v7426 = vpack.c.b16 %v6418, %v6402
        %v7427 = vpack.c.b16 %v6419, %v6403
        %v7428 = vpack.c.b16 %v6436, %v6420
        %v7429 = vpack.c.b16 %v6437, %v6421
        %v7430 = vpack.c.b16 %v6438, %v6422
        %v7431 = vpack.c.b16 %v6439, %v6423
        %v7432 = vpack.c.b16 %v6440, %v6424
        %v7433 = vpack.c.b16 %v6441, %v6425
        %v7434 = vpack.c.b16 %v6442, %v6426
        %v7435 = vpack.c.b16 %v6443, %v6427
        %v7436 = vpack.c.b16 %v6444, %v6428
        %v7437 = vpack.c.b16 %v6445, %v6429
        %v7438 = vpack.c.b16 %v6446, %v6430
        %v7439 = vpack.c.b16 %v6447, %v6431
        %v7440 = vpack.c.b16 %v6448, %v6432
        %v7441 = vpack.c.b16 %v6449, %v6433
        %v7442 = vpack.c.b16 %v6450, %v6434
        %v7443 = vpack.c.b16 %v6451, %v6435
        %v7444 = vpack.c.b16 %v6468, %v6452
        %v7445 = vpack.c.b16 %v6469, %v6453
        %v7446 = vpack.c.b16 %v6470, %v6454
        %v7447 = vpack.c.b16 %v6471, %v6455
        %v7448 = vpack.c.b16 %v6472, %v6456
        %v7449 = vpack.c.b16 %v6473, %v6457
        %v7450 = vpack.c.b16 %v6474, %v6458
        %v7451 = vpack.c.b16 %v6475, %v6459
        %v7452 = vpack.c.b16 %v6476, %v6460
        %v7453 = vpack.c.b16 %v6477, %v6461
        %v7454 = vpack.c.b16 %v6478, %v6462
        %v7455 = vpack.c.b16 %v6479, %v6463
        %v7456 = vpack.c.b16 %v6480, %v6464
        %v7457 = vpack.c.b16 %v6481, %v6465
        %v7458 = vpack.c.b16 %v6482, %v6466
        %v7459 = vpack.c.b16 %v6483, %v6467
        %v7460 = vpack.c.b16 %v6500, %v6484
        %v7461 = vpack.c.b16 %v6501, %v6485
        %v7462 = vpack.c.b16 %v6502, %v6486
        %v7463 = vpack.c.b16 %v6503, %v6487
        %v7464 = vpack.c.b16 %v6504, %v6488
        %v7465 = vpack.c.b16 %v6505, %v6489
        %v7466 = vpack.c.b16 %v6506, %v6490
        %v7467 = vpack.c.b16 %v6507, %v6491
        %v7468 = vpack.c.b16 %v6508, %v6492
        %v7469 = vpack.c.b16 %v6509, %v6493
        %v7470 = vpack.c.b16 %v6510, %v6494
        %v7471 = vpack.c.b16 %v6511, %v6495
        %v7472 = vpack.c.b16 %v6512, %v6496
        %v7473 = vpack.c.b16 %v6513, %v6497
        %v7474 = vpack.c.b16 %v6514, %v6498
        %v7475 = vpack.c.b16 %v6515, %v6499
        %v7476 = vpack.c.b16 %v6532, %v6516
        %v7477 = vpack.c.b16 %v6533, %v6517
        %v7478 = vpack.c.b16 %v6534, %v6518
        %v7479 = vpack.c.b16 %v6535, %v6519
        %v7480 = vpack.c.b16 %v6536, %v6520
        %v7481 = vpack.c.b16 %v6537, %v6521
        %v7482 = vpack.c.b16 %v6538, %v6522
        %v7483 = vpack.c.b16 %v6539, %v6523
        %v7484 = vpack.c.b16 %v6540, %v6524
        %v7485 = vpack.c.b16 %v6541, %v6525
        %v7486 = vpack.c.b16 %v6542, %v6526
        %v7487 = vpack.c.b16 %v6543, %v6527
        %v7488 = vpack.c.b16 %v6544, %v6528
        %v7489 = vpack.c.b16 %v6545, %v6529
        %v7490 = vpack.c.b16 %v6546, %v6530
        %v7491 = vpack.c.b16 %v6547, %v6531
        %v7492 = vpack.c.b16 %v6564, %v6548
        %v7493 = vpack.c.b16 %v6565, %v6549
        %v7494 = vpack.c.b16 %v6566, %v6550
        %v7495 = vpack.c.b16 %v6567, %v6551
        %v7496 = vpack.c.b16 %v6568, %v6552
        %v7497 = vpack.c.b16 %v6569, %v6553
        %v7498 = vpack.c.b16 %v6570, %v6554
        %v7499 = vpack.c.b16 %v6571, %v6555
        %v7500 = vpack.c.b16 %v6572, %v6556
        %v7501 = vpack.c.b16 %v6573, %v6557
        %v7502 = vpack.c.b16 %v6574, %v6558
        %v7503 = vpack.c.b16 %v6575, %v6559
        %v7504 = vpack.c.b16 %v6576, %v6560
        %v7505 = vpack.c.b16 %v6577, %v6561
        %v7506 = vpack.c.b16 %v6578, %v6562
        %v7507 = vpack.c.b16 %v6579, %v6563
        %v7508 = vpack.c.b16 %v6596, %v6580
        %v7509 = vpack.c.b16 %v6597, %v6581
        %v7510 = vpack.c.b16 %v6598, %v6582
        %v7511 = vpack.c.b16 %v6599, %v6583
        %v7512 = vpack.c.b16 %v6600, %v6584
        %v7513 = vpack.c.b16 %v6601, %v6585
        %v7514 = vpack.c.b16 %v6602, %v6586
        %v7515 = vpack.c.b16 %v6603, %v6587
        %v7516 = vpack.c.b16 %v6604, %v6588
        %v7517 = vpack.c.b16 %v6605, %v6589
        %v7518 = vpack.c.b16 %v6606, %v6590
        %v7519 = vpack.c.b16 %v6607, %v6591
        %v7520 = vpack.c.b16 %v6608, %v6592
        %v7521 = vpack.c.b16 %v6609, %v6593
        %v7522 = vpack.c.b16 %v6610, %v6594
        %v7523 = vpack.c.b16 %v6611, %v6595
        %v7524 = vpack.c.b16 %v6628, %v6612
        %v7525 = vpack.c.b16 %v6629, %v6613
        %v7526 = vpack.c.b16 %v6630, %v6614
        %v7527 = vpack.c.b16 %v6631, %v6615
        %v7528 = vpack.c.b16 %v6632, %v6616
        %v7529 = vpack.c.b16 %v6633, %v6617
        %v7530 = vpack.c.b16 %v6634, %v6618
        %v7531 = vpack.c.b16 %v6635, %v6619
        %v7532 = vpack.c.b16 %v6636, %v6620
        %v7533 = vpack.c.b16 %v6637, %v6621
        %v7534 = vpack.c.b16 %v6638, %v6622
        %v7535 = vpack.c.b16 %v6639, %v6623
        %v7536 = vpack.c.b16 %v6640, %v6624
        %v7537 = vpack.c.b16 %v6641, %v6625
        %v7538 = vpack.c.b16 %v6642, %v6626
        %v7539 = vpack.c.b16 %v6643, %v6627
        %v7540 = vpack.c.b16 %v6660, %v6644
        %v7541 = vpack.c.b16 %v6661, %v6645
        %v7542 = vpack.c.b16 %v6662, %v6646
        %v7543 = vpack.c.b16 %v6663, %v6647
        %v7544 = vpack.c.b16 %v6664, %v6648
        %v7545 = vpack.c.b16 %v6665, %v6649
        %v7546 = vpack.c.b16 %v6666, %v6650
        %v7547 = vpack.c.b16 %v6667, %v6651
        %v7548 = vpack.c.b16 %v6668, %v6652
        %v7549 = vpack.c.b16 %v6669, %v6653
        %v7550 = vpack.c.b16 %v6670, %v6654
        %v7551 = vpack.c.b16 %v6671, %v6655
        %v7552 = vpack.c.b16 %v6672, %v6656
        %v7553 = vpack.c.b16 %v6673, %v6657
        %v7554 = vpack.c.b16 %v6674, %v6658
        %v7555 = vpack.c.b16 %v6675, %v6659
        %v7556 = vpack.c.b16 %v6692, %v6676
        %v7557 = vpack.c.b16 %v6693, %v6677
        %v7558 = vpack.c.b16 %v6694, %v6678
        %v7559 = vpack.c.b16 %v6695, %v6679
        %v7560 = vpack.c.b16 %v6696, %v6680
        %v7561 = vpack.c.b16 %v6697, %v6681
        %v7562 = vpack.c.b16 %v6698, %v6682
        %v7563 = vpack.c.b16 %v6699, %v6683
        %v7564 = vpack.c.b16 %v6700, %v6684
        %v7565 = vpack.c.b16 %v6701, %v6685
        %v7566 = vpack.c.b16 %v6702, %v6686
        %v7567 = vpack.c.b16 %v6703, %v6687
        %v7568 = vpack.c.b16 %v6704, %v6688
        %v7569 = vpack.c.b16 %v6705, %v6689
        %v7570 = vpack.c.b16 %v6706, %v6690
        %v7571 = vpack.c.b16 %v6707, %v6691
        %v7572 = vpack.c.b16 %v6724, %v6708
        %v7573 = vpack.c.b16 %v6725, %v6709
        %v7574 = vpack.c.b16 %v6726, %v6710
        %v7575 = vpack.c.b16 %v6727, %v6711
        %v7576 = vpack.c.b16 %v6728, %v6712
        %v7577 = vpack.c.b16 %v6729, %v6713
        %v7578 = vpack.c.b16 %v6730, %v6714
        %v7579 = vpack.c.b16 %v6731, %v6715
        %v7580 = vpack.c.b16 %v6732, %v6716
        %v7581 = vpack.c.b16 %v6733, %v6717
        %v7582 = vpack.c.b16 %v6734, %v6718
        %v7583 = vpack.c.b16 %v6735, %v6719
        %v7584 = vpack.c.b16 %v6736, %v6720
        %v7585 = vpack.c.b16 %v6737, %v6721
        %v7586 = vpack.c.b16 %v6738, %v6722
        %v7587 = vpack.c.b16 %v6739, %v6723
        %v7588 = vpack.c.b16 %v6756, %v6740
        %v7589 = vpack.c.b16 %v6757, %v6741
        %v7590 = vpack.c.b16 %v6758, %v6742
        %v7591 = vpack.c.b16 %v6759, %v6743
        %v7592 = vpack.c.b16 %v6760, %v6744
        %v7593 = vpack.c.b16 %v6761, %v6745
        %v7594 = vpack.c.b16 %v6762, %v6746
        %v7595 = vpack.c.b16 %v6763, %v6747
        %v7596 = vpack.c.b16 %v6764, %v6748
        %v7597 = vpack.c.b16 %v6765, %v6749
        %v7598 = vpack.c.b16 %v6766, %v6750
        %v7599 = vpack.c.b16 %v6767, %v6751
        %v7600 = vpack.c.b16 %v6768, %v6752
        %v7601 = vpack.c.b16 %v6769, %v6753
        %v7602 = vpack.c.b16 %v6770, %v6754
        %v7603 = vpack.c.b16 %v6771, %v6755
        %v7604 = vpack.c.b16 %v6788, %v6772
        %v7605 = vpack.c.b16 %v6789, %v6773
        %v7606 = vpack.c.b16 %v6790, %v6774
        %v7607 = vpack.c.b16 %v6791, %v6775
        %v7608 = vpack.c.b16 %v6792, %v6776
        %v7609 = vpack.c.b16 %v6793, %v6777
        %v7610 = vpack.c.b16 %v6794, %v6778
        %v7611 = vpack.c.b16 %v6795, %v6779
        %v7612 = vpack.c.b16 %v6796, %v6780
        %v7613 = vpack.c.b16 %v6797, %v6781
        %v7614 = vpack.c.b16 %v6798, %v6782
        %v7615 = vpack.c.b16 %v6799, %v6783
        %v7616 = vpack.c.b16 %v6800, %v6784
        %v7617 = vpack.c.b16 %v6801, %v6785
        %v7618 = vpack.c.b16 %v6802, %v6786
        %v7619 = vpack.c.b16 %v6803, %v6787
        %v7620 = vpack.c.b16 %v6820, %v6804
        %v7621 = vpack.c.b16 %v6821, %v6805
        %v7622 = vpack.c.b16 %v6822, %v6806
        %v7623 = vpack.c.b16 %v6823, %v6807
        %v7624 = vpack.c.b16 %v6824, %v6808
        %v7625 = vpack.c.b16 %v6825, %v6809
        %v7626 = vpack.c.b16 %v6826, %v6810
        %v7627 = vpack.c.b16 %v6827, %v6811
        %v7628 = vpack.c.b16 %v6828, %v6812
        %v7629 = vpack.c.b16 %v6829, %v6813
        %v7630 = vpack.c.b16 %v6830, %v6814
        %v7631 = vpack.c.b16 %v6831, %v6815
        %v7632 = vpack.c.b16 %v6832, %v6816
        %v7633 = vpack.c.b16 %v6833, %v6817
        %v7634 = vpack.c.b16 %v6834, %v6818
        %v7635 = vpack.c.b16 %v6835, %v6819
        %v7636 = vpack.c.b16 %v6852, %v6836
        %v7637 = vpack.c.b16 %v6853, %v6837
        %v7638 = vpack.c.b16 %v6854, %v6838
        %v7639 = vpack.c.b16 %v6855, %v6839
        %v7640 = vpack.c.b16 %v6856, %v6840
        %v7641 = vpack.c.b16 %v6857, %v6841
        %v7642 = vpack.c.b16 %v6858, %v6842
        %v7643 = vpack.c.b16 %v6859, %v6843
        %v7644 = vpack.c.b16 %v6860, %v6844
        %v7645 = vpack.c.b16 %v6861, %v6845
        %v7646 = vpack.c.b16 %v6862, %v6846
        %v7647 = vpack.c.b16 %v6863, %v6847
        %v7648 = vpack.c.b16 %v6864, %v6848
        %v7649 = vpack.c.b16 %v6865, %v6849
        %v7650 = vpack.c.b16 %v6866, %v6850
        %v7651 = vpack.c.b16 %v6867, %v6851
        %v7652 = vpack.c.b16 %v6884, %v6868
        %v7653 = vpack.c.b16 %v6885, %v6869
        %v7654 = vpack.c.b16 %v6886, %v6870
        %v7655 = vpack.c.b16 %v6887, %v6871
        %v7656 = vpack.c.b16 %v6888, %v6872
        %v7657 = vpack.c.b16 %v6889, %v6873
        %v7658 = vpack.c.b16 %v6890, %v6874
        %v7659 = vpack.c.b16 %v6891, %v6875
        %v7660 = vpack.c.b16 %v6892, %v6876
        %v7661 = vpack.c.b16 %v6893, %v6877
        %v7662 = vpack.c.b16 %v6894, %v6878
        %v7663 = vpack.c.b16 %v6895, %v6879
        %v7664 = vpack.c.b16 %v6896, %v6880
        %v7665 = vpack.c.b16 %v6897, %v6881
        %v7666 = vpack.c.b16 %v6898, %v6882
        %v7667 = vpack.c.b16 %v6899, %v6883
        %v7668 = vpack.c.b16 %v6916, %v6900
        %v7669 = vpack.c.b16 %v6917, %v6901
        %v7670 = vpack.c.b16 %v6918, %v6902
        %v7671 = vpack.c.b16 %v6919, %v6903
        %v7672 = vpack.c.b16 %v6920, %v6904
        %v7673 = vpack.c.b16 %v6921, %v6905
        %v7674 = vpack.c.b16 %v6922, %v6906
        %v7675 = vpack.c.b16 %v6923, %v6907
        %v7676 = vpack.c.b16 %v6924, %v6908
        %v7677 = vpack.c.b16 %v6925, %v6909
        %v7678 = vpack.c.b16 %v6926, %v6910
        %v7679 = vpack.c.b16 %v6927, %v6911
        %v7680 = vpack.c.b16 %v6928, %v6912
        %v7681 = vpack.c.b16 %v6929, %v6913
        %v7682 = vpack.c.b16 %v6930, %v6914
        %v7683 = vpack.c.b16 %v6931, %v6915
        %v7684 = vpack.c.b16 %v6948, %v6932
        %v7685 = vpack.c.b16 %v6949, %v6933
        %v7686 = vpack.c.b16 %v6950, %v6934
        %v7687 = vpack.c.b16 %v6951, %v6935
        %v7688 = vpack.c.b16 %v6952, %v6936
        %v7689 = vpack.c.b16 %v6953, %v6937
        %v7690 = vpack.c.b16 %v6954, %v6938
        %v7691 = vpack.c.b16 %v6955, %v6939
        %v7692 = vpack.c.b16 %v6956, %v6940
        %v7693 = vpack.c.b16 %v6957, %v6941
        %v7694 = vpack.c.b16 %v6958, %v6942
        %v7695 = vpack.c.b16 %v6959, %v6943
        %v7696 = vpack.c.b16 %v6960, %v6944
        %v7697 = vpack.c.b16 %v6961, %v6945
        %v7698 = vpack.c.b16 %v6962, %v6946
        %v7699 = vpack.c.b16 %v6963, %v6947
        %v7700 = vpack.c.b16 %v6980, %v6964
        %v7701 = vpack.c.b16 %v6981, %v6965
        %v7702 = vpack.c.b16 %v6982, %v6966
        %v7703 = vpack.c.b16 %v6983, %v6967
        %v7704 = vpack.c.b16 %v6984, %v6968
        %v7705 = vpack.c.b16 %v6985, %v6969
        %v7706 = vpack.c.b16 %v6986, %v6970
        %v7707 = vpack.c.b16 %v6987, %v6971
        %v7708 = vpack.c.b16 %v6988, %v6972
        %v7709 = vpack.c.b16 %v6989, %v6973
        %v7710 = vpack.c.b16 %v6990, %v6974
        %v7711 = vpack.c.b16 %v6991, %v6975
        %v7712 = vpack.c.b16 %v6992, %v6976
        %v7713 = vpack.c.b16 %v6993, %v6977
        %v7714 = vpack.c.b16 %v6994, %v6978
        %v7715 = vpack.c.b16 %v6995, %v6979
        %v7716 = vpack.c.b16 %v7012, %v6996
        %v7717 = vpack.c.b16 %v7013, %v6997
        %v7718 = vpack.c.b16 %v7014, %v6998
        %v7719 = vpack.c.b16 %v7015, %v6999
        %v7720 = vpack.c.b16 %v7016, %v7000
        %v7721 = vpack.c.b16 %v7017, %v7001
        %v7722 = vpack.c.b16 %v7018, %v7002
        %v7723 = vpack.c.b16 %v7019, %v7003
        %v7724 = vpack.c.b16 %v7020, %v7004
        %v7725 = vpack.c.b16 %v7021, %v7005
        %v7726 = vpack.c.b16 %v7022, %v7006
        %v7727 = vpack.c.b16 %v7023, %v7007
        %v7728 = vpack.c.b16 %v7024, %v7008
        %v7729 = vpack.c.b16 %v7025, %v7009
        %v7730 = vpack.c.b16 %v7026, %v7010
        %v7731 = vpack.c.b16 %v7027, %v7011
        %v7732 = vpack.c.b16 %v7044, %v7028
        %v7733 = vpack.c.b16 %v7045, %v7029
        %v7734 = vpack.c.b16 %v7046, %v7030
        %v7735 = vpack.c.b16 %v7047, %v7031
        %v7736 = vpack.c.b16 %v7048, %v7032
        %v7737 = vpack.c.b16 %v7049, %v7033
        %v7738 = vpack.c.b16 %v7050, %v7034
        %v7739 = vpack.c.b16 %v7051, %v7035
        %v7740 = vpack.c.b16 %v7052, %v7036
        %v7741 = vpack.c.b16 %v7053, %v7037
        %v7742 = vpack.c.b16 %v7054, %v7038
        %v7743 = vpack.c.b16 %v7055, %v7039
        %v7744 = vpack.c.b16 %v7056, %v7040
        %v7745 = vpack.c.b16 %v7057, %v7041
        %v7746 = vpack.c.b16 %v7058, %v7042
        %v7747 = vpack.c.b16 %v7059, %v7043
        %v7748 = vpack.c.b16 %v7076, %v7060
        %v7749 = vpack.c.b16 %v7077, %v7061
        %v7750 = vpack.c.b16 %v7078, %v7062
        %v7751 = vpack.c.b16 %v7079, %v7063
        %v7752 = vpack.c.b16 %v7080, %v7064
        %v7753 = vpack.c.b16 %v7081, %v7065
        %v7754 = vpack.c.b16 %v7082, %v7066
        %v7755 = vpack.c.b16 %v7083, %v7067
        %v7756 = vpack.c.b16 %v7084, %v7068
        %v7757 = vpack.c.b16 %v7085, %v7069
        %v7758 = vpack.c.b16 %v7086, %v7070
        %v7759 = vpack.c.b16 %v7087, %v7071
        %v7760 = vpack.c.b16 %v7088, %v7072
        %v7761 = vpack.c.b16 %v7089, %v7073
        %v7762 = vpack.c.b16 %v7090, %v7074
        %v7763 = vpack.c.b16 %v7091, %v7075
        %v7764 = vpack.c.b16 %v7108, %v7092
        %v7765 = vpack.c.b16 %v7109, %v7093
        %v7766 = vpack.c.b16 %v7110, %v7094
        %v7767 = vpack.c.b16 %v7111, %v7095
        %v7768 = vpack.c.b16 %v7112, %v7096
        %v7769 = vpack.c.b16 %v7113, %v7097
        %v7770 = vpack.c.b16 %v7114, %v7098
        %v7771 = vpack.c.b16 %v7115, %v7099
        %v7772 = vpack.c.b16 %v7116, %v7100
        %v7773 = vpack.c.b16 %v7117, %v7101
        %v7774 = vpack.c.b16 %v7118, %v7102
        %v7775 = vpack.c.b16 %v7119, %v7103
        %v7776 = vpack.c.b16 %v7120, %v7104
        %v7777 = vpack.c.b16 %v7121, %v7105
        %v7778 = vpack.c.b16 %v7122, %v7106
        %v7779 = vpack.c.b16 %v7123, %v7107
        %v7780 = vpack.c.b16 %v7140, %v7124
        %v7781 = vpack.c.b16 %v7141, %v7125
        %v7782 = vpack.c.b16 %v7142, %v7126
        %v7783 = vpack.c.b16 %v7143, %v7127
        %v7784 = vpack.c.b16 %v7144, %v7128
        %v7785 = vpack.c.b16 %v7145, %v7129
        %v7786 = vpack.c.b16 %v7146, %v7130
        %v7787 = vpack.c.b16 %v7147, %v7131
        %v7788 = vpack.c.b16 %v7148, %v7132
        %v7789 = vpack.c.b16 %v7149, %v7133
        %v7790 = vpack.c.b16 %v7150, %v7134
        %v7791 = vpack.c.b16 %v7151, %v7135
        %v7792 = vpack.c.b16 %v7152, %v7136
        %v7793 = vpack.c.b16 %v7153, %v7137
        %v7794 = vpack.c.b16 %v7154, %v7138
        %v7795 = vpack.c.b16 %v7155, %v7139
        %v7796 = vpack.c.b16 %v7172, %v7156
        %v7797 = vpack.c.b16 %v7173, %v7157
        %v7798 = vpack.c.b16 %v7174, %v7158
        %v7799 = vpack.c.b16 %v7175, %v7159
        %v7800 = vpack.c.b16 %v7176, %v7160
        %v7801 = vpack.c.b16 %v7177, %v7161
        %v7802 = vpack.c.b16 %v7178, %v7162
        %v7803 = vpack.c.b16 %v7179, %v7163
        %v7804 = vpack.c.b16 %v7180, %v7164
        %v7805 = vpack.c.b16 %v7181, %v7165
        %v7806 = vpack.c.b16 %v7182, %v7166
        %v7807 = vpack.c.b16 %v7183, %v7167
        %v7808 = vpack.c.b16 %v7184, %v7168
        %v7809 = vpack.c.b16 %v7185, %v7169
        %v7810 = vpack.c.b16 %v7186, %v7170
        %v7811 = vpack.c.b16 %v7187, %v7171
        %v7812 = vpack.c.b16 %v7204, %v7188
        %v7813 = vpack.c.b16 %v7205, %v7189
        %v7814 = vpack.c.b16 %v7206, %v7190
        %v7815 = vpack.c.b16 %v7207, %v7191
        %v7816 = vpack.c.b16 %v7208, %v7192
        %v7817 = vpack.c.b16 %v7209, %v7193
        %v7818 = vpack.c.b16 %v7210, %v7194
        %v7819 = vpack.c.b16 %v7211, %v7195
        %v7820 = vpack.c.b16 %v7212, %v7196
        %v7821 = vpack.c.b16 %v7213, %v7197
        %v7822 = vpack.c.b16 %v7214, %v7198
        %v7823 = vpack.c.b16 %v7215, %v7199
        %v7824 = vpack.c.b16 %v7216, %v7200
        %v7825 = vpack.c.b16 %v7217, %v7201
        %v7826 = vpack.c.b16 %v7218, %v7202
        %v7827 = vpack.c.b16 %v7219, %v7203
        %v7828 = vpack.c.b16 %v7236, %v7220
        %v7829 = vpack.c.b16 %v7237, %v7221
        %v7830 = vpack.c.b16 %v7238, %v7222
        %v7831 = vpack.c.b16 %v7239, %v7223
        %v7832 = vpack.c.b16 %v7240, %v7224
        %v7833 = vpack.c.b16 %v7241, %v7225
        %v7834 = vpack.c.b16 %v7242, %v7226
        %v7835 = vpack.c.b16 %v7243, %v7227
        %v7836 = vpack.c.b16 %v7244, %v7228
        %v7837 = vpack.c.b16 %v7245, %v7229
        %v7838 = vpack.c.b16 %v7246, %v7230
        %v7839 = vpack.c.b16 %v7247, %v7231
        %v7840 = vpack.c.b16 %v7248, %v7232
        %v7841 = vpack.c.b16 %v7249, %v7233
        %v7842 = vpack.c.b16 %v7250, %v7234
        %v7843 = vpack.c.b16 %v7251, %v7235
        %v7844 = vpack.c.b16 %v7268, %v7252
        %v7845 = vpack.c.b16 %v7269, %v7253
        %v7846 = vpack.c.b16 %v7270, %v7254
        %v7847 = vpack.c.b16 %v7271, %v7255
        %v7848 = vpack.c.b16 %v7272, %v7256
        %v7849 = vpack.c.b16 %v7273, %v7257
        %v7850 = vpack.c.b16 %v7274, %v7258
        %v7851 = vpack.c.b16 %v7275, %v7259
        %v7852 = vpack.c.b16 %v7276, %v7260
        %v7853 = vpack.c.b16 %v7277, %v7261
        %v7854 = vpack.c.b16 %v7278, %v7262
        %v7855 = vpack.c.b16 %v7279, %v7263
        %v7856 = vpack.c.b16 %v7280, %v7264
        %v7857 = vpack.c.b16 %v7281, %v7265
        %v7858 = vpack.c.b16 %v7282, %v7266
        %v7859 = vpack.c.b16 %v7283, %v7267
        %v7860 = vpack.c.b16 %v7300, %v7284
        %v7861 = vpack.c.b16 %v7301, %v7285
        %v7862 = vpack.c.b16 %v7302, %v7286
        %v7863 = vpack.c.b16 %v7303, %v7287
        %v7864 = vpack.c.b16 %v7304, %v7288
        %v7865 = vpack.c.b16 %v7305, %v7289
        %v7866 = vpack.c.b16 %v7306, %v7290
        %v7867 = vpack.c.b16 %v7307, %v7291
        %v7868 = vpack.c.b16 %v7308, %v7292
        %v7869 = vpack.c.b16 %v7309, %v7293
        %v7870 = vpack.c.b16 %v7310, %v7294
        %v7871 = vpack.c.b16 %v7311, %v7295
        %v7872 = vpack.c.b16 %v7312, %v7296
        %v7873 = vpack.c.b16 %v7313, %v7297
        %v7874 = vpack.c.b16 %v7314, %v7298
        %v7875 = vpack.c.b16 %v7315, %v7299
        %v7876 = vpack.c.b16 %v7332, %v7316
        %v7877 = vpack.c.b16 %v7333, %v7317
        %v7878 = vpack.c.b16 %v7334, %v7318
        %v7879 = vpack.c.b16 %v7335, %v7319
        %v7880 = vpack.c.b16 %v7336, %v7320
        %v7881 = vpack.c.b16 %v7337, %v7321
        %v7882 = vpack.c.b16 %v7338, %v7322
        %v7883 = vpack.c.b16 %v7339, %v7323
        %v7884 = vpack.c.b16 %v7340, %v7324
        %v7885 = vpack.c.b16 %v7341, %v7325
        %v7886 = vpack.c.b16 %v7342, %v7326
        %v7887 = vpack.c.b16 %v7343, %v7327
        %v7888 = vpack.c.b16 %v7344, %v7328
        %v7889 = vpack.c.b16 %v7345, %v7329
        %v7890 = vpack.c.b16 %v7346, %v7330
        %v7891 = vpack.c.b16 %v7347, %v7331
        %v7892 = vpack.c.b16 %v7364, %v7348
        %v7893 = vpack.c.b16 %v7365, %v7349
        %v7894 = vpack.c.b16 %v7366, %v7350
        %v7895 = vpack.c.b16 %v7367, %v7351
        %v7896 = vpack.c.b16 %v7368, %v7352
        %v7897 = vpack.c.b16 %v7369, %v7353
        %v7898 = vpack.c.b16 %v7370, %v7354
        %v7899 = vpack.c.b16 %v7371, %v7355
        %v7900 = vpack.c.b16 %v7372, %v7356
        %v7901 = vpack.c.b16 %v7373, %v7357
        %v7902 = vpack.c.b16 %v7374, %v7358
        %v7903 = vpack.c.b16 %v7375, %v7359
        %v7904 = vpack.c.b16 %v7376, %v7360
        %v7905 = vpack.c.b16 %v7377, %v7361
        %v7906 = vpack.c.b16 %v7378, %v7362
        %v7907 = vpack.c.b16 %v7379, %v7363
        %v7908 = vpack.c.b16 %v7396, %v7380
        %v7909 = vpack.c.b16 %v7397, %v7381
        %v7910 = vpack.c.b16 %v7398, %v7382
        %v7911 = vpack.c.b16 %v7399, %v7383
        %v7912 = vpack.c.b16 %v7400, %v7384
        %v7913 = vpack.c.b16 %v7401, %v7385
        %v7914 = vpack.c.b16 %v7402, %v7386
        %v7915 = vpack.c.b16 %v7403, %v7387
        %v7916 = vpack.c.b16 %v7404, %v7388
        %v7917 = vpack.c.b16 %v7405, %v7389
        %v7918 = vpack.c.b16 %v7406, %v7390
        %v7919 = vpack.c.b16 %v7407, %v7391
        %v7920 = vpack.c.b16 %v7408, %v7392
        %v7921 = vpack.c.b16 %v7409, %v7393
        %v7922 = vpack.c.b16 %v7410, %v7394
        %v7923 = vpack.c.b16 %v7411, %v7395
        %8436 = vmatprep.subr.bf16.mxu0 %v7413
        %8437 = vmatpush1.bf16.msra.mxu0 %v7412
        %8438 = vmatprep.subr.bf16.mxu0 %v7429
        %8439 = vmatpush1.bf16.msra.mxu0 %v7428
        %8440 = vmatprep.subr.bf16.mxu0 %v7445
        %8441 = vmatpush1.bf16.msra.mxu0 %v7444
        %8442 = vmatprep.subr.bf16.mxu0 %v7461
        %8443 = vmatpush1.bf16.msra.mxu0 %v7460
        %8444 = vmatprep.subr.bf16.mxu0 %v7477
        %8445 = vmatpush1.bf16.msra.mxu0 %v7476
        %8446 = vmatprep.subr.bf16.mxu0 %v7493
        %8447 = vmatpush1.bf16.msra.mxu0 %v7492
        %8448 = vmatprep.subr.bf16.mxu0 %v7509
        %8449 = vmatpush1.bf16.msra.mxu0 %v7508
        %8450 = vmatprep.subr.bf16.mxu0 %v7525
        %8451 = vmatpush1.bf16.msra.mxu0 %v7524
        %8452 = vmatprep.subr.bf16.mxu0 %v7541
        %8453 = vmatpush1.bf16.msra.mxu0 %v7540
        %8454 = vmatprep.subr.bf16.mxu0 %v7557
        %8455 = vmatpush1.bf16.msra.mxu0 %v7556
        %8456 = vmatprep.subr.bf16.mxu0 %v7573
        %8457 = vmatpush1.bf16.msra.mxu0 %v7572
        %8458 = vmatprep.subr.bf16.mxu0 %v7589
        %8459 = vmatpush1.bf16.msra.mxu0 %v7588
        %8460 = vmatprep.subr.bf16.mxu0 %v7605
        %8461 = vmatpush1.bf16.msra.mxu0 %v7604
        %8462 = vmatprep.subr.bf16.mxu0 %v7621
        %8463 = vmatpush1.bf16.msra.mxu0 %v7620
        %8464 = vmatprep.subr.bf16.mxu0 %v7637
        %8465 = vmatpush1.bf16.msra.mxu0 %v7636
        %8466 = vmatprep.subr.bf16.mxu0 %v7653
        %8467 = vmatpush1.bf16.msra.mxu0 %v7652
        %8468 = vmatprep.mubr.bf16.mxu0 %v5277
        %8469 = vmatmul.mubr.bf16.gmra.mrb[0].mxu0 %v5276
        %v8470 = vpop.f32.mrb[0].mxu0
        %v8471 = vadd.f32 %v5799, %v8470
        %v8472 = vpop.f32.mrb[0].mxu0
        %v8473 = vadd.f32 %v5803, %v8472
        %v8474 = vpop.f32.mrb[0].mxu0
        %v8475 = vpop.f32.mrb[0].mxu0
        %8476 = vdwg.mxu0
        %8477 = vmatprep.subr.bf16.mxu0 %v7669
        %8478 = vmatpush1.bf16.msra.mxu0 %v7668
        %8479 = vmatprep.subr.bf16.mxu0 %v7685
        %8480 = vmatpush1.bf16.msra.mxu0 %v7684
        %8481 = vmatprep.subr.bf16.mxu0 %v7701
        %8482 = vmatpush1.bf16.msra.mxu0 %v7700
        %8483 = vmatprep.subr.bf16.mxu0 %v7717
        %8484 = vmatpush1.bf16.msra.mxu0 %v7716
        %8485 = vmatprep.subr.bf16.mxu0 %v7733
        %8486 = vmatpush1.bf16.msra.mxu0 %v7732
        %8487 = vmatprep.subr.bf16.mxu0 %v7749
        %8488 = vmatpush1.bf16.msra.mxu0 %v7748
        %8489 = vmatprep.subr.bf16.mxu0 %v7765
        %8490 = vmatpush1.bf16.msra.mxu0 %v7764
        %8491 = vmatprep.subr.bf16.mxu0 %v7781
        %8492 = vmatpush1.bf16.msra.mxu0 %v7780
        %8493 = vmatprep.subr.bf16.mxu0 %v7797
        %8494 = vmatpush1.bf16.msra.mxu0 %v7796
        %8495 = vmatprep.subr.bf16.mxu0 %v7813
        %8496 = vmatpush1.bf16.msra.mxu0 %v7812
        %8497 = vmatprep.subr.bf16.mxu0 %v7829
        %8498 = vmatpush1.bf16.msra.mxu0 %v7828
        %8499 = vmatprep.subr.bf16.mxu0 %v7845
        %8500 = vmatpush1.bf16.msra.mxu0 %v7844
        %8501 = vmatprep.subr.bf16.mxu0 %v7861
        %8502 = vmatpush1.bf16.msra.mxu0 %v7860
        %8503 = vmatprep.subr.bf16.mxu0 %v7877
        %8504 = vmatpush1.bf16.msra.mxu0 %v7876
        %8505 = vmatprep.subr.bf16.mxu0 %v7893
        %8506 = vmatpush1.bf16.msra.mxu0 %v7892
        %8507 = vmatprep.subr.bf16.mxu0 %v7909
        %8508 = vmatpush1.bf16.msra.mxu0 %v7908
        %8509 = vmatprep.mubr.bf16.mxu0 %v5279
        %8510 = vmatmul.mubr.bf16.gmra.mrb[0].mxu0 %v5278
        %v8511 = vpop.f32.mrb[0].mxu0
        %v8512 = vadd.f32 %v8471, %v8511
        %v8513 = vpop.f32.mrb[0].mxu0
        %v8514 = vadd.f32 %v8473, %v8513
        %v8515 = vpop.f32.mrb[0].mxu0
        %v8516 = vpop.f32.mrb[0].mxu0
        %8517 = vdwg.mxu0
        %8518 = vmatprep.subr.bf16.mxu0 %v7415
        %8519 = vmatpush1.bf16.msra.mxu0 %v7414
        %8520 = vmatprep.subr.bf16.mxu0 %v7431
        %8521 = vmatpush1.bf16.msra.mxu0 %v7430
        %8522 = vmatprep.subr.bf16.mxu0 %v7447
        %8523 = vmatpush1.bf16.msra.mxu0 %v7446
        %8524 = vmatprep.subr.bf16.mxu0 %v7463
        %8525 = vmatpush1.bf16.msra.mxu0 %v7462
        %8526 = vmatprep.subr.bf16.mxu0 %v7479
        %8527 = vmatpush1.bf16.msra.mxu0 %v7478
        %8528 = vmatprep.subr.bf16.mxu0 %v7495
        %8529 = vmatpush1.bf16.msra.mxu0 %v7494
        %8530 = vmatprep.subr.bf16.mxu0 %v7511
        %8531 = vmatpush1.bf16.msra.mxu0 %v7510
        %8532 = vmatprep.subr.bf16.mxu0 %v7527
        %8533 = vmatpush1.bf16.msra.mxu0 %v7526
        %8534 = vmatprep.subr.bf16.mxu0 %v7543
        %8535 = vmatpush1.bf16.msra.mxu0 %v7542
        %8536 = vmatprep.subr.bf16.mxu0 %v7559
        %8537 = vmatpush1.bf16.msra.mxu0 %v7558
        %8538 = vmatprep.subr.bf16.mxu0 %v7575
        %8539 = vmatpush1.bf16.msra.mxu0 %v7574
        %8540 = vmatprep.subr.bf16.mxu0 %v7591
        %8541 = vmatpush1.bf16.msra.mxu0 %v7590
        %8542 = vmatprep.subr.bf16.mxu0 %v7607
        %8543 = vmatpush1.bf16.msra.mxu0 %v7606
        %8544 = vmatprep.subr.bf16.mxu0 %v7623
        %8545 = vmatpush1.bf16.msra.mxu0 %v7622
        %8546 = vmatprep.subr.bf16.mxu0 %v7639
        %8547 = vmatpush1.bf16.msra.mxu0 %v7638
        %8548 = vmatprep.subr.bf16.mxu0 %v7655
        %8549 = vmatpush1.bf16.msra.mxu0 %v7654
        %8550 = vmatprep.mubr.bf16.mxu0 %v5277
        %8551 = vmatmul.mubr.bf16.gmra.mrb[0].mxu0 %v5276
        %v8552 = vpop.f32.mrb[0].mxu0
        %v8553 = vadd.f32 %v5807, %v8552
        %v8554 = vpop.f32.mrb[0].mxu0
        %v8555 = vadd.f32 %v5811, %v8554
        %v8556 = vpop.f32.mrb[0].mxu0
        %v8557 = vpop.f32.mrb[0].mxu0
        %8558 = vdwg.mxu0
        %8559 = vmatprep.subr.bf16.mxu0 %v7671
        %8560 = vmatpush1.bf16.msra.mxu0 %v7670
        %8561 = vmatprep.subr.bf16.mxu0 %v7687
        %8562 = vmatpush1.bf16.msra.mxu0 %v7686
        %8563 = vmatprep.subr.bf16.mxu0 %v7703
        %8564 = vmatpush1.bf16.msra.mxu0 %v7702
        %8565 = vmatprep.subr.bf16.mxu0 %v7719
        %8566 = vmatpush1.bf16.msra.mxu0 %v7718
        %8567 = vmatprep.subr.bf16.mxu0 %v7735
        %8568 = vmatpush1.bf16.msra.mxu0 %v7734
        %8569 = vmatprep.subr.bf16.mxu0 %v7751
        %8570 = vmatpush1.bf16.msra.mxu0 %v7750
        %8571 = vmatprep.subr.bf16.mxu0 %v7767
        %8572 = vmatpush1.bf16.msra.mxu0 %v7766
        %8573 = vmatprep.subr.bf16.mxu0 %v7783
        %8574 = vmatpush1.bf16.msra.mxu0 %v7782
        %8575 = vmatprep.subr.bf16.mxu0 %v7799
        %8576 = vmatpush1.bf16.msra.mxu0 %v7798
        %8577 = vmatprep.subr.bf16.mxu0 %v7815
        %8578 = vmatpush1.bf16.msra.mxu0 %v7814
        %8579 = vmatprep.subr.bf16.mxu0 %v7831
        %8580 = vmatpush1.bf16.msra.mxu0 %v7830
        %8581 = vmatprep.subr.bf16.mxu0 %v7847
        %8582 = vmatpush1.bf16.msra.mxu0 %v7846
        %8583 = vmatprep.subr.bf16.mxu0 %v7863
        %8584 = vmatpush1.bf16.msra.mxu0 %v7862
        %8585 = vmatprep.subr.bf16.mxu0 %v7879
        %8586 = vmatpush1.bf16.msra.mxu0 %v7878
        %8587 = vmatprep.subr.bf16.mxu0 %v7895
        %8588 = vmatpush1.bf16.msra.mxu0 %v7894
        %8589 = vmatprep.subr.bf16.mxu0 %v7911
        %8590 = vmatpush1.bf16.msra.mxu0 %v7910
        %8591 = vmatprep.mubr.bf16.mxu0 %v5279
        %8592 = vmatmul.mubr.bf16.gmra.mrb[0].mxu0 %v5278
        %v8593 = vpop.f32.mrb[0].mxu0
        %v8594 = vadd.f32 %v8553, %v8593
        %v8595 = vpop.f32.mrb[0].mxu0
        %v8596 = vadd.f32 %v8555, %v8595
        %v8597 = vpop.f32.mrb[0].mxu0
        %v8598 = vpop.f32.mrb[0].mxu0
        %8599 = vdwg.mxu0
        %8600 = vmatprep.subr.bf16.mxu0 %v7417
        %8601 = vmatpush1.bf16.msra.mxu0 %v7416
        %8602 = vmatprep.subr.bf16.mxu0 %v7433
        %8603 = vmatpush1.bf16.msra.mxu0 %v7432
        %8604 = vmatprep.subr.bf16.mxu0 %v7449
        %8605 = vmatpush1.bf16.msra.mxu0 %v7448
        %8606 = vmatprep.subr.bf16.mxu0 %v7465
        %8607 = vmatpush1.bf16.msra.mxu0 %v7464
        %8608 = vmatprep.subr.bf16.mxu0 %v7481
        %8609 = vmatpush1.bf16.msra.mxu0 %v7480
        %8610 = vmatprep.subr.bf16.mxu0 %v7497
        %8611 = vmatpush1.bf16.msra.mxu0 %v7496
        %8612 = vmatprep.subr.bf16.mxu0 %v7513
        %8613 = vmatpush1.bf16.msra.mxu0 %v7512
        %8614 = vmatprep.subr.bf16.mxu0 %v7529
        %8615 = vmatpush1.bf16.msra.mxu0 %v7528
        %8616 = vmatprep.subr.bf16.mxu0 %v7545
        %8617 = vmatpush1.bf16.msra.mxu0 %v7544
        %8618 = vmatprep.subr.bf16.mxu0 %v7561
        %8619 = vmatpush1.bf16.msra.mxu0 %v7560
        %8620 = vmatprep.subr.bf16.mxu0 %v7577
        %8621 = vmatpush1.bf16.msra.mxu0 %v7576
        %8622 = vmatprep.subr.bf16.mxu0 %v7593
        %8623 = vmatpush1.bf16.msra.mxu0 %v7592
        %8624 = vmatprep.subr.bf16.mxu0 %v7609
        %8625 = vmatpush1.bf16.msra.mxu0 %v7608
        %8626 = vmatprep.subr.bf16.mxu0 %v7625
        %8627 = vmatpush1.bf16.msra.mxu0 %v7624
        %8628 = vmatprep.subr.bf16.mxu0 %v7641
        %8629 = vmatpush1.bf16.msra.mxu0 %v7640
        %8630 = vmatprep.subr.bf16.mxu0 %v7657
        %8631 = vmatpush1.bf16.msra.mxu0 %v7656
        %8632 = vmatprep.mubr.bf16.mxu0 %v5277
        %8633 = vmatmul.mubr.bf16.gmra.mrb[0].mxu0 %v5276
        %v8634 = vpop.f32.mrb[0].mxu0
        %v8635 = vadd.f32 %v5815, %v8634
        %v8636 = vpop.f32.mrb[0].mxu0
        %v8637 = vadd.f32 %v5819, %v8636
        %v8638 = vpop.f32.mrb[0].mxu0
        %v8639 = vpop.f32.mrb[0].mxu0
        %8640 = vdwg.mxu0
        %8641 = vmatprep.subr.bf16.mxu0 %v7673
        %8642 = vmatpush1.bf16.msra.mxu0 %v7672
        %8643 = vmatprep.subr.bf16.mxu0 %v7689
        %8644 = vmatpush1.bf16.msra.mxu0 %v7688
        %8645 = vmatprep.subr.bf16.mxu0 %v7705
        %8646 = vmatpush1.bf16.msra.mxu0 %v7704
        %8647 = vmatprep.subr.bf16.mxu0 %v7721
        %8648 = vmatpush1.bf16.msra.mxu0 %v7720
        %8649 = vmatprep.subr.bf16.mxu0 %v7737
        %8650 = vmatpush1.bf16.msra.mxu0 %v7736
        %8651 = vmatprep.subr.bf16.mxu0 %v7753
        %8652 = vmatpush1.bf16.msra.mxu0 %v7752
        %8653 = vmatprep.subr.bf16.mxu0 %v7769
        %8654 = vmatpush1.bf16.msra.mxu0 %v7768
        %8655 = vmatprep.subr.bf16.mxu0 %v7785
        %8656 = vmatpush1.bf16.msra.mxu0 %v7784
        %8657 = vmatprep.subr.bf16.mxu0 %v7801
        %8658 = vmatpush1.bf16.msra.mxu0 %v7800
        %8659 = vmatprep.subr.bf16.mxu0 %v7817
        %8660 = vmatpush1.bf16.msra.mxu0 %v7816
        %8661 = vmatprep.subr.bf16.mxu0 %v7833
        %8662 = vmatpush1.bf16.msra.mxu0 %v7832
        %8663 = vmatprep.subr.bf16.mxu0 %v7849
        %8664 = vmatpush1.bf16.msra.mxu0 %v7848
        %8665 = vmatprep.subr.bf16.mxu0 %v7865
        %8666 = vmatpush1.bf16.msra.mxu0 %v7864
        %8667 = vmatprep.subr.bf16.mxu0 %v7881
        %8668 = vmatpush1.bf16.msra.mxu0 %v7880
        %8669 = vmatprep.subr.bf16.mxu0 %v7897
        %8670 = vmatpush1.bf16.msra.mxu0 %v7896
        %8671 = vmatprep.subr.bf16.mxu0 %v7913
        %8672 = vmatpush1.bf16.msra.mxu0 %v7912
        %8673 = vmatprep.mubr.bf16.mxu0 %v5279
        %8674 = vmatmul.mubr.bf16.gmra.mrb[0].mxu0 %v5278
        %v8675 = vpop.f32.mrb[0].mxu0
        %v8676 = vadd.f32 %v8635, %v8675
        %v8677 = vpop.f32.mrb[0].mxu0
        %v8678 = vadd.f32 %v8637, %v8677
        %v8679 = vpop.f32.mrb[0].mxu0
        %v8680 = vpop.f32.mrb[0].mxu0
        %8681 = vdwg.mxu0
        %8682 = vmatprep.subr.bf16.mxu0 %v7419
        %8683 = vmatpush1.bf16.msra.mxu0 %v7418
        %8684 = vmatprep.subr.bf16.mxu0 %v7435
        %8685 = vmatpush1.bf16.msra.mxu0 %v7434
        %8686 = vmatprep.subr.bf16.mxu0 %v7451
        %8687 = vmatpush1.bf16.msra.mxu0 %v7450
        %8688 = vmatprep.subr.bf16.mxu0 %v7467
        %8689 = vmatpush1.bf16.msra.mxu0 %v7466
        %8690 = vmatprep.subr.bf16.mxu0 %v7483
        %8691 = vmatpush1.bf16.msra.mxu0 %v7482
        %8692 = vmatprep.subr.bf16.mxu0 %v7499
        %8693 = vmatpush1.bf16.msra.mxu0 %v7498
        %8694 = vmatprep.subr.bf16.mxu0 %v7515
        %8695 = vmatpush1.bf16.msra.mxu0 %v7514
        %8696 = vmatprep.subr.bf16.mxu0 %v7531
        %8697 = vmatpush1.bf16.msra.mxu0 %v7530
        %8698 = vmatprep.subr.bf16.mxu0 %v7547
        %8699 = vmatpush1.bf16.msra.mxu0 %v7546
        %8700 = vmatprep.subr.bf16.mxu0 %v7563
        %8701 = vmatpush1.bf16.msra.mxu0 %v7562
        %8702 = vmatprep.subr.bf16.mxu0 %v7579
        %8703 = vmatpush1.bf16.msra.mxu0 %v7578
        %8704 = vmatprep.subr.bf16.mxu0 %v7595
        %8705 = vmatpush1.bf16.msra.mxu0 %v7594
        %8706 = vmatprep.subr.bf16.mxu0 %v7611
        %8707 = vmatpush1.bf16.msra.mxu0 %v7610
        %8708 = vmatprep.subr.bf16.mxu0 %v7627
        %8709 = vmatpush1.bf16.msra.mxu0 %v7626
        %8710 = vmatprep.subr.bf16.mxu0 %v7643
        %8711 = vmatpush1.bf16.msra.mxu0 %v7642
        %8712 = vmatprep.subr.bf16.mxu0 %v7659
        %8713 = vmatpush1.bf16.msra.mxu0 %v7658
        %8714 = vmatprep.mubr.bf16.mxu0 %v5277
        %8715 = vmatmul.mubr.bf16.gmra.mrb[0].mxu0 %v5276
        %v8716 = vpop.f32.mrb[0].mxu0
        %v8717 = vadd.f32 %v5823, %v8716
        %v8718 = vpop.f32.mrb[0].mxu0
        %v8719 = vadd.f32 %v5827, %v8718
        %v8720 = vpop.f32.mrb[0].mxu0
        %v8721 = vpop.f32.mrb[0].mxu0
        %8722 = vdwg.mxu0
        %8723 = vmatprep.subr.bf16.mxu0 %v7675
        %8724 = vmatpush1.bf16.msra.mxu0 %v7674
        %8725 = vmatprep.subr.bf16.mxu0 %v7691
        %8726 = vmatpush1.bf16.msra.mxu0 %v7690
        %8727 = vmatprep.subr.bf16.mxu0 %v7707
        %8728 = vmatpush1.bf16.msra.mxu0 %v7706
        %8729 = vmatprep.subr.bf16.mxu0 %v7723
        %8730 = vmatpush1.bf16.msra.mxu0 %v7722
        %8731 = vmatprep.subr.bf16.mxu0 %v7739
        %8732 = vmatpush1.bf16.msra.mxu0 %v7738
        %8733 = vmatprep.subr.bf16.mxu0 %v7755
        %8734 = vmatpush1.bf16.msra.mxu0 %v7754
        %8735 = vmatprep.subr.bf16.mxu0 %v7771
        %8736 = vmatpush1.bf16.msra.mxu0 %v7770
        %8737 = vmatprep.subr.bf16.mxu0 %v7787
        %8738 = vmatpush1.bf16.msra.mxu0 %v7786
        %8739 = vmatprep.subr.bf16.mxu0 %v7803
        %8740 = vmatpush1.bf16.msra.mxu0 %v7802
        %8741 = vmatprep.subr.bf16.mxu0 %v7819
        %8742 = vmatpush1.bf16.msra.mxu0 %v7818
        %8743 = vmatprep.subr.bf16.mxu0 %v7835
        %8744 = vmatpush1.bf16.msra.mxu0 %v7834
        %8745 = vmatprep.subr.bf16.mxu0 %v7851
        %8746 = vmatpush1.bf16.msra.mxu0 %v7850
        %8747 = vmatprep.subr.bf16.mxu0 %v7867
        %8748 = vmatpush1.bf16.msra.mxu0 %v7866
        %8749 = vmatprep.subr.bf16.mxu0 %v7883
        %8750 = vmatpush1.bf16.msra.mxu0 %v7882
        %8751 = vmatprep.subr.bf16.mxu0 %v7899
        %8752 = vmatpush1.bf16.msra.mxu0 %v7898
        %8753 = vmatprep.subr.bf16.mxu0 %v7915
        %8754 = vmatpush1.bf16.msra.mxu0 %v7914
        %8755 = vmatprep.mubr.bf16.mxu0 %v5279
        %8756 = vmatmul.mubr.bf16.gmra.mrb[0].mxu0 %v5278
        %v8757 = vpop.f32.mrb[0].mxu0
        %v8758 = vadd.f32 %v8717, %v8757
        %v8759 = vpop.f32.mrb[0].mxu0
        %v8760 = vadd.f32 %v8719, %v8759
        %v8761 = vpop.f32.mrb[0].mxu0
        %v8762 = vpop.f32.mrb[0].mxu0
        %8763 = vdwg.mxu0
        %8764 = vmatprep.subr.bf16.mxu0 %v7421
        %8765 = vmatpush1.bf16.msra.mxu0 %v7420
        %8766 = vmatprep.subr.bf16.mxu0 %v7437
        %8767 = vmatpush1.bf16.msra.mxu0 %v7436
        %8768 = vmatprep.subr.bf16.mxu0 %v7453
        %8769 = vmatpush1.bf16.msra.mxu0 %v7452
        %8770 = vmatprep.subr.bf16.mxu0 %v7469
        %8771 = vmatpush1.bf16.msra.mxu0 %v7468
        %8772 = vmatprep.subr.bf16.mxu0 %v7485
        %8773 = vmatpush1.bf16.msra.mxu0 %v7484
        %8774 = vmatprep.subr.bf16.mxu0 %v7501
        %8775 = vmatpush1.bf16.msra.mxu0 %v7500
        %8776 = vmatprep.subr.bf16.mxu0 %v7517
        %8777 = vmatpush1.bf16.msra.mxu0 %v7516
        %8778 = vmatprep.subr.bf16.mxu0 %v7533
        %8779 = vmatpush1.bf16.msra.mxu0 %v7532
        %8780 = vmatprep.subr.bf16.mxu0 %v7549
        %8781 = vmatpush1.bf16.msra.mxu0 %v7548
        %8782 = vmatprep.subr.bf16.mxu0 %v7565
        %8783 = vmatpush1.bf16.msra.mxu0 %v7564
        %8784 = vmatprep.subr.bf16.mxu0 %v7581
        %8785 = vmatpush1.bf16.msra.mxu0 %v7580
        %8786 = vmatprep.subr.bf16.mxu0 %v7597
        %8787 = vmatpush1.bf16.msra.mxu0 %v7596
        %8788 = vmatprep.subr.bf16.mxu0 %v7613
        %8789 = vmatpush1.bf16.msra.mxu0 %v7612
        %8790 = vmatprep.subr.bf16.mxu0 %v7629
        %8791 = vmatpush1.bf16.msra.mxu0 %v7628
        %8792 = vmatprep.subr.bf16.mxu0 %v7645
        %8793 = vmatpush1.bf16.msra.mxu0 %v7644
        %8794 = vmatprep.subr.bf16.mxu0 %v7661
        %8795 = vmatpush1.bf16.msra.mxu0 %v7660
        %8796 = vmatprep.mubr.bf16.mxu0 %v5277
        %8797 = vmatmul.mubr.bf16.gmra.mrb[0].mxu0 %v5276
        %v8798 = vpop.f32.mrb[0].mxu0
        %v8799 = vadd.f32 %v5831, %v8798
        %v8800 = vpop.f32.mrb[0].mxu0
        %v8801 = vadd.f32 %v5835, %v8800
        %v8802 = vpop.f32.mrb[0].mxu0
        %v8803 = vpop.f32.mrb[0].mxu0
        %8804 = vdwg.mxu0
        %8805 = vmatprep.subr.bf16.mxu0 %v7677
        %8806 = vmatpush1.bf16.msra.mxu0 %v7676
        %8807 = vmatprep.subr.bf16.mxu0 %v7693
        %8808 = vmatpush1.bf16.msra.mxu0 %v7692
        %8809 = vmatprep.subr.bf16.mxu0 %v7709
        %8810 = vmatpush1.bf16.msra.mxu0 %v7708
        %8811 = vmatprep.subr.bf16.mxu0 %v7725
        %8812 = vmatpush1.bf16.msra.mxu0 %v7724
        %8813 = vmatprep.subr.bf16.mxu0 %v7741
        %8814 = vmatpush1.bf16.msra.mxu0 %v7740
        %8815 = vmatprep.subr.bf16.mxu0 %v7757
        %8816 = vmatpush1.bf16.msra.mxu0 %v7756
        %8817 = vmatprep.subr.bf16.mxu0 %v7773
        %8818 = vmatpush1.bf16.msra.mxu0 %v7772
        %8819 = vmatprep.subr.bf16.mxu0 %v7789
        %8820 = vmatpush1.bf16.msra.mxu0 %v7788
        %8821 = vmatprep.subr.bf16.mxu0 %v7805
        %8822 = vmatpush1.bf16.msra.mxu0 %v7804
        %8823 = vmatprep.subr.bf16.mxu0 %v7821
        %8824 = vmatpush1.bf16.msra.mxu0 %v7820
        %8825 = vmatprep.subr.bf16.mxu0 %v7837
        %8826 = vmatpush1.bf16.msra.mxu0 %v7836
        %8827 = vmatprep.subr.bf16.mxu0 %v7853
        %8828 = vmatpush1.bf16.msra.mxu0 %v7852
        %8829 = vmatprep.subr.bf16.mxu0 %v7869
        %8830 = vmatpush1.bf16.msra.mxu0 %v7868
        %8831 = vmatprep.subr.bf16.mxu0 %v7885
        %8832 = vmatpush1.bf16.msra.mxu0 %v7884
        %8833 = vmatprep.subr.bf16.mxu0 %v7901
        %8834 = vmatpush1.bf16.msra.mxu0 %v7900
        %8835 = vmatprep.subr.bf16.mxu0 %v7917
        %8836 = vmatpush1.bf16.msra.mxu0 %v7916
        %8837 = vmatprep.mubr.bf16.mxu0 %v5279
        %8838 = vmatmul.mubr.bf16.gmra.mrb[0].mxu0 %v5278
        %v8839 = vpop.f32.mrb[0].mxu0
        %v8840 = vadd.f32 %v8799, %v8839
        %v8841 = vpop.f32.mrb[0].mxu0
        %v8842 = vadd.f32 %v8801, %v8841
        %v8843 = vpop.f32.mrb[0].mxu0
        %v8844 = vpop.f32.mrb[0].mxu0
        %8845 = vdwg.mxu0
        %8846 = vmatprep.subr.bf16.mxu0 %v7423
        %8847 = vmatpush1.bf16.msra.mxu0 %v7422
        %8848 = vmatprep.subr.bf16.mxu0 %v7439
        %8849 = vmatpush1.bf16.msra.mxu0 %v7438
        %8850 = vmatprep.subr.bf16.mxu0 %v7455
        %8851 = vmatpush1.bf16.msra.mxu0 %v7454
        %8852 = vmatprep.subr.bf16.mxu0 %v7471
        %8853 = vmatpush1.bf16.msra.mxu0 %v7470
        %8854 = vmatprep.subr.bf16.mxu0 %v7487
        %8855 = vmatpush1.bf16.msra.mxu0 %v7486
        %8856 = vmatprep.subr.bf16.mxu0 %v7503
        %8857 = vmatpush1.bf16.msra.mxu0 %v7502
        %8858 = vmatprep.subr.bf16.mxu0 %v7519
        %8859 = vmatpush1.bf16.msra.mxu0 %v7518
        %8860 = vmatprep.subr.bf16.mxu0 %v7535
        %8861 = vmatpush1.bf16.msra.mxu0 %v7534
        %8862 = vmatprep.subr.bf16.mxu0 %v7551
        %8863 = vmatpush1.bf16.msra.mxu0 %v7550
        %8864 = vmatprep.subr.bf16.mxu0 %v7567
        %8865 = vmatpush1.bf16.msra.mxu0 %v7566
        %8866 = vmatprep.subr.bf16.mxu0 %v7583
        %8867 = vmatpush1.bf16.msra.mxu0 %v7582
        %8868 = vmatprep.subr.bf16.mxu0 %v7599
        %8869 = vmatpush1.bf16.msra.mxu0 %v7598
        %8870 = vmatprep.subr.bf16.mxu0 %v7615
        %8871 = vmatpush1.bf16.msra.mxu0 %v7614
        %8872 = vmatprep.subr.bf16.mxu0 %v7631
        %8873 = vmatpush1.bf16.msra.mxu0 %v7630
        %8874 = vmatprep.subr.bf16.mxu0 %v7647
        %8875 = vmatpush1.bf16.msra.mxu0 %v7646
        %8876 = vmatprep.subr.bf16.mxu0 %v7663
        %8877 = vmatpush1.bf16.msra.mxu0 %v7662
        %8878 = vmatprep.mubr.bf16.mxu0 %v5277
        %8879 = vmatmul.mubr.bf16.gmra.mrb[0].mxu0 %v5276
        %v8880 = vpop.f32.mrb[0].mxu0
        %v8881 = vadd.f32 %v5839, %v8880
        %v8882 = vpop.f32.mrb[0].mxu0
        %v8883 = vadd.f32 %v5843, %v8882
        %v8884 = vpop.f32.mrb[0].mxu0
        %v8885 = vpop.f32.mrb[0].mxu0
        %8886 = vdwg.mxu0
        %8887 = vmatprep.subr.bf16.mxu0 %v7679
        %8888 = vmatpush1.bf16.msra.mxu0 %v7678
        %8889 = vmatprep.subr.bf16.mxu0 %v7695
        %8890 = vmatpush1.bf16.msra.mxu0 %v7694
        %8891 = vmatprep.subr.bf16.mxu0 %v7711
        %8892 = vmatpush1.bf16.msra.mxu0 %v7710
        %8893 = vmatprep.subr.bf16.mxu0 %v7727
        %8894 = vmatpush1.bf16.msra.mxu0 %v7726
        %8895 = vmatprep.subr.bf16.mxu0 %v7743
        %8896 = vmatpush1.bf16.msra.mxu0 %v7742
        %8897 = vmatprep.subr.bf16.mxu0 %v7759
        %8898 = vmatpush1.bf16.msra.mxu0 %v7758
        %8899 = vmatprep.subr.bf16.mxu0 %v7775
        %8900 = vmatpush1.bf16.msra.mxu0 %v7774
        %8901 = vmatprep.subr.bf16.mxu0 %v7791
        %8902 = vmatpush1.bf16.msra.mxu0 %v7790
        %8903 = vmatprep.subr.bf16.mxu0 %v7807
        %8904 = vmatpush1.bf16.msra.mxu0 %v7806
        %8905 = vmatprep.subr.bf16.mxu0 %v7823
        %8906 = vmatpush1.bf16.msra.mxu0 %v7822
        %8907 = vmatprep.subr.bf16.mxu0 %v7839
        %8908 = vmatpush1.bf16.msra.mxu0 %v7838
        %8909 = vmatprep.subr.bf16.mxu0 %v7855
        %8910 = vmatpush1.bf16.msra.mxu0 %v7854
        %8911 = vmatprep.subr.bf16.mxu0 %v7871
        %8912 = vmatpush1.bf16.msra.mxu0 %v7870
        %8913 = vmatprep.subr.bf16.mxu0 %v7887
        %8914 = vmatpush1.bf16.msra.mxu0 %v7886
        %8915 = vmatprep.subr.bf16.mxu0 %v7903
        %8916 = vmatpush1.bf16.msra.mxu0 %v7902
        %8917 = vmatprep.subr.bf16.mxu0 %v7919
        %8918 = vmatpush1.bf16.msra.mxu0 %v7918
        %8919 = vmatprep.mubr.bf16.mxu0 %v5279
        %8920 = vmatmul.mubr.bf16.gmra.mrb[0].mxu0 %v5278
        %v8921 = vpop.f32.mrb[0].mxu0
        %v8922 = vadd.f32 %v8881, %v8921
        %v8923 = vpop.f32.mrb[0].mxu0
        %v8924 = vadd.f32 %v8883, %v8923
        %v8925 = vpop.f32.mrb[0].mxu0
        %v8926 = vpop.f32.mrb[0].mxu0
        %8927 = vdwg.mxu0
        %8928 = vmatprep.subr.bf16.mxu0 %v7425
        %8929 = vmatpush1.bf16.msra.mxu0 %v7424
        %8930 = vmatprep.subr.bf16.mxu0 %v7441
        %8931 = vmatpush1.bf16.msra.mxu0 %v7440
        %8932 = vmatprep.subr.bf16.mxu0 %v7457
        %8933 = vmatpush1.bf16.msra.mxu0 %v7456
        %8934 = vmatprep.subr.bf16.mxu0 %v7473
        %8935 = vmatpush1.bf16.msra.mxu0 %v7472
        %8936 = vmatprep.subr.bf16.mxu0 %v7489
        %8937 = vmatpush1.bf16.msra.mxu0 %v7488
        %8938 = vmatprep.subr.bf16.mxu0 %v7505
        %8939 = vmatpush1.bf16.msra.mxu0 %v7504
        %8940 = vmatprep.subr.bf16.mxu0 %v7521
        %8941 = vmatpush1.bf16.msra.mxu0 %v7520
        %8942 = vmatprep.subr.bf16.mxu0 %v7537
        %8943 = vmatpush1.bf16.msra.mxu0 %v7536
        %8944 = vmatprep.subr.bf16.mxu0 %v7553
        %8945 = vmatpush1.bf16.msra.mxu0 %v7552
        %8946 = vmatprep.subr.bf16.mxu0 %v7569
        %8947 = vmatpush1.bf16.msra.mxu0 %v7568
        %8948 = vmatprep.subr.bf16.mxu0 %v7585
        %8949 = vmatpush1.bf16.msra.mxu0 %v7584
        %8950 = vmatprep.subr.bf16.mxu0 %v7601
        %8951 = vmatpush1.bf16.msra.mxu0 %v7600
        %8952 = vmatprep.subr.bf16.mxu0 %v7617
        %8953 = vmatpush1.bf16.msra.mxu0 %v7616
        %8954 = vmatprep.subr.bf16.mxu0 %v7633
        %8955 = vmatpush1.bf16.msra.mxu0 %v7632
        %8956 = vmatprep.subr.bf16.mxu0 %v7649
        %8957 = vmatpush1.bf16.msra.mxu0 %v7648
        %8958 = vmatprep.subr.bf16.mxu0 %v7665
        %8959 = vmatpush1.bf16.msra.mxu0 %v7664
        %8960 = vmatprep.mubr.bf16.mxu0 %v5277
        %8961 = vmatmul.mubr.bf16.gmra.mrb[0].mxu0 %v5276
        %v8962 = vpop.f32.mrb[0].mxu0
        %v8963 = vadd.f32 %v5847, %v8962
        %v8964 = vpop.f32.mrb[0].mxu0
        %v8965 = vadd.f32 %v5851, %v8964
        %v8966 = vpop.f32.mrb[0].mxu0
        %v8967 = vpop.f32.mrb[0].mxu0
        %8968 = vdwg.mxu0
        %8969 = vmatprep.subr.bf16.mxu0 %v7681
        %8970 = vmatpush1.bf16.msra.mxu0 %v7680
        %8971 = vmatprep.subr.bf16.mxu0 %v7697
        %8972 = vmatpush1.bf16.msra.mxu0 %v7696
        %8973 = vmatprep.subr.bf16.mxu0 %v7713
        %8974 = vmatpush1.bf16.msra.mxu0 %v7712
        %8975 = vmatprep.subr.bf16.mxu0 %v7729
        %8976 = vmatpush1.bf16.msra.mxu0 %v7728
        %8977 = vmatprep.subr.bf16.mxu0 %v7745
        %8978 = vmatpush1.bf16.msra.mxu0 %v7744
        %8979 = vmatprep.subr.bf16.mxu0 %v7761
        %8980 = vmatpush1.bf16.msra.mxu0 %v7760
        %8981 = vmatprep.subr.bf16.mxu0 %v7777
        %8982 = vmatpush1.bf16.msra.mxu0 %v7776
        %8983 = vmatprep.subr.bf16.mxu0 %v7793
        %8984 = vmatpush1.bf16.msra.mxu0 %v7792
        %8985 = vmatprep.subr.bf16.mxu0 %v7809
        %8986 = vmatpush1.bf16.msra.mxu0 %v7808
        %8987 = vmatprep.subr.bf16.mxu0 %v7825
        %8988 = vmatpush1.bf16.msra.mxu0 %v7824
        %8989 = vmatprep.subr.bf16.mxu0 %v7841
        %8990 = vmatpush1.bf16.msra.mxu0 %v7840
        %8991 = vmatprep.subr.bf16.mxu0 %v7857
        %8992 = vmatpush1.bf16.msra.mxu0 %v7856
        %8993 = vmatprep.subr.bf16.mxu0 %v7873
        %8994 = vmatpush1.bf16.msra.mxu0 %v7872
        %8995 = vmatprep.subr.bf16.mxu0 %v7889
        %8996 = vmatpush1.bf16.msra.mxu0 %v7888
        %8997 = vmatprep.subr.bf16.mxu0 %v7905
        %8998 = vmatpush1.bf16.msra.mxu0 %v7904
        %8999 = vmatprep.subr.bf16.mxu0 %v7921
        %9000 = vmatpush1.bf16.msra.mxu0 %v7920
        %9001 = vmatprep.mubr.bf16.mxu0 %v5279
        %9002 = vmatmul.mubr.bf16.gmra.mrb[0].mxu0 %v5278
        %v9003 = vpop.f32.mrb[0].mxu0
        %v9004 = vadd.f32 %v8963, %v9003
        %v9005 = vpop.f32.mrb[0].mxu0
        %v9006 = vadd.f32 %v8965, %v9005
        %v9007 = vpop.f32.mrb[0].mxu0
        %v9008 = vpop.f32.mrb[0].mxu0
        %9009 = vdwg.mxu0
        %9010 = vmatprep.subr.bf16.mxu0 %v7427
        %9011 = vmatpush1.bf16.msra.mxu0 %v7426
        %9012 = vmatprep.subr.bf16.mxu0 %v7443
        %9013 = vmatpush1.bf16.msra.mxu0 %v7442
        %9014 = vmatprep.subr.bf16.mxu0 %v7459
        %9015 = vmatpush1.bf16.msra.mxu0 %v7458
        %9016 = vmatprep.subr.bf16.mxu0 %v7475
        %9017 = vmatpush1.bf16.msra.mxu0 %v7474
        %9018 = vmatprep.subr.bf16.mxu0 %v7491
        %9019 = vmatpush1.bf16.msra.mxu0 %v7490
        %9020 = vmatprep.subr.bf16.mxu0 %v7507
        %9021 = vmatpush1.bf16.msra.mxu0 %v7506
        %9022 = vmatprep.subr.bf16.mxu0 %v7523
        %9023 = vmatpush1.bf16.msra.mxu0 %v7522
        %9024 = vmatprep.subr.bf16.mxu0 %v7539
        %9025 = vmatpush1.bf16.msra.mxu0 %v7538
        %9026 = vmatprep.subr.bf16.mxu0 %v7555
        %9027 = vmatpush1.bf16.msra.mxu0 %v7554
        %9028 = vmatprep.subr.bf16.mxu0 %v7571
        %9029 = vmatpush1.bf16.msra.mxu0 %v7570
        %9030 = vmatprep.subr.bf16.mxu0 %v7587
        %9031 = vmatpush1.bf16.msra.mxu0 %v7586
        %9032 = vmatprep.subr.bf16.mxu0 %v7603
        %9033 = vmatpush1.bf16.msra.mxu0 %v7602
        %9034 = vmatprep.subr.bf16.mxu0 %v7619
        %9035 = vmatpush1.bf16.msra.mxu0 %v7618
        %9036 = vmatprep.subr.bf16.mxu0 %v7635
        %9037 = vmatpush1.bf16.msra.mxu0 %v7634
        %9038 = vmatprep.subr.bf16.mxu0 %v7651
        %9039 = vmatpush1.bf16.msra.mxu0 %v7650
        %9040 = vmatprep.subr.bf16.mxu0 %v7667
        %9041 = vmatpush1.bf16.msra.mxu0 %v7666
        %9042 = vmatprep.mubr.bf16.mxu0 %v5277
        %9043 = vmatmul.mubr.bf16.gmra.mrb[0].mxu0 %v5276
        %v9044 = vpop.f32.mrb[0].mxu0
        %v9045 = vadd.f32 %v5855, %v9044
        %v9046 = vpop.f32.mrb[0].mxu0
        %v9047 = vadd.f32 %v5859, %v9046
        %v9048 = vpop.f32.mrb[0].mxu0
        %v9049 = vpop.f32.mrb[0].mxu0
        %9050 = vdwg.mxu0
        %9051 = vmatprep.subr.bf16.mxu0 %v7683
        %9052 = vmatpush1.bf16.msra.mxu0 %v7682
        %9053 = vmatprep.subr.bf16.mxu0 %v7699
        %9054 = vmatpush1.bf16.msra.mxu0 %v7698
        %9055 = vmatprep.subr.bf16.mxu0 %v7715
        %9056 = vmatpush1.bf16.msra.mxu0 %v7714
        %9057 = vmatprep.subr.bf16.mxu0 %v7731
        %9058 = vmatpush1.bf16.msra.mxu0 %v7730
        %9059 = vmatprep.subr.bf16.mxu0 %v7747
        %9060 = vmatpush1.bf16.msra.mxu0 %v7746
        %9061 = vmatprep.subr.bf16.mxu0 %v7763
        %9062 = vmatpush1.bf16.msra.mxu0 %v7762
        %9063 = vmatprep.subr.bf16.mxu0 %v7779
        %9064 = vmatpush1.bf16.msra.mxu0 %v7778
        %9065 = vmatprep.subr.bf16.mxu0 %v7795
        %9066 = vmatpush1.bf16.msra.mxu0 %v7794
        %9067 = vmatprep.subr.bf16.mxu0 %v7811
        %9068 = vmatpush1.bf16.msra.mxu0 %v7810
        %9069 = vmatprep.subr.bf16.mxu0 %v7827
        %9070 = vmatpush1.bf16.msra.mxu0 %v7826
        %9071 = vmatprep.subr.bf16.mxu0 %v7843
        %9072 = vmatpush1.bf16.msra.mxu0 %v7842
        %9073 = vmatprep.subr.bf16.mxu0 %v7859
        %9074 = vmatpush1.bf16.msra.mxu0 %v7858
        %9075 = vmatprep.subr.bf16.mxu0 %v7875
        %9076 = vmatpush1.bf16.msra.mxu0 %v7874
        %9077 = vmatprep.subr.bf16.mxu0 %v7891
        %9078 = vmatpush1.bf16.msra.mxu0 %v7890
        %9079 = vmatprep.subr.bf16.mxu0 %v7907
        %9080 = vmatpush1.bf16.msra.mxu0 %v7906
        %9081 = vmatprep.subr.bf16.mxu0 %v7923
        %9082 = vmatpush1.bf16.msra.mxu0 %v7922
        %9083 = vmatprep.mubr.bf16.mxu0 %v5279
        %9084 = vmatmul.mubr.bf16.gmra.mrb[0].mxu0 %v5278
        %v9085 = vpop.f32.mrb[0].mxu0
        %v9086 = vadd.f32 %v9045, %v9085
        %v9087 = vpop.f32.mrb[0].mxu0
        %v9088 = vadd.f32 %v9047, %v9087
        %v9089 = vpop.f32.mrb[0].mxu0
        %v9090 = vpop.f32.mrb[0].mxu0
        %9091 = vdwg.mxu0
        %v9092 = vmax.f32 %v8512, 0.0
        %v9093 = vmax.f32 %v8514, 0.0
        %v9094 = vmax.f32 %v8594, 0.0
        %v9095 = vmax.f32 %v8596, 0.0
        %v9096 = vmax.f32 %v8676, 0.0
        %v9097 = vmax.f32 %v8678, 0.0
        %v9098 = vmax.f32 %v8758, 0.0
        %v9099 = vmax.f32 %v8760, 0.0
        %v9100 = vmax.f32 %v8840, 0.0
        %v9101 = vmax.f32 %v8842, 0.0
        %v9102 = vmax.f32 %v8922, 0.0
        %v9103 = vmax.f32 %v8924, 0.0
        %v9104 = vmax.f32 %v9004, 0.0
        %v9105 = vmax.f32 %v9006, 0.0
        %v9106 = vmax.f32 %v9086, 0.0
        %v9107 = vmax.f32 %v9088, 0.0
        %v9108 = vpack.c.bf16 %v9092, %v9092
        %v9109 = vpack.c.bf16 %v9093, %v9093
        %v9110 = vpack.c.bf16 %v9094, %v9094
        %v9111 = vpack.c.bf16 %v9095, %v9095
        %v9112 = vpack.c.bf16 %v9096, %v9096
        %v9113 = vpack.c.bf16 %v9097, %v9097
        %v9114 = vpack.c.bf16 %v9098, %v9098
        %v9115 = vpack.c.bf16 %v9099, %v9099
        %v9116 = vpack.c.bf16 %v9100, %v9100
        %v9117 = vpack.c.bf16 %v9101, %v9101
        %v9118 = vpack.c.bf16 %v9102, %v9102
        %v9119 = vpack.c.bf16 %v9103, %v9103
        %v9120 = vpack.c.bf16 %v9104, %v9104
        %v9121 = vpack.c.bf16 %v9105, %v9105
        %v9122 = vpack.c.bf16 %v9106, %v9106
        %v9123 = vpack.c.bf16 %v9107, %v9107
        %v9124 = vld [vmem:[#allocation14] sm:$0xff]
        %v9125 = vld [vmem:[#allocation14 + $0x8] sm:$0xff]
        %v9126 = vld [vmem:[#allocation14 + $0x10] sm:$0xff]
        %v9127 = vld [vmem:[#allocation14 + $0x18] sm:$0xff]
        %v9128 = vld [vmem:[#allocation14 + $0x20] sm:$0xff]
        %v9129 = vld [vmem:[#allocation14 + $0x28] sm:$0xff]
        %v9130 = vld [vmem:[#allocation14 + $0x30] sm:$0xff]
        %v9131 = vld [vmem:[#allocation14 + $0x38] sm:$0xff]
        %v9132 = vld [vmem:[#allocation14 + $0x40] sm:$0xff]
        %v9133 = vld [vmem:[#allocation14 + $0x48] sm:$0xff]
        %v9134 = vld [vmem:[#allocation14 + $0x50] sm:$0xff]
        %v9135 = vld [vmem:[#allocation14 + $0x58] sm:$0xff]
        %v9136 = vld [vmem:[#allocation14 + $0x60] sm:$0xff]
        %v9137 = vld [vmem:[#allocation14 + $0x68] sm:$0xff]
        %v9138 = vld [vmem:[#allocation14 + $0x70] sm:$0xff]
        %v9139 = vld [vmem:[#allocation14 + $0x78] sm:$0xff]
        %v9140 = vld [vmem:[#allocation14 + $0x80] sm:$0xff]
        %v9141 = vld [vmem:[#allocation14 + $0x88] sm:$0xff]
        %v9142 = vld [vmem:[#allocation14 + $0x90] sm:$0xff]
        %v9143 = vld [vmem:[#allocation14 + $0x98] sm:$0xff]
        %v9144 = vld [vmem:[#allocation14 + $0xa0] sm:$0xff]
        %v9145 = vld [vmem:[#allocation14 + $0xa8] sm:$0xff]
        %v9146 = vld [vmem:[#allocation14 + $0xb0] sm:$0xff]
        %v9147 = vld [vmem:[#allocation14 + $0xb8] sm:$0xff]
        %v9148 = vld [vmem:[#allocation14 + $0xc0] sm:$0xff]
        %v9149 = vld [vmem:[#allocation14 + $0xc8] sm:$0xff]
        %v9150 = vld [vmem:[#allocation14 + $0xd0] sm:$0xff]
        %v9151 = vld [vmem:[#allocation14 + $0xd8] sm:$0xff]
        %v9152 = vld [vmem:[#allocation14 + $0xe0] sm:$0xff]
        %v9153 = vld [vmem:[#allocation14 + $0xe8] sm:$0xff]
        %v9154 = vld [vmem:[#allocation14 + $0xf0] sm:$0xff]
        %v9155 = vld [vmem:[#allocation14 + $0xf8] sm:$0xff]
        %v9156 = vld [vmem:[#allocation14 + $0x100] sm:$0xff]
        %v9157 = vld [vmem:[#allocation14 + $0x108] sm:$0xff]
        %v9158 = vld [vmem:[#allocation14 + $0x110] sm:$0xff]
        %v9159 = vld [vmem:[#allocation14 + $0x118] sm:$0xff]
        %v9160 = vld [vmem:[#allocation14 + $0x120] sm:$0xff]
        %v9161 = vld [vmem:[#allocation14 + $0x128] sm:$0xff]
        %v9162 = vld [vmem:[#allocation14 + $0x130] sm:$0xff]
        %v9163 = vld [vmem:[#allocation14 + $0x138] sm:$0xff]
        %v9164 = vld [vmem:[#allocation14 + $0x140] sm:$0xff]
        %v9165 = vld [vmem:[#allocation14 + $0x148] sm:$0xff]
        %v9166 = vld [vmem:[#allocation14 + $0x150] sm:$0xff]
        %v9167 = vld [vmem:[#allocation14 + $0x158] sm:$0xff]
        %v9168 = vld [vmem:[#allocation14 + $0x160] sm:$0xff]
        %v9169 = vld [vmem:[#allocation14 + $0x168] sm:$0xff]
        %v9170 = vld [vmem:[#allocation14 + $0x170] sm:$0xff]
        %v9171 = vld [vmem:[#allocation14 + $0x178] sm:$0xff]
        %v9172 = vld [vmem:[#allocation14 + $0x180] sm:$0xff]
        %v9173 = vld [vmem:[#allocation14 + $0x188] sm:$0xff]
        %v9174 = vld [vmem:[#allocation14 + $0x190] sm:$0xff]
        %v9175 = vld [vmem:[#allocation14 + $0x198] sm:$0xff]
        %v9176 = vld [vmem:[#allocation14 + $0x1a0] sm:$0xff]
        %v9177 = vld [vmem:[#allocation14 + $0x1a8] sm:$0xff]
        %v9178 = vld [vmem:[#allocation14 + $0x1b0] sm:$0xff]
        %v9179 = vld [vmem:[#allocation14 + $0x1b8] sm:$0xff]
        %v9180 = vld [vmem:[#allocation14 + $0x1c0] sm:$0xff]
        %v9181 = vld [vmem:[#allocation14 + $0x1c8] sm:$0xff]
        %v9182 = vld [vmem:[#allocation14 + $0x1d0] sm:$0xff]
        %v9183 = vld [vmem:[#allocation14 + $0x1d8] sm:$0xff]
        %v9184 = vld [vmem:[#allocation14 + $0x1e0] sm:$0xff]
        %v9185 = vld [vmem:[#allocation14 + $0x1e8] sm:$0xff]
        %v9186 = vld [vmem:[#allocation14 + $0x1f0] sm:$0xff]
        %v9187 = vld [vmem:[#allocation14 + $0x1f8] sm:$0xff]
        %v9188 = vld [vmem:[#allocation14 + $0x200] sm:$0xff]
        %v9189 = vld [vmem:[#allocation14 + $0x208] sm:$0xff]
        %v9190 = vld [vmem:[#allocation14 + $0x210] sm:$0xff]
        %v9191 = vld [vmem:[#allocation14 + $0x218] sm:$0xff]
        %v9192 = vld [vmem:[#allocation14 + $0x220] sm:$0xff]
        %v9193 = vld [vmem:[#allocation14 + $0x228] sm:$0xff]
        %v9194 = vld [vmem:[#allocation14 + $0x230] sm:$0xff]
        %v9195 = vld [vmem:[#allocation14 + $0x238] sm:$0xff]
        %v9196 = vld [vmem:[#allocation14 + $0x240] sm:$0xff]
        %v9197 = vld [vmem:[#allocation14 + $0x248] sm:$0xff]
        %v9198 = vld [vmem:[#allocation14 + $0x250] sm:$0xff]
        %v9199 = vld [vmem:[#allocation14 + $0x258] sm:$0xff]
        %v9200 = vld [vmem:[#allocation14 + $0x260] sm:$0xff]
        %v9201 = vld [vmem:[#allocation14 + $0x268] sm:$0xff]
        %v9202 = vld [vmem:[#allocation14 + $0x270] sm:$0xff]
        %v9203 = vld [vmem:[#allocation14 + $0x278] sm:$0xff]
        %v9204 = vld [vmem:[#allocation14 + $0x280] sm:$0xff]
        %v9205 = vld [vmem:[#allocation14 + $0x288] sm:$0xff]
        %v9206 = vld [vmem:[#allocation14 + $0x290] sm:$0xff]
        %v9207 = vld [vmem:[#allocation14 + $0x298] sm:$0xff]
        %v9208 = vld [vmem:[#allocation14 + $0x2a0] sm:$0xff]
        %v9209 = vld [vmem:[#allocation14 + $0x2a8] sm:$0xff]
        %v9210 = vld [vmem:[#allocation14 + $0x2b0] sm:$0xff]
        %v9211 = vld [vmem:[#allocation14 + $0x2b8] sm:$0xff]
        %v9212 = vld [vmem:[#allocation14 + $0x2c0] sm:$0xff]
        %v9213 = vld [vmem:[#allocation14 + $0x2c8] sm:$0xff]
        %v9214 = vld [vmem:[#allocation14 + $0x2d0] sm:$0xff]
        %v9215 = vld [vmem:[#allocation14 + $0x2d8] sm:$0xff]
        %v9216 = vld [vmem:[#allocation14 + $0x2e0] sm:$0xff]
        %v9217 = vld [vmem:[#allocation14 + $0x2e8] sm:$0xff]
        %v9218 = vld [vmem:[#allocation14 + $0x2f0] sm:$0xff]
        %v9219 = vld [vmem:[#allocation14 + $0x2f8] sm:$0xff]
        %v9220 = vld [vmem:[#allocation14 + $0x300] sm:$0xff]
        %v9221 = vld [vmem:[#allocation14 + $0x308] sm:$0xff]
        %v9222 = vld [vmem:[#allocation14 + $0x310] sm:$0xff]
        %v9223 = vld [vmem:[#allocation14 + $0x318] sm:$0xff]
        %v9224 = vld [vmem:[#allocation14 + $0x320] sm:$0xff]
        %v9225 = vld [vmem:[#allocation14 + $0x328] sm:$0xff]
        %v9226 = vld [vmem:[#allocation14 + $0x330] sm:$0xff]
        %v9227 = vld [vmem:[#allocation14 + $0x338] sm:$0xff]
        %v9228 = vld [vmem:[#allocation14 + $0x340] sm:$0xff]
        %v9229 = vld [vmem:[#allocation14 + $0x348] sm:$0xff]
        %v9230 = vld [vmem:[#allocation14 + $0x350] sm:$0xff]
        %v9231 = vld [vmem:[#allocation14 + $0x358] sm:$0xff]
        %v9232 = vld [vmem:[#allocation14 + $0x360] sm:$0xff]
        %v9233 = vld [vmem:[#allocation14 + $0x368] sm:$0xff]
        %v9234 = vld [vmem:[#allocation14 + $0x370] sm:$0xff]
        %v9235 = vld [vmem:[#allocation14 + $0x378] sm:$0xff]
        %v9236 = vld [vmem:[#allocation14 + $0x380] sm:$0xff]
        %v9237 = vld [vmem:[#allocation14 + $0x388] sm:$0xff]
        %v9238 = vld [vmem:[#allocation14 + $0x390] sm:$0xff]
        %v9239 = vld [vmem:[#allocation14 + $0x398] sm:$0xff]
        %v9240 = vld [vmem:[#allocation14 + $0x3a0] sm:$0xff]
        %v9241 = vld [vmem:[#allocation14 + $0x3a8] sm:$0xff]
        %v9242 = vld [vmem:[#allocation14 + $0x3b0] sm:$0xff]
        %v9243 = vld [vmem:[#allocation14 + $0x3b8] sm:$0xff]
        %v9244 = vld [vmem:[#allocation14 + $0x3c0] sm:$0xff]
        %v9245 = vld [vmem:[#allocation14 + $0x3c8] sm:$0xff]
        %v9246 = vld [vmem:[#allocation14 + $0x3d0] sm:$0xff]
        %v9247 = vld [vmem:[#allocation14 + $0x3d8] sm:$0xff]
        %v9248 = vld [vmem:[#allocation14 + $0x3e0] sm:$0xff]
        %v9249 = vld [vmem:[#allocation14 + $0x3e8] sm:$0xff]
        %v9250 = vld [vmem:[#allocation14 + $0x3f0] sm:$0xff]
        %v9251 = vld [vmem:[#allocation14 + $0x3f8] sm:$0xff]
        %v9252 = vld [vmem:[#allocation14 + $0x400] sm:$0xff]
        %v9253 = vld [vmem:[#allocation14 + $0x408] sm:$0xff]
        %v9254 = vld [vmem:[#allocation14 + $0x410] sm:$0xff]
        %v9255 = vld [vmem:[#allocation14 + $0x418] sm:$0xff]
        %v9256 = vld [vmem:[#allocation14 + $0x420] sm:$0xff]
        %v9257 = vld [vmem:[#allocation14 + $0x428] sm:$0xff]
        %v9258 = vld [vmem:[#allocation14 + $0x430] sm:$0xff]
        %v9259 = vld [vmem:[#allocation14 + $0x438] sm:$0xff]
        %v9260 = vld [vmem:[#allocation14 + $0x440] sm:$0xff]
        %v9261 = vld [vmem:[#allocation14 + $0x448] sm:$0xff]
        %v9262 = vld [vmem:[#allocation14 + $0x450] sm:$0xff]
        %v9263 = vld [vmem:[#allocation14 + $0x458] sm:$0xff]
        %v9264 = vld [vmem:[#allocation14 + $0x460] sm:$0xff]
        %v9265 = vld [vmem:[#allocation14 + $0x468] sm:$0xff]
        %v9266 = vld [vmem:[#allocation14 + $0x470] sm:$0xff]
        %v9267 = vld [vmem:[#allocation14 + $0x478] sm:$0xff]
        %v9268 = vld [vmem:[#allocation14 + $0x480] sm:$0xff]
        %v9269 = vld [vmem:[#allocation14 + $0x488] sm:$0xff]
        %v9270 = vld [vmem:[#allocation14 + $0x490] sm:$0xff]
        %v9271 = vld [vmem:[#allocation14 + $0x498] sm:$0xff]
        %v9272 = vld [vmem:[#allocation14 + $0x4a0] sm:$0xff]
        %v9273 = vld [vmem:[#allocation14 + $0x4a8] sm:$0xff]
        %v9274 = vld [vmem:[#allocation14 + $0x4b0] sm:$0xff]
        %v9275 = vld [vmem:[#allocation14 + $0x4b8] sm:$0xff]
        %v9276 = vld [vmem:[#allocation14 + $0x4c0] sm:$0xff]
        %v9277 = vld [vmem:[#allocation14 + $0x4c8] sm:$0xff]
        %v9278 = vld [vmem:[#allocation14 + $0x4d0] sm:$0xff]
        %v9279 = vld [vmem:[#allocation14 + $0x4d8] sm:$0xff]
        %v9280 = vld [vmem:[#allocation14 + $0x4e0] sm:$0xff]
        %v9281 = vld [vmem:[#allocation14 + $0x4e8] sm:$0xff]
        %v9282 = vld [vmem:[#allocation14 + $0x4f0] sm:$0xff]
        %v9283 = vld [vmem:[#allocation14 + $0x4f8] sm:$0xff]
        %v9284 = vld [vmem:[#allocation14 + $0x500] sm:$0xff]
        %v9285 = vld [vmem:[#allocation14 + $0x508] sm:$0xff]
        %v9286 = vld [vmem:[#allocation14 + $0x510] sm:$0xff]
        %v9287 = vld [vmem:[#allocation14 + $0x518] sm:$0xff]
        %v9288 = vld [vmem:[#allocation14 + $0x520] sm:$0xff]
        %v9289 = vld [vmem:[#allocation14 + $0x528] sm:$0xff]
        %v9290 = vld [vmem:[#allocation14 + $0x530] sm:$0xff]
        %v9291 = vld [vmem:[#allocation14 + $0x538] sm:$0xff]
        %v9292 = vld [vmem:[#allocation14 + $0x540] sm:$0xff]
        %v9293 = vld [vmem:[#allocation14 + $0x548] sm:$0xff]
        %v9294 = vld [vmem:[#allocation14 + $0x550] sm:$0xff]
        %v9295 = vld [vmem:[#allocation14 + $0x558] sm:$0xff]
        %v9296 = vld [vmem:[#allocation14 + $0x560] sm:$0xff]
        %v9297 = vld [vmem:[#allocation14 + $0x568] sm:$0xff]
        %v9298 = vld [vmem:[#allocation14 + $0x570] sm:$0xff]
        %v9299 = vld [vmem:[#allocation14 + $0x578] sm:$0xff]
        %v9300 = vld [vmem:[#allocation14 + $0x580] sm:$0xff]
        %v9301 = vld [vmem:[#allocation14 + $0x588] sm:$0xff]
        %v9302 = vld [vmem:[#allocation14 + $0x590] sm:$0xff]
        %v9303 = vld [vmem:[#allocation14 + $0x598] sm:$0xff]
        %v9304 = vld [vmem:[#allocation14 + $0x5a0] sm:$0xff]
        %v9305 = vld [vmem:[#allocation14 + $0x5a8] sm:$0xff]
        %v9306 = vld [vmem:[#allocation14 + $0x5b0] sm:$0xff]
        %v9307 = vld [vmem:[#allocation14 + $0x5b8] sm:$0xff]
        %v9308 = vld [vmem:[#allocation14 + $0x5c0] sm:$0xff]
        %v9309 = vld [vmem:[#allocation14 + $0x5c8] sm:$0xff]
        %v9310 = vld [vmem:[#allocation14 + $0x5d0] sm:$0xff]
        %v9311 = vld [vmem:[#allocation14 + $0x5d8] sm:$0xff]
        %v9312 = vld [vmem:[#allocation14 + $0x5e0] sm:$0xff]
        %v9313 = vld [vmem:[#allocation14 + $0x5e8] sm:$0xff]
        %v9314 = vld [vmem:[#allocation14 + $0x5f0] sm:$0xff]
        %v9315 = vld [vmem:[#allocation14 + $0x5f8] sm:$0xff]
        %v9316 = vld [vmem:[#allocation14 + $0x600] sm:$0xff]
        %v9317 = vld [vmem:[#allocation14 + $0x608] sm:$0xff]
        %v9318 = vld [vmem:[#allocation14 + $0x610] sm:$0xff]
        %v9319 = vld [vmem:[#allocation14 + $0x618] sm:$0xff]
        %v9320 = vld [vmem:[#allocation14 + $0x620] sm:$0xff]
        %v9321 = vld [vmem:[#allocation14 + $0x628] sm:$0xff]
        %v9322 = vld [vmem:[#allocation14 + $0x630] sm:$0xff]
        %v9323 = vld [vmem:[#allocation14 + $0x638] sm:$0xff]
        %v9324 = vld [vmem:[#allocation14 + $0x640] sm:$0xff]
        %v9325 = vld [vmem:[#allocation14 + $0x648] sm:$0xff]
        %v9326 = vld [vmem:[#allocation14 + $0x650] sm:$0xff]
        %v9327 = vld [vmem:[#allocation14 + $0x658] sm:$0xff]
        %v9328 = vld [vmem:[#allocation14 + $0x660] sm:$0xff]
        %v9329 = vld [vmem:[#allocation14 + $0x668] sm:$0xff]
        %v9330 = vld [vmem:[#allocation14 + $0x670] sm:$0xff]
        %v9331 = vld [vmem:[#allocation14 + $0x678] sm:$0xff]
        %v9332 = vld [vmem:[#allocation14 + $0x680] sm:$0xff]
        %v9333 = vld [vmem:[#allocation14 + $0x688] sm:$0xff]
        %v9334 = vld [vmem:[#allocation14 + $0x690] sm:$0xff]
        %v9335 = vld [vmem:[#allocation14 + $0x698] sm:$0xff]
        %v9336 = vld [vmem:[#allocation14 + $0x6a0] sm:$0xff]
        %v9337 = vld [vmem:[#allocation14 + $0x6a8] sm:$0xff]
        %v9338 = vld [vmem:[#allocation14 + $0x6b0] sm:$0xff]
        %v9339 = vld [vmem:[#allocation14 + $0x6b8] sm:$0xff]
        %v9340 = vld [vmem:[#allocation14 + $0x6c0] sm:$0xff]
        %v9341 = vld [vmem:[#allocation14 + $0x6c8] sm:$0xff]
        %v9342 = vld [vmem:[#allocation14 + $0x6d0] sm:$0xff]
        %v9343 = vld [vmem:[#allocation14 + $0x6d8] sm:$0xff]
        %v9344 = vld [vmem:[#allocation14 + $0x6e0] sm:$0xff]
        %v9345 = vld [vmem:[#allocation14 + $0x6e8] sm:$0xff]
        %v9346 = vld [vmem:[#allocation14 + $0x6f0] sm:$0xff]
        %v9347 = vld [vmem:[#allocation14 + $0x6f8] sm:$0xff]
        %v9348 = vld [vmem:[#allocation14 + $0x700] sm:$0xff]
        %v9349 = vld [vmem:[#allocation14 + $0x708] sm:$0xff]
        %v9350 = vld [vmem:[#allocation14 + $0x710] sm:$0xff]
        %v9351 = vld [vmem:[#allocation14 + $0x718] sm:$0xff]
        %v9352 = vld [vmem:[#allocation14 + $0x720] sm:$0xff]
        %v9353 = vld [vmem:[#allocation14 + $0x728] sm:$0xff]
        %v9354 = vld [vmem:[#allocation14 + $0x730] sm:$0xff]
        %v9355 = vld [vmem:[#allocation14 + $0x738] sm:$0xff]
        %v9356 = vld [vmem:[#allocation14 + $0x740] sm:$0xff]
        %v9357 = vld [vmem:[#allocation14 + $0x748] sm:$0xff]
        %v9358 = vld [vmem:[#allocation14 + $0x750] sm:$0xff]
        %v9359 = vld [vmem:[#allocation14 + $0x758] sm:$0xff]
        %v9360 = vld [vmem:[#allocation14 + $0x760] sm:$0xff]
        %v9361 = vld [vmem:[#allocation14 + $0x768] sm:$0xff]
        %v9362 = vld [vmem:[#allocation14 + $0x770] sm:$0xff]
        %v9363 = vld [vmem:[#allocation14 + $0x778] sm:$0xff]
        %v9364 = vld [vmem:[#allocation14 + $0x780] sm:$0xff]
        %v9365 = vld [vmem:[#allocation14 + $0x788] sm:$0xff]
        %v9366 = vld [vmem:[#allocation14 + $0x790] sm:$0xff]
        %v9367 = vld [vmem:[#allocation14 + $0x798] sm:$0xff]
        %v9368 = vld [vmem:[#allocation14 + $0x7a0] sm:$0xff]
        %v9369 = vld [vmem:[#allocation14 + $0x7a8] sm:$0xff]
        %v9370 = vld [vmem:[#allocation14 + $0x7b0] sm:$0xff]
        %v9371 = vld [vmem:[#allocation14 + $0x7b8] sm:$0xff]
        %v9372 = vld [vmem:[#allocation14 + $0x7c0] sm:$0xff]
        %v9373 = vld [vmem:[#allocation14 + $0x7c8] sm:$0xff]
        %v9374 = vld [vmem:[#allocation14 + $0x7d0] sm:$0xff]
        %v9375 = vld [vmem:[#allocation14 + $0x7d8] sm:$0xff]
        %v9376 = vld [vmem:[#allocation14 + $0x7e0] sm:$0xff]
        %v9377 = vld [vmem:[#allocation14 + $0x7e8] sm:$0xff]
        %v9378 = vld [vmem:[#allocation14 + $0x7f0] sm:$0xff]
        %v9379 = vld [vmem:[#allocation14 + $0x7f8] sm:$0xff]
        %v9380 = vld [vmem:[#allocation14 + $0x800] sm:$0xff]
        %v9381 = vld [vmem:[#allocation14 + $0x808] sm:$0xff]
        %v9382 = vld [vmem:[#allocation14 + $0x810] sm:$0xff]
        %v9383 = vld [vmem:[#allocation14 + $0x818] sm:$0xff]
        %v9384 = vld [vmem:[#allocation14 + $0x820] sm:$0xff]
        %v9385 = vld [vmem:[#allocation14 + $0x828] sm:$0xff]
        %v9386 = vld [vmem:[#allocation14 + $0x830] sm:$0xff]
        %v9387 = vld [vmem:[#allocation14 + $0x838] sm:$0xff]
        %v9388 = vld [vmem:[#allocation14 + $0x840] sm:$0xff]
        %v9389 = vld [vmem:[#allocation14 + $0x848] sm:$0xff]
        %v9390 = vld [vmem:[#allocation14 + $0x850] sm:$0xff]
        %v9391 = vld [vmem:[#allocation14 + $0x858] sm:$0xff]
        %v9392 = vld [vmem:[#allocation14 + $0x860] sm:$0xff]
        %v9393 = vld [vmem:[#allocation14 + $0x868] sm:$0xff]
        %v9394 = vld [vmem:[#allocation14 + $0x870] sm:$0xff]
        %v9395 = vld [vmem:[#allocation14 + $0x878] sm:$0xff]
        %v9396 = vld [vmem:[#allocation14 + $0x880] sm:$0xff]
        %v9397 = vld [vmem:[#allocation14 + $0x888] sm:$0xff]
        %v9398 = vld [vmem:[#allocation14 + $0x890] sm:$0xff]
        %v9399 = vld [vmem:[#allocation14 + $0x898] sm:$0xff]
        %v9400 = vld [vmem:[#allocation14 + $0x8a0] sm:$0xff]
        %v9401 = vld [vmem:[#allocation14 + $0x8a8] sm:$0xff]
        %v9402 = vld [vmem:[#allocation14 + $0x8b0] sm:$0xff]
        %v9403 = vld [vmem:[#allocation14 + $0x8b8] sm:$0xff]
        %v9404 = vld [vmem:[#allocation14 + $0x8c0] sm:$0xff]
        %v9405 = vld [vmem:[#allocation14 + $0x8c8] sm:$0xff]
        %v9406 = vld [vmem:[#allocation14 + $0x8d0] sm:$0xff]
        %v9407 = vld [vmem:[#allocation14 + $0x8d8] sm:$0xff]
        %v9408 = vld [vmem:[#allocation14 + $0x8e0] sm:$0xff]
        %v9409 = vld [vmem:[#allocation14 + $0x8e8] sm:$0xff]
        %v9410 = vld [vmem:[#allocation14 + $0x8f0] sm:$0xff]
        %v9411 = vld [vmem:[#allocation14 + $0x8f8] sm:$0xff]
        %v9412 = vld [vmem:[#allocation14 + $0x900] sm:$0xff]
        %v9413 = vld [vmem:[#allocation14 + $0x908] sm:$0xff]
        %v9414 = vld [vmem:[#allocation14 + $0x910] sm:$0xff]
        %v9415 = vld [vmem:[#allocation14 + $0x918] sm:$0xff]
        %v9416 = vld [vmem:[#allocation14 + $0x920] sm:$0xff]
        %v9417 = vld [vmem:[#allocation14 + $0x928] sm:$0xff]
        %v9418 = vld [vmem:[#allocation14 + $0x930] sm:$0xff]
        %v9419 = vld [vmem:[#allocation14 + $0x938] sm:$0xff]
        %v9420 = vld [vmem:[#allocation14 + $0x940] sm:$0xff]
        %v9421 = vld [vmem:[#allocation14 + $0x948] sm:$0xff]
        %v9422 = vld [vmem:[#allocation14 + $0x950] sm:$0xff]
        %v9423 = vld [vmem:[#allocation14 + $0x958] sm:$0xff]
        %v9424 = vld [vmem:[#allocation14 + $0x960] sm:$0xff]
        %v9425 = vld [vmem:[#allocation14 + $0x968] sm:$0xff]
        %v9426 = vld [vmem:[#allocation14 + $0x970] sm:$0xff]
        %v9427 = vld [vmem:[#allocation14 + $0x978] sm:$0xff]
        %v9428 = vld [vmem:[#allocation14 + $0x980] sm:$0xff]
        %v9429 = vld [vmem:[#allocation14 + $0x988] sm:$0xff]
        %v9430 = vld [vmem:[#allocation14 + $0x990] sm:$0xff]
        %v9431 = vld [vmem:[#allocation14 + $0x998] sm:$0xff]
        %v9432 = vld [vmem:[#allocation14 + $0x9a0] sm:$0xff]
        %v9433 = vld [vmem:[#allocation14 + $0x9a8] sm:$0xff]
        %v9434 = vld [vmem:[#allocation14 + $0x9b0] sm:$0xff]
        %v9435 = vld [vmem:[#allocation14 + $0x9b8] sm:$0xff]
        %v9436 = vld [vmem:[#allocation14 + $0x9c0] sm:$0xff]
        %v9437 = vld [vmem:[#allocation14 + $0x9c8] sm:$0xff]
        %v9438 = vld [vmem:[#allocation14 + $0x9d0] sm:$0xff]
        %v9439 = vld [vmem:[#allocation14 + $0x9d8] sm:$0xff]
        %v9440 = vld [vmem:[#allocation14 + $0x9e0] sm:$0xff]
        %v9441 = vld [vmem:[#allocation14 + $0x9e8] sm:$0xff]
        %v9442 = vld [vmem:[#allocation14 + $0x9f0] sm:$0xff]
        %v9443 = vld [vmem:[#allocation14 + $0x9f8] sm:$0xff]
        %v9444 = vld [vmem:[#allocation14 + $0xa00] sm:$0xff]
        %v9445 = vld [vmem:[#allocation14 + $0xa08] sm:$0xff]
        %v9446 = vld [vmem:[#allocation14 + $0xa10] sm:$0xff]
        %v9447 = vld [vmem:[#allocation14 + $0xa18] sm:$0xff]
        %v9448 = vld [vmem:[#allocation14 + $0xa20] sm:$0xff]
        %v9449 = vld [vmem:[#allocation14 + $0xa28] sm:$0xff]
        %v9450 = vld [vmem:[#allocation14 + $0xa30] sm:$0xff]
        %v9451 = vld [vmem:[#allocation14 + $0xa38] sm:$0xff]
        %v9452 = vld [vmem:[#allocation14 + $0xa40] sm:$0xff]
        %v9453 = vld [vmem:[#allocation14 + $0xa48] sm:$0xff]
        %v9454 = vld [vmem:[#allocation14 + $0xa50] sm:$0xff]
        %v9455 = vld [vmem:[#allocation14 + $0xa58] sm:$0xff]
        %v9456 = vld [vmem:[#allocation14 + $0xa60] sm:$0xff]
        %v9457 = vld [vmem:[#allocation14 + $0xa68] sm:$0xff]
        %v9458 = vld [vmem:[#allocation14 + $0xa70] sm:$0xff]
        %v9459 = vld [vmem:[#allocation14 + $0xa78] sm:$0xff]
        %v9460 = vld [vmem:[#allocation14 + $0xa80] sm:$0xff]
        %v9461 = vld [vmem:[#allocation14 + $0xa88] sm:$0xff]
        %v9462 = vld [vmem:[#allocation14 + $0xa90] sm:$0xff]
        %v9463 = vld [vmem:[#allocation14 + $0xa98] sm:$0xff]
        %v9464 = vld [vmem:[#allocation14 + $0xaa0] sm:$0xff]
        %v9465 = vld [vmem:[#allocation14 + $0xaa8] sm:$0xff]
        %v9466 = vld [vmem:[#allocation14 + $0xab0] sm:$0xff]
        %v9467 = vld [vmem:[#allocation14 + $0xab8] sm:$0xff]
        %v9468 = vld [vmem:[#allocation14 + $0xac0] sm:$0xff]
        %v9469 = vld [vmem:[#allocation14 + $0xac8] sm:$0xff]
        %v9470 = vld [vmem:[#allocation14 + $0xad0] sm:$0xff]
        %v9471 = vld [vmem:[#allocation14 + $0xad8] sm:$0xff]
        %v9472 = vld [vmem:[#allocation14 + $0xae0] sm:$0xff]
        %v9473 = vld [vmem:[#allocation14 + $0xae8] sm:$0xff]
        %v9474 = vld [vmem:[#allocation14 + $0xaf0] sm:$0xff]
        %v9475 = vld [vmem:[#allocation14 + $0xaf8] sm:$0xff]
        %v9476 = vld [vmem:[#allocation14 + $0xb00] sm:$0xff]
        %v9477 = vld [vmem:[#allocation14 + $0xb08] sm:$0xff]
        %v9478 = vld [vmem:[#allocation14 + $0xb10] sm:$0xff]
        %v9479 = vld [vmem:[#allocation14 + $0xb18] sm:$0xff]
        %v9480 = vld [vmem:[#allocation14 + $0xb20] sm:$0xff]
        %v9481 = vld [vmem:[#allocation14 + $0xb28] sm:$0xff]
        %v9482 = vld [vmem:[#allocation14 + $0xb30] sm:$0xff]
        %v9483 = vld [vmem:[#allocation14 + $0xb38] sm:$0xff]
        %v9484 = vld [vmem:[#allocation14 + $0xb40] sm:$0xff]
        %v9485 = vld [vmem:[#allocation14 + $0xb48] sm:$0xff]
        %v9486 = vld [vmem:[#allocation14 + $0xb50] sm:$0xff]
        %v9487 = vld [vmem:[#allocation14 + $0xb58] sm:$0xff]
        %v9488 = vld [vmem:[#allocation14 + $0xb60] sm:$0xff]
        %v9489 = vld [vmem:[#allocation14 + $0xb68] sm:$0xff]
        %v9490 = vld [vmem:[#allocation14 + $0xb70] sm:$0xff]
        %v9491 = vld [vmem:[#allocation14 + $0xb78] sm:$0xff]
        %v9492 = vld [vmem:[#allocation14 + $0xb80] sm:$0xff]
        %v9493 = vld [vmem:[#allocation14 + $0xb88] sm:$0xff]
        %v9494 = vld [vmem:[#allocation14 + $0xb90] sm:$0xff]
        %v9495 = vld [vmem:[#allocation14 + $0xb98] sm:$0xff]
        %v9496 = vld [vmem:[#allocation14 + $0xba0] sm:$0xff]
        %v9497 = vld [vmem:[#allocation14 + $0xba8] sm:$0xff]
        %v9498 = vld [vmem:[#allocation14 + $0xbb0] sm:$0xff]
        %v9499 = vld [vmem:[#allocation14 + $0xbb8] sm:$0xff]
        %v9500 = vld [vmem:[#allocation14 + $0xbc0] sm:$0xff]
        %v9501 = vld [vmem:[#allocation14 + $0xbc8] sm:$0xff]
        %v9502 = vld [vmem:[#allocation14 + $0xbd0] sm:$0xff]
        %v9503 = vld [vmem:[#allocation14 + $0xbd8] sm:$0xff]
        %v9504 = vld [vmem:[#allocation14 + $0xbe0] sm:$0xff]
        %v9505 = vld [vmem:[#allocation14 + $0xbe8] sm:$0xff]
        %v9506 = vld [vmem:[#allocation14 + $0xbf0] sm:$0xff]
        %v9507 = vld [vmem:[#allocation14 + $0xbf8] sm:$0xff]
        %v9508 = vld [vmem:[#allocation14 + $0xc00] sm:$0xff]
        %v9509 = vld [vmem:[#allocation14 + $0xc08] sm:$0xff]
        %v9510 = vld [vmem:[#allocation14 + $0xc10] sm:$0xff]
        %v9511 = vld [vmem:[#allocation14 + $0xc18] sm:$0xff]
        %v9512 = vld [vmem:[#allocation14 + $0xc20] sm:$0xff]
        %v9513 = vld [vmem:[#allocation14 + $0xc28] sm:$0xff]
        %v9514 = vld [vmem:[#allocation14 + $0xc30] sm:$0xff]
        %v9515 = vld [vmem:[#allocation14 + $0xc38] sm:$0xff]
        %v9516 = vld [vmem:[#allocation14 + $0xc40] sm:$0xff]
        %v9517 = vld [vmem:[#allocation14 + $0xc48] sm:$0xff]
        %v9518 = vld [vmem:[#allocation14 + $0xc50] sm:$0xff]
        %v9519 = vld [vmem:[#allocation14 + $0xc58] sm:$0xff]
        %v9520 = vld [vmem:[#allocation14 + $0xc60] sm:$0xff]
        %v9521 = vld [vmem:[#allocation14 + $0xc68] sm:$0xff]
        %v9522 = vld [vmem:[#allocation14 + $0xc70] sm:$0xff]
        %v9523 = vld [vmem:[#allocation14 + $0xc78] sm:$0xff]
        %v9524 = vld [vmem:[#allocation14 + $0xc80] sm:$0xff]
        %v9525 = vld [vmem:[#allocation14 + $0xc88] sm:$0xff]
        %v9526 = vld [vmem:[#allocation14 + $0xc90] sm:$0xff]
        %v9527 = vld [vmem:[#allocation14 + $0xc98] sm:$0xff]
        %v9528 = vld [vmem:[#allocation14 + $0xca0] sm:$0xff]
        %v9529 = vld [vmem:[#allocation14 + $0xca8] sm:$0xff]
        %v9530 = vld [vmem:[#allocation14 + $0xcb0] sm:$0xff]
        %v9531 = vld [vmem:[#allocation14 + $0xcb8] sm:$0xff]
        %v9532 = vld [vmem:[#allocation14 + $0xcc0] sm:$0xff]
        %v9533 = vld [vmem:[#allocation14 + $0xcc8] sm:$0xff]
        %v9534 = vld [vmem:[#allocation14 + $0xcd0] sm:$0xff]
        %v9535 = vld [vmem:[#allocation14 + $0xcd8] sm:$0xff]
        %v9536 = vld [vmem:[#allocation14 + $0xce0] sm:$0xff]
        %v9537 = vld [vmem:[#allocation14 + $0xce8] sm:$0xff]
        %v9538 = vld [vmem:[#allocation14 + $0xcf0] sm:$0xff]
        %v9539 = vld [vmem:[#allocation14 + $0xcf8] sm:$0xff]
        %v9540 = vld [vmem:[#allocation14 + $0xd00] sm:$0xff]
        %v9541 = vld [vmem:[#allocation14 + $0xd08] sm:$0xff]
        %v9542 = vld [vmem:[#allocation14 + $0xd10] sm:$0xff]
        %v9543 = vld [vmem:[#allocation14 + $0xd18] sm:$0xff]
        %v9544 = vld [vmem:[#allocation14 + $0xd20] sm:$0xff]
        %v9545 = vld [vmem:[#allocation14 + $0xd28] sm:$0xff]
        %v9546 = vld [vmem:[#allocation14 + $0xd30] sm:$0xff]
        %v9547 = vld [vmem:[#allocation14 + $0xd38] sm:$0xff]
        %v9548 = vld [vmem:[#allocation14 + $0xd40] sm:$0xff]
        %v9549 = vld [vmem:[#allocation14 + $0xd48] sm:$0xff]
        %v9550 = vld [vmem:[#allocation14 + $0xd50] sm:$0xff]
        %v9551 = vld [vmem:[#allocation14 + $0xd58] sm:$0xff]
        %v9552 = vld [vmem:[#allocation14 + $0xd60] sm:$0xff]
        %v9553 = vld [vmem:[#allocation14 + $0xd68] sm:$0xff]
        %v9554 = vld [vmem:[#allocation14 + $0xd70] sm:$0xff]
        %v9555 = vld [vmem:[#allocation14 + $0xd78] sm:$0xff]
        %v9556 = vld [vmem:[#allocation14 + $0xd80] sm:$0xff]
        %v9557 = vld [vmem:[#allocation14 + $0xd88] sm:$0xff]
        %v9558 = vld [vmem:[#allocation14 + $0xd90] sm:$0xff]
        %v9559 = vld [vmem:[#allocation14 + $0xd98] sm:$0xff]
        %v9560 = vld [vmem:[#allocation14 + $0xda0] sm:$0xff]
        %v9561 = vld [vmem:[#allocation14 + $0xda8] sm:$0xff]
        %v9562 = vld [vmem:[#allocation14 + $0xdb0] sm:$0xff]
        %v9563 = vld [vmem:[#allocation14 + $0xdb8] sm:$0xff]
        %v9564 = vld [vmem:[#allocation14 + $0xdc0] sm:$0xff]
        %v9565 = vld [vmem:[#allocation14 + $0xdc8] sm:$0xff]
        %v9566 = vld [vmem:[#allocation14 + $0xdd0] sm:$0xff]
        %v9567 = vld [vmem:[#allocation14 + $0xdd8] sm:$0xff]
        %v9568 = vld [vmem:[#allocation14 + $0xde0] sm:$0xff]
        %v9569 = vld [vmem:[#allocation14 + $0xde8] sm:$0xff]
        %v9570 = vld [vmem:[#allocation14 + $0xdf0] sm:$0xff]
        %v9571 = vld [vmem:[#allocation14 + $0xdf8] sm:$0xff]
        %v9572 = vld [vmem:[#allocation14 + $0xe00] sm:$0xff]
        %v9573 = vld [vmem:[#allocation14 + $0xe08] sm:$0xff]
        %v9574 = vld [vmem:[#allocation14 + $0xe10] sm:$0xff]
        %v9575 = vld [vmem:[#allocation14 + $0xe18] sm:$0xff]
        %v9576 = vld [vmem:[#allocation14 + $0xe20] sm:$0xff]
        %v9577 = vld [vmem:[#allocation14 + $0xe28] sm:$0xff]
        %v9578 = vld [vmem:[#allocation14 + $0xe30] sm:$0xff]
        %v9579 = vld [vmem:[#allocation14 + $0xe38] sm:$0xff]
        %v9580 = vld [vmem:[#allocation14 + $0xe40] sm:$0xff]
        %v9581 = vld [vmem:[#allocation14 + $0xe48] sm:$0xff]
        %v9582 = vld [vmem:[#allocation14 + $0xe50] sm:$0xff]
        %v9583 = vld [vmem:[#allocation14 + $0xe58] sm:$0xff]
        %v9584 = vld [vmem:[#allocation14 + $0xe60] sm:$0xff]
        %v9585 = vld [vmem:[#allocation14 + $0xe68] sm:$0xff]
        %v9586 = vld [vmem:[#allocation14 + $0xe70] sm:$0xff]
        %v9587 = vld [vmem:[#allocation14 + $0xe78] sm:$0xff]
        %v9588 = vld [vmem:[#allocation14 + $0xe80] sm:$0xff]
        %v9589 = vld [vmem:[#allocation14 + $0xe88] sm:$0xff]
        %v9590 = vld [vmem:[#allocation14 + $0xe90] sm:$0xff]
        %v9591 = vld [vmem:[#allocation14 + $0xe98] sm:$0xff]
        %v9592 = vld [vmem:[#allocation14 + $0xea0] sm:$0xff]
        %v9593 = vld [vmem:[#allocation14 + $0xea8] sm:$0xff]
        %v9594 = vld [vmem:[#allocation14 + $0xeb0] sm:$0xff]
        %v9595 = vld [vmem:[#allocation14 + $0xeb8] sm:$0xff]
        %v9596 = vld [vmem:[#allocation14 + $0xec0] sm:$0xff]
        %v9597 = vld [vmem:[#allocation14 + $0xec8] sm:$0xff]
        %v9598 = vld [vmem:[#allocation14 + $0xed0] sm:$0xff]
        %v9599 = vld [vmem:[#allocation14 + $0xed8] sm:$0xff]
        %v9600 = vld [vmem:[#allocation14 + $0xee0] sm:$0xff]
        %v9601 = vld [vmem:[#allocation14 + $0xee8] sm:$0xff]
        %v9602 = vld [vmem:[#allocation14 + $0xef0] sm:$0xff]
        %v9603 = vld [vmem:[#allocation14 + $0xef8] sm:$0xff]
        %v9604 = vld [vmem:[#allocation14 + $0xf00] sm:$0xff]
        %v9605 = vld [vmem:[#allocation14 + $0xf08] sm:$0xff]
        %v9606 = vld [vmem:[#allocation14 + $0xf10] sm:$0xff]
        %v9607 = vld [vmem:[#allocation14 + $0xf18] sm:$0xff]
        %v9608 = vld [vmem:[#allocation14 + $0xf20] sm:$0xff]
        %v9609 = vld [vmem:[#allocation14 + $0xf28] sm:$0xff]
        %v9610 = vld [vmem:[#allocation14 + $0xf30] sm:$0xff]
        %v9611 = vld [vmem:[#allocation14 + $0xf38] sm:$0xff]
        %v9612 = vld [vmem:[#allocation14 + $0xf40] sm:$0xff]
        %v9613 = vld [vmem:[#allocation14 + $0xf48] sm:$0xff]
        %v9614 = vld [vmem:[#allocation14 + $0xf50] sm:$0xff]
        %v9615 = vld [vmem:[#allocation14 + $0xf58] sm:$0xff]
        %v9616 = vld [vmem:[#allocation14 + $0xf60] sm:$0xff]
        %v9617 = vld [vmem:[#allocation14 + $0xf68] sm:$0xff]
        %v9618 = vld [vmem:[#allocation14 + $0xf70] sm:$0xff]
        %v9619 = vld [vmem:[#allocation14 + $0xf78] sm:$0xff]
        %v9620 = vld [vmem:[#allocation14 + $0xf80] sm:$0xff]
        %v9621 = vld [vmem:[#allocation14 + $0xf88] sm:$0xff]
        %v9622 = vld [vmem:[#allocation14 + $0xf90] sm:$0xff]
        %v9623 = vld [vmem:[#allocation14 + $0xf98] sm:$0xff]
        %v9624 = vld [vmem:[#allocation14 + $0xfa0] sm:$0xff]
        %v9625 = vld [vmem:[#allocation14 + $0xfa8] sm:$0xff]
        %v9626 = vld [vmem:[#allocation14 + $0xfb0] sm:$0xff]
        %v9627 = vld [vmem:[#allocation14 + $0xfb8] sm:$0xff]
        %v9628 = vld [vmem:[#allocation14 + $0xfc0] sm:$0xff]
        %v9629 = vld [vmem:[#allocation14 + $0xfc8] sm:$0xff]
        %v9630 = vld [vmem:[#allocation14 + $0xfd0] sm:$0xff]
        %v9631 = vld [vmem:[#allocation14 + $0xfd8] sm:$0xff]
        %v9632 = vld [vmem:[#allocation14 + $0xfe0] sm:$0xff]
        %v9633 = vld [vmem:[#allocation14 + $0xfe8] sm:$0xff]
        %v9634 = vld [vmem:[#allocation14 + $0xff0] sm:$0xff]
        %v9635 = vld [vmem:[#allocation14 + $0xff8] sm:$0xff]
        %v9636 = vld [vmem:[#allocation16] sm:$0xf]
        %v9638 = vlaneseq
        %v9639 = vshrl.u32 %v9638, 7
        %v9640 = vsub.s32 0, %v9639
        %v9641 = vrot.slane %v9636, %v9640
        %v9642 = vlaneseq
        %v9643 = vshrl.u32 %v9642, 7
        %v9644 = vsub.s32 1, %v9643
        %v9645 = vrot.slane %v9636, %v9644
        %v9646 = vlaneseq
        %v9647 = vshrl.u32 %v9646, 7
        %v9648 = vsub.s32 2, %v9647
        %v9649 = vrot.slane %v9636, %v9648
        %v9650 = vlaneseq
        %v9651 = vshrl.u32 %v9650, 7
        %v9652 = vsub.s32 3, %v9651
        %v9653 = vrot.slane %v9636, %v9652
        %v10170 = vunpack.c.l.b16 %v9124
        %v10171 = vunpack.c.h.b16 %v9124
        %v10172 = vunpack.c.l.b16 %v9125
        %v10173 = vunpack.c.h.b16 %v9125
        %v10174 = vunpack.c.l.b16 %v9126
        %v10175 = vunpack.c.h.b16 %v9126
        %v10176 = vunpack.c.l.b16 %v9127
        %v10177 = vunpack.c.h.b16 %v9127
        %v10178 = vunpack.c.l.b16 %v9128
        %v10179 = vunpack.c.h.b16 %v9128
        %v10180 = vunpack.c.l.b16 %v9129
        %v10181 = vunpack.c.h.b16 %v9129
        %v10182 = vunpack.c.l.b16 %v9130
        %v10183 = vunpack.c.h.b16 %v9130
        %v10184 = vunpack.c.l.b16 %v9131
        %v10185 = vunpack.c.h.b16 %v9131
        %v10186 = vunpack.c.l.b16 %v9132
        %v10187 = vunpack.c.h.b16 %v9132
        %v10188 = vunpack.c.l.b16 %v9133
        %v10189 = vunpack.c.h.b16 %v9133
        %v10190 = vunpack.c.l.b16 %v9134
        %v10191 = vunpack.c.h.b16 %v9134
        %v10192 = vunpack.c.l.b16 %v9135
        %v10193 = vunpack.c.h.b16 %v9135
        %v10194 = vunpack.c.l.b16 %v9136
        %v10195 = vunpack.c.h.b16 %v9136
        %v10196 = vunpack.c.l.b16 %v9137
        %v10197 = vunpack.c.h.b16 %v9137
        %v10198 = vunpack.c.l.b16 %v9138
        %v10199 = vunpack.c.h.b16 %v9138
        %v10200 = vunpack.c.l.b16 %v9139
        %v10201 = vunpack.c.h.b16 %v9139
        %v10202 = vunpack.c.l.b16 %v9140
        %v10203 = vunpack.c.h.b16 %v9140
        %v10204 = vunpack.c.l.b16 %v9141
        %v10205 = vunpack.c.h.b16 %v9141
        %v10206 = vunpack.c.l.b16 %v9142
        %v10207 = vunpack.c.h.b16 %v9142
        %v10208 = vunpack.c.l.b16 %v9143
        %v10209 = vunpack.c.h.b16 %v9143
        %v10210 = vunpack.c.l.b16 %v9144
        %v10211 = vunpack.c.h.b16 %v9144
        %v10212 = vunpack.c.l.b16 %v9145
        %v10213 = vunpack.c.h.b16 %v9145
        %v10214 = vunpack.c.l.b16 %v9146
        %v10215 = vunpack.c.h.b16 %v9146
        %v10216 = vunpack.c.l.b16 %v9147
        %v10217 = vunpack.c.h.b16 %v9147
        %v10218 = vunpack.c.l.b16 %v9148
        %v10219 = vunpack.c.h.b16 %v9148
        %v10220 = vunpack.c.l.b16 %v9149
        %v10221 = vunpack.c.h.b16 %v9149
        %v10222 = vunpack.c.l.b16 %v9150
        %v10223 = vunpack.c.h.b16 %v9150
        %v10224 = vunpack.c.l.b16 %v9151
        %v10225 = vunpack.c.h.b16 %v9151
        %v10226 = vunpack.c.l.b16 %v9152
        %v10227 = vunpack.c.h.b16 %v9152
        %v10228 = vunpack.c.l.b16 %v9153
        %v10229 = vunpack.c.h.b16 %v9153
        %v10230 = vunpack.c.l.b16 %v9154
        %v10231 = vunpack.c.h.b16 %v9154
        %v10232 = vunpack.c.l.b16 %v9155
        %v10233 = vunpack.c.h.b16 %v9155
        %v10234 = vunpack.c.l.b16 %v9156
        %v10235 = vunpack.c.h.b16 %v9156
        %v10236 = vunpack.c.l.b16 %v9157
        %v10237 = vunpack.c.h.b16 %v9157
        %v10238 = vunpack.c.l.b16 %v9158
        %v10239 = vunpack.c.h.b16 %v9158
        %v10240 = vunpack.c.l.b16 %v9159
        %v10241 = vunpack.c.h.b16 %v9159
        %v10242 = vunpack.c.l.b16 %v9160
        %v10243 = vunpack.c.h.b16 %v9160
        %v10244 = vunpack.c.l.b16 %v9161
        %v10245 = vunpack.c.h.b16 %v9161
        %v10246 = vunpack.c.l.b16 %v9162
        %v10247 = vunpack.c.h.b16 %v9162
        %v10248 = vunpack.c.l.b16 %v9163
        %v10249 = vunpack.c.h.b16 %v9163
        %v10250 = vunpack.c.l.b16 %v9164
        %v10251 = vunpack.c.h.b16 %v9164
        %v10252 = vunpack.c.l.b16 %v9165
        %v10253 = vunpack.c.h.b16 %v9165
        %v10254 = vunpack.c.l.b16 %v9166
        %v10255 = vunpack.c.h.b16 %v9166
        %v10256 = vunpack.c.l.b16 %v9167
        %v10257 = vunpack.c.h.b16 %v9167
        %v10258 = vunpack.c.l.b16 %v9168
        %v10259 = vunpack.c.h.b16 %v9168
        %v10260 = vunpack.c.l.b16 %v9169
        %v10261 = vunpack.c.h.b16 %v9169
        %v10262 = vunpack.c.l.b16 %v9170
        %v10263 = vunpack.c.h.b16 %v9170
        %v10264 = vunpack.c.l.b16 %v9171
        %v10265 = vunpack.c.h.b16 %v9171
        %v10266 = vunpack.c.l.b16 %v9172
        %v10267 = vunpack.c.h.b16 %v9172
        %v10268 = vunpack.c.l.b16 %v9173
        %v10269 = vunpack.c.h.b16 %v9173
        %v10270 = vunpack.c.l.b16 %v9174
        %v10271 = vunpack.c.h.b16 %v9174
        %v10272 = vunpack.c.l.b16 %v9175
        %v10273 = vunpack.c.h.b16 %v9175
        %v10274 = vunpack.c.l.b16 %v9176
        %v10275 = vunpack.c.h.b16 %v9176
        %v10276 = vunpack.c.l.b16 %v9177
        %v10277 = vunpack.c.h.b16 %v9177
        %v10278 = vunpack.c.l.b16 %v9178
        %v10279 = vunpack.c.h.b16 %v9178
        %v10280 = vunpack.c.l.b16 %v9179
        %v10281 = vunpack.c.h.b16 %v9179
        %v10282 = vunpack.c.l.b16 %v9180
        %v10283 = vunpack.c.h.b16 %v9180
        %v10284 = vunpack.c.l.b16 %v9181
        %v10285 = vunpack.c.h.b16 %v9181
        %v10286 = vunpack.c.l.b16 %v9182
        %v10287 = vunpack.c.h.b16 %v9182
        %v10288 = vunpack.c.l.b16 %v9183
        %v10289 = vunpack.c.h.b16 %v9183
        %v10290 = vunpack.c.l.b16 %v9184
        %v10291 = vunpack.c.h.b16 %v9184
        %v10292 = vunpack.c.l.b16 %v9185
        %v10293 = vunpack.c.h.b16 %v9185
        %v10294 = vunpack.c.l.b16 %v9186
        %v10295 = vunpack.c.h.b16 %v9186
        %v10296 = vunpack.c.l.b16 %v9187
        %v10297 = vunpack.c.h.b16 %v9187
        %v10298 = vunpack.c.l.b16 %v9188
        %v10299 = vunpack.c.h.b16 %v9188
        %v10300 = vunpack.c.l.b16 %v9189
        %v10301 = vunpack.c.h.b16 %v9189
        %v10302 = vunpack.c.l.b16 %v9190
        %v10303 = vunpack.c.h.b16 %v9190
        %v10304 = vunpack.c.l.b16 %v9191
        %v10305 = vunpack.c.h.b16 %v9191
        %v10306 = vunpack.c.l.b16 %v9192
        %v10307 = vunpack.c.h.b16 %v9192
        %v10308 = vunpack.c.l.b16 %v9193
        %v10309 = vunpack.c.h.b16 %v9193
        %v10310 = vunpack.c.l.b16 %v9194
        %v10311 = vunpack.c.h.b16 %v9194
        %v10312 = vunpack.c.l.b16 %v9195
        %v10313 = vunpack.c.h.b16 %v9195
        %v10314 = vunpack.c.l.b16 %v9196
        %v10315 = vunpack.c.h.b16 %v9196
        %v10316 = vunpack.c.l.b16 %v9197
        %v10317 = vunpack.c.h.b16 %v9197
        %v10318 = vunpack.c.l.b16 %v9198
        %v10319 = vunpack.c.h.b16 %v9198
        %v10320 = vunpack.c.l.b16 %v9199
        %v10321 = vunpack.c.h.b16 %v9199
        %v10322 = vunpack.c.l.b16 %v9200
        %v10323 = vunpack.c.h.b16 %v9200
        %v10324 = vunpack.c.l.b16 %v9201
        %v10325 = vunpack.c.h.b16 %v9201
        %v10326 = vunpack.c.l.b16 %v9202
        %v10327 = vunpack.c.h.b16 %v9202
        %v10328 = vunpack.c.l.b16 %v9203
        %v10329 = vunpack.c.h.b16 %v9203
        %v10330 = vunpack.c.l.b16 %v9204
        %v10331 = vunpack.c.h.b16 %v9204
        %v10332 = vunpack.c.l.b16 %v9205
        %v10333 = vunpack.c.h.b16 %v9205
        %v10334 = vunpack.c.l.b16 %v9206
        %v10335 = vunpack.c.h.b16 %v9206
        %v10336 = vunpack.c.l.b16 %v9207
        %v10337 = vunpack.c.h.b16 %v9207
        %v10338 = vunpack.c.l.b16 %v9208
        %v10339 = vunpack.c.h.b16 %v9208
        %v10340 = vunpack.c.l.b16 %v9209
        %v10341 = vunpack.c.h.b16 %v9209
        %v10342 = vunpack.c.l.b16 %v9210
        %v10343 = vunpack.c.h.b16 %v9210
        %v10344 = vunpack.c.l.b16 %v9211
        %v10345 = vunpack.c.h.b16 %v9211
        %v10346 = vunpack.c.l.b16 %v9212
        %v10347 = vunpack.c.h.b16 %v9212
        %v10348 = vunpack.c.l.b16 %v9213
        %v10349 = vunpack.c.h.b16 %v9213
        %v10350 = vunpack.c.l.b16 %v9214
        %v10351 = vunpack.c.h.b16 %v9214
        %v10352 = vunpack.c.l.b16 %v9215
        %v10353 = vunpack.c.h.b16 %v9215
        %v10354 = vunpack.c.l.b16 %v9216
        %v10355 = vunpack.c.h.b16 %v9216
        %v10356 = vunpack.c.l.b16 %v9217
        %v10357 = vunpack.c.h.b16 %v9217
        %v10358 = vunpack.c.l.b16 %v9218
        %v10359 = vunpack.c.h.b16 %v9218
        %v10360 = vunpack.c.l.b16 %v9219
        %v10361 = vunpack.c.h.b16 %v9219
        %v10362 = vunpack.c.l.b16 %v9220
        %v10363 = vunpack.c.h.b16 %v9220
        %v10364 = vunpack.c.l.b16 %v9221
        %v10365 = vunpack.c.h.b16 %v9221
        %v10366 = vunpack.c.l.b16 %v9222
        %v10367 = vunpack.c.h.b16 %v9222
        %v10368 = vunpack.c.l.b16 %v9223
        %v10369 = vunpack.c.h.b16 %v9223
        %v10370 = vunpack.c.l.b16 %v9224
        %v10371 = vunpack.c.h.b16 %v9224
        %v10372 = vunpack.c.l.b16 %v9225
        %v10373 = vunpack.c.h.b16 %v9225
        %v10374 = vunpack.c.l.b16 %v9226
        %v10375 = vunpack.c.h.b16 %v9226
        %v10376 = vunpack.c.l.b16 %v9227
        %v10377 = vunpack.c.h.b16 %v9227
        %v10378 = vunpack.c.l.b16 %v9228
        %v10379 = vunpack.c.h.b16 %v9228
        %v10380 = vunpack.c.l.b16 %v9229
        %v10381 = vunpack.c.h.b16 %v9229
        %v10382 = vunpack.c.l.b16 %v9230
        %v10383 = vunpack.c.h.b16 %v9230
        %v10384 = vunpack.c.l.b16 %v9231
        %v10385 = vunpack.c.h.b16 %v9231
        %v10386 = vunpack.c.l.b16 %v9232
        %v10387 = vunpack.c.h.b16 %v9232
        %v10388 = vunpack.c.l.b16 %v9233
        %v10389 = vunpack.c.h.b16 %v9233
        %v10390 = vunpack.c.l.b16 %v9234
        %v10391 = vunpack.c.h.b16 %v9234
        %v10392 = vunpack.c.l.b16 %v9235
        %v10393 = vunpack.c.h.b16 %v9235
        %v10394 = vunpack.c.l.b16 %v9236
        %v10395 = vunpack.c.h.b16 %v9236
        %v10396 = vunpack.c.l.b16 %v9237
        %v10397 = vunpack.c.h.b16 %v9237
        %v10398 = vunpack.c.l.b16 %v9238
        %v10399 = vunpack.c.h.b16 %v9238
        %v10400 = vunpack.c.l.b16 %v9239
        %v10401 = vunpack.c.h.b16 %v9239
        %v10402 = vunpack.c.l.b16 %v9240
        %v10403 = vunpack.c.h.b16 %v9240
        %v10404 = vunpack.c.l.b16 %v9241
        %v10405 = vunpack.c.h.b16 %v9241
        %v10406 = vunpack.c.l.b16 %v9242
        %v10407 = vunpack.c.h.b16 %v9242
        %v10408 = vunpack.c.l.b16 %v9243
        %v10409 = vunpack.c.h.b16 %v9243
        %v10410 = vunpack.c.l.b16 %v9244
        %v10411 = vunpack.c.h.b16 %v9244
        %v10412 = vunpack.c.l.b16 %v9245
        %v10413 = vunpack.c.h.b16 %v9245
        %v10414 = vunpack.c.l.b16 %v9246
        %v10415 = vunpack.c.h.b16 %v9246
        %v10416 = vunpack.c.l.b16 %v9247
        %v10417 = vunpack.c.h.b16 %v9247
        %v10418 = vunpack.c.l.b16 %v9248
        %v10419 = vunpack.c.h.b16 %v9248
        %v10420 = vunpack.c.l.b16 %v9249
        %v10421 = vunpack.c.h.b16 %v9249
        %v10422 = vunpack.c.l.b16 %v9250
        %v10423 = vunpack.c.h.b16 %v9250
        %v10424 = vunpack.c.l.b16 %v9251
        %v10425 = vunpack.c.h.b16 %v9251
        %v10426 = vunpack.c.l.b16 %v9252
        %v10427 = vunpack.c.h.b16 %v9252
        %v10428 = vunpack.c.l.b16 %v9253
        %v10429 = vunpack.c.h.b16 %v9253
        %v10430 = vunpack.c.l.b16 %v9254
        %v10431 = vunpack.c.h.b16 %v9254
        %v10432 = vunpack.c.l.b16 %v9255
        %v10433 = vunpack.c.h.b16 %v9255
        %v10434 = vunpack.c.l.b16 %v9256
        %v10435 = vunpack.c.h.b16 %v9256
        %v10436 = vunpack.c.l.b16 %v9257
        %v10437 = vunpack.c.h.b16 %v9257
        %v10438 = vunpack.c.l.b16 %v9258
        %v10439 = vunpack.c.h.b16 %v9258
        %v10440 = vunpack.c.l.b16 %v9259
        %v10441 = vunpack.c.h.b16 %v9259
        %v10442 = vunpack.c.l.b16 %v9260
        %v10443 = vunpack.c.h.b16 %v9260
        %v10444 = vunpack.c.l.b16 %v9261
        %v10445 = vunpack.c.h.b16 %v9261
        %v10446 = vunpack.c.l.b16 %v9262
        %v10447 = vunpack.c.h.b16 %v9262
        %v10448 = vunpack.c.l.b16 %v9263
        %v10449 = vunpack.c.h.b16 %v9263
        %v10450 = vunpack.c.l.b16 %v9264
        %v10451 = vunpack.c.h.b16 %v9264
        %v10452 = vunpack.c.l.b16 %v9265
        %v10453 = vunpack.c.h.b16 %v9265
        %v10454 = vunpack.c.l.b16 %v9266
        %v10455 = vunpack.c.h.b16 %v9266
        %v10456 = vunpack.c.l.b16 %v9267
        %v10457 = vunpack.c.h.b16 %v9267
        %v10458 = vunpack.c.l.b16 %v9268
        %v10459 = vunpack.c.h.b16 %v9268
        %v10460 = vunpack.c.l.b16 %v9269
        %v10461 = vunpack.c.h.b16 %v9269
        %v10462 = vunpack.c.l.b16 %v9270
        %v10463 = vunpack.c.h.b16 %v9270
        %v10464 = vunpack.c.l.b16 %v9271
        %v10465 = vunpack.c.h.b16 %v9271
        %v10466 = vunpack.c.l.b16 %v9272
        %v10467 = vunpack.c.h.b16 %v9272
        %v10468 = vunpack.c.l.b16 %v9273
        %v10469 = vunpack.c.h.b16 %v9273
        %v10470 = vunpack.c.l.b16 %v9274
        %v10471 = vunpack.c.h.b16 %v9274
        %v10472 = vunpack.c.l.b16 %v9275
        %v10473 = vunpack.c.h.b16 %v9275
        %v10474 = vunpack.c.l.b16 %v9276
        %v10475 = vunpack.c.h.b16 %v9276
        %v10476 = vunpack.c.l.b16 %v9277
        %v10477 = vunpack.c.h.b16 %v9277
        %v10478 = vunpack.c.l.b16 %v9278
        %v10479 = vunpack.c.h.b16 %v9278
        %v10480 = vunpack.c.l.b16 %v9279
        %v10481 = vunpack.c.h.b16 %v9279
        %v10482 = vunpack.c.l.b16 %v9280
        %v10483 = vunpack.c.h.b16 %v9280
        %v10484 = vunpack.c.l.b16 %v9281
        %v10485 = vunpack.c.h.b16 %v9281
        %v10486 = vunpack.c.l.b16 %v9282
        %v10487 = vunpack.c.h.b16 %v9282
        %v10488 = vunpack.c.l.b16 %v9283
        %v10489 = vunpack.c.h.b16 %v9283
        %v10490 = vunpack.c.l.b16 %v9284
        %v10491 = vunpack.c.h.b16 %v9284
        %v10492 = vunpack.c.l.b16 %v9285
        %v10493 = vunpack.c.h.b16 %v9285
        %v10494 = vunpack.c.l.b16 %v9286
        %v10495 = vunpack.c.h.b16 %v9286
        %v10496 = vunpack.c.l.b16 %v9287
        %v10497 = vunpack.c.h.b16 %v9287
        %v10498 = vunpack.c.l.b16 %v9288
        %v10499 = vunpack.c.h.b16 %v9288
        %v10500 = vunpack.c.l.b16 %v9289
        %v10501 = vunpack.c.h.b16 %v9289
        %v10502 = vunpack.c.l.b16 %v9290
        %v10503 = vunpack.c.h.b16 %v9290
        %v10504 = vunpack.c.l.b16 %v9291
        %v10505 = vunpack.c.h.b16 %v9291
        %v10506 = vunpack.c.l.b16 %v9292
        %v10507 = vunpack.c.h.b16 %v9292
        %v10508 = vunpack.c.l.b16 %v9293
        %v10509 = vunpack.c.h.b16 %v9293
        %v10510 = vunpack.c.l.b16 %v9294
        %v10511 = vunpack.c.h.b16 %v9294
        %v10512 = vunpack.c.l.b16 %v9295
        %v10513 = vunpack.c.h.b16 %v9295
        %v10514 = vunpack.c.l.b16 %v9296
        %v10515 = vunpack.c.h.b16 %v9296
        %v10516 = vunpack.c.l.b16 %v9297
        %v10517 = vunpack.c.h.b16 %v9297
        %v10518 = vunpack.c.l.b16 %v9298
        %v10519 = vunpack.c.h.b16 %v9298
        %v10520 = vunpack.c.l.b16 %v9299
        %v10521 = vunpack.c.h.b16 %v9299
        %v10522 = vunpack.c.l.b16 %v9300
        %v10523 = vunpack.c.h.b16 %v9300
        %v10524 = vunpack.c.l.b16 %v9301
        %v10525 = vunpack.c.h.b16 %v9301
        %v10526 = vunpack.c.l.b16 %v9302
        %v10527 = vunpack.c.h.b16 %v9302
        %v10528 = vunpack.c.l.b16 %v9303
        %v10529 = vunpack.c.h.b16 %v9303
        %v10530 = vunpack.c.l.b16 %v9304
        %v10531 = vunpack.c.h.b16 %v9304
        %v10532 = vunpack.c.l.b16 %v9305
        %v10533 = vunpack.c.h.b16 %v9305
        %v10534 = vunpack.c.l.b16 %v9306
        %v10535 = vunpack.c.h.b16 %v9306
        %v10536 = vunpack.c.l.b16 %v9307
        %v10537 = vunpack.c.h.b16 %v9307
        %v10538 = vunpack.c.l.b16 %v9308
        %v10539 = vunpack.c.h.b16 %v9308
        %v10540 = vunpack.c.l.b16 %v9309
        %v10541 = vunpack.c.h.b16 %v9309
        %v10542 = vunpack.c.l.b16 %v9310
        %v10543 = vunpack.c.h.b16 %v9310
        %v10544 = vunpack.c.l.b16 %v9311
        %v10545 = vunpack.c.h.b16 %v9311
        %v10546 = vunpack.c.l.b16 %v9312
        %v10547 = vunpack.c.h.b16 %v9312
        %v10548 = vunpack.c.l.b16 %v9313
        %v10549 = vunpack.c.h.b16 %v9313
        %v10550 = vunpack.c.l.b16 %v9314
        %v10551 = vunpack.c.h.b16 %v9314
        %v10552 = vunpack.c.l.b16 %v9315
        %v10553 = vunpack.c.h.b16 %v9315
        %v10554 = vunpack.c.l.b16 %v9316
        %v10555 = vunpack.c.h.b16 %v9316
        %v10556 = vunpack.c.l.b16 %v9317
        %v10557 = vunpack.c.h.b16 %v9317
        %v10558 = vunpack.c.l.b16 %v9318
        %v10559 = vunpack.c.h.b16 %v9318
        %v10560 = vunpack.c.l.b16 %v9319
        %v10561 = vunpack.c.h.b16 %v9319
        %v10562 = vunpack.c.l.b16 %v9320
        %v10563 = vunpack.c.h.b16 %v9320
        %v10564 = vunpack.c.l.b16 %v9321
        %v10565 = vunpack.c.h.b16 %v9321
        %v10566 = vunpack.c.l.b16 %v9322
        %v10567 = vunpack.c.h.b16 %v9322
        %v10568 = vunpack.c.l.b16 %v9323
        %v10569 = vunpack.c.h.b16 %v9323
        %v10570 = vunpack.c.l.b16 %v9324
        %v10571 = vunpack.c.h.b16 %v9324
        %v10572 = vunpack.c.l.b16 %v9325
        %v10573 = vunpack.c.h.b16 %v9325
        %v10574 = vunpack.c.l.b16 %v9326
        %v10575 = vunpack.c.h.b16 %v9326
        %v10576 = vunpack.c.l.b16 %v9327
        %v10577 = vunpack.c.h.b16 %v9327
        %v10578 = vunpack.c.l.b16 %v9328
        %v10579 = vunpack.c.h.b16 %v9328
        %v10580 = vunpack.c.l.b16 %v9329
        %v10581 = vunpack.c.h.b16 %v9329
        %v10582 = vunpack.c.l.b16 %v9330
        %v10583 = vunpack.c.h.b16 %v9330
        %v10584 = vunpack.c.l.b16 %v9331
        %v10585 = vunpack.c.h.b16 %v9331
        %v10586 = vunpack.c.l.b16 %v9332
        %v10587 = vunpack.c.h.b16 %v9332
        %v10588 = vunpack.c.l.b16 %v9333
        %v10589 = vunpack.c.h.b16 %v9333
        %v10590 = vunpack.c.l.b16 %v9334
        %v10591 = vunpack.c.h.b16 %v9334
        %v10592 = vunpack.c.l.b16 %v9335
        %v10593 = vunpack.c.h.b16 %v9335
        %v10594 = vunpack.c.l.b16 %v9336
        %v10595 = vunpack.c.h.b16 %v9336
        %v10596 = vunpack.c.l.b16 %v9337
        %v10597 = vunpack.c.h.b16 %v9337
        %v10598 = vunpack.c.l.b16 %v9338
        %v10599 = vunpack.c.h.b16 %v9338
        %v10600 = vunpack.c.l.b16 %v9339
        %v10601 = vunpack.c.h.b16 %v9339
        %v10602 = vunpack.c.l.b16 %v9340
        %v10603 = vunpack.c.h.b16 %v9340
        %v10604 = vunpack.c.l.b16 %v9341
        %v10605 = vunpack.c.h.b16 %v9341
        %v10606 = vunpack.c.l.b16 %v9342
        %v10607 = vunpack.c.h.b16 %v9342
        %v10608 = vunpack.c.l.b16 %v9343
        %v10609 = vunpack.c.h.b16 %v9343
        %v10610 = vunpack.c.l.b16 %v9344
        %v10611 = vunpack.c.h.b16 %v9344
        %v10612 = vunpack.c.l.b16 %v9345
        %v10613 = vunpack.c.h.b16 %v9345
        %v10614 = vunpack.c.l.b16 %v9346
        %v10615 = vunpack.c.h.b16 %v9346
        %v10616 = vunpack.c.l.b16 %v9347
        %v10617 = vunpack.c.h.b16 %v9347
        %v10618 = vunpack.c.l.b16 %v9348
        %v10619 = vunpack.c.h.b16 %v9348
        %v10620 = vunpack.c.l.b16 %v9349
        %v10621 = vunpack.c.h.b16 %v9349
        %v10622 = vunpack.c.l.b16 %v9350
        %v10623 = vunpack.c.h.b16 %v9350
        %v10624 = vunpack.c.l.b16 %v9351
        %v10625 = vunpack.c.h.b16 %v9351
        %v10626 = vunpack.c.l.b16 %v9352
        %v10627 = vunpack.c.h.b16 %v9352
        %v10628 = vunpack.c.l.b16 %v9353
        %v10629 = vunpack.c.h.b16 %v9353
        %v10630 = vunpack.c.l.b16 %v9354
        %v10631 = vunpack.c.h.b16 %v9354
        %v10632 = vunpack.c.l.b16 %v9355
        %v10633 = vunpack.c.h.b16 %v9355
        %v10634 = vunpack.c.l.b16 %v9356
        %v10635 = vunpack.c.h.b16 %v9356
        %v10636 = vunpack.c.l.b16 %v9357
        %v10637 = vunpack.c.h.b16 %v9357
        %v10638 = vunpack.c.l.b16 %v9358
        %v10639 = vunpack.c.h.b16 %v9358
        %v10640 = vunpack.c.l.b16 %v9359
        %v10641 = vunpack.c.h.b16 %v9359
        %v10642 = vunpack.c.l.b16 %v9360
        %v10643 = vunpack.c.h.b16 %v9360
        %v10644 = vunpack.c.l.b16 %v9361
        %v10645 = vunpack.c.h.b16 %v9361
        %v10646 = vunpack.c.l.b16 %v9362
        %v10647 = vunpack.c.h.b16 %v9362
        %v10648 = vunpack.c.l.b16 %v9363
        %v10649 = vunpack.c.h.b16 %v9363
        %v10650 = vunpack.c.l.b16 %v9364
        %v10651 = vunpack.c.h.b16 %v9364
        %v10652 = vunpack.c.l.b16 %v9365
        %v10653 = vunpack.c.h.b16 %v9365
        %v10654 = vunpack.c.l.b16 %v9366
        %v10655 = vunpack.c.h.b16 %v9366
        %v10656 = vunpack.c.l.b16 %v9367
        %v10657 = vunpack.c.h.b16 %v9367
        %v10658 = vunpack.c.l.b16 %v9368
        %v10659 = vunpack.c.h.b16 %v9368
        %v10660 = vunpack.c.l.b16 %v9369
        %v10661 = vunpack.c.h.b16 %v9369
        %v10662 = vunpack.c.l.b16 %v9370
        %v10663 = vunpack.c.h.b16 %v9370
        %v10664 = vunpack.c.l.b16 %v9371
        %v10665 = vunpack.c.h.b16 %v9371
        %v10666 = vunpack.c.l.b16 %v9372
        %v10667 = vunpack.c.h.b16 %v9372
        %v10668 = vunpack.c.l.b16 %v9373
        %v10669 = vunpack.c.h.b16 %v9373
        %v10670 = vunpack.c.l.b16 %v9374
        %v10671 = vunpack.c.h.b16 %v9374
        %v10672 = vunpack.c.l.b16 %v9375
        %v10673 = vunpack.c.h.b16 %v9375
        %v10674 = vunpack.c.l.b16 %v9376
        %v10675 = vunpack.c.h.b16 %v9376
        %v10676 = vunpack.c.l.b16 %v9377
        %v10677 = vunpack.c.h.b16 %v9377
        %v10678 = vunpack.c.l.b16 %v9378
        %v10679 = vunpack.c.h.b16 %v9378
        %v10680 = vunpack.c.l.b16 %v9379
        %v10681 = vunpack.c.h.b16 %v9379
        %v10682 = vunpack.c.l.b16 %v9380
        %v10683 = vunpack.c.h.b16 %v9380
        %v10684 = vunpack.c.l.b16 %v9381
        %v10685 = vunpack.c.h.b16 %v9381
        %v10686 = vunpack.c.l.b16 %v9382
        %v10687 = vunpack.c.h.b16 %v9382
        %v10688 = vunpack.c.l.b16 %v9383
        %v10689 = vunpack.c.h.b16 %v9383
        %v10690 = vunpack.c.l.b16 %v9384
        %v10691 = vunpack.c.h.b16 %v9384
        %v10692 = vunpack.c.l.b16 %v9385
        %v10693 = vunpack.c.h.b16 %v9385
        %v10694 = vunpack.c.l.b16 %v9386
        %v10695 = vunpack.c.h.b16 %v9386
        %v10696 = vunpack.c.l.b16 %v9387
        %v10697 = vunpack.c.h.b16 %v9387
        %v10698 = vunpack.c.l.b16 %v9388
        %v10699 = vunpack.c.h.b16 %v9388
        %v10700 = vunpack.c.l.b16 %v9389
        %v10701 = vunpack.c.h.b16 %v9389
        %v10702 = vunpack.c.l.b16 %v9390
        %v10703 = vunpack.c.h.b16 %v9390
        %v10704 = vunpack.c.l.b16 %v9391
        %v10705 = vunpack.c.h.b16 %v9391
        %v10706 = vunpack.c.l.b16 %v9392
        %v10707 = vunpack.c.h.b16 %v9392
        %v10708 = vunpack.c.l.b16 %v9393
        %v10709 = vunpack.c.h.b16 %v9393
        %v10710 = vunpack.c.l.b16 %v9394
        %v10711 = vunpack.c.h.b16 %v9394
        %v10712 = vunpack.c.l.b16 %v9395
        %v10713 = vunpack.c.h.b16 %v9395
        %v10714 = vunpack.c.l.b16 %v9396
        %v10715 = vunpack.c.h.b16 %v9396
        %v10716 = vunpack.c.l.b16 %v9397
        %v10717 = vunpack.c.h.b16 %v9397
        %v10718 = vunpack.c.l.b16 %v9398
        %v10719 = vunpack.c.h.b16 %v9398
        %v10720 = vunpack.c.l.b16 %v9399
        %v10721 = vunpack.c.h.b16 %v9399
        %v10722 = vunpack.c.l.b16 %v9400
        %v10723 = vunpack.c.h.b16 %v9400
        %v10724 = vunpack.c.l.b16 %v9401
        %v10725 = vunpack.c.h.b16 %v9401
        %v10726 = vunpack.c.l.b16 %v9402
        %v10727 = vunpack.c.h.b16 %v9402
        %v10728 = vunpack.c.l.b16 %v9403
        %v10729 = vunpack.c.h.b16 %v9403
        %v10730 = vunpack.c.l.b16 %v9404
        %v10731 = vunpack.c.h.b16 %v9404
        %v10732 = vunpack.c.l.b16 %v9405
        %v10733 = vunpack.c.h.b16 %v9405
        %v10734 = vunpack.c.l.b16 %v9406
        %v10735 = vunpack.c.h.b16 %v9406
        %v10736 = vunpack.c.l.b16 %v9407
        %v10737 = vunpack.c.h.b16 %v9407
        %v10738 = vunpack.c.l.b16 %v9408
        %v10739 = vunpack.c.h.b16 %v9408
        %v10740 = vunpack.c.l.b16 %v9409
        %v10741 = vunpack.c.h.b16 %v9409
        %v10742 = vunpack.c.l.b16 %v9410
        %v10743 = vunpack.c.h.b16 %v9410
        %v10744 = vunpack.c.l.b16 %v9411
        %v10745 = vunpack.c.h.b16 %v9411
        %v10746 = vunpack.c.l.b16 %v9412
        %v10747 = vunpack.c.h.b16 %v9412
        %v10748 = vunpack.c.l.b16 %v9413
        %v10749 = vunpack.c.h.b16 %v9413
        %v10750 = vunpack.c.l.b16 %v9414
        %v10751 = vunpack.c.h.b16 %v9414
        %v10752 = vunpack.c.l.b16 %v9415
        %v10753 = vunpack.c.h.b16 %v9415
        %v10754 = vunpack.c.l.b16 %v9416
        %v10755 = vunpack.c.h.b16 %v9416
        %v10756 = vunpack.c.l.b16 %v9417
        %v10757 = vunpack.c.h.b16 %v9417
        %v10758 = vunpack.c.l.b16 %v9418
        %v10759 = vunpack.c.h.b16 %v9418
        %v10760 = vunpack.c.l.b16 %v9419
        %v10761 = vunpack.c.h.b16 %v9419
        %v10762 = vunpack.c.l.b16 %v9420
        %v10763 = vunpack.c.h.b16 %v9420
        %v10764 = vunpack.c.l.b16 %v9421
        %v10765 = vunpack.c.h.b16 %v9421
        %v10766 = vunpack.c.l.b16 %v9422
        %v10767 = vunpack.c.h.b16 %v9422
        %v10768 = vunpack.c.l.b16 %v9423
        %v10769 = vunpack.c.h.b16 %v9423
        %v10770 = vunpack.c.l.b16 %v9424
        %v10771 = vunpack.c.h.b16 %v9424
        %v10772 = vunpack.c.l.b16 %v9425
        %v10773 = vunpack.c.h.b16 %v9425
        %v10774 = vunpack.c.l.b16 %v9426
        %v10775 = vunpack.c.h.b16 %v9426
        %v10776 = vunpack.c.l.b16 %v9427
        %v10777 = vunpack.c.h.b16 %v9427
        %v10778 = vunpack.c.l.b16 %v9428
        %v10779 = vunpack.c.h.b16 %v9428
        %v10780 = vunpack.c.l.b16 %v9429
        %v10781 = vunpack.c.h.b16 %v9429
        %v10782 = vunpack.c.l.b16 %v9430
        %v10783 = vunpack.c.h.b16 %v9430
        %v10784 = vunpack.c.l.b16 %v9431
        %v10785 = vunpack.c.h.b16 %v9431
        %v10786 = vunpack.c.l.b16 %v9432
        %v10787 = vunpack.c.h.b16 %v9432
        %v10788 = vunpack.c.l.b16 %v9433
        %v10789 = vunpack.c.h.b16 %v9433
        %v10790 = vunpack.c.l.b16 %v9434
        %v10791 = vunpack.c.h.b16 %v9434
        %v10792 = vunpack.c.l.b16 %v9435
        %v10793 = vunpack.c.h.b16 %v9435
        %v10794 = vunpack.c.l.b16 %v9436
        %v10795 = vunpack.c.h.b16 %v9436
        %v10796 = vunpack.c.l.b16 %v9437
        %v10797 = vunpack.c.h.b16 %v9437
        %v10798 = vunpack.c.l.b16 %v9438
        %v10799 = vunpack.c.h.b16 %v9438
        %v10800 = vunpack.c.l.b16 %v9439
        %v10801 = vunpack.c.h.b16 %v9439
        %v10802 = vunpack.c.l.b16 %v9440
        %v10803 = vunpack.c.h.b16 %v9440
        %v10804 = vunpack.c.l.b16 %v9441
        %v10805 = vunpack.c.h.b16 %v9441
        %v10806 = vunpack.c.l.b16 %v9442
        %v10807 = vunpack.c.h.b16 %v9442
        %v10808 = vunpack.c.l.b16 %v9443
        %v10809 = vunpack.c.h.b16 %v9443
        %v10810 = vunpack.c.l.b16 %v9444
        %v10811 = vunpack.c.h.b16 %v9444
        %v10812 = vunpack.c.l.b16 %v9445
        %v10813 = vunpack.c.h.b16 %v9445
        %v10814 = vunpack.c.l.b16 %v9446
        %v10815 = vunpack.c.h.b16 %v9446
        %v10816 = vunpack.c.l.b16 %v9447
        %v10817 = vunpack.c.h.b16 %v9447
        %v10818 = vunpack.c.l.b16 %v9448
        %v10819 = vunpack.c.h.b16 %v9448
        %v10820 = vunpack.c.l.b16 %v9449
        %v10821 = vunpack.c.h.b16 %v9449
        %v10822 = vunpack.c.l.b16 %v9450
        %v10823 = vunpack.c.h.b16 %v9450
        %v10824 = vunpack.c.l.b16 %v9451
        %v10825 = vunpack.c.h.b16 %v9451
        %v10826 = vunpack.c.l.b16 %v9452
        %v10827 = vunpack.c.h.b16 %v9452
        %v10828 = vunpack.c.l.b16 %v9453
        %v10829 = vunpack.c.h.b16 %v9453
        %v10830 = vunpack.c.l.b16 %v9454
        %v10831 = vunpack.c.h.b16 %v9454
        %v10832 = vunpack.c.l.b16 %v9455
        %v10833 = vunpack.c.h.b16 %v9455
        %v10834 = vunpack.c.l.b16 %v9456
        %v10835 = vunpack.c.h.b16 %v9456
        %v10836 = vunpack.c.l.b16 %v9457
        %v10837 = vunpack.c.h.b16 %v9457
        %v10838 = vunpack.c.l.b16 %v9458
        %v10839 = vunpack.c.h.b16 %v9458
        %v10840 = vunpack.c.l.b16 %v9459
        %v10841 = vunpack.c.h.b16 %v9459
        %v10842 = vunpack.c.l.b16 %v9460
        %v10843 = vunpack.c.h.b16 %v9460
        %v10844 = vunpack.c.l.b16 %v9461
        %v10845 = vunpack.c.h.b16 %v9461
        %v10846 = vunpack.c.l.b16 %v9462
        %v10847 = vunpack.c.h.b16 %v9462
        %v10848 = vunpack.c.l.b16 %v9463
        %v10849 = vunpack.c.h.b16 %v9463
        %v10850 = vunpack.c.l.b16 %v9464
        %v10851 = vunpack.c.h.b16 %v9464
        %v10852 = vunpack.c.l.b16 %v9465
        %v10853 = vunpack.c.h.b16 %v9465
        %v10854 = vunpack.c.l.b16 %v9466
        %v10855 = vunpack.c.h.b16 %v9466
        %v10856 = vunpack.c.l.b16 %v9467
        %v10857 = vunpack.c.h.b16 %v9467
        %v10858 = vunpack.c.l.b16 %v9468
        %v10859 = vunpack.c.h.b16 %v9468
        %v10860 = vunpack.c.l.b16 %v9469
        %v10861 = vunpack.c.h.b16 %v9469
        %v10862 = vunpack.c.l.b16 %v9470
        %v10863 = vunpack.c.h.b16 %v9470
        %v10864 = vunpack.c.l.b16 %v9471
        %v10865 = vunpack.c.h.b16 %v9471
        %v10866 = vunpack.c.l.b16 %v9472
        %v10867 = vunpack.c.h.b16 %v9472
        %v10868 = vunpack.c.l.b16 %v9473
        %v10869 = vunpack.c.h.b16 %v9473
        %v10870 = vunpack.c.l.b16 %v9474
        %v10871 = vunpack.c.h.b16 %v9474
        %v10872 = vunpack.c.l.b16 %v9475
        %v10873 = vunpack.c.h.b16 %v9475
        %v10874 = vunpack.c.l.b16 %v9476
        %v10875 = vunpack.c.h.b16 %v9476
        %v10876 = vunpack.c.l.b16 %v9477
        %v10877 = vunpack.c.h.b16 %v9477
        %v10878 = vunpack.c.l.b16 %v9478
        %v10879 = vunpack.c.h.b16 %v9478
        %v10880 = vunpack.c.l.b16 %v9479
        %v10881 = vunpack.c.h.b16 %v9479
        %v10882 = vunpack.c.l.b16 %v9480
        %v10883 = vunpack.c.h.b16 %v9480
        %v10884 = vunpack.c.l.b16 %v9481
        %v10885 = vunpack.c.h.b16 %v9481
        %v10886 = vunpack.c.l.b16 %v9482
        %v10887 = vunpack.c.h.b16 %v9482
        %v10888 = vunpack.c.l.b16 %v9483
        %v10889 = vunpack.c.h.b16 %v9483
        %v10890 = vunpack.c.l.b16 %v9484
        %v10891 = vunpack.c.h.b16 %v9484
        %v10892 = vunpack.c.l.b16 %v9485
        %v10893 = vunpack.c.h.b16 %v9485
        %v10894 = vunpack.c.l.b16 %v9486
        %v10895 = vunpack.c.h.b16 %v9486
        %v10896 = vunpack.c.l.b16 %v9487
        %v10897 = vunpack.c.h.b16 %v9487
        %v10898 = vunpack.c.l.b16 %v9488
        %v10899 = vunpack.c.h.b16 %v9488
        %v10900 = vunpack.c.l.b16 %v9489
        %v10901 = vunpack.c.h.b16 %v9489
        %v10902 = vunpack.c.l.b16 %v9490
        %v10903 = vunpack.c.h.b16 %v9490
        %v10904 = vunpack.c.l.b16 %v9491
        %v10905 = vunpack.c.h.b16 %v9491
        %v10906 = vunpack.c.l.b16 %v9492
        %v10907 = vunpack.c.h.b16 %v9492
        %v10908 = vunpack.c.l.b16 %v9493
        %v10909 = vunpack.c.h.b16 %v9493
        %v10910 = vunpack.c.l.b16 %v9494
        %v10911 = vunpack.c.h.b16 %v9494
        %v10912 = vunpack.c.l.b16 %v9495
        %v10913 = vunpack.c.h.b16 %v9495
        %v10914 = vunpack.c.l.b16 %v9496
        %v10915 = vunpack.c.h.b16 %v9496
        %v10916 = vunpack.c.l.b16 %v9497
        %v10917 = vunpack.c.h.b16 %v9497
        %v10918 = vunpack.c.l.b16 %v9498
        %v10919 = vunpack.c.h.b16 %v9498
        %v10920 = vunpack.c.l.b16 %v9499
        %v10921 = vunpack.c.h.b16 %v9499
        %v10922 = vunpack.c.l.b16 %v9500
        %v10923 = vunpack.c.h.b16 %v9500
        %v10924 = vunpack.c.l.b16 %v9501
        %v10925 = vunpack.c.h.b16 %v9501
        %v10926 = vunpack.c.l.b16 %v9502
        %v10927 = vunpack.c.h.b16 %v9502
        %v10928 = vunpack.c.l.b16 %v9503
        %v10929 = vunpack.c.h.b16 %v9503
        %v10930 = vunpack.c.l.b16 %v9504
        %v10931 = vunpack.c.h.b16 %v9504
        %v10932 = vunpack.c.l.b16 %v9505
        %v10933 = vunpack.c.h.b16 %v9505
        %v10934 = vunpack.c.l.b16 %v9506
        %v10935 = vunpack.c.h.b16 %v9506
        %v10936 = vunpack.c.l.b16 %v9507
        %v10937 = vunpack.c.h.b16 %v9507
        %v10938 = vunpack.c.l.b16 %v9508
        %v10939 = vunpack.c.h.b16 %v9508
        %v10940 = vunpack.c.l.b16 %v9509
        %v10941 = vunpack.c.h.b16 %v9509
        %v10942 = vunpack.c.l.b16 %v9510
        %v10943 = vunpack.c.h.b16 %v9510
        %v10944 = vunpack.c.l.b16 %v9511
        %v10945 = vunpack.c.h.b16 %v9511
        %v10946 = vunpack.c.l.b16 %v9512
        %v10947 = vunpack.c.h.b16 %v9512
        %v10948 = vunpack.c.l.b16 %v9513
        %v10949 = vunpack.c.h.b16 %v9513
        %v10950 = vunpack.c.l.b16 %v9514
        %v10951 = vunpack.c.h.b16 %v9514
        %v10952 = vunpack.c.l.b16 %v9515
        %v10953 = vunpack.c.h.b16 %v9515
        %v10954 = vunpack.c.l.b16 %v9516
        %v10955 = vunpack.c.h.b16 %v9516
        %v10956 = vunpack.c.l.b16 %v9517
        %v10957 = vunpack.c.h.b16 %v9517
        %v10958 = vunpack.c.l.b16 %v9518
        %v10959 = vunpack.c.h.b16 %v9518
        %v10960 = vunpack.c.l.b16 %v9519
        %v10961 = vunpack.c.h.b16 %v9519
        %v10962 = vunpack.c.l.b16 %v9520
        %v10963 = vunpack.c.h.b16 %v9520
        %v10964 = vunpack.c.l.b16 %v9521
        %v10965 = vunpack.c.h.b16 %v9521
        %v10966 = vunpack.c.l.b16 %v9522
        %v10967 = vunpack.c.h.b16 %v9522
        %v10968 = vunpack.c.l.b16 %v9523
        %v10969 = vunpack.c.h.b16 %v9523
        %v10970 = vunpack.c.l.b16 %v9524
        %v10971 = vunpack.c.h.b16 %v9524
        %v10972 = vunpack.c.l.b16 %v9525
        %v10973 = vunpack.c.h.b16 %v9525
        %v10974 = vunpack.c.l.b16 %v9526
        %v10975 = vunpack.c.h.b16 %v9526
        %v10976 = vunpack.c.l.b16 %v9527
        %v10977 = vunpack.c.h.b16 %v9527
        %v10978 = vunpack.c.l.b16 %v9528
        %v10979 = vunpack.c.h.b16 %v9528
        %v10980 = vunpack.c.l.b16 %v9529
        %v10981 = vunpack.c.h.b16 %v9529
        %v10982 = vunpack.c.l.b16 %v9530
        %v10983 = vunpack.c.h.b16 %v9530
        %v10984 = vunpack.c.l.b16 %v9531
        %v10985 = vunpack.c.h.b16 %v9531
        %v10986 = vunpack.c.l.b16 %v9532
        %v10987 = vunpack.c.h.b16 %v9532
        %v10988 = vunpack.c.l.b16 %v9533
        %v10989 = vunpack.c.h.b16 %v9533
        %v10990 = vunpack.c.l.b16 %v9534
        %v10991 = vunpack.c.h.b16 %v9534
        %v10992 = vunpack.c.l.b16 %v9535
        %v10993 = vunpack.c.h.b16 %v9535
        %v10994 = vunpack.c.l.b16 %v9536
        %v10995 = vunpack.c.h.b16 %v9536
        %v10996 = vunpack.c.l.b16 %v9537
        %v10997 = vunpack.c.h.b16 %v9537
        %v10998 = vunpack.c.l.b16 %v9538
        %v10999 = vunpack.c.h.b16 %v9538
        %v11000 = vunpack.c.l.b16 %v9539
        %v11001 = vunpack.c.h.b16 %v9539
        %v11002 = vunpack.c.l.b16 %v9540
        %v11003 = vunpack.c.h.b16 %v9540
        %v11004 = vunpack.c.l.b16 %v9541
        %v11005 = vunpack.c.h.b16 %v9541
        %v11006 = vunpack.c.l.b16 %v9542
        %v11007 = vunpack.c.h.b16 %v9542
        %v11008 = vunpack.c.l.b16 %v9543
        %v11009 = vunpack.c.h.b16 %v9543
        %v11010 = vunpack.c.l.b16 %v9544
        %v11011 = vunpack.c.h.b16 %v9544
        %v11012 = vunpack.c.l.b16 %v9545
        %v11013 = vunpack.c.h.b16 %v9545
        %v11014 = vunpack.c.l.b16 %v9546
        %v11015 = vunpack.c.h.b16 %v9546
        %v11016 = vunpack.c.l.b16 %v9547
        %v11017 = vunpack.c.h.b16 %v9547
        %v11018 = vunpack.c.l.b16 %v9548
        %v11019 = vunpack.c.h.b16 %v9548
        %v11020 = vunpack.c.l.b16 %v9549
        %v11021 = vunpack.c.h.b16 %v9549
        %v11022 = vunpack.c.l.b16 %v9550
        %v11023 = vunpack.c.h.b16 %v9550
        %v11024 = vunpack.c.l.b16 %v9551
        %v11025 = vunpack.c.h.b16 %v9551
        %v11026 = vunpack.c.l.b16 %v9552
        %v11027 = vunpack.c.h.b16 %v9552
        %v11028 = vunpack.c.l.b16 %v9553
        %v11029 = vunpack.c.h.b16 %v9553
        %v11030 = vunpack.c.l.b16 %v9554
        %v11031 = vunpack.c.h.b16 %v9554
        %v11032 = vunpack.c.l.b16 %v9555
        %v11033 = vunpack.c.h.b16 %v9555
        %v11034 = vunpack.c.l.b16 %v9556
        %v11035 = vunpack.c.h.b16 %v9556
        %v11036 = vunpack.c.l.b16 %v9557
        %v11037 = vunpack.c.h.b16 %v9557
        %v11038 = vunpack.c.l.b16 %v9558
        %v11039 = vunpack.c.h.b16 %v9558
        %v11040 = vunpack.c.l.b16 %v9559
        %v11041 = vunpack.c.h.b16 %v9559
        %v11042 = vunpack.c.l.b16 %v9560
        %v11043 = vunpack.c.h.b16 %v9560
        %v11044 = vunpack.c.l.b16 %v9561
        %v11045 = vunpack.c.h.b16 %v9561
        %v11046 = vunpack.c.l.b16 %v9562
        %v11047 = vunpack.c.h.b16 %v9562
        %v11048 = vunpack.c.l.b16 %v9563
        %v11049 = vunpack.c.h.b16 %v9563
        %v11050 = vunpack.c.l.b16 %v9564
        %v11051 = vunpack.c.h.b16 %v9564
        %v11052 = vunpack.c.l.b16 %v9565
        %v11053 = vunpack.c.h.b16 %v9565
        %v11054 = vunpack.c.l.b16 %v9566
        %v11055 = vunpack.c.h.b16 %v9566
        %v11056 = vunpack.c.l.b16 %v9567
        %v11057 = vunpack.c.h.b16 %v9567
        %v11058 = vunpack.c.l.b16 %v9568
        %v11059 = vunpack.c.h.b16 %v9568
        %v11060 = vunpack.c.l.b16 %v9569
        %v11061 = vunpack.c.h.b16 %v9569
        %v11062 = vunpack.c.l.b16 %v9570
        %v11063 = vunpack.c.h.b16 %v9570
        %v11064 = vunpack.c.l.b16 %v9571
        %v11065 = vunpack.c.h.b16 %v9571
        %v11066 = vunpack.c.l.b16 %v9572
        %v11067 = vunpack.c.h.b16 %v9572
        %v11068 = vunpack.c.l.b16 %v9573
        %v11069 = vunpack.c.h.b16 %v9573
        %v11070 = vunpack.c.l.b16 %v9574
        %v11071 = vunpack.c.h.b16 %v9574
        %v11072 = vunpack.c.l.b16 %v9575
        %v11073 = vunpack.c.h.b16 %v9575
        %v11074 = vunpack.c.l.b16 %v9576
        %v11075 = vunpack.c.h.b16 %v9576
        %v11076 = vunpack.c.l.b16 %v9577
        %v11077 = vunpack.c.h.b16 %v9577
        %v11078 = vunpack.c.l.b16 %v9578
        %v11079 = vunpack.c.h.b16 %v9578
        %v11080 = vunpack.c.l.b16 %v9579
        %v11081 = vunpack.c.h.b16 %v9579
        %v11082 = vunpack.c.l.b16 %v9580
        %v11083 = vunpack.c.h.b16 %v9580
        %v11084 = vunpack.c.l.b16 %v9581
        %v11085 = vunpack.c.h.b16 %v9581
        %v11086 = vunpack.c.l.b16 %v9582
        %v11087 = vunpack.c.h.b16 %v9582
        %v11088 = vunpack.c.l.b16 %v9583
        %v11089 = vunpack.c.h.b16 %v9583
        %v11090 = vunpack.c.l.b16 %v9584
        %v11091 = vunpack.c.h.b16 %v9584
        %v11092 = vunpack.c.l.b16 %v9585
        %v11093 = vunpack.c.h.b16 %v9585
        %v11094 = vunpack.c.l.b16 %v9586
        %v11095 = vunpack.c.h.b16 %v9586
        %v11096 = vunpack.c.l.b16 %v9587
        %v11097 = vunpack.c.h.b16 %v9587
        %v11098 = vunpack.c.l.b16 %v9588
        %v11099 = vunpack.c.h.b16 %v9588
        %v11100 = vunpack.c.l.b16 %v9589
        %v11101 = vunpack.c.h.b16 %v9589
        %v11102 = vunpack.c.l.b16 %v9590
        %v11103 = vunpack.c.h.b16 %v9590
        %v11104 = vunpack.c.l.b16 %v9591
        %v11105 = vunpack.c.h.b16 %v9591
        %v11106 = vunpack.c.l.b16 %v9592
        %v11107 = vunpack.c.h.b16 %v9592
        %v11108 = vunpack.c.l.b16 %v9593
        %v11109 = vunpack.c.h.b16 %v9593
        %v11110 = vunpack.c.l.b16 %v9594
        %v11111 = vunpack.c.h.b16 %v9594
        %v11112 = vunpack.c.l.b16 %v9595
        %v11113 = vunpack.c.h.b16 %v9595
        %v11114 = vunpack.c.l.b16 %v9596
        %v11115 = vunpack.c.h.b16 %v9596
        %v11116 = vunpack.c.l.b16 %v9597
        %v11117 = vunpack.c.h.b16 %v9597
        %v11118 = vunpack.c.l.b16 %v9598
        %v11119 = vunpack.c.h.b16 %v9598
        %v11120 = vunpack.c.l.b16 %v9599
        %v11121 = vunpack.c.h.b16 %v9599
        %v11122 = vunpack.c.l.b16 %v9600
        %v11123 = vunpack.c.h.b16 %v9600
        %v11124 = vunpack.c.l.b16 %v9601
        %v11125 = vunpack.c.h.b16 %v9601
        %v11126 = vunpack.c.l.b16 %v9602
        %v11127 = vunpack.c.h.b16 %v9602
        %v11128 = vunpack.c.l.b16 %v9603
        %v11129 = vunpack.c.h.b16 %v9603
        %v11130 = vunpack.c.l.b16 %v9604
        %v11131 = vunpack.c.h.b16 %v9604
        %v11132 = vunpack.c.l.b16 %v9605
        %v11133 = vunpack.c.h.b16 %v9605
        %v11134 = vunpack.c.l.b16 %v9606
        %v11135 = vunpack.c.h.b16 %v9606
        %v11136 = vunpack.c.l.b16 %v9607
        %v11137 = vunpack.c.h.b16 %v9607
        %v11138 = vunpack.c.l.b16 %v9608
        %v11139 = vunpack.c.h.b16 %v9608
        %v11140 = vunpack.c.l.b16 %v9609
        %v11141 = vunpack.c.h.b16 %v9609
        %v11142 = vunpack.c.l.b16 %v9610
        %v11143 = vunpack.c.h.b16 %v9610
        %v11144 = vunpack.c.l.b16 %v9611
        %v11145 = vunpack.c.h.b16 %v9611
        %v11146 = vunpack.c.l.b16 %v9612
        %v11147 = vunpack.c.h.b16 %v9612
        %v11148 = vunpack.c.l.b16 %v9613
        %v11149 = vunpack.c.h.b16 %v9613
        %v11150 = vunpack.c.l.b16 %v9614
        %v11151 = vunpack.c.h.b16 %v9614
        %v11152 = vunpack.c.l.b16 %v9615
        %v11153 = vunpack.c.h.b16 %v9615
        %v11154 = vunpack.c.l.b16 %v9616
        %v11155 = vunpack.c.h.b16 %v9616
        %v11156 = vunpack.c.l.b16 %v9617
        %v11157 = vunpack.c.h.b16 %v9617
        %v11158 = vunpack.c.l.b16 %v9618
        %v11159 = vunpack.c.h.b16 %v9618
        %v11160 = vunpack.c.l.b16 %v9619
        %v11161 = vunpack.c.h.b16 %v9619
        %v11162 = vunpack.c.l.b16 %v9620
        %v11163 = vunpack.c.h.b16 %v9620
        %v11164 = vunpack.c.l.b16 %v9621
        %v11165 = vunpack.c.h.b16 %v9621
        %v11166 = vunpack.c.l.b16 %v9622
        %v11167 = vunpack.c.h.b16 %v9622
        %v11168 = vunpack.c.l.b16 %v9623
        %v11169 = vunpack.c.h.b16 %v9623
        %v11170 = vunpack.c.l.b16 %v9624
        %v11171 = vunpack.c.h.b16 %v9624
        %v11172 = vunpack.c.l.b16 %v9625
        %v11173 = vunpack.c.h.b16 %v9625
        %v11174 = vunpack.c.l.b16 %v9626
        %v11175 = vunpack.c.h.b16 %v9626
        %v11176 = vunpack.c.l.b16 %v9627
        %v11177 = vunpack.c.h.b16 %v9627
        %v11178 = vunpack.c.l.b16 %v9628
        %v11179 = vunpack.c.h.b16 %v9628
        %v11180 = vunpack.c.l.b16 %v9629
        %v11181 = vunpack.c.h.b16 %v9629
        %v11182 = vunpack.c.l.b16 %v9630
        %v11183 = vunpack.c.h.b16 %v9630
        %v11184 = vunpack.c.l.b16 %v9631
        %v11185 = vunpack.c.h.b16 %v9631
        %v11186 = vunpack.c.l.b16 %v9632
        %v11187 = vunpack.c.h.b16 %v9632
        %v11188 = vunpack.c.l.b16 %v9633
        %v11189 = vunpack.c.h.b16 %v9633
        %v11190 = vunpack.c.l.b16 %v9634
        %v11191 = vunpack.c.h.b16 %v9634
        %v11192 = vunpack.c.l.b16 %v9635
        %v11193 = vunpack.c.h.b16 %v9635
        %v11194 = vpack.c.b16 %v10174, %v10170
        %v11195 = vpack.c.b16 %v10175, %v10171
        %v11196 = vpack.c.b16 %v10176, %v10172
        %v11197 = vpack.c.b16 %v10177, %v10173
        %v11198 = vpack.c.b16 %v10182, %v10178
        %v11199 = vpack.c.b16 %v10183, %v10179
        %v11200 = vpack.c.b16 %v10184, %v10180
        %v11201 = vpack.c.b16 %v10185, %v10181
        %v11202 = vpack.c.b16 %v10190, %v10186
        %v11203 = vpack.c.b16 %v10191, %v10187
        %v11204 = vpack.c.b16 %v10192, %v10188
        %v11205 = vpack.c.b16 %v10193, %v10189
        %v11206 = vpack.c.b16 %v10198, %v10194
        %v11207 = vpack.c.b16 %v10199, %v10195
        %v11208 = vpack.c.b16 %v10200, %v10196
        %v11209 = vpack.c.b16 %v10201, %v10197
        %v11210 = vpack.c.b16 %v10206, %v10202
        %v11211 = vpack.c.b16 %v10207, %v10203
        %v11212 = vpack.c.b16 %v10208, %v10204
        %v11213 = vpack.c.b16 %v10209, %v10205
        %v11214 = vpack.c.b16 %v10214, %v10210
        %v11215 = vpack.c.b16 %v10215, %v10211
        %v11216 = vpack.c.b16 %v10216, %v10212
        %v11217 = vpack.c.b16 %v10217, %v10213
        %v11218 = vpack.c.b16 %v10222, %v10218
        %v11219 = vpack.c.b16 %v10223, %v10219
        %v11220 = vpack.c.b16 %v10224, %v10220
        %v11221 = vpack.c.b16 %v10225, %v10221
        %v11222 = vpack.c.b16 %v10230, %v10226
        %v11223 = vpack.c.b16 %v10231, %v10227
        %v11224 = vpack.c.b16 %v10232, %v10228
        %v11225 = vpack.c.b16 %v10233, %v10229
        %v11226 = vpack.c.b16 %v10238, %v10234
        %v11227 = vpack.c.b16 %v10239, %v10235
        %v11228 = vpack.c.b16 %v10240, %v10236
        %v11229 = vpack.c.b16 %v10241, %v10237
        %v11230 = vpack.c.b16 %v10246, %v10242
        %v11231 = vpack.c.b16 %v10247, %v10243
        %v11232 = vpack.c.b16 %v10248, %v10244
        %v11233 = vpack.c.b16 %v10249, %v10245
        %v11234 = vpack.c.b16 %v10254, %v10250
        %v11235 = vpack.c.b16 %v10255, %v10251
        %v11236 = vpack.c.b16 %v10256, %v10252
        %v11237 = vpack.c.b16 %v10257, %v10253
        %v11238 = vpack.c.b16 %v10262, %v10258
        %v11239 = vpack.c.b16 %v10263, %v10259
        %v11240 = vpack.c.b16 %v10264, %v10260
        %v11241 = vpack.c.b16 %v10265, %v10261
        %v11242 = vpack.c.b16 %v10270, %v10266
        %v11243 = vpack.c.b16 %v10271, %v10267
        %v11244 = vpack.c.b16 %v10272, %v10268
        %v11245 = vpack.c.b16 %v10273, %v10269
        %v11246 = vpack.c.b16 %v10278, %v10274
        %v11247 = vpack.c.b16 %v10279, %v10275
        %v11248 = vpack.c.b16 %v10280, %v10276
        %v11249 = vpack.c.b16 %v10281, %v10277
        %v11250 = vpack.c.b16 %v10286, %v10282
        %v11251 = vpack.c.b16 %v10287, %v10283
        %v11252 = vpack.c.b16 %v10288, %v10284
        %v11253 = vpack.c.b16 %v10289, %v10285
        %v11254 = vpack.c.b16 %v10294, %v10290
        %v11255 = vpack.c.b16 %v10295, %v10291
        %v11256 = vpack.c.b16 %v10296, %v10292
        %v11257 = vpack.c.b16 %v10297, %v10293
        %v11258 = vpack.c.b16 %v10302, %v10298
        %v11259 = vpack.c.b16 %v10303, %v10299
        %v11260 = vpack.c.b16 %v10304, %v10300
        %v11261 = vpack.c.b16 %v10305, %v10301
        %v11262 = vpack.c.b16 %v10310, %v10306
        %v11263 = vpack.c.b16 %v10311, %v10307
        %v11264 = vpack.c.b16 %v10312, %v10308
        %v11265 = vpack.c.b16 %v10313, %v10309
        %v11266 = vpack.c.b16 %v10318, %v10314
        %v11267 = vpack.c.b16 %v10319, %v10315
        %v11268 = vpack.c.b16 %v10320, %v10316
        %v11269 = vpack.c.b16 %v10321, %v10317
        %v11270 = vpack.c.b16 %v10326, %v10322
        %v11271 = vpack.c.b16 %v10327, %v10323
        %v11272 = vpack.c.b16 %v10328, %v10324
        %v11273 = vpack.c.b16 %v10329, %v10325
        %v11274 = vpack.c.b16 %v10334, %v10330
        %v11275 = vpack.c.b16 %v10335, %v10331
        %v11276 = vpack.c.b16 %v10336, %v10332
        %v11277 = vpack.c.b16 %v10337, %v10333
        %v11278 = vpack.c.b16 %v10342, %v10338
        %v11279 = vpack.c.b16 %v10343, %v10339
        %v11280 = vpack.c.b16 %v10344, %v10340
        %v11281 = vpack.c.b16 %v10345, %v10341
        %v11282 = vpack.c.b16 %v10350, %v10346
        %v11283 = vpack.c.b16 %v10351, %v10347
        %v11284 = vpack.c.b16 %v10352, %v10348
        %v11285 = vpack.c.b16 %v10353, %v10349
        %v11286 = vpack.c.b16 %v10358, %v10354
        %v11287 = vpack.c.b16 %v10359, %v10355
        %v11288 = vpack.c.b16 %v10360, %v10356
        %v11289 = vpack.c.b16 %v10361, %v10357
        %v11290 = vpack.c.b16 %v10366, %v10362
        %v11291 = vpack.c.b16 %v10367, %v10363
        %v11292 = vpack.c.b16 %v10368, %v10364
        %v11293 = vpack.c.b16 %v10369, %v10365
        %v11294 = vpack.c.b16 %v10374, %v10370
        %v11295 = vpack.c.b16 %v10375, %v10371
        %v11296 = vpack.c.b16 %v10376, %v10372
        %v11297 = vpack.c.b16 %v10377, %v10373
        %v11298 = vpack.c.b16 %v10382, %v10378
        %v11299 = vpack.c.b16 %v10383, %v10379
        %v11300 = vpack.c.b16 %v10384, %v10380
        %v11301 = vpack.c.b16 %v10385, %v10381
        %v11302 = vpack.c.b16 %v10390, %v10386
        %v11303 = vpack.c.b16 %v10391, %v10387
        %v11304 = vpack.c.b16 %v10392, %v10388
        %v11305 = vpack.c.b16 %v10393, %v10389
        %v11306 = vpack.c.b16 %v10398, %v10394
        %v11307 = vpack.c.b16 %v10399, %v10395
        %v11308 = vpack.c.b16 %v10400, %v10396
        %v11309 = vpack.c.b16 %v10401, %v10397
        %v11310 = vpack.c.b16 %v10406, %v10402
        %v11311 = vpack.c.b16 %v10407, %v10403
        %v11312 = vpack.c.b16 %v10408, %v10404
        %v11313 = vpack.c.b16 %v10409, %v10405
        %v11314 = vpack.c.b16 %v10414, %v10410
        %v11315 = vpack.c.b16 %v10415, %v10411
        %v11316 = vpack.c.b16 %v10416, %v10412
        %v11317 = vpack.c.b16 %v10417, %v10413
        %v11318 = vpack.c.b16 %v10422, %v10418
        %v11319 = vpack.c.b16 %v10423, %v10419
        %v11320 = vpack.c.b16 %v10424, %v10420
        %v11321 = vpack.c.b16 %v10425, %v10421
        %v11322 = vpack.c.b16 %v10430, %v10426
        %v11323 = vpack.c.b16 %v10431, %v10427
        %v11324 = vpack.c.b16 %v10432, %v10428
        %v11325 = vpack.c.b16 %v10433, %v10429
        %v11326 = vpack.c.b16 %v10438, %v10434
        %v11327 = vpack.c.b16 %v10439, %v10435
        %v11328 = vpack.c.b16 %v10440, %v10436
        %v11329 = vpack.c.b16 %v10441, %v10437
        %v11330 = vpack.c.b16 %v10446, %v10442
        %v11331 = vpack.c.b16 %v10447, %v10443
        %v11332 = vpack.c.b16 %v10448, %v10444
        %v11333 = vpack.c.b16 %v10449, %v10445
        %v11334 = vpack.c.b16 %v10454, %v10450
        %v11335 = vpack.c.b16 %v10455, %v10451
        %v11336 = vpack.c.b16 %v10456, %v10452
        %v11337 = vpack.c.b16 %v10457, %v10453
        %v11338 = vpack.c.b16 %v10462, %v10458
        %v11339 = vpack.c.b16 %v10463, %v10459
        %v11340 = vpack.c.b16 %v10464, %v10460
        %v11341 = vpack.c.b16 %v10465, %v10461
        %v11342 = vpack.c.b16 %v10470, %v10466
        %v11343 = vpack.c.b16 %v10471, %v10467
        %v11344 = vpack.c.b16 %v10472, %v10468
        %v11345 = vpack.c.b16 %v10473, %v10469
        %v11346 = vpack.c.b16 %v10478, %v10474
        %v11347 = vpack.c.b16 %v10479, %v10475
        %v11348 = vpack.c.b16 %v10480, %v10476
        %v11349 = vpack.c.b16 %v10481, %v10477
        %v11350 = vpack.c.b16 %v10486, %v10482
        %v11351 = vpack.c.b16 %v10487, %v10483
        %v11352 = vpack.c.b16 %v10488, %v10484
        %v11353 = vpack.c.b16 %v10489, %v10485
        %v11354 = vpack.c.b16 %v10494, %v10490
        %v11355 = vpack.c.b16 %v10495, %v10491
        %v11356 = vpack.c.b16 %v10496, %v10492
        %v11357 = vpack.c.b16 %v10497, %v10493
        %v11358 = vpack.c.b16 %v10502, %v10498
        %v11359 = vpack.c.b16 %v10503, %v10499
        %v11360 = vpack.c.b16 %v10504, %v10500
        %v11361 = vpack.c.b16 %v10505, %v10501
        %v11362 = vpack.c.b16 %v10510, %v10506
        %v11363 = vpack.c.b16 %v10511, %v10507
        %v11364 = vpack.c.b16 %v10512, %v10508
        %v11365 = vpack.c.b16 %v10513, %v10509
        %v11366 = vpack.c.b16 %v10518, %v10514
        %v11367 = vpack.c.b16 %v10519, %v10515
        %v11368 = vpack.c.b16 %v10520, %v10516
        %v11369 = vpack.c.b16 %v10521, %v10517
        %v11370 = vpack.c.b16 %v10526, %v10522
        %v11371 = vpack.c.b16 %v10527, %v10523
        %v11372 = vpack.c.b16 %v10528, %v10524
        %v11373 = vpack.c.b16 %v10529, %v10525
        %v11374 = vpack.c.b16 %v10534, %v10530
        %v11375 = vpack.c.b16 %v10535, %v10531
        %v11376 = vpack.c.b16 %v10536, %v10532
        %v11377 = vpack.c.b16 %v10537, %v10533
        %v11378 = vpack.c.b16 %v10542, %v10538
        %v11379 = vpack.c.b16 %v10543, %v10539
        %v11380 = vpack.c.b16 %v10544, %v10540
        %v11381 = vpack.c.b16 %v10545, %v10541
        %v11382 = vpack.c.b16 %v10550, %v10546
        %v11383 = vpack.c.b16 %v10551, %v10547
        %v11384 = vpack.c.b16 %v10552, %v10548
        %v11385 = vpack.c.b16 %v10553, %v10549
        %v11386 = vpack.c.b16 %v10558, %v10554
        %v11387 = vpack.c.b16 %v10559, %v10555
        %v11388 = vpack.c.b16 %v10560, %v10556
        %v11389 = vpack.c.b16 %v10561, %v10557
        %v11390 = vpack.c.b16 %v10566, %v10562
        %v11391 = vpack.c.b16 %v10567, %v10563
        %v11392 = vpack.c.b16 %v10568, %v10564
        %v11393 = vpack.c.b16 %v10569, %v10565
        %v11394 = vpack.c.b16 %v10574, %v10570
        %v11395 = vpack.c.b16 %v10575, %v10571
        %v11396 = vpack.c.b16 %v10576, %v10572
        %v11397 = vpack.c.b16 %v10577, %v10573
        %v11398 = vpack.c.b16 %v10582, %v10578
        %v11399 = vpack.c.b16 %v10583, %v10579
        %v11400 = vpack.c.b16 %v10584, %v10580
        %v11401 = vpack.c.b16 %v10585, %v10581
        %v11402 = vpack.c.b16 %v10590, %v10586
        %v11403 = vpack.c.b16 %v10591, %v10587
        %v11404 = vpack.c.b16 %v10592, %v10588
        %v11405 = vpack.c.b16 %v10593, %v10589
        %v11406 = vpack.c.b16 %v10598, %v10594
        %v11407 = vpack.c.b16 %v10599, %v10595
        %v11408 = vpack.c.b16 %v10600, %v10596
        %v11409 = vpack.c.b16 %v10601, %v10597
        %v11410 = vpack.c.b16 %v10606, %v10602
        %v11411 = vpack.c.b16 %v10607, %v10603
        %v11412 = vpack.c.b16 %v10608, %v10604
        %v11413 = vpack.c.b16 %v10609, %v10605
        %v11414 = vpack.c.b16 %v10614, %v10610
        %v11415 = vpack.c.b16 %v10615, %v10611
        %v11416 = vpack.c.b16 %v10616, %v10612
        %v11417 = vpack.c.b16 %v10617, %v10613
        %v11418 = vpack.c.b16 %v10622, %v10618
        %v11419 = vpack.c.b16 %v10623, %v10619
        %v11420 = vpack.c.b16 %v10624, %v10620
        %v11421 = vpack.c.b16 %v10625, %v10621
        %v11422 = vpack.c.b16 %v10630, %v10626
        %v11423 = vpack.c.b16 %v10631, %v10627
        %v11424 = vpack.c.b16 %v10632, %v10628
        %v11425 = vpack.c.b16 %v10633, %v10629
        %v11426 = vpack.c.b16 %v10638, %v10634
        %v11427 = vpack.c.b16 %v10639, %v10635
        %v11428 = vpack.c.b16 %v10640, %v10636
        %v11429 = vpack.c.b16 %v10641, %v10637
        %v11430 = vpack.c.b16 %v10646, %v10642
        %v11431 = vpack.c.b16 %v10647, %v10643
        %v11432 = vpack.c.b16 %v10648, %v10644
        %v11433 = vpack.c.b16 %v10649, %v10645
        %v11434 = vpack.c.b16 %v10654, %v10650
        %v11435 = vpack.c.b16 %v10655, %v10651
        %v11436 = vpack.c.b16 %v10656, %v10652
        %v11437 = vpack.c.b16 %v10657, %v10653
        %v11438 = vpack.c.b16 %v10662, %v10658
        %v11439 = vpack.c.b16 %v10663, %v10659
        %v11440 = vpack.c.b16 %v10664, %v10660
        %v11441 = vpack.c.b16 %v10665, %v10661
        %v11442 = vpack.c.b16 %v10670, %v10666
        %v11443 = vpack.c.b16 %v10671, %v10667
        %v11444 = vpack.c.b16 %v10672, %v10668
        %v11445 = vpack.c.b16 %v10673, %v10669
        %v11446 = vpack.c.b16 %v10678, %v10674
        %v11447 = vpack.c.b16 %v10679, %v10675
        %v11448 = vpack.c.b16 %v10680, %v10676
        %v11449 = vpack.c.b16 %v10681, %v10677
        %v11450 = vpack.c.b16 %v10686, %v10682
        %v11451 = vpack.c.b16 %v10687, %v10683
        %v11452 = vpack.c.b16 %v10688, %v10684
        %v11453 = vpack.c.b16 %v10689, %v10685
        %v11454 = vpack.c.b16 %v10694, %v10690
        %v11455 = vpack.c.b16 %v10695, %v10691
        %v11456 = vpack.c.b16 %v10696, %v10692
        %v11457 = vpack.c.b16 %v10697, %v10693
        %v11458 = vpack.c.b16 %v10702, %v10698
        %v11459 = vpack.c.b16 %v10703, %v10699
        %v11460 = vpack.c.b16 %v10704, %v10700
        %v11461 = vpack.c.b16 %v10705, %v10701
        %v11462 = vpack.c.b16 %v10710, %v10706
        %v11463 = vpack.c.b16 %v10711, %v10707
        %v11464 = vpack.c.b16 %v10712, %v10708
        %v11465 = vpack.c.b16 %v10713, %v10709
        %v11466 = vpack.c.b16 %v10718, %v10714
        %v11467 = vpack.c.b16 %v10719, %v10715
        %v11468 = vpack.c.b16 %v10720, %v10716
        %v11469 = vpack.c.b16 %v10721, %v10717
        %v11470 = vpack.c.b16 %v10726, %v10722
        %v11471 = vpack.c.b16 %v10727, %v10723
        %v11472 = vpack.c.b16 %v10728, %v10724
        %v11473 = vpack.c.b16 %v10729, %v10725
        %v11474 = vpack.c.b16 %v10734, %v10730
        %v11475 = vpack.c.b16 %v10735, %v10731
        %v11476 = vpack.c.b16 %v10736, %v10732
        %v11477 = vpack.c.b16 %v10737, %v10733
        %v11478 = vpack.c.b16 %v10742, %v10738
        %v11479 = vpack.c.b16 %v10743, %v10739
        %v11480 = vpack.c.b16 %v10744, %v10740
        %v11481 = vpack.c.b16 %v10745, %v10741
        %v11482 = vpack.c.b16 %v10750, %v10746
        %v11483 = vpack.c.b16 %v10751, %v10747
        %v11484 = vpack.c.b16 %v10752, %v10748
        %v11485 = vpack.c.b16 %v10753, %v10749
        %v11486 = vpack.c.b16 %v10758, %v10754
        %v11487 = vpack.c.b16 %v10759, %v10755
        %v11488 = vpack.c.b16 %v10760, %v10756
        %v11489 = vpack.c.b16 %v10761, %v10757
        %v11490 = vpack.c.b16 %v10766, %v10762
        %v11491 = vpack.c.b16 %v10767, %v10763
        %v11492 = vpack.c.b16 %v10768, %v10764
        %v11493 = vpack.c.b16 %v10769, %v10765
        %v11494 = vpack.c.b16 %v10774, %v10770
        %v11495 = vpack.c.b16 %v10775, %v10771
        %v11496 = vpack.c.b16 %v10776, %v10772
        %v11497 = vpack.c.b16 %v10777, %v10773
        %v11498 = vpack.c.b16 %v10782, %v10778
        %v11499 = vpack.c.b16 %v10783, %v10779
        %v11500 = vpack.c.b16 %v10784, %v10780
        %v11501 = vpack.c.b16 %v10785, %v10781
        %v11502 = vpack.c.b16 %v10790, %v10786
        %v11503 = vpack.c.b16 %v10791, %v10787
        %v11504 = vpack.c.b16 %v10792, %v10788
        %v11505 = vpack.c.b16 %v10793, %v10789
        %v11506 = vpack.c.b16 %v10798, %v10794
        %v11507 = vpack.c.b16 %v10799, %v10795
        %v11508 = vpack.c.b16 %v10800, %v10796
        %v11509 = vpack.c.b16 %v10801, %v10797
        %v11510 = vpack.c.b16 %v10806, %v10802
        %v11511 = vpack.c.b16 %v10807, %v10803
        %v11512 = vpack.c.b16 %v10808, %v10804
        %v11513 = vpack.c.b16 %v10809, %v10805
        %v11514 = vpack.c.b16 %v10814, %v10810
        %v11515 = vpack.c.b16 %v10815, %v10811
        %v11516 = vpack.c.b16 %v10816, %v10812
        %v11517 = vpack.c.b16 %v10817, %v10813
        %v11518 = vpack.c.b16 %v10822, %v10818
        %v11519 = vpack.c.b16 %v10823, %v10819
        %v11520 = vpack.c.b16 %v10824, %v10820
        %v11521 = vpack.c.b16 %v10825, %v10821
        %v11522 = vpack.c.b16 %v10830, %v10826
        %v11523 = vpack.c.b16 %v10831, %v10827
        %v11524 = vpack.c.b16 %v10832, %v10828
        %v11525 = vpack.c.b16 %v10833, %v10829
        %v11526 = vpack.c.b16 %v10838, %v10834
        %v11527 = vpack.c.b16 %v10839, %v10835
        %v11528 = vpack.c.b16 %v10840, %v10836
        %v11529 = vpack.c.b16 %v10841, %v10837
        %v11530 = vpack.c.b16 %v10846, %v10842
        %v11531 = vpack.c.b16 %v10847, %v10843
        %v11532 = vpack.c.b16 %v10848, %v10844
        %v11533 = vpack.c.b16 %v10849, %v10845
        %v11534 = vpack.c.b16 %v10854, %v10850
        %v11535 = vpack.c.b16 %v10855, %v10851
        %v11536 = vpack.c.b16 %v10856, %v10852
        %v11537 = vpack.c.b16 %v10857, %v10853
        %v11538 = vpack.c.b16 %v10862, %v10858
        %v11539 = vpack.c.b16 %v10863, %v10859
        %v11540 = vpack.c.b16 %v10864, %v10860
        %v11541 = vpack.c.b16 %v10865, %v10861
        %v11542 = vpack.c.b16 %v10870, %v10866
        %v11543 = vpack.c.b16 %v10871, %v10867
        %v11544 = vpack.c.b16 %v10872, %v10868
        %v11545 = vpack.c.b16 %v10873, %v10869
        %v11546 = vpack.c.b16 %v10878, %v10874
        %v11547 = vpack.c.b16 %v10879, %v10875
        %v11548 = vpack.c.b16 %v10880, %v10876
        %v11549 = vpack.c.b16 %v10881, %v10877
        %v11550 = vpack.c.b16 %v10886, %v10882
        %v11551 = vpack.c.b16 %v10887, %v10883
        %v11552 = vpack.c.b16 %v10888, %v10884
        %v11553 = vpack.c.b16 %v10889, %v10885
        %v11554 = vpack.c.b16 %v10894, %v10890
        %v11555 = vpack.c.b16 %v10895, %v10891
        %v11556 = vpack.c.b16 %v10896, %v10892
        %v11557 = vpack.c.b16 %v10897, %v10893
        %v11558 = vpack.c.b16 %v10902, %v10898
        %v11559 = vpack.c.b16 %v10903, %v10899
        %v11560 = vpack.c.b16 %v10904, %v10900
        %v11561 = vpack.c.b16 %v10905, %v10901
        %v11562 = vpack.c.b16 %v10910, %v10906
        %v11563 = vpack.c.b16 %v10911, %v10907
        %v11564 = vpack.c.b16 %v10912, %v10908
        %v11565 = vpack.c.b16 %v10913, %v10909
        %v11566 = vpack.c.b16 %v10918, %v10914
        %v11567 = vpack.c.b16 %v10919, %v10915
        %v11568 = vpack.c.b16 %v10920, %v10916
        %v11569 = vpack.c.b16 %v10921, %v10917
        %v11570 = vpack.c.b16 %v10926, %v10922
        %v11571 = vpack.c.b16 %v10927, %v10923
        %v11572 = vpack.c.b16 %v10928, %v10924
        %v11573 = vpack.c.b16 %v10929, %v10925
        %v11574 = vpack.c.b16 %v10934, %v10930
        %v11575 = vpack.c.b16 %v10935, %v10931
        %v11576 = vpack.c.b16 %v10936, %v10932
        %v11577 = vpack.c.b16 %v10937, %v10933
        %v11578 = vpack.c.b16 %v10942, %v10938
        %v11579 = vpack.c.b16 %v10943, %v10939
        %v11580 = vpack.c.b16 %v10944, %v10940
        %v11581 = vpack.c.b16 %v10945, %v10941
        %v11582 = vpack.c.b16 %v10950, %v10946
        %v11583 = vpack.c.b16 %v10951, %v10947
        %v11584 = vpack.c.b16 %v10952, %v10948
        %v11585 = vpack.c.b16 %v10953, %v10949
        %v11586 = vpack.c.b16 %v10958, %v10954
        %v11587 = vpack.c.b16 %v10959, %v10955
        %v11588 = vpack.c.b16 %v10960, %v10956
        %v11589 = vpack.c.b16 %v10961, %v10957
        %v11590 = vpack.c.b16 %v10966, %v10962
        %v11591 = vpack.c.b16 %v10967, %v10963
        %v11592 = vpack.c.b16 %v10968, %v10964
        %v11593 = vpack.c.b16 %v10969, %v10965
        %v11594 = vpack.c.b16 %v10974, %v10970
        %v11595 = vpack.c.b16 %v10975, %v10971
        %v11596 = vpack.c.b16 %v10976, %v10972
        %v11597 = vpack.c.b16 %v10977, %v10973
        %v11598 = vpack.c.b16 %v10982, %v10978
        %v11599 = vpack.c.b16 %v10983, %v10979
        %v11600 = vpack.c.b16 %v10984, %v10980
        %v11601 = vpack.c.b16 %v10985, %v10981
        %v11602 = vpack.c.b16 %v10990, %v10986
        %v11603 = vpack.c.b16 %v10991, %v10987
        %v11604 = vpack.c.b16 %v10992, %v10988
        %v11605 = vpack.c.b16 %v10993, %v10989
        %v11606 = vpack.c.b16 %v10998, %v10994
        %v11607 = vpack.c.b16 %v10999, %v10995
        %v11608 = vpack.c.b16 %v11000, %v10996
        %v11609 = vpack.c.b16 %v11001, %v10997
        %v11610 = vpack.c.b16 %v11006, %v11002
        %v11611 = vpack.c.b16 %v11007, %v11003
        %v11612 = vpack.c.b16 %v11008, %v11004
        %v11613 = vpack.c.b16 %v11009, %v11005
        %v11614 = vpack.c.b16 %v11014, %v11010
        %v11615 = vpack.c.b16 %v11015, %v11011
        %v11616 = vpack.c.b16 %v11016, %v11012
        %v11617 = vpack.c.b16 %v11017, %v11013
        %v11618 = vpack.c.b16 %v11022, %v11018
        %v11619 = vpack.c.b16 %v11023, %v11019
        %v11620 = vpack.c.b16 %v11024, %v11020
        %v11621 = vpack.c.b16 %v11025, %v11021
        %v11622 = vpack.c.b16 %v11030, %v11026
        %v11623 = vpack.c.b16 %v11031, %v11027
        %v11624 = vpack.c.b16 %v11032, %v11028
        %v11625 = vpack.c.b16 %v11033, %v11029
        %v11626 = vpack.c.b16 %v11038, %v11034
        %v11627 = vpack.c.b16 %v11039, %v11035
        %v11628 = vpack.c.b16 %v11040, %v11036
        %v11629 = vpack.c.b16 %v11041, %v11037
        %v11630 = vpack.c.b16 %v11046, %v11042
        %v11631 = vpack.c.b16 %v11047, %v11043
        %v11632 = vpack.c.b16 %v11048, %v11044
        %v11633 = vpack.c.b16 %v11049, %v11045
        %v11634 = vpack.c.b16 %v11054, %v11050
        %v11635 = vpack.c.b16 %v11055, %v11051
        %v11636 = vpack.c.b16 %v11056, %v11052
        %v11637 = vpack.c.b16 %v11057, %v11053
        %v11638 = vpack.c.b16 %v11062, %v11058
        %v11639 = vpack.c.b16 %v11063, %v11059
        %v11640 = vpack.c.b16 %v11064, %v11060
        %v11641 = vpack.c.b16 %v11065, %v11061
        %v11642 = vpack.c.b16 %v11070, %v11066
        %v11643 = vpack.c.b16 %v11071, %v11067
        %v11644 = vpack.c.b16 %v11072, %v11068
        %v11645 = vpack.c.b16 %v11073, %v11069
        %v11646 = vpack.c.b16 %v11078, %v11074
        %v11647 = vpack.c.b16 %v11079, %v11075
        %v11648 = vpack.c.b16 %v11080, %v11076
        %v11649 = vpack.c.b16 %v11081, %v11077
        %v11650 = vpack.c.b16 %v11086, %v11082
        %v11651 = vpack.c.b16 %v11087, %v11083
        %v11652 = vpack.c.b16 %v11088, %v11084
        %v11653 = vpack.c.b16 %v11089, %v11085
        %v11654 = vpack.c.b16 %v11094, %v11090
        %v11655 = vpack.c.b16 %v11095, %v11091
        %v11656 = vpack.c.b16 %v11096, %v11092
        %v11657 = vpack.c.b16 %v11097, %v11093
        %v11658 = vpack.c.b16 %v11102, %v11098
        %v11659 = vpack.c.b16 %v11103, %v11099
        %v11660 = vpack.c.b16 %v11104, %v11100
        %v11661 = vpack.c.b16 %v11105, %v11101
        %v11662 = vpack.c.b16 %v11110, %v11106
        %v11663 = vpack.c.b16 %v11111, %v11107
        %v11664 = vpack.c.b16 %v11112, %v11108
        %v11665 = vpack.c.b16 %v11113, %v11109
        %v11666 = vpack.c.b16 %v11118, %v11114
        %v11667 = vpack.c.b16 %v11119, %v11115
        %v11668 = vpack.c.b16 %v11120, %v11116
        %v11669 = vpack.c.b16 %v11121, %v11117
        %v11670 = vpack.c.b16 %v11126, %v11122
        %v11671 = vpack.c.b16 %v11127, %v11123
        %v11672 = vpack.c.b16 %v11128, %v11124
        %v11673 = vpack.c.b16 %v11129, %v11125
        %v11674 = vpack.c.b16 %v11134, %v11130
        %v11675 = vpack.c.b16 %v11135, %v11131
        %v11676 = vpack.c.b16 %v11136, %v11132
        %v11677 = vpack.c.b16 %v11137, %v11133
        %v11678 = vpack.c.b16 %v11142, %v11138
        %v11679 = vpack.c.b16 %v11143, %v11139
        %v11680 = vpack.c.b16 %v11144, %v11140
        %v11681 = vpack.c.b16 %v11145, %v11141
        %v11682 = vpack.c.b16 %v11150, %v11146
        %v11683 = vpack.c.b16 %v11151, %v11147
        %v11684 = vpack.c.b16 %v11152, %v11148
        %v11685 = vpack.c.b16 %v11153, %v11149
        %v11686 = vpack.c.b16 %v11158, %v11154
        %v11687 = vpack.c.b16 %v11159, %v11155
        %v11688 = vpack.c.b16 %v11160, %v11156
        %v11689 = vpack.c.b16 %v11161, %v11157
        %v11690 = vpack.c.b16 %v11166, %v11162
        %v11691 = vpack.c.b16 %v11167, %v11163
        %v11692 = vpack.c.b16 %v11168, %v11164
        %v11693 = vpack.c.b16 %v11169, %v11165
        %v11694 = vpack.c.b16 %v11174, %v11170
        %v11695 = vpack.c.b16 %v11175, %v11171
        %v11696 = vpack.c.b16 %v11176, %v11172
        %v11697 = vpack.c.b16 %v11177, %v11173
        %v11698 = vpack.c.b16 %v11182, %v11178
        %v11699 = vpack.c.b16 %v11183, %v11179
        %v11700 = vpack.c.b16 %v11184, %v11180
        %v11701 = vpack.c.b16 %v11185, %v11181
        %v11702 = vpack.c.b16 %v11190, %v11186
        %v11703 = vpack.c.b16 %v11191, %v11187
        %v11704 = vpack.c.b16 %v11192, %v11188
        %v11705 = vpack.c.b16 %v11193, %v11189
        %12218 = vmatprep.subr.bf16.mxu0 %v11195
        %12219 = vmatpush1.bf16.msra.mxu0 %v11194
        %12220 = vmatprep.subr.bf16.mxu0 %v11199
        %12221 = vmatpush1.bf16.msra.mxu0 %v11198
        %12222 = vmatprep.subr.bf16.mxu0 %v11203
        %12223 = vmatpush1.bf16.msra.mxu0 %v11202
        %12224 = vmatprep.subr.bf16.mxu0 %v11207
        %12225 = vmatpush1.bf16.msra.mxu0 %v11206
        %12226 = vmatprep.subr.bf16.mxu0 %v11211
        %12227 = vmatpush1.bf16.msra.mxu0 %v11210
        %12228 = vmatprep.subr.bf16.mxu0 %v11215
        %12229 = vmatpush1.bf16.msra.mxu0 %v11214
        %12230 = vmatprep.subr.bf16.mxu0 %v11219
        %12231 = vmatpush1.bf16.msra.mxu0 %v11218
        %12232 = vmatprep.subr.bf16.mxu0 %v11223
        %12233 = vmatpush1.bf16.msra.mxu0 %v11222
        %12234 = vmatprep.subr.bf16.mxu0 %v11227
        %12235 = vmatpush1.bf16.msra.mxu0 %v11226
        %12236 = vmatprep.subr.bf16.mxu0 %v11231
        %12237 = vmatpush1.bf16.msra.mxu0 %v11230
        %12238 = vmatprep.subr.bf16.mxu0 %v11235
        %12239 = vmatpush1.bf16.msra.mxu0 %v11234
        %12240 = vmatprep.subr.bf16.mxu0 %v11239
        %12241 = vmatpush1.bf16.msra.mxu0 %v11238
        %12242 = vmatprep.subr.bf16.mxu0 %v11243
        %12243 = vmatpush1.bf16.msra.mxu0 %v11242
        %12244 = vmatprep.subr.bf16.mxu0 %v11247
        %12245 = vmatpush1.bf16.msra.mxu0 %v11246
        %12246 = vmatprep.subr.bf16.mxu0 %v11251
        %12247 = vmatpush1.bf16.msra.mxu0 %v11250
        %12248 = vmatprep.subr.bf16.mxu0 %v11255
        %12249 = vmatpush1.bf16.msra.mxu0 %v11254
        %12250 = vmatprep.mubr.bf16.mxu0 %v9109
        %12251 = vmatmul.mubr.bf16.gmra.mrb[0].mxu0 %v9108
        %v12252 = vpop.f32.mrb[0].mxu0
        %v12253 = vadd.f32 %v9641, %v12252
        %v12254 = vpop.f32.mrb[0].mxu0
        %v12255 = vadd.f32 %v9645, %v12254
        %v12256 = vpop.f32.mrb[0].mxu0
        %v12257 = vpop.f32.mrb[0].mxu0
        %12258 = vdwg.mxu0
        %12259 = vmatprep.subr.bf16.mxu0 %v11259
        %12260 = vmatpush1.bf16.msra.mxu0 %v11258
        %12261 = vmatprep.subr.bf16.mxu0 %v11263
        %12262 = vmatpush1.bf16.msra.mxu0 %v11262
        %12263 = vmatprep.subr.bf16.mxu0 %v11267
        %12264 = vmatpush1.bf16.msra.mxu0 %v11266
        %12265 = vmatprep.subr.bf16.mxu0 %v11271
        %12266 = vmatpush1.bf16.msra.mxu0 %v11270
        %12267 = vmatprep.subr.bf16.mxu0 %v11275
        %12268 = vmatpush1.bf16.msra.mxu0 %v11274
        %12269 = vmatprep.subr.bf16.mxu0 %v11279
        %12270 = vmatpush1.bf16.msra.mxu0 %v11278
        %12271 = vmatprep.subr.bf16.mxu0 %v11283
        %12272 = vmatpush1.bf16.msra.mxu0 %v11282
        %12273 = vmatprep.subr.bf16.mxu0 %v11287
        %12274 = vmatpush1.bf16.msra.mxu0 %v11286
        %12275 = vmatprep.subr.bf16.mxu0 %v11291
        %12276 = vmatpush1.bf16.msra.mxu0 %v11290
        %12277 = vmatprep.subr.bf16.mxu0 %v11295
        %12278 = vmatpush1.bf16.msra.mxu0 %v11294
        %12279 = vmatprep.subr.bf16.mxu0 %v11299
        %12280 = vmatpush1.bf16.msra.mxu0 %v11298
        %12281 = vmatprep.subr.bf16.mxu0 %v11303
        %12282 = vmatpush1.bf16.msra.mxu0 %v11302
        %12283 = vmatprep.subr.bf16.mxu0 %v11307
        %12284 = vmatpush1.bf16.msra.mxu0 %v11306
        %12285 = vmatprep.subr.bf16.mxu0 %v11311
        %12286 = vmatpush1.bf16.msra.mxu0 %v11310
        %12287 = vmatprep.subr.bf16.mxu0 %v11315
        %12288 = vmatpush1.bf16.msra.mxu0 %v11314
        %12289 = vmatprep.subr.bf16.mxu0 %v11319
        %12290 = vmatpush1.bf16.msra.mxu0 %v11318
        %12291 = vmatprep.mubr.bf16.mxu0 %v9111
        %12292 = vmatmul.mubr.bf16.gmra.mrb[0].mxu0 %v9110
        %v12293 = vpop.f32.mrb[0].mxu0
        %v12294 = vadd.f32 %v12253, %v12293
        %v12295 = vpop.f32.mrb[0].mxu0
        %v12296 = vadd.f32 %v12255, %v12295
        %v12297 = vpop.f32.mrb[0].mxu0
        %v12298 = vpop.f32.mrb[0].mxu0
        %12299 = vdwg.mxu0
        %12300 = vmatprep.subr.bf16.mxu0 %v11323
        %12301 = vmatpush1.bf16.msra.mxu0 %v11322
        %12302 = vmatprep.subr.bf16.mxu0 %v11327
        %12303 = vmatpush1.bf16.msra.mxu0 %v11326
        %12304 = vmatprep.subr.bf16.mxu0 %v11331
        %12305 = vmatpush1.bf16.msra.mxu0 %v11330
        %12306 = vmatprep.subr.bf16.mxu0 %v11335
        %12307 = vmatpush1.bf16.msra.mxu0 %v11334
        %12308 = vmatprep.subr.bf16.mxu0 %v11339
        %12309 = vmatpush1.bf16.msra.mxu0 %v11338
        %12310 = vmatprep.subr.bf16.mxu0 %v11343
        %12311 = vmatpush1.bf16.msra.mxu0 %v11342
        %12312 = vmatprep.subr.bf16.mxu0 %v11347
        %12313 = vmatpush1.bf16.msra.mxu0 %v11346
        %12314 = vmatprep.subr.bf16.mxu0 %v11351
        %12315 = vmatpush1.bf16.msra.mxu0 %v11350
        %12316 = vmatprep.subr.bf16.mxu0 %v11355
        %12317 = vmatpush1.bf16.msra.mxu0 %v11354
        %12318 = vmatprep.subr.bf16.mxu0 %v11359
        %12319 = vmatpush1.bf16.msra.mxu0 %v11358
        %12320 = vmatprep.subr.bf16.mxu0 %v11363
        %12321 = vmatpush1.bf16.msra.mxu0 %v11362
        %12322 = vmatprep.subr.bf16.mxu0 %v11367
        %12323 = vmatpush1.bf16.msra.mxu0 %v11366
        %12324 = vmatprep.subr.bf16.mxu0 %v11371
        %12325 = vmatpush1.bf16.msra.mxu0 %v11370
        %12326 = vmatprep.subr.bf16.mxu0 %v11375
        %12327 = vmatpush1.bf16.msra.mxu0 %v11374
        %12328 = vmatprep.subr.bf16.mxu0 %v11379
        %12329 = vmatpush1.bf16.msra.mxu0 %v11378
        %12330 = vmatprep.subr.bf16.mxu0 %v11383
        %12331 = vmatpush1.bf16.msra.mxu0 %v11382
        %12332 = vmatprep.mubr.bf16.mxu0 %v9113
        %12333 = vmatmul.mubr.bf16.gmra.mrb[0].mxu0 %v9112
        %v12334 = vpop.f32.mrb[0].mxu0
        %v12335 = vadd.f32 %v12294, %v12334
        %v12336 = vpop.f32.mrb[0].mxu0
        %v12337 = vadd.f32 %v12296, %v12336
        %v12338 = vpop.f32.mrb[0].mxu0
        %v12339 = vpop.f32.mrb[0].mxu0
        %12340 = vdwg.mxu0
        %12341 = vmatprep.subr.bf16.mxu0 %v11387
        %12342 = vmatpush1.bf16.msra.mxu0 %v11386
        %12343 = vmatprep.subr.bf16.mxu0 %v11391
        %12344 = vmatpush1.bf16.msra.mxu0 %v11390
        %12345 = vmatprep.subr.bf16.mxu0 %v11395
        %12346 = vmatpush1.bf16.msra.mxu0 %v11394
        %12347 = vmatprep.subr.bf16.mxu0 %v11399
        %12348 = vmatpush1.bf16.msra.mxu0 %v11398
        %12349 = vmatprep.subr.bf16.mxu0 %v11403
        %12350 = vmatpush1.bf16.msra.mxu0 %v11402
        %12351 = vmatprep.subr.bf16.mxu0 %v11407
        %12352 = vmatpush1.bf16.msra.mxu0 %v11406
        %12353 = vmatprep.subr.bf16.mxu0 %v11411
        %12354 = vmatpush1.bf16.msra.mxu0 %v11410
        %12355 = vmatprep.subr.bf16.mxu0 %v11415
        %12356 = vmatpush1.bf16.msra.mxu0 %v11414
        %12357 = vmatprep.subr.bf16.mxu0 %v11419
        %12358 = vmatpush1.bf16.msra.mxu0 %v11418
        %12359 = vmatprep.subr.bf16.mxu0 %v11423
        %12360 = vmatpush1.bf16.msra.mxu0 %v11422
        %12361 = vmatprep.subr.bf16.mxu0 %v11427
        %12362 = vmatpush1.bf16.msra.mxu0 %v11426
        %12363 = vmatprep.subr.bf16.mxu0 %v11431
        %12364 = vmatpush1.bf16.msra.mxu0 %v11430
        %12365 = vmatprep.subr.bf16.mxu0 %v11435
        %12366 = vmatpush1.bf16.msra.mxu0 %v11434
        %12367 = vmatprep.subr.bf16.mxu0 %v11439
        %12368 = vmatpush1.bf16.msra.mxu0 %v11438
        %12369 = vmatprep.subr.bf16.mxu0 %v11443
        %12370 = vmatpush1.bf16.msra.mxu0 %v11442
        %12371 = vmatprep.subr.bf16.mxu0 %v11447
        %12372 = vmatpush1.bf16.msra.mxu0 %v11446
        %12373 = vmatprep.mubr.bf16.mxu0 %v9115
        %12374 = vmatmul.mubr.bf16.gmra.mrb[0].mxu0 %v9114
        %v12375 = vpop.f32.mrb[0].mxu0
        %v12376 = vadd.f32 %v12335, %v12375
        %v12377 = vpop.f32.mrb[0].mxu0
        %v12378 = vadd.f32 %v12337, %v12377
        %v12379 = vpop.f32.mrb[0].mxu0
        %v12380 = vpop.f32.mrb[0].mxu0
        %12381 = vdwg.mxu0
        %12382 = vmatprep.subr.bf16.mxu0 %v11451
        %12383 = vmatpush1.bf16.msra.mxu0 %v11450
        %12384 = vmatprep.subr.bf16.mxu0 %v11455
        %12385 = vmatpush1.bf16.msra.mxu0 %v11454
        %12386 = vmatprep.subr.bf16.mxu0 %v11459
        %12387 = vmatpush1.bf16.msra.mxu0 %v11458
        %12388 = vmatprep.subr.bf16.mxu0 %v11463
        %12389 = vmatpush1.bf16.msra.mxu0 %v11462
        %12390 = vmatprep.subr.bf16.mxu0 %v11467
        %12391 = vmatpush1.bf16.msra.mxu0 %v11466
        %12392 = vmatprep.subr.bf16.mxu0 %v11471
        %12393 = vmatpush1.bf16.msra.mxu0 %v11470
        %12394 = vmatprep.subr.bf16.mxu0 %v11475
        %12395 = vmatpush1.bf16.msra.mxu0 %v11474
        %12396 = vmatprep.subr.bf16.mxu0 %v11479
        %12397 = vmatpush1.bf16.msra.mxu0 %v11478
        %12398 = vmatprep.subr.bf16.mxu0 %v11483
        %12399 = vmatpush1.bf16.msra.mxu0 %v11482
        %12400 = vmatprep.subr.bf16.mxu0 %v11487
        %12401 = vmatpush1.bf16.msra.mxu0 %v11486
        %12402 = vmatprep.subr.bf16.mxu0 %v11491
        %12403 = vmatpush1.bf16.msra.mxu0 %v11490
        %12404 = vmatprep.subr.bf16.mxu0 %v11495
        %12405 = vmatpush1.bf16.msra.mxu0 %v11494
        %12406 = vmatprep.subr.bf16.mxu0 %v11499
        %12407 = vmatpush1.bf16.msra.mxu0 %v11498
        %12408 = vmatprep.subr.bf16.mxu0 %v11503
        %12409 = vmatpush1.bf16.msra.mxu0 %v11502
        %12410 = vmatprep.subr.bf16.mxu0 %v11507
        %12411 = vmatpush1.bf16.msra.mxu0 %v11506
        %12412 = vmatprep.subr.bf16.mxu0 %v11511
        %12413 = vmatpush1.bf16.msra.mxu0 %v11510
        %12414 = vmatprep.mubr.bf16.mxu0 %v9117
        %12415 = vmatmul.mubr.bf16.gmra.mrb[0].mxu0 %v9116
        %v12416 = vpop.f32.mrb[0].mxu0
        %v12417 = vadd.f32 %v12376, %v12416
        %v12418 = vpop.f32.mrb[0].mxu0
        %v12419 = vadd.f32 %v12378, %v12418
        %v12420 = vpop.f32.mrb[0].mxu0
        %v12421 = vpop.f32.mrb[0].mxu0
        %12422 = vdwg.mxu0
        %12423 = vmatprep.subr.bf16.mxu0 %v11515
        %12424 = vmatpush1.bf16.msra.mxu0 %v11514
        %12425 = vmatprep.subr.bf16.mxu0 %v11519
        %12426 = vmatpush1.bf16.msra.mxu0 %v11518
        %12427 = vmatprep.subr.bf16.mxu0 %v11523
        %12428 = vmatpush1.bf16.msra.mxu0 %v11522
        %12429 = vmatprep.subr.bf16.mxu0 %v11527
        %12430 = vmatpush1.bf16.msra.mxu0 %v11526
        %12431 = vmatprep.subr.bf16.mxu0 %v11531
        %12432 = vmatpush1.bf16.msra.mxu0 %v11530
        %12433 = vmatprep.subr.bf16.mxu0 %v11535
        %12434 = vmatpush1.bf16.msra.mxu0 %v11534
        %12435 = vmatprep.subr.bf16.mxu0 %v11539
        %12436 = vmatpush1.bf16.msra.mxu0 %v11538
        %12437 = vmatprep.subr.bf16.mxu0 %v11543
        %12438 = vmatpush1.bf16.msra.mxu0 %v11542
        %12439 = vmatprep.subr.bf16.mxu0 %v11547
        %12440 = vmatpush1.bf16.msra.mxu0 %v11546
        %12441 = vmatprep.subr.bf16.mxu0 %v11551
        %12442 = vmatpush1.bf16.msra.mxu0 %v11550
        %12443 = vmatprep.subr.bf16.mxu0 %v11555
        %12444 = vmatpush1.bf16.msra.mxu0 %v11554
        %12445 = vmatprep.subr.bf16.mxu0 %v11559
        %12446 = vmatpush1.bf16.msra.mxu0 %v11558
        %12447 = vmatprep.subr.bf16.mxu0 %v11563
        %12448 = vmatpush1.bf16.msra.mxu0 %v11562
        %12449 = vmatprep.subr.bf16.mxu0 %v11567
        %12450 = vmatpush1.bf16.msra.mxu0 %v11566
        %12451 = vmatprep.subr.bf16.mxu0 %v11571
        %12452 = vmatpush1.bf16.msra.mxu0 %v11570
        %12453 = vmatprep.subr.bf16.mxu0 %v11575
        %12454 = vmatpush1.bf16.msra.mxu0 %v11574
        %12455 = vmatprep.mubr.bf16.mxu0 %v9119
        %12456 = vmatmul.mubr.bf16.gmra.mrb[0].mxu0 %v9118
        %v12457 = vpop.f32.mrb[0].mxu0
        %v12458 = vadd.f32 %v12417, %v12457
        %v12459 = vpop.f32.mrb[0].mxu0
        %v12460 = vadd.f32 %v12419, %v12459
        %v12461 = vpop.f32.mrb[0].mxu0
        %v12462 = vpop.f32.mrb[0].mxu0
        %12463 = vdwg.mxu0
        %12464 = vmatprep.subr.bf16.mxu0 %v11579
        %12465 = vmatpush1.bf16.msra.mxu0 %v11578
        %12466 = vmatprep.subr.bf16.mxu0 %v11583
        %12467 = vmatpush1.bf16.msra.mxu0 %v11582
        %12468 = vmatprep.subr.bf16.mxu0 %v11587
        %12469 = vmatpush1.bf16.msra.mxu0 %v11586
        %12470 = vmatprep.subr.bf16.mxu0 %v11591
        %12471 = vmatpush1.bf16.msra.mxu0 %v11590
        %12472 = vmatprep.subr.bf16.mxu0 %v11595
        %12473 = vmatpush1.bf16.msra.mxu0 %v11594
        %12474 = vmatprep.subr.bf16.mxu0 %v11599
        %12475 = vmatpush1.bf16.msra.mxu0 %v11598
        %12476 = vmatprep.subr.bf16.mxu0 %v11603
        %12477 = vmatpush1.bf16.msra.mxu0 %v11602
        %12478 = vmatprep.subr.bf16.mxu0 %v11607
        %12479 = vmatpush1.bf16.msra.mxu0 %v11606
        %12480 = vmatprep.subr.bf16.mxu0 %v11611
        %12481 = vmatpush1.bf16.msra.mxu0 %v11610
        %12482 = vmatprep.subr.bf16.mxu0 %v11615
        %12483 = vmatpush1.bf16.msra.mxu0 %v11614
        %12484 = vmatprep.subr.bf16.mxu0 %v11619
        %12485 = vmatpush1.bf16.msra.mxu0 %v11618
        %12486 = vmatprep.subr.bf16.mxu0 %v11623
        %12487 = vmatpush1.bf16.msra.mxu0 %v11622
        %12488 = vmatprep.subr.bf16.mxu0 %v11627
        %12489 = vmatpush1.bf16.msra.mxu0 %v11626
        %12490 = vmatprep.subr.bf16.mxu0 %v11631
        %12491 = vmatpush1.bf16.msra.mxu0 %v11630
        %12492 = vmatprep.subr.bf16.mxu0 %v11635
        %12493 = vmatpush1.bf16.msra.mxu0 %v11634
        %12494 = vmatprep.subr.bf16.mxu0 %v11639
        %12495 = vmatpush1.bf16.msra.mxu0 %v11638
        %12496 = vmatprep.mubr.bf16.mxu0 %v9121
        %12497 = vmatmul.mubr.bf16.gmra.mrb[0].mxu0 %v9120
        %v12498 = vpop.f32.mrb[0].mxu0
        %v12499 = vadd.f32 %v12458, %v12498
        %v12500 = vpop.f32.mrb[0].mxu0
        %v12501 = vadd.f32 %v12460, %v12500
        %v12502 = vpop.f32.mrb[0].mxu0
        %v12503 = vpop.f32.mrb[0].mxu0
        %12504 = vdwg.mxu0
        %12505 = vmatprep.subr.bf16.mxu0 %v11643
        %12506 = vmatpush1.bf16.msra.mxu0 %v11642
        %12507 = vmatprep.subr.bf16.mxu0 %v11647
        %12508 = vmatpush1.bf16.msra.mxu0 %v11646
        %12509 = vmatprep.subr.bf16.mxu0 %v11651
        %12510 = vmatpush1.bf16.msra.mxu0 %v11650
        %12511 = vmatprep.subr.bf16.mxu0 %v11655
        %12512 = vmatpush1.bf16.msra.mxu0 %v11654
        %12513 = vmatprep.subr.bf16.mxu0 %v11659
        %12514 = vmatpush1.bf16.msra.mxu0 %v11658
        %12515 = vmatprep.subr.bf16.mxu0 %v11663
        %12516 = vmatpush1.bf16.msra.mxu0 %v11662
        %12517 = vmatprep.subr.bf16.mxu0 %v11667
        %12518 = vmatpush1.bf16.msra.mxu0 %v11666
        %12519 = vmatprep.subr.bf16.mxu0 %v11671
        %12520 = vmatpush1.bf16.msra.mxu0 %v11670
        %12521 = vmatprep.subr.bf16.mxu0 %v11675
        %12522 = vmatpush1.bf16.msra.mxu0 %v11674
        %12523 = vmatprep.subr.bf16.mxu0 %v11679
        %12524 = vmatpush1.bf16.msra.mxu0 %v11678
        %12525 = vmatprep.subr.bf16.mxu0 %v11683
        %12526 = vmatpush1.bf16.msra.mxu0 %v11682
        %12527 = vmatprep.subr.bf16.mxu0 %v11687
        %12528 = vmatpush1.bf16.msra.mxu0 %v11686
        %12529 = vmatprep.subr.bf16.mxu0 %v11691
        %12530 = vmatpush1.bf16.msra.mxu0 %v11690
        %12531 = vmatprep.subr.bf16.mxu0 %v11695
        %12532 = vmatpush1.bf16.msra.mxu0 %v11694
        %12533 = vmatprep.subr.bf16.mxu0 %v11699
        %12534 = vmatpush1.bf16.msra.mxu0 %v11698
        %12535 = vmatprep.subr.bf16.mxu0 %v11703
        %12536 = vmatpush1.bf16.msra.mxu0 %v11702
        %12537 = vmatprep.mubr.bf16.mxu0 %v9123
        %12538 = vmatmul.mubr.bf16.gmra.mrb[0].mxu0 %v9122
        %v12539 = vpop.f32.mrb[0].mxu0
        %v12540 = vadd.f32 %v12499, %v12539
        %v12541 = vpop.f32.mrb[0].mxu0
        %v12542 = vadd.f32 %v12501, %v12541
        %v12543 = vpop.f32.mrb[0].mxu0
        %v12544 = vpop.f32.mrb[0].mxu0
        %12545 = vdwg.mxu0
        %12546 = vmatprep.subr.bf16.mxu0 %v11197
        %12547 = vmatpush1.bf16.msra.mxu0 %v11196
        %12548 = vmatprep.subr.bf16.mxu0 %v11201
        %12549 = vmatpush1.bf16.msra.mxu0 %v11200
        %12550 = vmatprep.subr.bf16.mxu0 %v11205
        %12551 = vmatpush1.bf16.msra.mxu0 %v11204
        %12552 = vmatprep.subr.bf16.mxu0 %v11209
        %12553 = vmatpush1.bf16.msra.mxu0 %v11208
        %12554 = vmatprep.subr.bf16.mxu0 %v11213
        %12555 = vmatpush1.bf16.msra.mxu0 %v11212
        %12556 = vmatprep.subr.bf16.mxu0 %v11217
        %12557 = vmatpush1.bf16.msra.mxu0 %v11216
        %12558 = vmatprep.subr.bf16.mxu0 %v11221
        %12559 = vmatpush1.bf16.msra.mxu0 %v11220
        %12560 = vmatprep.subr.bf16.mxu0 %v11225
        %12561 = vmatpush1.bf16.msra.mxu0 %v11224
        %12562 = vmatprep.subr.bf16.mxu0 %v11229
        %12563 = vmatpush1.bf16.msra.mxu0 %v11228
        %12564 = vmatprep.subr.bf16.mxu0 %v11233
        %12565 = vmatpush1.bf16.msra.mxu0 %v11232
        %12566 = vmatprep.subr.bf16.mxu0 %v11237
        %12567 = vmatpush1.bf16.msra.mxu0 %v11236
        %12568 = vmatprep.subr.bf16.mxu0 %v11241
        %12569 = vmatpush1.bf16.msra.mxu0 %v11240
        %12570 = vmatprep.subr.bf16.mxu0 %v11245
        %12571 = vmatpush1.bf16.msra.mxu0 %v11244
        %12572 = vmatprep.subr.bf16.mxu0 %v11249
        %12573 = vmatpush1.bf16.msra.mxu0 %v11248
        %12574 = vmatprep.subr.bf16.mxu0 %v11253
        %12575 = vmatpush1.bf16.msra.mxu0 %v11252
        %12576 = vmatprep.subr.bf16.mxu0 %v11257
        %12577 = vmatpush1.bf16.msra.mxu0 %v11256
        %12578 = vmatprep.mubr.bf16.mxu0 %v9109
        %12579 = vmatmul.mubr.bf16.gmra.mrb[0].mxu0 %v9108
        %v12580 = vpop.f32.mrb[0].mxu0
        %v12581 = vadd.f32 %v9649, %v12580
        %v12582 = vpop.f32.mrb[0].mxu0
        %v12583 = vadd.f32 %v9653, %v12582
        %v12584 = vpop.f32.mrb[0].mxu0
        %v12585 = vpop.f32.mrb[0].mxu0
        %12586 = vdwg.mxu0
        %12587 = vmatprep.subr.bf16.mxu0 %v11261
        %12588 = vmatpush1.bf16.msra.mxu0 %v11260
        %12589 = vmatprep.subr.bf16.mxu0 %v11265
        %12590 = vmatpush1.bf16.msra.mxu0 %v11264
        %12591 = vmatprep.subr.bf16.mxu0 %v11269
        %12592 = vmatpush1.bf16.msra.mxu0 %v11268
        %12593 = vmatprep.subr.bf16.mxu0 %v11273
        %12594 = vmatpush1.bf16.msra.mxu0 %v11272
        %12595 = vmatprep.subr.bf16.mxu0 %v11277
        %12596 = vmatpush1.bf16.msra.mxu0 %v11276
        %12597 = vmatprep.subr.bf16.mxu0 %v11281
        %12598 = vmatpush1.bf16.msra.mxu0 %v11280
        %12599 = vmatprep.subr.bf16.mxu0 %v11285
        %12600 = vmatpush1.bf16.msra.mxu0 %v11284
        %12601 = vmatprep.subr.bf16.mxu0 %v11289
        %12602 = vmatpush1.bf16.msra.mxu0 %v11288
        %12603 = vmatprep.subr.bf16.mxu0 %v11293
        %12604 = vmatpush1.bf16.msra.mxu0 %v11292
        %12605 = vmatprep.subr.bf16.mxu0 %v11297
        %12606 = vmatpush1.bf16.msra.mxu0 %v11296
        %12607 = vmatprep.subr.bf16.mxu0 %v11301
        %12608 = vmatpush1.bf16.msra.mxu0 %v11300
        %12609 = vmatprep.subr.bf16.mxu0 %v11305
        %12610 = vmatpush1.bf16.msra.mxu0 %v11304
        %12611 = vmatprep.subr.bf16.mxu0 %v11309
        %12612 = vmatpush1.bf16.msra.mxu0 %v11308
        %12613 = vmatprep.subr.bf16.mxu0 %v11313
        %12614 = vmatpush1.bf16.msra.mxu0 %v11312
        %12615 = vmatprep.subr.bf16.mxu0 %v11317
        %12616 = vmatpush1.bf16.msra.mxu0 %v11316
        %12617 = vmatprep.subr.bf16.mxu0 %v11321
        %12618 = vmatpush1.bf16.msra.mxu0 %v11320
        %12619 = vmatprep.mubr.bf16.mxu0 %v9111
        %12620 = vmatmul.mubr.bf16.gmra.mrb[0].mxu0 %v9110
        %v12621 = vpop.f32.mrb[0].mxu0
        %v12622 = vadd.f32 %v12581, %v12621
        %v12623 = vpop.f32.mrb[0].mxu0
        %v12624 = vadd.f32 %v12583, %v12623
        %v12625 = vpop.f32.mrb[0].mxu0
        %v12626 = vpop.f32.mrb[0].mxu0
        %12627 = vdwg.mxu0
        %12628 = vmatprep.subr.bf16.mxu0 %v11325
        %12629 = vmatpush1.bf16.msra.mxu0 %v11324
        %12630 = vmatprep.subr.bf16.mxu0 %v11329
        %12631 = vmatpush1.bf16.msra.mxu0 %v11328
        %12632 = vmatprep.subr.bf16.mxu0 %v11333
        %12633 = vmatpush1.bf16.msra.mxu0 %v11332
        %12634 = vmatprep.subr.bf16.mxu0 %v11337
        %12635 = vmatpush1.bf16.msra.mxu0 %v11336
        %12636 = vmatprep.subr.bf16.mxu0 %v11341
        %12637 = vmatpush1.bf16.msra.mxu0 %v11340
        %12638 = vmatprep.subr.bf16.mxu0 %v11345
        %12639 = vmatpush1.bf16.msra.mxu0 %v11344
        %12640 = vmatprep.subr.bf16.mxu0 %v11349
        %12641 = vmatpush1.bf16.msra.mxu0 %v11348
        %12642 = vmatprep.subr.bf16.mxu0 %v11353
        %12643 = vmatpush1.bf16.msra.mxu0 %v11352
        %12644 = vmatprep.subr.bf16.mxu0 %v11357
        %12645 = vmatpush1.bf16.msra.mxu0 %v11356
        %12646 = vmatprep.subr.bf16.mxu0 %v11361
        %12647 = vmatpush1.bf16.msra.mxu0 %v11360
        %12648 = vmatprep.subr.bf16.mxu0 %v11365
        %12649 = vmatpush1.bf16.msra.mxu0 %v11364
        %12650 = vmatprep.subr.bf16.mxu0 %v11369
        %12651 = vmatpush1.bf16.msra.mxu0 %v11368
        %12652 = vmatprep.subr.bf16.mxu0 %v11373
        %12653 = vmatpush1.bf16.msra.mxu0 %v11372
        %12654 = vmatprep.subr.bf16.mxu0 %v11377
        %12655 = vmatpush1.bf16.msra.mxu0 %v11376
        %12656 = vmatprep.subr.bf16.mxu0 %v11381
        %12657 = vmatpush1.bf16.msra.mxu0 %v11380
        %12658 = vmatprep.subr.bf16.mxu0 %v11385
        %12659 = vmatpush1.bf16.msra.mxu0 %v11384
        %12660 = vmatprep.mubr.bf16.mxu0 %v9113
        %12661 = vmatmul.mubr.bf16.gmra.mrb[0].mxu0 %v9112
        %v12662 = vpop.f32.mrb[0].mxu0
        %v12663 = vadd.f32 %v12622, %v12662
        %v12664 = vpop.f32.mrb[0].mxu0
        %v12665 = vadd.f32 %v12624, %v12664
        %v12666 = vpop.f32.mrb[0].mxu0
        %v12667 = vpop.f32.mrb[0].mxu0
        %12668 = vdwg.mxu0
        %12669 = vmatprep.subr.bf16.mxu0 %v11389
        %12670 = vmatpush1.bf16.msra.mxu0 %v11388
        %12671 = vmatprep.subr.bf16.mxu0 %v11393
        %12672 = vmatpush1.bf16.msra.mxu0 %v11392
        %12673 = vmatprep.subr.bf16.mxu0 %v11397
        %12674 = vmatpush1.bf16.msra.mxu0 %v11396
        %12675 = vmatprep.subr.bf16.mxu0 %v11401
        %12676 = vmatpush1.bf16.msra.mxu0 %v11400
        %12677 = vmatprep.subr.bf16.mxu0 %v11405
        %12678 = vmatpush1.bf16.msra.mxu0 %v11404
        %12679 = vmatprep.subr.bf16.mxu0 %v11409
        %12680 = vmatpush1.bf16.msra.mxu0 %v11408
        %12681 = vmatprep.subr.bf16.mxu0 %v11413
        %12682 = vmatpush1.bf16.msra.mxu0 %v11412
        %12683 = vmatprep.subr.bf16.mxu0 %v11417
        %12684 = vmatpush1.bf16.msra.mxu0 %v11416
        %12685 = vmatprep.subr.bf16.mxu0 %v11421
        %12686 = vmatpush1.bf16.msra.mxu0 %v11420
        %12687 = vmatprep.subr.bf16.mxu0 %v11425
        %12688 = vmatpush1.bf16.msra.mxu0 %v11424
        %12689 = vmatprep.subr.bf16.mxu0 %v11429
        %12690 = vmatpush1.bf16.msra.mxu0 %v11428
        %12691 = vmatprep.subr.bf16.mxu0 %v11433
        %12692 = vmatpush1.bf16.msra.mxu0 %v11432
        %12693 = vmatprep.subr.bf16.mxu0 %v11437
        %12694 = vmatpush1.bf16.msra.mxu0 %v11436
        %12695 = vmatprep.subr.bf16.mxu0 %v11441
        %12696 = vmatpush1.bf16.msra.mxu0 %v11440
        %12697 = vmatprep.subr.bf16.mxu0 %v11445
        %12698 = vmatpush1.bf16.msra.mxu0 %v11444
        %12699 = vmatprep.subr.bf16.mxu0 %v11449
        %12700 = vmatpush1.bf16.msra.mxu0 %v11448
        %12701 = vmatprep.mubr.bf16.mxu0 %v9115
        %12702 = vmatmul.mubr.bf16.gmra.mrb[0].mxu0 %v9114
        %v12703 = vpop.f32.mrb[0].mxu0
        %v12704 = vadd.f32 %v12663, %v12703
        %v12705 = vpop.f32.mrb[0].mxu0
        %v12706 = vadd.f32 %v12665, %v12705
        %v12707 = vpop.f32.mrb[0].mxu0
        %v12708 = vpop.f32.mrb[0].mxu0
        %12709 = vdwg.mxu0
        %12710 = vmatprep.subr.bf16.mxu0 %v11453
        %12711 = vmatpush1.bf16.msra.mxu0 %v11452
        %12712 = vmatprep.subr.bf16.mxu0 %v11457
        %12713 = vmatpush1.bf16.msra.mxu0 %v11456
        %12714 = vmatprep.subr.bf16.mxu0 %v11461
        %12715 = vmatpush1.bf16.msra.mxu0 %v11460
        %12716 = vmatprep.subr.bf16.mxu0 %v11465
        %12717 = vmatpush1.bf16.msra.mxu0 %v11464
        %12718 = vmatprep.subr.bf16.mxu0 %v11469
        %12719 = vmatpush1.bf16.msra.mxu0 %v11468
        %12720 = vmatprep.subr.bf16.mxu0 %v11473
        %12721 = vmatpush1.bf16.msra.mxu0 %v11472
        %12722 = vmatprep.subr.bf16.mxu0 %v11477
        %12723 = vmatpush1.bf16.msra.mxu0 %v11476
        %12724 = vmatprep.subr.bf16.mxu0 %v11481
        %12725 = vmatpush1.bf16.msra.mxu0 %v11480
        %12726 = vmatprep.subr.bf16.mxu0 %v11485
        %12727 = vmatpush1.bf16.msra.mxu0 %v11484
        %12728 = vmatprep.subr.bf16.mxu0 %v11489
        %12729 = vmatpush1.bf16.msra.mxu0 %v11488
        %12730 = vmatprep.subr.bf16.mxu0 %v11493
        %12731 = vmatpush1.bf16.msra.mxu0 %v11492
        %12732 = vmatprep.subr.bf16.mxu0 %v11497
        %12733 = vmatpush1.bf16.msra.mxu0 %v11496
        %12734 = vmatprep.subr.bf16.mxu0 %v11501
        %12735 = vmatpush1.bf16.msra.mxu0 %v11500
        %12736 = vmatprep.subr.bf16.mxu0 %v11505
        %12737 = vmatpush1.bf16.msra.mxu0 %v11504
        %12738 = vmatprep.subr.bf16.mxu0 %v11509
        %12739 = vmatpush1.bf16.msra.mxu0 %v11508
        %12740 = vmatprep.subr.bf16.mxu0 %v11513
        %12741 = vmatpush1.bf16.msra.mxu0 %v11512
        %12742 = vmatprep.mubr.bf16.mxu0 %v9117
        %12743 = vmatmul.mubr.bf16.gmra.mrb[0].mxu0 %v9116
        %v12744 = vpop.f32.mrb[0].mxu0
        %v12745 = vadd.f32 %v12704, %v12744
        %v12746 = vpop.f32.mrb[0].mxu0
        %v12747 = vadd.f32 %v12706, %v12746
        %v12748 = vpop.f32.mrb[0].mxu0
        %v12749 = vpop.f32.mrb[0].mxu0
        %12750 = vdwg.mxu0
        %12751 = vmatprep.subr.bf16.mxu0 %v11517
        %12752 = vmatpush1.bf16.msra.mxu0 %v11516
        %12753 = vmatprep.subr.bf16.mxu0 %v11521
        %12754 = vmatpush1.bf16.msra.mxu0 %v11520
        %12755 = vmatprep.subr.bf16.mxu0 %v11525
        %12756 = vmatpush1.bf16.msra.mxu0 %v11524
        %12757 = vmatprep.subr.bf16.mxu0 %v11529
        %12758 = vmatpush1.bf16.msra.mxu0 %v11528
        %12759 = vmatprep.subr.bf16.mxu0 %v11533
        %12760 = vmatpush1.bf16.msra.mxu0 %v11532
        %12761 = vmatprep.subr.bf16.mxu0 %v11537
        %12762 = vmatpush1.bf16.msra.mxu0 %v11536
        %12763 = vmatprep.subr.bf16.mxu0 %v11541
        %12764 = vmatpush1.bf16.msra.mxu0 %v11540
        %12765 = vmatprep.subr.bf16.mxu0 %v11545
        %12766 = vmatpush1.bf16.msra.mxu0 %v11544
        %12767 = vmatprep.subr.bf16.mxu0 %v11549
        %12768 = vmatpush1.bf16.msra.mxu0 %v11548
        %12769 = vmatprep.subr.bf16.mxu0 %v11553
        %12770 = vmatpush1.bf16.msra.mxu0 %v11552
        %12771 = vmatprep.subr.bf16.mxu0 %v11557
        %12772 = vmatpush1.bf16.msra.mxu0 %v11556
        %12773 = vmatprep.subr.bf16.mxu0 %v11561
        %12774 = vmatpush1.bf16.msra.mxu0 %v11560
        %12775 = vmatprep.subr.bf16.mxu0 %v11565
        %12776 = vmatpush1.bf16.msra.mxu0 %v11564
        %12777 = vmatprep.subr.bf16.mxu0 %v11569
        %12778 = vmatpush1.bf16.msra.mxu0 %v11568
        %12779 = vmatprep.subr.bf16.mxu0 %v11573
        %12780 = vmatpush1.bf16.msra.mxu0 %v11572
        %12781 = vmatprep.subr.bf16.mxu0 %v11577
        %12782 = vmatpush1.bf16.msra.mxu0 %v11576
        %12783 = vmatprep.mubr.bf16.mxu0 %v9119
        %12784 = vmatmul.mubr.bf16.gmra.mrb[0].mxu0 %v9118
        %v12785 = vpop.f32.mrb[0].mxu0
        %v12786 = vadd.f32 %v12745, %v12785
        %v12787 = vpop.f32.mrb[0].mxu0
        %v12788 = vadd.f32 %v12747, %v12787
        %v12789 = vpop.f32.mrb[0].mxu0
        %v12790 = vpop.f32.mrb[0].mxu0
        %12791 = vdwg.mxu0
        %12792 = vmatprep.subr.bf16.mxu0 %v11581
        %12793 = vmatpush1.bf16.msra.mxu0 %v11580
        %12794 = vmatprep.subr.bf16.mxu0 %v11585
        %12795 = vmatpush1.bf16.msra.mxu0 %v11584
        %12796 = vmatprep.subr.bf16.mxu0 %v11589
        %12797 = vmatpush1.bf16.msra.mxu0 %v11588
        %12798 = vmatprep.subr.bf16.mxu0 %v11593
        %12799 = vmatpush1.bf16.msra.mxu0 %v11592
        %12800 = vmatprep.subr.bf16.mxu0 %v11597
        %12801 = vmatpush1.bf16.msra.mxu0 %v11596
        %12802 = vmatprep.subr.bf16.mxu0 %v11601
        %12803 = vmatpush1.bf16.msra.mxu0 %v11600
        %12804 = vmatprep.subr.bf16.mxu0 %v11605
        %12805 = vmatpush1.bf16.msra.mxu0 %v11604
        %12806 = vmatprep.subr.bf16.mxu0 %v11609
        %12807 = vmatpush1.bf16.msra.mxu0 %v11608
        %12808 = vmatprep.subr.bf16.mxu0 %v11613
        %12809 = vmatpush1.bf16.msra.mxu0 %v11612
        %12810 = vmatprep.subr.bf16.mxu0 %v11617
        %12811 = vmatpush1.bf16.msra.mxu0 %v11616
        %12812 = vmatprep.subr.bf16.mxu0 %v11621
        %12813 = vmatpush1.bf16.msra.mxu0 %v11620
        %12814 = vmatprep.subr.bf16.mxu0 %v11625
        %12815 = vmatpush1.bf16.msra.mxu0 %v11624
        %12816 = vmatprep.subr.bf16.mxu0 %v11629
        %12817 = vmatpush1.bf16.msra.mxu0 %v11628
        %12818 = vmatprep.subr.bf16.mxu0 %v11633
        %12819 = vmatpush1.bf16.msra.mxu0 %v11632
        %12820 = vmatprep.subr.bf16.mxu0 %v11637
        %12821 = vmatpush1.bf16.msra.mxu0 %v11636
        %12822 = vmatprep.subr.bf16.mxu0 %v11641
        %12823 = vmatpush1.bf16.msra.mxu0 %v11640
        %12824 = vmatprep.mubr.bf16.mxu0 %v9121
        %12825 = vmatmul.mubr.bf16.gmra.mrb[0].mxu0 %v9120
        %v12826 = vpop.f32.mrb[0].mxu0
        %v12827 = vadd.f32 %v12786, %v12826
        %v12828 = vpop.f32.mrb[0].mxu0
        %v12829 = vadd.f32 %v12788, %v12828
        %v12830 = vpop.f32.mrb[0].mxu0
        %v12831 = vpop.f32.mrb[0].mxu0
        %12832 = vdwg.mxu0
        %12833 = vmatprep.subr.bf16.mxu0 %v11645
        %12834 = vmatpush1.bf16.msra.mxu0 %v11644
        %12835 = vmatprep.subr.bf16.mxu0 %v11649
        %12836 = vmatpush1.bf16.msra.mxu0 %v11648
        %12837 = vmatprep.subr.bf16.mxu0 %v11653
        %12838 = vmatpush1.bf16.msra.mxu0 %v11652
        %12839 = vmatprep.subr.bf16.mxu0 %v11657
        %12840 = vmatpush1.bf16.msra.mxu0 %v11656
        %12841 = vmatprep.subr.bf16.mxu0 %v11661
        %12842 = vmatpush1.bf16.msra.mxu0 %v11660
        %12843 = vmatprep.subr.bf16.mxu0 %v11665
        %12844 = vmatpush1.bf16.msra.mxu0 %v11664
        %12845 = vmatprep.subr.bf16.mxu0 %v11669
        %12846 = vmatpush1.bf16.msra.mxu0 %v11668
        %12847 = vmatprep.subr.bf16.mxu0 %v11673
        %12848 = vmatpush1.bf16.msra.mxu0 %v11672
        %12849 = vmatprep.subr.bf16.mxu0 %v11677
        %12850 = vmatpush1.bf16.msra.mxu0 %v11676
        %12851 = vmatprep.subr.bf16.mxu0 %v11681
        %12852 = vmatpush1.bf16.msra.mxu0 %v11680
        %12853 = vmatprep.subr.bf16.mxu0 %v11685
        %12854 = vmatpush1.bf16.msra.mxu0 %v11684
        %12855 = vmatprep.subr.bf16.mxu0 %v11689
        %12856 = vmatpush1.bf16.msra.mxu0 %v11688
        %12857 = vmatprep.subr.bf16.mxu0 %v11693
        %12858 = vmatpush1.bf16.msra.mxu0 %v11692
        %12859 = vmatprep.subr.bf16.mxu0 %v11697
        %12860 = vmatpush1.bf16.msra.mxu0 %v11696
        %12861 = vmatprep.subr.bf16.mxu0 %v11701
        %12862 = vmatpush1.bf16.msra.mxu0 %v11700
        %12863 = vmatprep.subr.bf16.mxu0 %v11705
        %12864 = vmatpush1.bf16.msra.mxu0 %v11704
        %12865 = vmatprep.mubr.bf16.mxu0 %v9123
        %12866 = vmatmul.mubr.bf16.gmra.mrb[0].mxu0 %v9122
        %v12867 = vpop.f32.mrb[0].mxu0
        %v12868 = vadd.f32 %v12827, %v12867
        %v12869 = vpop.f32.mrb[0].mxu0
        %v12870 = vadd.f32 %v12829, %v12869
        %v12871 = vpop.f32.mrb[0].mxu0
        %v12872 = vpop.f32.mrb[0].mxu0
        %12873 = vdwg.mxu0
        %v12874 = vadd.f32 %v12540, %v5272
        %v12875 = vadd.f32 %v12542, %v5273
        %v12876 = vadd.f32 %v12868, %v5274
        %v12877 = vadd.f32 %v12870, %v5275
        %v12878 = vadd.f32 %v12874, %v12875
        %v12879 = vadd.f32 %v12878, %v12876
        %v12880 = vadd.f32 %v12879, %v12877
        %12881 = vadd.xlane.f32.xlu0 %v12880
        %v12882 = vpop.xlane.xlu0 %12881
        %v12883 = vmul.f32 %v12882, %v5254
        %v12884 = vsub.f32 %v12874, %v12883
        %v12885 = vsub.f32 %v12875, %v12883
        %v12886 = vsub.f32 %v12876, %v12883
        %v12887 = vsub.f32 %v12877, %v12883
        %v12888 = vmul.f32 %v12884, %v12884
        %v12889 = vmul.f32 %v12885, %v12885
        %v12890 = vmul.f32 %v12886, %v12886
        %v12891 = vmul.f32 %v12887, %v12887
        %v12892 = vadd.f32 %v12888, %v12889
        %v12893 = vadd.f32 %v12892, %v12890
        %v12894 = vadd.f32 %v12893, %v12891
        %12895 = vadd.xlane.f32.xlu0 %v12894
        %v12896 = vpop.xlane.xlu0 %12895
        %v12897 = vmul.f32 %v12896, %v5254
        %v12898 = vadd.f32 %v12897, 1e-05
        %v12899 = vrsqrt.pop %v12898
        %v12900 = vmul.f32 %v12884, %v12899
        %v12901 = vmul.f32 %v12885, %v12899
        %v12902 = vmul.f32 %v12886, %v12899
        %v12903 = vmul.f32 %v12887, %v12899
        %12904 = vst [vmem:[%s496] sm:$0xff] %v12900
        %12905 = vst [vmem:[%s496 + $0x8] sm:$0xff] %v12901
        %12906 = vst [vmem:[%s496 + $0x10] sm:$0xff] %v12902
        %12907 = vst [vmem:[%s496 + $0x18] sm:$0xff] %v12903
        %s12908 = sand.u32 %s259, 1
        %s12909 = scalar_lea.sflag [#allocation4], %s12908
        %s12910 = sand.u32 %s259, 1
        %s12911 = smul.addr %s12910, 32
        %s12912 = scalar_lea.vmem [#allocation17], %s12911
        // Predicated region
        $region97: #{encoder_layer.1} parent=59 // pred_check
          %p12913 = pneg %p269
        $region98: #{encoder_layer.1} parent=59 // pred_check_branch
          %12915 = sbr.rel (%p12913) target = $region100
        $region99: #{encoder_layer.1} parent=59 // pred_region
          %s12917 = ssub.s32 512, 512
          %12918 = vsyncadd %s12909, %s12917
          %s12919 = smul.addr %s31, 4
          %s12920 = smul.addr %s12919, 128
          %s12921 = scalar_lea.hbm %s10, %s12920
          %s12923 = sshll.u32 %s12912, 4
          %s12924 = int_to_ptr.vmem [resolvable:$true] %s12923
          %12926 = dma.vmem_to_hbm [thread:$0]  %s12924, 512, %s12921, %s12909
        $region100: #{encoder_layer.1} parent=59 // pred_fallthru
          _
      $region60: #{encoder_layer.1} parent=5 // pred_fallthru
        _
      %p12927 = scmp.le.s32.totalorder 2, %s26
      // Predicated region
      $region101: #{encoder_layer.1} parent=5 // pred_check
        %p12928 = pneg %p12927
      $region102: #{encoder_layer.1} parent=5 // pred_check_branch
        %12930 = sbr.rel (%p12928) target = $region104
      $region103: #{encoder_layer.1} parent=5 // pred_region
        %s12931 = ssub.s32 %s26, 2
        // Predicated region
        $region105: #{encoder_layer.1} parent=103 // pred_check
          %p12932 = pneg %p275
        $region106: #{encoder_layer.1} parent=103 // pred_check_branch
          %12934 = sbr.rel (%p12932) target = $region108
        $region107: #{encoder_layer.1} parent=103 // pred_region
          %s12935 = sand.u32 %s260, 1
          %s12936 = scalar_lea.sflag [#allocation4], %s12935
          %s12937 = sand.u32 %s260, 1
          %s12938 = smul.addr %s12937, 32
          %s12939 = scalar_lea.vmem [#allocation17], %s12938
          %12940 = dma.done %s12936, 512
        $region108: #{encoder_layer.1} parent=103 // pred_fallthru
          _
      $region104: #{encoder_layer.1} parent=5 // pred_fallthru
        _
    $region6: #{encoder_layer.1} parent=1 // loop_footer
      %s30 = sadd.s32 1, %s26
    $region7: #{encoder_layer.1} parent=1 // loop_footer_branch
      %25 = sbr.rel target = $region3
    $region8: #{encoder_layer.1} parent=1 // loop_exit
      _
    %12941 = vsyncpa [#allocation3], 1
    %s12942 = scalar_lea.sflag [#allocation3], 1
    %12943 = vsyncpa %s12942, 1
    %12944 = vsyncpa [#allocation6], 1
    %12945 = vsyncpa [#allocation9], 1
    %12946 = vsyncpa [#allocation12], 1
    %12947 = vsyncpa [#allocation15], 1
    %12948 = vsyncpa [#allocation4], 1
    %s12949 = scalar_lea.sflag [#allocation4], 1
    %12950 = vsyncpa %s12949, 1

</llo_original>
